<compile_context>
chip_gen: v7x
topology: tpu7x:2x2x1
jax: 0.10.0
libtpu: 0.0.40
codegen_flags: <defaults>
</compile_context>

<pallas_src>
import functools

import jax
import jax.numpy as jnp
import numpy as np
from jax import lax
from jax.experimental import pallas as pl
from jax.experimental.pallas import tpu as pltpu


# ----------------------------- kernel helpers ------------------------------

def _fill_padded(buf_ref, t, p):
    """Write tile `t` into the interior of padded VMEM scratch `buf_ref`.

    The border is (re)zeroed every grid step: it is a cheap full-width memset
    and stays correct even when the "parallel" batch axis is sharded across
    TensorCores (a `pl.program_id(0) == 0` init guard would not run on every
    core's first iteration).
    """
    if p == 0:
        buf_ref[...] = t
        return
    nb, h, w, _ = t.shape
    buf_ref[...] = jnp.zeros(buf_ref.shape, buf_ref.dtype)
    buf_ref[:, p:p + h, p:p + w, :] = t


def _conv_bn_relu6(pad_ref, w_ref, b_ref, k, stride, ho, wo):
    """k x k conv (cross-correlation) + folded-BN bias + ReLU6.

    pad_ref: (nb, h+2p, w+2p, ci) bf16 VMEM scratch holding the padded tile.
    w_ref:   (k*k, ci, co) bf16   (BN scale folded in; tap index = kh*k + kw).
    b_ref:   (1, co)       f32    (folded BN bias).
    Returns  (nb*ho*wo, co) f32 with bias + ReLU6 applied.

    Per-tap matmuls accumulated in f32: no k*k im2col lane-concatenation, so
    the largest live tensor stays O(activation) instead of O(k^2*activation).
    """
    nb, hp, wp, ci = pad_ref.shape
    co = w_ref.shape[-1]
    m_rows = nb * ho * wo

    w_all = w_ref[...]                                       # (k*k, ci, co)
    acc = jnp.zeros((m_rows, co), jnp.float32)
    tp = pad_ref[...] if stride != 1 else None               # only for stride>1
    for kh in range(k):
        for kw in range(k):
            if stride == 1:
                v = pad_ref[:, kh:kh + ho, kw:kw + wo, :]    # static shifted view
            else:
                v = lax.slice(
                    tp, (0, kh, kw, 0),
                    (nb, kh + (ho - 1) * stride + 1,
                     kw + (wo - 1) * stride + 1, ci),
                    (1, stride, stride, 1))
            m = v.reshape(m_rows, ci)                        # leading-dim merge only
            acc = acc + jnp.dot(m, w_all[kh * k + kw],
                                preferred_element_type=jnp.float32)
    return jnp.clip(acc + b_ref[...], 0.0, 6.0)


# --------------------------------- kernel ----------------------------------

def bottleneck_kernel(x_ref, w1_ref, b1_ref, w2_ref, b2_ref, o_ref,
                      pad1_ref, pad2_ref, *, k, stride, pad):
    nb = x_ref.shape[0]
    _, hp2, wp2, ch = pad2_ref.shape
    ho, wo = hp2 - 2 * pad, wp2 - 2 * pad
    _, ho2, wo2, cout = o_ref.shape

    # conv1: pad into scratch, per-tap matmul accumulate, bias + ReLU6.
    _fill_padded(pad1_ref, x_ref[...], pad)                  # bf16 input block
    h = _conv_bn_relu6(pad1_ref, w1_ref, b1_ref, k, stride, ho, wo)

    # Hand conv1's bf16 output straight into the interior of conv2's scratch.
    _fill_padded(pad2_ref, h.reshape(nb, ho, wo, ch).astype(jnp.bfloat16), pad)
    y = _conv_bn_relu6(pad2_ref, w2_ref, b2_ref, k, 1, ho2, wo2)

    o_ref[...] = y.reshape(nb, ho2, wo2, cout).astype(o_ref.dtype)


# ------------------------------ VMEM heuristic ------------------------------

def _vmem_tile_bytes(shape, dtype):
    """Approximate VMEM bytes of a buffer, including (sublane, lane) padding."""
    itemsize = jnp.dtype(dtype).itemsize
    sublane = {4: 8, 2: 16, 1: 32}.get(itemsize, 8)
    dims = list(shape)
    if dims:
        dims[-1] = -(-dims[-1] // 128) * 128
    if len(dims) >= 2:
        dims[-2] = -(-dims[-2] // sublane) * sublane
    n = 1
    for d in dims:
        n *= d
    return n * itemsize


# --------------------------------- wrapper ---------------------------------

def bottleneck(x_nchw, params, *, kernel_size, stride, padding,
               images_per_step=None, vmem_limit_bytes=None):
    k, s, p = kernel_size, stride, padding

    # NCHW -> NHWC and cast to bf16 so the kernel DMAs half the bytes.
    x = jnp.transpose(x_nchw, (0, 2, 3, 1)).astype(jnp.bfloat16)
    N, H, W, Cin = x.shape
    Ch = params["w1"].shape[-1]
    Cout = params["w2"].shape[-1]
    Ho = (H + 2 * p - k) // s + 1
    Wo = (W + 2 * p - k) // s + 1
    Ho2 = (Ho + 2 * p - k) + 1
    Wo2 = (Wo + 2 * p - k) + 1

    # v7x-safe default (64 MiB physical VMEM/core). v5e/v6e have 128 MiB, so
    # raising this toward ~100 MiB there lets nb (and the matmul M dim) grow
    # and amortises the ~0.35us/step grid overhead further.
    if vmem_limit_bytes is None:
        vmem_limit_bytes = 48 * 1024 * 1024

    bf16, f32 = jnp.bfloat16, jnp.float32

    def per_image_vmem():
        b = 0
        b += 2 * _vmem_tile_bytes((1, H, W, Cin), bf16)            # in block (x2 buffers)
        b += 2 * _vmem_tile_bytes((1, Ho2, Wo2, Cout), bf16)       # out block (x2 buffers)
        b += _vmem_tile_bytes((1, H + 2 * p, W + 2 * p, Cin), bf16)    # pad1 scratch
        b += _vmem_tile_bytes((1, Ho + 2 * p, Wo + 2 * p, Ch), bf16)   # pad2 scratch
        b += _vmem_tile_bytes((Ho * Wo, Ch), f32)                  # conv1 f32 accumulator
        b += _vmem_tile_bytes((Ho2 * Wo2, Cout), f32)              # conv2 f32 accumulator
        b += 2 * _vmem_tile_bytes((1, Ho, Wo, Cin), bf16)          # live conv1 tap slices
        b += 2 * _vmem_tile_bytes((1, Ho2, Wo2, Ch), bf16)         # live conv2 tap slices
        b += _vmem_tile_bytes((1, Ho, Wo, Ch), bf16)               # conv1 -> conv2 handoff
        return b

    fixed = 2 * sum(_vmem_tile_bytes(params[name].shape, params[name].dtype)
                    for name in ("w1", "b1", "w2", "b2"))

    if images_per_step is None:
        per_img = per_image_vmem()
        budget = max(int(0.75 * vmem_limit_bytes) - fixed, per_img)
        nb_cap = max(1, budget // per_img)
        # Never collapse the grid to a single step: >=2 steps keeps the
        # BlockSpec pipeline overlapping load/store with compute, and an even
        # step count feeds both v7x TensorCores under "parallel" semantics.
        nb_cap = min(nb_cap, max(1, N // 2))
        divisors = [d for d in range(1, nb_cap + 1) if N % d == 0]
        even = [d for d in divisors if (N // d) % 2 == 0]
        nb = max(even) if even else max(divisors)
    else:
        nb = images_per_step
        assert N % nb == 0, (N, nb)

    kern = functools.partial(bottleneck_kernel, k=k, stride=s, pad=p)
    param_list = [params["w1"], params["b1"], params["w2"], params["b2"]]

    def full_spec(a):
        nd = a.ndim
        return pl.BlockSpec(a.shape, lambda n, _nd=nd: (0,) * _nd)

    out = pl.pallas_call(
        kern,
        grid=(N // nb,),
        in_specs=[pl.BlockSpec((nb, H, W, Cin), lambda n: (n, 0, 0, 0))]
                + [full_spec(a) for a in param_list],
        out_specs=pl.BlockSpec((nb, Ho2, Wo2, Cout), lambda n: (n, 0, 0, 0)),
        out_shape=jax.ShapeDtypeStruct((N, Ho2, Wo2, Cout), jnp.bfloat16),
        scratch_shapes=[
            pltpu.VMEM((nb, H + 2 * p, W + 2 * p, Cin), jnp.bfloat16),
            pltpu.VMEM((nb, Ho + 2 * p, Wo + 2 * p, Ch), jnp.bfloat16),
        ],
        compiler_params=pltpu.CompilerParams(
            dimension_semantics=("parallel",),
            vmem_limit_bytes=vmem_limit_bytes),
    )(x, *param_list)

    # bf16 kernel writeback; cast back to f32 outside the kernel so the public
    # interface matches the PyTorch module's dtype.
    return jnp.transpose(out, (0, 3, 1, 2)).astype(jnp.float32)


# ---------------------- deterministic parameter init -----------------------

def init_params(key, C_in, C_hidden, C_out, k, eps=1e-5):
    """Conv weights (PyTorch OIHW) + eval-mode BN stats, folded & reshaped.

    Weights are returned tap-major as (k*k, Ci, Co) bf16 (BN scale folded in);
    biases as (1, Co) f32.
    """
    def conv_bn(kk, Ci, Co):
        kw_, kg, kb, km, kv = jax.random.split(kk, 5)
        w = 0.3 * jax.random.normal(kw_, (Co, Ci, k, k), jnp.float32)   # OIHW
        gamma = 1.0 + 0.1 * jax.random.normal(kg, (Co,), jnp.float32)
        beta = 0.1 * jax.random.normal(kb, (Co,), jnp.float32)
        mean = 0.1 * jax.random.normal(km, (Co,), jnp.float32)
        var = jax.random.uniform(kv, (Co,), jnp.float32, minval=0.5, maxval=1.5)
        scale = gamma / jnp.sqrt(var + eps)
        bias = beta - mean * scale
        w_folded = w * scale[:, None, None, None]
        # OIHW -> (kh, kw, Ci, Co) -> (k*k, Ci, Co), matching kernel tap order.
        w_taps = jnp.transpose(w_folded, (2, 3, 1, 0)).reshape(k * k, Ci, Co)
        return w_taps.astype(jnp.bfloat16), bias.reshape(1, Co)

    k1, k2 = jax.random.split(key)
    w1, b1 = conv_bn(k1, C_in, C_hidden)
    w2, b2 = conv_bn(k2, C_hidden, C_out)
    return {"w1": w1, "b1": b1, "w2": w2, "b2": b2}


# ------------------------- pure-JAX reference (check) ----------------------

def bottleneck_reference(x_nchw, params, k, stride, pad):
    """f32 convs on bf16-rounded operands (mirrors the kernel's MXU precision)."""
    x = jnp.transpose(x_nchw, (0, 2, 3, 1)).astype(jnp.float32)

    def layer(t, w_taps, b, s_):
        kk, ci, co = w_taps.shape
        w = w_taps.astype(jnp.float32).reshape(k, k, ci, co)    # HWIO
        t = t.astype(jnp.bfloat16).astype(jnp.float32)
        y = lax.conv_general_dilated(
            t, w, (s_, s_), ((pad, pad), (pad, pad)),
            dimension_numbers=("NHWC", "HWIO", "NHWC"),
            precision=lax.Precision.HIGHEST)
        return jnp.clip(y + b, 0.0, 6.0)

    h = layer(x, params["w1"], params["b1"], stride)
    y = layer(h, params["w2"], params["b2"], 1)
    return jnp.transpose(y, (0, 3, 1, 2))


# ----------------------------------- main -----------------------------------

if __name__ == "__main__":
    N, C_in, C_hidden, C_out = 2, 4, 8, 4
    H = W = 16
    k, stride, padding = 3, 1, 1

    key = jax.random.PRNGKey(0)
    kx, kp = jax.random.split(key)
    x = jax.random.normal(kx, (N, C_in, H, W), jnp.float32)
    params = init_params(kp, C_in, C_hidden, C_out, k)

    fwd = jax.jit(functools.partial(bottleneck, kernel_size=k, stride=stride,
                                    padding=padding))
    out = jax.block_until_ready(fwd(x, params))
    ref = jax.block_until_ready(
        bottleneck_reference(x, params, k, stride, padding))

    assert out.shape == ref.shape == (N, C_out, H, W), (out.shape, ref.shape)
    # bf16 MXU operands + bf16 output writeback vs f32 reference math.
    np.testing.assert_allclose(np.asarray(out), np.asarray(ref),
                               rtol=2e-2, atol=3e-2)
    print("KERNEL_OK")
</pallas_src>

<mosaic_0001>
module attributes {stable_mosaic.version = 11 : i64} {
  func.func @bottleneck_kernel(%arg0: i32, %arg1: memref<1x16x16x4xbf16, #tpu.memory_space<vmem>>, %arg2: memref<9x4x8xbf16, #tpu.memory_space<vmem>>, %arg3: memref<1x8xf32, #tpu.memory_space<vmem>>, %arg4: memref<9x8x4xbf16, #tpu.memory_space<vmem>>, %arg5: memref<1x4xf32, #tpu.memory_space<vmem>>, %arg6: memref<1x16x16x4xbf16, #tpu.memory_space<vmem>>, %arg7: memref<1x18x18x4xbf16, #tpu.memory_space<vmem>>, %arg8: memref<1x18x18x8xbf16, #tpu.memory_space<vmem>>) attributes {dimension_semantics = [#tpu.dimension_semantics<parallel>], iteration_bounds = array<i64: 2>, scalar_prefetch = 0 : i64, scratch_operands = 2 : i64, tpu.core_type = #tpu.core_type<tc>, window_params = [{transform_indices = @transform_0, window_bounds = array<i64: 1, 16, 16, 4>}, {pipeline_mode = #tpu.pipeline_mode<synchronous>, transform_indices = @transform_1, window_bounds = array<i64: 9, 4, 8>}, {pipeline_mode = #tpu.pipeline_mode<synchronous>, transform_indices = @transform_2, window_bounds = array<i64: 1, 8>}, {pipeline_mode = #tpu.pipeline_mode<synchronous>, transform_indices = @transform_3, window_bounds = array<i64: 9, 8, 4>}, {pipeline_mode = #tpu.pipeline_mode<synchronous>, transform_indices = @transform_4, window_bounds = array<i64: 1, 4>}, {transform_indices = @transform_5, window_bounds = array<i64: 1, 16, 16, 4>}]} {
    %c0 = arith.constant 0 : index
    %c0_0 = arith.constant 0 : index
    %c0_1 = arith.constant 0 : index
    %c0_2 = arith.constant 0 : index
    %0 = vector.load %arg1[%c0, %c0_0, %c0_1, %c0_2] : memref<1x16x16x4xbf16, #tpu.memory_space<vmem>>, vector<1x16x16x4xbf16>
    %cst = arith.constant 0.000000e+00 : bf16
    %1 = vector.broadcast %cst : bf16 to vector<1x18x18x4xbf16>
    %c0_3 = arith.constant 0 : index
    %c0_4 = arith.constant 0 : index
    %c0_5 = arith.constant 0 : index
    %c0_6 = arith.constant 0 : index
    %2 = vector.load %arg7[%c0_3, %c0_4, %c0_5, %c0_6] : memref<1x18x18x4xbf16, #tpu.memory_space<vmem>>, vector<1x18x18x4xbf16>
    tpu.vector_store %arg7[%c0_3, %c0_4, %c0_5, %c0_6], %1 {strides = array<i32>} : memref<1x18x18x4xbf16, #tpu.memory_space<vmem>>, vector<1x18x18x4xbf16>,
    %c0_7 = arith.constant 0 : index
    %c1 = arith.constant 1 : index
    %c1_8 = arith.constant 1 : index
    %c0_9 = arith.constant 0 : index
    %3 = vector.load %arg7[%c0_7, %c1, %c1_8, %c0_9] : memref<1x18x18x4xbf16, #tpu.memory_space<vmem>>, vector<1x16x16x4xbf16>
    tpu.vector_store %arg7[%c0_7, %c1, %c1_8, %c0_9], %0 {strides = array<i32>} : memref<1x18x18x4xbf16, #tpu.memory_space<vmem>>, vector<1x16x16x4xbf16>,
    %c0_10 = arith.constant 0 : index
    %c0_11 = arith.constant 0 : index
    %c0_12 = arith.constant 0 : index
    %4 = vector.load %arg2[%c0_10, %c0_11, %c0_12] : memref<9x4x8xbf16, #tpu.memory_space<vmem>>, vector<9x4x8xbf16>
    %cst_13 = arith.constant 0.000000e+00 : f32
    %5 = vector.broadcast %cst_13 : f32 to vector<256x8xf32>
    %c0_14 = arith.constant 0 : index
    %c0_15 = arith.constant 0 : index
    %c0_16 = arith.constant 0 : index
    %c0_17 = arith.constant 0 : index
    %6 = vector.load %arg7[%c0_14, %c0_15, %c0_16, %c0_17] : memref<1x18x18x4xbf16, #tpu.memory_space<vmem>>, vector<1x16x16x4xbf16>
    %7 = vector.shape_cast %6 : vector<1x16x16x4xbf16> to vector<256x4xbf16>
    %8 = vector.extract_strided_slice %4 {offsets = [0, 0, 0], sizes = [1, 4, 8], strides = [1, 1, 1]} : vector<9x4x8xbf16> to vector<1x4x8xbf16>
    %9 = vector.shape_cast %8 : vector<1x4x8xbf16> to vector<4x8xbf16>
    %cst_18 = arith.constant dense<0.000000e+00> : vector<256x8xf32>
    %10 = tpu.matmul %7, %9, %cst_18 {dimension_numbers = #tpu.dot_dimension_numbers<[1], [0], [0], [1], [0, 0, 1, 1], [], []>} : vector<256x4xbf16>, vector<4x8xbf16>, vector<256x8xf32> -> vector<256x8xf32>
    %11 = arith.addf %5, %10 : vector<256x8xf32>
    %c0_19 = arith.constant 0 : index
    %c0_20 = arith.constant 0 : index
    %c1_21 = arith.constant 1 : index
    %c0_22 = arith.constant 0 : index
    %12 = vector.load %arg7[%c0_19, %c0_20, %c1_21, %c0_22] : memref<1x18x18x4xbf16, #tpu.memory_space<vmem>>, vector<1x16x16x4xbf16>
    %13 = vector.shape_cast %12 : vector<1x16x16x4xbf16> to vector<256x4xbf16>
    %14 = vector.extract_strided_slice %4 {offsets = [1, 0, 0], sizes = [1, 4, 8], strides = [1, 1, 1]} : vector<9x4x8xbf16> to vector<1x4x8xbf16>
    %15 = vector.shape_cast %14 : vector<1x4x8xbf16> to vector<4x8xbf16>
    %cst_23 = arith.constant dense<0.000000e+00> : vector<256x8xf32>
    %16 = tpu.matmul %13, %15, %cst_23 {dimension_numbers = #tpu.dot_dimension_numbers<[1], [0], [0], [1], [0, 0, 1, 1], [], []>} : vector<256x4xbf16>, vector<4x8xbf16>, vector<256x8xf32> -> vector<256x8xf32>
    %17 = arith.addf %11, %16 : vector<256x8xf32>
    %c0_24 = arith.constant 0 : index
    %c0_25 = arith.constant 0 : index
    %c2 = arith.constant 2 : index
    %c0_26 = arith.constant 0 : index
    %18 = vector.load %arg7[%c0_24, %c0_25, %c2, %c0_26] : memref<1x18x18x4xbf16, #tpu.memory_space<vmem>>, vector<1x16x16x4xbf16>
    %19 = vector.shape_cast %18 : vector<1x16x16x4xbf16> to vector<256x4xbf16>
    %20 = vector.extract_strided_slice %4 {offsets = [2, 0, 0], sizes = [1, 4, 8], strides = [1, 1, 1]} : vector<9x4x8xbf16> to vector<1x4x8xbf16>
    %21 = vector.shape_cast %20 : vector<1x4x8xbf16> to vector<4x8xbf16>
    %cst_27 = arith.constant dense<0.000000e+00> : vector<256x8xf32>
    %22 = tpu.matmul %19, %21, %cst_27 {dimension_numbers = #tpu.dot_dimension_numbers<[1], [0], [0], [1], [0, 0, 1, 1], [], []>} : vector<256x4xbf16>, vector<4x8xbf16>, vector<256x8xf32> -> vector<256x8xf32>
    %23 = arith.addf %17, %22 : vector<256x8xf32>
    %c0_28 = arith.constant 0 : index
    %c1_29 = arith.constant 1 : index
    %c0_30 = arith.constant 0 : index
    %c0_31 = arith.constant 0 : index
    %24 = vector.load %arg7[%c0_28, %c1_29, %c0_30, %c0_31] : memref<1x18x18x4xbf16, #tpu.memory_space<vmem>>, vector<1x16x16x4xbf16>
    %25 = vector.shape_cast %24 : vector<1x16x16x4xbf16> to vector<256x4xbf16>
    %26 = vector.extract_strided_slice %4 {offsets = [3, 0, 0], sizes = [1, 4, 8], strides = [1, 1, 1]} : vector<9x4x8xbf16> to vector<1x4x8xbf16>
    %27 = vector.shape_cast %26 : vector<1x4x8xbf16> to vector<4x8xbf16>
    %cst_32 = arith.constant dense<0.000000e+00> : vector<256x8xf32>
    %28 = tpu.matmul %25, %27, %cst_32 {dimension_numbers = #tpu.dot_dimension_numbers<[1], [0], [0], [1], [0, 0, 1, 1], [], []>} : vector<256x4xbf16>, vector<4x8xbf16>, vector<256x8xf32> -> vector<256x8xf32>
    %29 = arith.addf %23, %28 : vector<256x8xf32>
    %c0_33 = arith.constant 0 : index
    %c1_34 = arith.constant 1 : index
    %c1_35 = arith.constant 1 : index
    %c0_36 = arith.constant 0 : index
    %30 = vector.load %arg7[%c0_33, %c1_34, %c1_35, %c0_36] : memref<1x18x18x4xbf16, #tpu.memory_space<vmem>>, vector<1x16x16x4xbf16>
    %31 = vector.shape_cast %30 : vector<1x16x16x4xbf16> to vector<256x4xbf16>
    %32 = vector.extract_strided_slice %4 {offsets = [4, 0, 0], sizes = [1, 4, 8], strides = [1, 1, 1]} : vector<9x4x8xbf16> to vector<1x4x8xbf16>
    %33 = vector.shape_cast %32 : vector<1x4x8xbf16> to vector<4x8xbf16>
    %cst_37 = arith.constant dense<0.000000e+00> : vector<256x8xf32>
    %34 = tpu.matmul %31, %33, %cst_37 {dimension_numbers = #tpu.dot_dimension_numbers<[1], [0], [0], [1], [0, 0, 1, 1], [], []>} : vector<256x4xbf16>, vector<4x8xbf16>, vector<256x8xf32> -> vector<256x8xf32>
    %35 = arith.addf %29, %34 : vector<256x8xf32>
    %c0_38 = arith.constant 0 : index
    %c1_39 = arith.constant 1 : index
    %c2_40 = arith.constant 2 : index
    %c0_41 = arith.constant 0 : index
    %36 = vector.load %arg7[%c0_38, %c1_39, %c2_40, %c0_41] : memref<1x18x18x4xbf16, #tpu.memory_space<vmem>>, vector<1x16x16x4xbf16>
    %37 = vector.shape_cast %36 : vector<1x16x16x4xbf16> to vector<256x4xbf16>
    %38 = vector.extract_strided_slice %4 {offsets = [5, 0, 0], sizes = [1, 4, 8], strides = [1, 1, 1]} : vector<9x4x8xbf16> to vector<1x4x8xbf16>
    %39 = vector.shape_cast %38 : vector<1x4x8xbf16> to vector<4x8xbf16>
    %cst_42 = arith.constant dense<0.000000e+00> : vector<256x8xf32>
    %40 = tpu.matmul %37, %39, %cst_42 {dimension_numbers = #tpu.dot_dimension_numbers<[1], [0], [0], [1], [0, 0, 1, 1], [], []>} : vector<256x4xbf16>, vector<4x8xbf16>, vector<256x8xf32> -> vector<256x8xf32>
    %41 = arith.addf %35, %40 : vector<256x8xf32>
    %c0_43 = arith.constant 0 : index
    %c2_44 = arith.constant 2 : index
    %c0_45 = arith.constant 0 : index
    %c0_46 = arith.constant 0 : index
    %42 = vector.load %arg7[%c0_43, %c2_44, %c0_45, %c0_46] : memref<1x18x18x4xbf16, #tpu.memory_space<vmem>>, vector<1x16x16x4xbf16>
    %43 = vector.shape_cast %42 : vector<1x16x16x4xbf16> to vector<256x4xbf16>
    %44 = vector.extract_strided_slice %4 {offsets = [6, 0, 0], sizes = [1, 4, 8], strides = [1, 1, 1]} : vector<9x4x8xbf16> to vector<1x4x8xbf16>
    %45 = vector.shape_cast %44 : vector<1x4x8xbf16> to vector<4x8xbf16>
    %cst_47 = arith.constant dense<0.000000e+00> : vector<256x8xf32>
    %46 = tpu.matmul %43, %45, %cst_47 {dimension_numbers = #tpu.dot_dimension_numbers<[1], [0], [0], [1], [0, 0, 1, 1], [], []>} : vector<256x4xbf16>, vector<4x8xbf16>, vector<256x8xf32> -> vector<256x8xf32>
    %47 = arith.addf %41, %46 : vector<256x8xf32>
    %c0_48 = arith.constant 0 : index
    %c2_49 = arith.constant 2 : index
    %c1_50 = arith.constant 1 : index
    %c0_51 = arith.constant 0 : index
    %48 = vector.load %arg7[%c0_48, %c2_49, %c1_50, %c0_51] : memref<1x18x18x4xbf16, #tpu.memory_space<vmem>>, vector<1x16x16x4xbf16>
    %49 = vector.shape_cast %48 : vector<1x16x16x4xbf16> to vector<256x4xbf16>
    %50 = vector.extract_strided_slice %4 {offsets = [7, 0, 0], sizes = [1, 4, 8], strides = [1, 1, 1]} : vector<9x4x8xbf16> to vector<1x4x8xbf16>
    %51 = vector.shape_cast %50 : vector<1x4x8xbf16> to vector<4x8xbf16>
    %cst_52 = arith.constant dense<0.000000e+00> : vector<256x8xf32>
    %52 = tpu.matmul %49, %51, %cst_52 {dimension_numbers = #tpu.dot_dimension_numbers<[1], [0], [0], [1], [0, 0, 1, 1], [], []>} : vector<256x4xbf16>, vector<4x8xbf16>, vector<256x8xf32> -> vector<256x8xf32>
    %53 = arith.addf %47, %52 : vector<256x8xf32>
    %c0_53 = arith.constant 0 : index
    %c2_54 = arith.constant 2 : index
    %c2_55 = arith.constant 2 : index
    %c0_56 = arith.constant 0 : index
    %54 = vector.load %arg7[%c0_53, %c2_54, %c2_55, %c0_56] : memref<1x18x18x4xbf16, #tpu.memory_space<vmem>>, vector<1x16x16x4xbf16>
    %55 = vector.shape_cast %54 : vector<1x16x16x4xbf16> to vector<256x4xbf16>
    %56 = vector.extract_strided_slice %4 {offsets = [8, 0, 0], sizes = [1, 4, 8], strides = [1, 1, 1]} : vector<9x4x8xbf16> to vector<1x4x8xbf16>
    %57 = vector.shape_cast %56 : vector<1x4x8xbf16> to vector<4x8xbf16>
    %cst_57 = arith.constant dense<0.000000e+00> : vector<256x8xf32>
    %58 = tpu.matmul %55, %57, %cst_57 {dimension_numbers = #tpu.dot_dimension_numbers<[1], [0], [0], [1], [0, 0, 1, 1], [], []>} : vector<256x4xbf16>, vector<4x8xbf16>, vector<256x8xf32> -> vector<256x8xf32>
    %59 = arith.addf %53, %58 : vector<256x8xf32>
    %c0_58 = arith.constant 0 : index
    %c0_59 = arith.constant 0 : index
    %60 = vector.load %arg3[%c0_58, %c0_59] : memref<1x8xf32, #tpu.memory_space<vmem>>, vector<1x8xf32>
    %61 = vector.broadcast %60 : vector<1x8xf32> to vector<256x8xf32>
    %62 = arith.addf %59, %61 : vector<256x8xf32>
    %cst_60 = arith.constant 0.000000e+00 : f32
    %cst_61 = arith.constant 6.000000e+00 : f32
    %63 = vector.broadcast %cst_60 : f32 to vector<256x8xf32>
    %64 = arith.maximumf %63, %62 : vector<256x8xf32>
    %65 = vector.broadcast %cst_61 : f32 to vector<256x8xf32>
    %66 = arith.minimumf %65, %64 : vector<256x8xf32>
    %67 = vector.shape_cast %66 : vector<256x8xf32> to vector<1x16x16x8xf32>
    %68 = arith.truncf %67 : vector<1x16x16x8xf32> to vector<1x16x16x8xbf16>
    %cst_62 = arith.constant 0.000000e+00 : bf16
    %69 = vector.broadcast %cst_62 : bf16 to vector<1x18x18x8xbf16>
    %c0_63 = arith.constant 0 : index
    %c0_64 = arith.constant 0 : index
    %c0_65 = arith.constant 0 : index
    %c0_66 = arith.constant 0 : index
    %70 = vector.load %arg8[%c0_63, %c0_64, %c0_65, %c0_66] : memref<1x18x18x8xbf16, #tpu.memory_space<vmem>>, vector<1x18x18x8xbf16>
    tpu.vector_store %arg8[%c0_63, %c0_64, %c0_65, %c0_66], %69 {strides = array<i32>} : memref<1x18x18x8xbf16, #tpu.memory_space<vmem>>, vector<1x18x18x8xbf16>,
    %c0_67 = arith.constant 0 : index
    %c1_68 = arith.constant 1 : index
    %c1_69 = arith.constant 1 : index
    %c0_70 = arith.constant 0 : index
    %71 = vector.load %arg8[%c0_67, %c1_68, %c1_69, %c0_70] : memref<1x18x18x8xbf16, #tpu.memory_space<vmem>>, vector<1x16x16x8xbf16>
    tpu.vector_store %arg8[%c0_67, %c1_68, %c1_69, %c0_70], %68 {strides = array<i32>} : memref<1x18x18x8xbf16, #tpu.memory_space<vmem>>, vector<1x16x16x8xbf16>,
    %c0_71 = arith.constant 0 : index
    %c0_72 = arith.constant 0 : index
    %c0_73 = arith.constant 0 : index
    %72 = vector.load %arg4[%c0_71, %c0_72, %c0_73] : memref<9x8x4xbf16, #tpu.memory_space<vmem>>, vector<9x8x4xbf16>
    %cst_74 = arith.constant 0.000000e+00 : f32
    %73 = vector.broadcast %cst_74 : f32 to vector<256x4xf32>
    %c0_75 = arith.constant 0 : index
    %c0_76 = arith.constant 0 : index
    %c0_77 = arith.constant 0 : index
    %c0_78 = arith.constant 0 : index
    %74 = vector.load %arg8[%c0_75, %c0_76, %c0_77, %c0_78] : memref<1x18x18x8xbf16, #tpu.memory_space<vmem>>, vector<1x16x16x8xbf16>
    %75 = vector.shape_cast %74 : vector<1x16x16x8xbf16> to vector<256x8xbf16>
    %76 = vector.extract_strided_slice %72 {offsets = [0, 0, 0], sizes = [1, 8, 4], strides = [1, 1, 1]} : vector<9x8x4xbf16> to vector<1x8x4xbf16>
    %77 = vector.shape_cast %76 : vector<1x8x4xbf16> to vector<8x4xbf16>
    %cst_79 = arith.constant dense<0.000000e+00> : vector<256x4xf32>
    %78 = tpu.matmul %75, %77, %cst_79 {dimension_numbers = #tpu.dot_dimension_numbers<[1], [0], [0], [1], [0, 0, 1, 1], [], []>} : vector<256x8xbf16>, vector<8x4xbf16>, vector<256x4xf32> -> vector<256x4xf32>
    %79 = arith.addf %73, %78 : vector<256x4xf32>
    %c0_80 = arith.constant 0 : index
    %c0_81 = arith.constant 0 : index
    %c1_82 = arith.constant 1 : index
    %c0_83 = arith.constant 0 : index
    %80 = vector.load %arg8[%c0_80, %c0_81, %c1_82, %c0_83] : memref<1x18x18x8xbf16, #tpu.memory_space<vmem>>, vector<1x16x16x8xbf16>
    %81 = vector.shape_cast %80 : vector<1x16x16x8xbf16> to vector<256x8xbf16>
    %82 = vector.extract_strided_slice %72 {offsets = [1, 0, 0], sizes = [1, 8, 4], strides = [1, 1, 1]} : vector<9x8x4xbf16> to vector<1x8x4xbf16>
    %83 = vector.shape_cast %82 : vector<1x8x4xbf16> to vector<8x4xbf16>
    %cst_84 = arith.constant dense<0.000000e+00> : vector<256x4xf32>
    %84 = tpu.matmul %81, %83, %cst_84 {dimension_numbers = #tpu.dot_dimension_numbers<[1], [0], [0], [1], [0, 0, 1, 1], [], []>} : vector<256x8xbf16>, vector<8x4xbf16>, vector<256x4xf32> -> vector<256x4xf32>
    %85 = arith.addf %79, %84 : vector<256x4xf32>
    %c0_85 = arith.constant 0 : index
    %c0_86 = arith.constant 0 : index
    %c2_87 = arith.constant 2 : index
    %c0_88 = arith.constant 0 : index
    %86 = vector.load %arg8[%c0_85, %c0_86, %c2_87, %c0_88] : memref<1x18x18x8xbf16, #tpu.memory_space<vmem>>, vector<1x16x16x8xbf16>
    %87 = vector.shape_cast %86 : vector<1x16x16x8xbf16> to vector<256x8xbf16>
    %88 = vector.extract_strided_slice %72 {offsets = [2, 0, 0], sizes = [1, 8, 4], strides = [1, 1, 1]} : vector<9x8x4xbf16> to vector<1x8x4xbf16>
    %89 = vector.shape_cast %88 : vector<1x8x4xbf16> to vector<8x4xbf16>
    %cst_89 = arith.constant dense<0.000000e+00> : vector<256x4xf32>
    %90 = tpu.matmul %87, %89, %cst_89 {dimension_numbers = #tpu.dot_dimension_numbers<[1], [0], [0], [1], [0, 0, 1, 1], [], []>} : vector<256x8xbf16>, vector<8x4xbf16>, vector<256x4xf32> -> vector<256x4xf32>
    %91 = arith.addf %85, %90 : vector<256x4xf32>
    %c0_90 = arith.constant 0 : index
    %c1_91 = arith.constant 1 : index
    %c0_92 = arith.constant 0 : index
    %c0_93 = arith.constant 0 : index
    %92 = vector.load %arg8[%c0_90, %c1_91, %c0_92, %c0_93] : memref<1x18x18x8xbf16, #tpu.memory_space<vmem>>, vector<1x16x16x8xbf16>
    %93 = vector.shape_cast %92 : vector<1x16x16x8xbf16> to vector<256x8xbf16>
    %94 = vector.extract_strided_slice %72 {offsets = [3, 0, 0], sizes = [1, 8, 4], strides = [1, 1, 1]} : vector<9x8x4xbf16> to vector<1x8x4xbf16>
    %95 = vector.shape_cast %94 : vector<1x8x4xbf16> to vector<8x4xbf16>
    %cst_94 = arith.constant dense<0.000000e+00> : vector<256x4xf32>
    %96 = tpu.matmul %93, %95, %cst_94 {dimension_numbers = #tpu.dot_dimension_numbers<[1], [0], [0], [1], [0, 0, 1, 1], [], []>} : vector<256x8xbf16>, vector<8x4xbf16>, vector<256x4xf32> -> vector<256x4xf32>
    %97 = arith.addf %91, %96 : vector<256x4xf32>
    %c0_95 = arith.constant 0 : index
    %c1_96 = arith.constant 1 : index
    %c1_97 = arith.constant 1 : index
    %c0_98 = arith.constant 0 : index
    %98 = vector.load %arg8[%c0_95, %c1_96, %c1_97, %c0_98] : memref<1x18x18x8xbf16, #tpu.memory_space<vmem>>, vector<1x16x16x8xbf16>
    %99 = vector.shape_cast %98 : vector<1x16x16x8xbf16> to vector<256x8xbf16>
    %100 = vector.extract_strided_slice %72 {offsets = [4, 0, 0], sizes = [1, 8, 4], strides = [1, 1, 1]} : vector<9x8x4xbf16> to vector<1x8x4xbf16>
    %101 = vector.shape_cast %100 : vector<1x8x4xbf16> to vector<8x4xbf16>
    %cst_99 = arith.constant dense<0.000000e+00> : vector<256x4xf32>
    %102 = tpu.matmul %99, %101, %cst_99 {dimension_numbers = #tpu.dot_dimension_numbers<[1], [0], [0], [1], [0, 0, 1, 1], [], []>} : vector<256x8xbf16>, vector<8x4xbf16>, vector<256x4xf32> -> vector<256x4xf32>
    %103 = arith.addf %97, %102 : vector<256x4xf32>
    %c0_100 = arith.constant 0 : index
    %c1_101 = arith.constant 1 : index
    %c2_102 = arith.constant 2 : index
    %c0_103 = arith.constant 0 : index
    %104 = vector.load %arg8[%c0_100, %c1_101, %c2_102, %c0_103] : memref<1x18x18x8xbf16, #tpu.memory_space<vmem>>, vector<1x16x16x8xbf16>
    %105 = vector.shape_cast %104 : vector<1x16x16x8xbf16> to vector<256x8xbf16>
    %106 = vector.extract_strided_slice %72 {offsets = [5, 0, 0], sizes = [1, 8, 4], strides = [1, 1, 1]} : vector<9x8x4xbf16> to vector<1x8x4xbf16>
    %107 = vector.shape_cast %106 : vector<1x8x4xbf16> to vector<8x4xbf16>
    %cst_104 = arith.constant dense<0.000000e+00> : vector<256x4xf32>
    %108 = tpu.matmul %105, %107, %cst_104 {dimension_numbers = #tpu.dot_dimension_numbers<[1], [0], [0], [1], [0, 0, 1, 1], [], []>} : vector<256x8xbf16>, vector<8x4xbf16>, vector<256x4xf32> -> vector<256x4xf32>
    %109 = arith.addf %103, %108 : vector<256x4xf32>
    %c0_105 = arith.constant 0 : index
    %c2_106 = arith.constant 2 : index
    %c0_107 = arith.constant 0 : index
    %c0_108 = arith.constant 0 : index
    %110 = vector.load %arg8[%c0_105, %c2_106, %c0_107, %c0_108] : memref<1x18x18x8xbf16, #tpu.memory_space<vmem>>, vector<1x16x16x8xbf16>
    %111 = vector.shape_cast %110 : vector<1x16x16x8xbf16> to vector<256x8xbf16>
    %112 = vector.extract_strided_slice %72 {offsets = [6, 0, 0], sizes = [1, 8, 4], strides = [1, 1, 1]} : vector<9x8x4xbf16> to vector<1x8x4xbf16>
    %113 = vector.shape_cast %112 : vector<1x8x4xbf16> to vector<8x4xbf16>
    %cst_109 = arith.constant dense<0.000000e+00> : vector<256x4xf32>
    %114 = tpu.matmul %111, %113, %cst_109 {dimension_numbers = #tpu.dot_dimension_numbers<[1], [0], [0], [1], [0, 0, 1, 1], [], []>} : vector<256x8xbf16>, vector<8x4xbf16>, vector<256x4xf32> -> vector<256x4xf32>
    %115 = arith.addf %109, %114 : vector<256x4xf32>
    %c0_110 = arith.constant 0 : index
    %c2_111 = arith.constant 2 : index
    %c1_112 = arith.constant 1 : index
    %c0_113 = arith.constant 0 : index
    %116 = vector.load %arg8[%c0_110, %c2_111, %c1_112, %c0_113] : memref<1x18x18x8xbf16, #tpu.memory_space<vmem>>, vector<1x16x16x8xbf16>
    %117 = vector.shape_cast %116 : vector<1x16x16x8xbf16> to vector<256x8xbf16>
    %118 = vector.extract_strided_slice %72 {offsets = [7, 0, 0], sizes = [1, 8, 4], strides = [1, 1, 1]} : vector<9x8x4xbf16> to vector<1x8x4xbf16>
    %119 = vector.shape_cast %118 : vector<1x8x4xbf16> to vector<8x4xbf16>
    %cst_114 = arith.constant dense<0.000000e+00> : vector<256x4xf32>
    %120 = tpu.matmul %117, %119, %cst_114 {dimension_numbers = #tpu.dot_dimension_numbers<[1], [0], [0], [1], [0, 0, 1, 1], [], []>} : vector<256x8xbf16>, vector<8x4xbf16>, vector<256x4xf32> -> vector<256x4xf32>
    %121 = arith.addf %115, %120 : vector<256x4xf32>
    %c0_115 = arith.constant 0 : index
    %c2_116 = arith.constant 2 : index
    %c2_117 = arith.constant 2 : index
    %c0_118 = arith.constant 0 : index
    %122 = vector.load %arg8[%c0_115, %c2_116, %c2_117, %c0_118] : memref<1x18x18x8xbf16, #tpu.memory_space<vmem>>, vector<1x16x16x8xbf16>
    %123 = vector.shape_cast %122 : vector<1x16x16x8xbf16> to vector<256x8xbf16>
    %124 = vector.extract_strided_slice %72 {offsets = [8, 0, 0], sizes = [1, 8, 4], strides = [1, 1, 1]} : vector<9x8x4xbf16> to vector<1x8x4xbf16>
    %125 = vector.shape_cast %124 : vector<1x8x4xbf16> to vector<8x4xbf16>
    %cst_119 = arith.constant dense<0.000000e+00> : vector<256x4xf32>
    %126 = tpu.matmul %123, %125, %cst_119 {dimension_numbers = #tpu.dot_dimension_numbers<[1], [0], [0], [1], [0, 0, 1, 1], [], []>} : vector<256x8xbf16>, vector<8x4xbf16>, vector<256x4xf32> -> vector<256x4xf32>
    %127 = arith.addf %121, %126 : vector<256x4xf32>
    %c0_120 = arith.constant 0 : index
    %c0_121 = arith.constant 0 : index
    %128 = vector.load %arg5[%c0_120, %c0_121] : memref<1x4xf32, #tpu.memory_space<vmem>>, vector<1x4xf32>
    %129 = vector.broadcast %128 : vector<1x4xf32> to vector<256x4xf32>
    %130 = arith.addf %127, %129 : vector<256x4xf32>
    %cst_122 = arith.constant 0.000000e+00 : f32
    %cst_123 = arith.constant 6.000000e+00 : f32
    %131 = vector.broadcast %cst_122 : f32 to vector<256x4xf32>
    %132 = arith.maximumf %131, %130 : vector<256x4xf32>
    %133 = vector.broadcast %cst_123 : f32 to vector<256x4xf32>
    %134 = arith.minimumf %133, %132 : vector<256x4xf32>
    %135 = vector.shape_cast %134 : vector<256x4xf32> to vector<1x16x16x4xf32>
    %136 = arith.truncf %135 : vector<1x16x16x4xf32> to vector<1x16x16x4xbf16>
    %c0_124 = arith.constant 0 : index
    %c0_125 = arith.constant 0 : index
    %c0_126 = arith.constant 0 : index
    %c0_127 = arith.constant 0 : index
    %137 = vector.load %arg6[%c0_124, %c0_125, %c0_126, %c0_127] : memref<1x16x16x4xbf16, #tpu.memory_space<vmem>>, vector<1x16x16x4xbf16>
    tpu.vector_store %arg6[%c0_124, %c0_125, %c0_126, %c0_127], %136 {strides = array<i32>} : memref<1x16x16x4xbf16, #tpu.memory_space<vmem>>, vector<1x16x16x4xbf16>,
    return
  }
  func.func @transform_0(%arg0: i32) -> (i32, i32, i32, i32) {
    %c0_i32 = arith.constant 0 : i32
    %c0_i32_0 = arith.constant 0 : i32
    %c0_i32_1 = arith.constant 0 : i32
    %c0_i32_2 = arith.constant 0 : i32
    return %arg0, %c0_i32, %c0_i32_0, %c0_i32_1 : i32, i32, i32, i32
  }
  func.func @transform_1(%arg0: i32) -> (i32, i32, i32) {
    %c0_i32 = arith.constant 0 : i32
    %c0_i32_0 = arith.constant 0 : i32
    %c0_i32_1 = arith.constant 0 : i32
    %c0_i32_2 = arith.constant 0 : i32
    return %c0_i32, %c0_i32_0, %c0_i32_1 : i32, i32, i32
  }
  func.func @transform_2(%arg0: i32) -> (i32, i32) {
    %c0_i32 = arith.constant 0 : i32
    %c0_i32_0 = arith.constant 0 : i32
    %c0_i32_1 = arith.constant 0 : i32
    return %c0_i32, %c0_i32_0 : i32, i32
  }
  func.func @transform_3(%arg0: i32) -> (i32, i32, i32) {
    %c0_i32 = arith.constant 0 : i32
    %c0_i32_0 = arith.constant 0 : i32
    %c0_i32_1 = arith.constant 0 : i32
    %c0_i32_2 = arith.constant 0 : i32
    return %c0_i32, %c0_i32_0, %c0_i32_1 : i32, i32, i32
  }
  func.func @transform_4(%arg0: i32) -> (i32, i32) {
    %c0_i32 = arith.constant 0 : i32
    %c0_i32_0 = arith.constant 0 : i32
    %c0_i32_1 = arith.constant 0 : i32
    return %c0_i32, %c0_i32_0 : i32, i32
  }
  func.func @transform_5(%arg0: i32) -> (i32, i32, i32, i32) {
    %c0_i32 = arith.constant 0 : i32
    %c0_i32_0 = arith.constant 0 : i32
    %c0_i32_1 = arith.constant 0 : i32
    %c0_i32_2 = arith.constant 0 : i32
    return %arg0, %c0_i32, %c0_i32_0, %c0_i32_1 : i32, i32, i32, i32
  }
}

</mosaic_0001>

<llo_original>
// kernel: bottleneck.1
$region0: #{bottleneck.1}
  #allocation0 [shape = 'u32[]', space=smem, size = 0x4, offset = 0x4, fixed_abs, tag = 'smem constant byte address 0x4 - core index']
  #allocation1 [shape = 'u32[144,128]{1,0:T(1,128)}', space=vmem, size = 0x12000, scoped, tag = 'internal scratch']
  #allocation2 [shape = 'bf16[1,18,18,4]{3,2,1,0:T(8,128)(2,1)}', space=vmem, size = 0x1b000, scoped, tag = 'scratch operand']
  #allocation3 [shape = 'bf16[1,18,18,8]{3,2,1,0:T(8,128)(2,1)}', space=vmem, size = 0x1b000, scoped, tag = 'scratch operand']
  %s0 = inlined_call_operand.vmem [shape: bf16[2,16,16,4], index: 0, kind: input, shape index: {}]
  %s1 = inlined_call_operand.vmem [shape: bf16[9,4,8], index: 1, kind: input, shape index: {}]
  %s2 = inlined_call_operand.vmem [shape: f32[1,8], index: 2, kind: input, shape index: {}]
  %s3 = inlined_call_operand.vmem [shape: bf16[9,8,4], index: 3, kind: input, shape index: {}]
  %s4 = inlined_call_operand.vmem [shape: f32[1,4], index: 4, kind: input, shape index: {}]
  %s5 = inlined_call_operand.vmem [shape: bf16[2,16,16,4], index: 5, kind: output, shape index: {}]
  %s6 = sld [smem:[#allocation0]]
  $region53: #{bottleneck.1} parent=0
    _
  %s8 = ssub.s32 1, %s6
  %s9 = scalar_select 0, %s8, %s6
  loop: start=0, step=1, limit=4
  $region2: #{bottleneck.1} parent=0 // loop_pre_header
    _
  $region3: #{bottleneck.1} parent=0 // loop_header
    %s11 = sphi 0, %s15
    %p12 = scmp.ge.s32.totalorder %s11, 4
    %s21 = sphi 0, %s23
    %s24 = sphi 0, %s21
    %s25 = sphi 0, %s24
    %s41 = sphi 0, %s25
    %s45 = sphi 0, %s45
    %s47 = sphi 0, %s45
    %s48 = sphi 0, %s47
    %s62 = sphi 0, %s48
    %s66 = sphi 0, %s66
    %s68 = sphi 0, %s66
    %s69 = sphi 0, %s68
    %s83 = sphi 0, %s69
    %s87 = sphi 0, %s87
    %s89 = sphi 0, %s87
    %s90 = sphi 0, %s89
    %s104 = sphi 0, %s90
    %s108 = sphi 0, %s108
    %s110 = sphi 0, %s108
    %s111 = sphi 0, %s110
    %s125 = sphi 0, %s111
    %s131 = sphi 0, %s133
    %s134 = sphi 0, %s131
    %s135 = sphi 0, %s134
    %s151 = sphi 0, %s135
  $region4: #{bottleneck.1} parent=0 // loop_header_branch
    %14 = sbr.rel (%p12) target = $region8
  $region5: #{bottleneck.1} parent=0 // loop_body
    %s16 = ssub.s32 %s11, 1
    %s17 = ssub.s32 %s11, 2
    %s18 = sadd.s32 %s11, 1
    %s19 = ssub.s32 %s11, %s18
    %p20 = scmp.eq.s32.totalorder %s19, 0
    %s22 = sadd.s32 %s21, 1
    %s23 = scalar_select %p20, %s21, %s22
    %p26 = pneg %p20
    %p27 = scmp.eq.s32.totalorder %s11, 1
    %p28 = por %p26, %p27
    %p29 = scmp.ne.s32.totalorder %s21, %s24
    %p30 = scmp.eq.s32.totalorder %s11, 0
    %p31 = por %p29, %p30
    %p32 = scmp.ne.s32.totalorder %s21, %s24
    %p33 = scmp.eq.s32.totalorder %s16, 1
    %p34 = por %p32, %p33
    %p35 = scmp.ne.s32.totalorder %s24, %s25
    %p36 = scmp.eq.s32.totalorder %s16, 0
    %p37 = por %p35, %p36
    %p38 = scmp.ne.s32.totalorder %s24, %s25
    %p39 = scmp.eq.s32.totalorder %s17, 1
    %p40 = por %p38, %p39
    %p42 = scmp.ne.s32.totalorder %s25, %s41
    %p43 = scmp.eq.s32.totalorder %s17, 0
    %p44 = por %p42, %p43
    %s46 = sadd.s32 %s45, 1
    %p49 = scmp.eq.s32.totalorder %s11, 1
    %p50 = scmp.ne.s32.totalorder %s45, %s47
    %p51 = scmp.eq.s32.totalorder %s11, 0
    %p52 = por %p50, %p51
    %p53 = scmp.ne.s32.totalorder %s45, %s47
    %p54 = scmp.eq.s32.totalorder %s16, 1
    %p55 = por %p53, %p54
    %p56 = scmp.ne.s32.totalorder %s47, %s48
    %p57 = scmp.eq.s32.totalorder %s16, 0
    %p58 = por %p56, %p57
    %p59 = scmp.ne.s32.totalorder %s47, %s48
    %p60 = scmp.eq.s32.totalorder %s17, 1
    %p61 = por %p59, %p60
    %p63 = scmp.ne.s32.totalorder %s48, %s62
    %p64 = scmp.eq.s32.totalorder %s17, 0
    %p65 = por %p63, %p64
    %s67 = sadd.s32 %s66, 1
    %p70 = scmp.eq.s32.totalorder %s11, 1
    %p71 = scmp.ne.s32.totalorder %s66, %s68
    %p72 = scmp.eq.s32.totalorder %s11, 0
    %p73 = por %p71, %p72
    %p74 = scmp.ne.s32.totalorder %s66, %s68
    %p75 = scmp.eq.s32.totalorder %s16, 1
    %p76 = por %p74, %p75
    %p77 = scmp.ne.s32.totalorder %s68, %s69
    %p78 = scmp.eq.s32.totalorder %s16, 0
    %p79 = por %p77, %p78
    %p80 = scmp.ne.s32.totalorder %s68, %s69
    %p81 = scmp.eq.s32.totalorder %s17, 1
    %p82 = por %p80, %p81
    %p84 = scmp.ne.s32.totalorder %s69, %s83
    %p85 = scmp.eq.s32.totalorder %s17, 0
    %p86 = por %p84, %p85
    %s88 = sadd.s32 %s87, 1
    %p91 = scmp.eq.s32.totalorder %s11, 1
    %p92 = scmp.ne.s32.totalorder %s87, %s89
    %p93 = scmp.eq.s32.totalorder %s11, 0
    %p94 = por %p92, %p93
    %p95 = scmp.ne.s32.totalorder %s87, %s89
    %p96 = scmp.eq.s32.totalorder %s16, 1
    %p97 = por %p95, %p96
    %p98 = scmp.ne.s32.totalorder %s89, %s90
    %p99 = scmp.eq.s32.totalorder %s16, 0
    %p100 = por %p98, %p99
    %p101 = scmp.ne.s32.totalorder %s89, %s90
    %p102 = scmp.eq.s32.totalorder %s17, 1
    %p103 = por %p101, %p102
    %p105 = scmp.ne.s32.totalorder %s90, %s104
    %p106 = scmp.eq.s32.totalorder %s17, 0
    %p107 = por %p105, %p106
    %s109 = sadd.s32 %s108, 1
    %p112 = scmp.eq.s32.totalorder %s11, 1
    %p113 = scmp.ne.s32.totalorder %s108, %s110
    %p114 = scmp.eq.s32.totalorder %s11, 0
    %p115 = por %p113, %p114
    %p116 = scmp.ne.s32.totalorder %s108, %s110
    %p117 = scmp.eq.s32.totalorder %s16, 1
    %p118 = por %p116, %p117
    %p119 = scmp.ne.s32.totalorder %s110, %s111
    %p120 = scmp.eq.s32.totalorder %s16, 0
    %p121 = por %p119, %p120
    %p122 = scmp.ne.s32.totalorder %s110, %s111
    %p123 = scmp.eq.s32.totalorder %s17, 1
    %p124 = por %p122, %p123
    %p126 = scmp.ne.s32.totalorder %s111, %s125
    %p127 = scmp.eq.s32.totalorder %s17, 0
    %p128 = por %p126, %p127
    %s129 = ssub.s32 %s11, %s18
    %p130 = scmp.eq.s32.totalorder %s129, 0
    %s132 = sadd.s32 %s131, 1
    %s133 = scalar_select %p130, %s131, %s132
    %p136 = pneg %p130
    %p137 = scmp.eq.s32.totalorder %s11, 1
    %p138 = por %p136, %p137
    %p139 = scmp.ne.s32.totalorder %s131, %s134
    %p140 = scmp.eq.s32.totalorder %s11, 0
    %p141 = por %p139, %p140
    %p142 = scmp.ne.s32.totalorder %s131, %s134
    %p143 = scmp.eq.s32.totalorder %s16, 1
    %p144 = por %p142, %p143
    %p145 = scmp.ne.s32.totalorder %s134, %s135
    %p146 = scmp.eq.s32.totalorder %s16, 0
    %p147 = por %p145, %p146
    %p148 = scmp.ne.s32.totalorder %s134, %s135
    %p149 = scmp.eq.s32.totalorder %s17, 1
    %p150 = por %p148, %p149
    %p152 = scmp.ne.s32.totalorder %s135, %s151
    %p153 = scmp.eq.s32.totalorder %s17, 0
    %p154 = por %p152, %p153
    %p155 = scmp.le.s32.totalorder 1, %s11
    %p156 = scmp.lt.s32.totalorder %s11, 3
    %p157 = pnand %p155, %p156
    %p158 = pneg %p157
    // Predicated region
    $region9: #{bottleneck.1} parent=5 // pred_check
      _
    $region10: #{bottleneck.1} parent=5 // pred_check_branch
      %160 = sbr.rel (%p157) target = $region12
    $region11: #{bottleneck.1} parent=5 // pred_region
      %s161 = ssub.s32 %s11, 1
      // Predicated region
      $region13: #{bottleneck.1} parent=11 // pred_check
        %p162 = pneg %p58
      $region14: #{bottleneck.1} parent=11 // pred_check_branch
        %164 = sbr.rel (%p162) target = $region16
      $region15: #{bottleneck.1} parent=11 // pred_region
        _
      $region16: #{bottleneck.1} parent=11 // pred_fallthru
        _
      // Predicated region
      $region17: #{bottleneck.1} parent=11 // pred_check
        %p165 = pneg %p79
      $region18: #{bottleneck.1} parent=11 // pred_check_branch
        %167 = sbr.rel (%p165) target = $region20
      $region19: #{bottleneck.1} parent=11 // pred_region
        _
      $region20: #{bottleneck.1} parent=11 // pred_fallthru
        _
      // Predicated region
      $region21: #{bottleneck.1} parent=11 // pred_check
        %p168 = pneg %p100
      $region22: #{bottleneck.1} parent=11 // pred_check_branch
        %170 = sbr.rel (%p168) target = $region24
      $region23: #{bottleneck.1} parent=11 // pred_region
        _
      $region24: #{bottleneck.1} parent=11 // pred_fallthru
        _
      // Predicated region
      $region25: #{bottleneck.1} parent=11 // pred_check
        %p171 = pneg %p121
      $region26: #{bottleneck.1} parent=11 // pred_check_branch
        %173 = sbr.rel (%p171) target = $region28
      $region27: #{bottleneck.1} parent=11 // pred_region
        _
      $region28: #{bottleneck.1} parent=11 // pred_fallthru
        _
    $region12: #{bottleneck.1} parent=5 // pred_fallthru
      _
    %p174 = scmp.lt.s32.totalorder %s11, 2
    // Predicated region
    $region29: #{bottleneck.1} parent=5 // pred_check
      %p175 = pneg %p174
    $region30: #{bottleneck.1} parent=5 // pred_check_branch
      %177 = sbr.rel (%p175) target = $region32
    $region31: #{bottleneck.1} parent=5 // pred_region
      // Predicated region
      $region33: #{bottleneck.1} parent=31 // pred_check
        %p178 = pneg %p31
      $region34: #{bottleneck.1} parent=31 // pred_check_branch
        %180 = sbr.rel (%p178) target = $region36
      $region35: #{bottleneck.1} parent=31 // pred_region
        %p181 = scmp.lt.s32.totalorder %s11, 1
        %s182 = scalar_select %p181, %s11, 1
        %s183 = smul.addr %s182, 32
        %s184 = smul.addr %s183, 4
        %s185 = scalar_lea.vmem %s0, %s184
      $region36: #{bottleneck.1} parent=31 // pred_fallthru
        _
    $region32: #{bottleneck.1} parent=5 // pred_fallthru
      _
    %p186 = scmp.le.s32.totalorder 1, %s11
    %p187 = scmp.lt.s32.totalorder %s11, 3
    %p188 = pnand %p186, %p187
    %p189 = pneg %p188
    // Predicated region
    $region37: #{bottleneck.1} parent=5 // pred_check
      _
    $region38: #{bottleneck.1} parent=5 // pred_check_branch
      %191 = sbr.rel (%p188) target = $region40
    $region39: #{bottleneck.1} parent=5 // pred_region
      %s192 = ssub.s32 %s11, 1
      %p193 = scmp.lt.s32.totalorder %s16, 1
      %s194 = scalar_select %p193, %s16, 1
      %s195 = smul.addr %s194, 32
      %s196 = smul.addr %s195, 4
      %s197 = scalar_lea.vmem %s0, %s196
      %p198 = pneg %p37
      %p199 = pneg %p34
      %p200 = pneg %p58
      %p201 = pneg %p55
      %p202 = pneg %p79
      %p203 = pneg %p76
      %p204 = pneg %p100
      %p205 = pneg %p97
      %p206 = pneg %p121
      %p207 = pneg %p118
      %p208 = pneg %p147
      %p209 = pneg %p144
      %p210 = scmp.lt.s32.totalorder %s16, 1
      %s211 = scalar_select %p210, %s16, 1
      %s212 = smul.addr %s211, 32
      %s213 = smul.addr %s212, 4
      %s214 = scalar_lea.vmem %s5, %s213
      %p215 = scmp.lt.s32.totalorder %s16, 1
      %s216 = scalar_select %p215, %s16, 1
      %s217 = smul.addr %s216, 32
      %s218 = smul.addr %s217, 4
      %s219 = scalar_lea.vmem %s0, %s218
      %p220 = scmp.lt.s32.totalorder %s16, 1
      %s221 = scalar_select %p220, %s16, 1
      %s222 = smul.addr %s221, 32
      %s223 = smul.addr %s222, 4
      %s224 = scalar_lea.vmem %s5, %s223
      %v226 = vld [vmem:[%s219] sm:$0xf]
      %v227 = vld [vmem:[%s219 + $0x4] sm:$0xf]
      %v228 = vld [vmem:[%s219 + $0x8] sm:$0xf]
      %v229 = vld [vmem:[%s219 + $0xc] sm:$0xf]
      %v230 = vld [vmem:[%s219 + $0x10] sm:$0xf]
      %v231 = vld [vmem:[%s219 + $0x14] sm:$0xf]
      %v232 = vld [vmem:[%s219 + $0x18] sm:$0xf]
      %v233 = vld [vmem:[%s219 + $0x1c] sm:$0xf]
      %v234 = vld [vmem:[%s219 + $0x20] sm:$0xf]
      %v235 = vld [vmem:[%s219 + $0x24] sm:$0xf]
      %v236 = vld [vmem:[%s219 + $0x28] sm:$0xf]
      %v237 = vld [vmem:[%s219 + $0x2c] sm:$0xf]
      %v238 = vld [vmem:[%s219 + $0x30] sm:$0xf]
      %v239 = vld [vmem:[%s219 + $0x34] sm:$0xf]
      %v240 = vld [vmem:[%s219 + $0x38] sm:$0xf]
      %v241 = vld [vmem:[%s219 + $0x3c] sm:$0xf]
      %v242 = vld [vmem:[%s219 + $0x40] sm:$0xf]
      %v243 = vld [vmem:[%s219 + $0x44] sm:$0xf]
      %v244 = vld [vmem:[%s219 + $0x48] sm:$0xf]
      %v245 = vld [vmem:[%s219 + $0x4c] sm:$0xf]
      %v246 = vld [vmem:[%s219 + $0x50] sm:$0xf]
      %v247 = vld [vmem:[%s219 + $0x54] sm:$0xf]
      %v248 = vld [vmem:[%s219 + $0x58] sm:$0xf]
      %v249 = vld [vmem:[%s219 + $0x5c] sm:$0xf]
      %v250 = vld [vmem:[%s219 + $0x60] sm:$0xf]
      %v251 = vld [vmem:[%s219 + $0x64] sm:$0xf]
      %v252 = vld [vmem:[%s219 + $0x68] sm:$0xf]
      %v253 = vld [vmem:[%s219 + $0x6c] sm:$0xf]
      %v254 = vld [vmem:[%s219 + $0x70] sm:$0xf]
      %v255 = vld [vmem:[%s219 + $0x74] sm:$0xf]
      %v256 = vld [vmem:[%s219 + $0x78] sm:$0xf]
      %v257 = vld [vmem:[%s219 + $0x7c] sm:$0xf]
      %vm258 = vcmask 27648
      %259 = vst.msk [vmem:[#allocation2] sm:$0xf] %vm258, 0
      %260 = vst.msk [vmem:[#allocation2 + $0x4] sm:$0xf] %vm258, 0
      %vm261 = vcmask 24576
      %262 = vst.msk [vmem:[#allocation2 + $0x8] sm:$0x1] %vm261, 0
      %263 = vst.msk [vmem:[#allocation2 + $0xc] sm:$0xf] %vm258, 0
      %264 = vst.msk [vmem:[#allocation2 + $0x10] sm:$0xf] %vm258, 0
      %265 = vst.msk [vmem:[#allocation2 + $0x14] sm:$0x1] %vm261, 0
      %266 = vst.msk [vmem:[#allocation2 + $0x18] sm:$0xf] %vm258, 0
      %267 = vst.msk [vmem:[#allocation2 + $0x1c] sm:$0xf] %vm258, 0
      %268 = vst.msk [vmem:[#allocation2 + $0x20] sm:$0x1] %vm261, 0
      %269 = vst.msk [vmem:[#allocation2 + $0x24] sm:$0xf] %vm258, 0
      %270 = vst.msk [vmem:[#allocation2 + $0x28] sm:$0xf] %vm258, 0
      %271 = vst.msk [vmem:[#allocation2 + $0x2c] sm:$0x1] %vm261, 0
      %272 = vst.msk [vmem:[#allocation2 + $0x30] sm:$0xf] %vm258, 0
      %273 = vst.msk [vmem:[#allocation2 + $0x34] sm:$0xf] %vm258, 0
      %274 = vst.msk [vmem:[#allocation2 + $0x38] sm:$0x1] %vm261, 0
      %275 = vst.msk [vmem:[#allocation2 + $0x3c] sm:$0xf] %vm258, 0
      %276 = vst.msk [vmem:[#allocation2 + $0x40] sm:$0xf] %vm258, 0
      %277 = vst.msk [vmem:[#allocation2 + $0x44] sm:$0x1] %vm261, 0
      %278 = vst.msk [vmem:[#allocation2 + $0x48] sm:$0xf] %vm258, 0
      %279 = vst.msk [vmem:[#allocation2 + $0x4c] sm:$0xf] %vm258, 0
      %280 = vst.msk [vmem:[#allocation2 + $0x50] sm:$0x1] %vm261, 0
      %281 = vst.msk [vmem:[#allocation2 + $0x54] sm:$0xf] %vm258, 0
      %282 = vst.msk [vmem:[#allocation2 + $0x58] sm:$0xf] %vm258, 0
      %283 = vst.msk [vmem:[#allocation2 + $0x5c] sm:$0x1] %vm261, 0
      %284 = vst.msk [vmem:[#allocation2 + $0x60] sm:$0xf] %vm258, 0
      %285 = vst.msk [vmem:[#allocation2 + $0x64] sm:$0xf] %vm258, 0
      %286 = vst.msk [vmem:[#allocation2 + $0x68] sm:$0x1] %vm261, 0
      %287 = vst.msk [vmem:[#allocation2 + $0x6c] sm:$0xf] %vm258, 0
      %288 = vst.msk [vmem:[#allocation2 + $0x70] sm:$0xf] %vm258, 0
      %289 = vst.msk [vmem:[#allocation2 + $0x74] sm:$0x1] %vm261, 0
      %290 = vst.msk [vmem:[#allocation2 + $0x78] sm:$0xf] %vm258, 0
      %291 = vst.msk [vmem:[#allocation2 + $0x7c] sm:$0xf] %vm258, 0
      %292 = vst.msk [vmem:[#allocation2 + $0x80] sm:$0x1] %vm261, 0
      %293 = vst.msk [vmem:[#allocation2 + $0x84] sm:$0xf] %vm258, 0
      %294 = vst.msk [vmem:[#allocation2 + $0x88] sm:$0xf] %vm258, 0
      %295 = vst.msk [vmem:[#allocation2 + $0x8c] sm:$0x1] %vm261, 0
      %296 = vst.msk [vmem:[#allocation2 + $0x90] sm:$0xf] %vm258, 0
      %297 = vst.msk [vmem:[#allocation2 + $0x94] sm:$0xf] %vm258, 0
      %298 = vst.msk [vmem:[#allocation2 + $0x98] sm:$0x1] %vm261, 0
      %299 = vst.msk [vmem:[#allocation2 + $0x9c] sm:$0xf] %vm258, 0
      %300 = vst.msk [vmem:[#allocation2 + $0xa0] sm:$0xf] %vm258, 0
      %301 = vst.msk [vmem:[#allocation2 + $0xa4] sm:$0x1] %vm261, 0
      %302 = vst.msk [vmem:[#allocation2 + $0xa8] sm:$0xf] %vm258, 0
      %303 = vst.msk [vmem:[#allocation2 + $0xac] sm:$0xf] %vm258, 0
      %304 = vst.msk [vmem:[#allocation2 + $0xb0] sm:$0x1] %vm261, 0
      %305 = vst.msk [vmem:[#allocation2 + $0xb4] sm:$0xf] %vm258, 0
      %306 = vst.msk [vmem:[#allocation2 + $0xb8] sm:$0xf] %vm258, 0
      %307 = vst.msk [vmem:[#allocation2 + $0xbc] sm:$0x1] %vm261, 0
      %308 = vst.msk [vmem:[#allocation2 + $0xc0] sm:$0xf] %vm258, 0
      %309 = vst.msk [vmem:[#allocation2 + $0xc4] sm:$0xf] %vm258, 0
      %310 = vst.msk [vmem:[#allocation2 + $0xc8] sm:$0x1] %vm261, 0
      %311 = vst.msk [vmem:[#allocation2 + $0xcc] sm:$0xf] %vm258, 0
      %312 = vst.msk [vmem:[#allocation2 + $0xd0] sm:$0xf] %vm258, 0
      %313 = vst.msk [vmem:[#allocation2 + $0xd4] sm:$0x1] %vm261, 0
      %vm314 = vsmask.f32 256
      %vm315 = vsmask.f32 4368
      %vm316 = vmor %vm314, %vm315
      %v318 = vshrl.u32 %v226, 16
      %v320 = vrot.slane %v318, 7
      %v321 = vshll.u32 %v226, 16
      %v323 = vor.u32 %v320, %v321
      %v324 = vrot.slane %v320, 4
      %v326 = vshrl.u32 %v227, 16
      %v328 = vrot.slane %v326, 7
      %v329 = vshll.u32 %v227, 16
      %v331 = vor.u32 %v328, %v329
      %v332 = vsel %vm316, %v324, %v331
      %v333 = vrot.slane %v328, 4
      %v335 = vshrl.u32 %v228, 16
      %v337 = vrot.slane %v335, 7
      %v338 = vshll.u32 %v228, 16
      %v340 = vor.u32 %v337, %v338
      %v341 = vrot.slane %v337, 4
      %v343 = vshrl.u32 %v229, 16
      %v345 = vrot.slane %v343, 7
      %v346 = vshll.u32 %v229, 16
      %v348 = vor.u32 %v345, %v346
      %v349 = vsel %vm316, %v341, %v348
      %v350 = vrot.slane %v345, 4
      %v352 = vshrl.u32 %v230, 16
      %v354 = vrot.slane %v352, 7
      %v355 = vshll.u32 %v230, 16
      %v357 = vor.u32 %v354, %v355
      %v358 = vrot.slane %v354, 4
      %v360 = vshrl.u32 %v231, 16
      %v362 = vrot.slane %v360, 7
      %v363 = vshll.u32 %v231, 16
      %v365 = vor.u32 %v362, %v363
      %v366 = vsel %vm316, %v358, %v365
      %v367 = vrot.slane %v362, 4
      %v369 = vshrl.u32 %v232, 16
      %v371 = vrot.slane %v369, 7
      %v372 = vshll.u32 %v232, 16
      %v374 = vor.u32 %v371, %v372
      %v375 = vrot.slane %v371, 4
      %v377 = vshrl.u32 %v233, 16
      %v379 = vrot.slane %v377, 7
      %v380 = vshll.u32 %v233, 16
      %v382 = vor.u32 %v379, %v380
      %v383 = vsel %vm316, %v375, %v382
      %v384 = vrot.slane %v379, 4
      %v386 = vshrl.u32 %v234, 16
      %v388 = vrot.slane %v386, 7
      %v389 = vshll.u32 %v234, 16
      %v391 = vor.u32 %v388, %v389
      %v392 = vrot.slane %v388, 4
      %v394 = vshrl.u32 %v235, 16
      %v396 = vrot.slane %v394, 7
      %v397 = vshll.u32 %v235, 16
      %v399 = vor.u32 %v396, %v397
      %v400 = vsel %vm316, %v392, %v399
      %v401 = vrot.slane %v396, 4
      %v403 = vshrl.u32 %v236, 16
      %v405 = vrot.slane %v403, 7
      %v406 = vshll.u32 %v236, 16
      %v408 = vor.u32 %v405, %v406
      %v409 = vrot.slane %v405, 4
      %v411 = vshrl.u32 %v237, 16
      %v413 = vrot.slane %v411, 7
      %v414 = vshll.u32 %v237, 16
      %v416 = vor.u32 %v413, %v414
      %v417 = vsel %vm316, %v409, %v416
      %v418 = vrot.slane %v413, 4
      %v420 = vshrl.u32 %v238, 16
      %v422 = vrot.slane %v420, 7
      %v423 = vshll.u32 %v238, 16
      %v425 = vor.u32 %v422, %v423
      %v426 = vrot.slane %v422, 4
      %v428 = vshrl.u32 %v239, 16
      %v430 = vrot.slane %v428, 7
      %v431 = vshll.u32 %v239, 16
      %v433 = vor.u32 %v430, %v431
      %v434 = vsel %vm316, %v426, %v433
      %v435 = vrot.slane %v430, 4
      %v437 = vshrl.u32 %v240, 16
      %v439 = vrot.slane %v437, 7
      %v440 = vshll.u32 %v240, 16
      %v442 = vor.u32 %v439, %v440
      %v443 = vrot.slane %v439, 4
      %v445 = vshrl.u32 %v241, 16
      %v447 = vrot.slane %v445, 7
      %v448 = vshll.u32 %v241, 16
      %v450 = vor.u32 %v447, %v448
      %v451 = vsel %vm316, %v443, %v450
      %v452 = vrot.slane %v447, 4
      %v454 = vshrl.u32 %v242, 16
      %v456 = vrot.slane %v454, 7
      %v457 = vshll.u32 %v242, 16
      %v459 = vor.u32 %v456, %v457
      %v460 = vrot.slane %v456, 4
      %v462 = vshrl.u32 %v243, 16
      %v464 = vrot.slane %v462, 7
      %v465 = vshll.u32 %v243, 16
      %v467 = vor.u32 %v464, %v465
      %v468 = vsel %vm316, %v460, %v467
      %v469 = vrot.slane %v464, 4
      %v471 = vshrl.u32 %v244, 16
      %v473 = vrot.slane %v471, 7
      %v474 = vshll.u32 %v244, 16
      %v476 = vor.u32 %v473, %v474
      %v477 = vrot.slane %v473, 4
      %v479 = vshrl.u32 %v245, 16
      %v481 = vrot.slane %v479, 7
      %v482 = vshll.u32 %v245, 16
      %v484 = vor.u32 %v481, %v482
      %v485 = vsel %vm316, %v477, %v484
      %v486 = vrot.slane %v481, 4
      %v488 = vshrl.u32 %v246, 16
      %v490 = vrot.slane %v488, 7
      %v491 = vshll.u32 %v246, 16
      %v493 = vor.u32 %v490, %v491
      %v494 = vrot.slane %v490, 4
      %v496 = vshrl.u32 %v247, 16
      %v498 = vrot.slane %v496, 7
      %v499 = vshll.u32 %v247, 16
      %v501 = vor.u32 %v498, %v499
      %v502 = vsel %vm316, %v494, %v501
      %v503 = vrot.slane %v498, 4
      %v505 = vshrl.u32 %v248, 16
      %v507 = vrot.slane %v505, 7
      %v508 = vshll.u32 %v248, 16
      %v510 = vor.u32 %v507, %v508
      %v511 = vrot.slane %v507, 4
      %v513 = vshrl.u32 %v249, 16
      %v515 = vrot.slane %v513, 7
      %v516 = vshll.u32 %v249, 16
      %v518 = vor.u32 %v515, %v516
      %v519 = vsel %vm316, %v511, %v518
      %v520 = vrot.slane %v515, 4
      %v522 = vshrl.u32 %v250, 16
      %v524 = vrot.slane %v522, 7
      %v525 = vshll.u32 %v250, 16
      %v527 = vor.u32 %v524, %v525
      %v528 = vrot.slane %v524, 4
      %v530 = vshrl.u32 %v251, 16
      %v532 = vrot.slane %v530, 7
      %v533 = vshll.u32 %v251, 16
      %v535 = vor.u32 %v532, %v533
      %v536 = vsel %vm316, %v528, %v535
      %v537 = vrot.slane %v532, 4
      %v539 = vshrl.u32 %v252, 16
      %v541 = vrot.slane %v539, 7
      %v542 = vshll.u32 %v252, 16
      %v544 = vor.u32 %v541, %v542
      %v545 = vrot.slane %v541, 4
      %v547 = vshrl.u32 %v253, 16
      %v549 = vrot.slane %v547, 7
      %v550 = vshll.u32 %v253, 16
      %v552 = vor.u32 %v549, %v550
      %v553 = vsel %vm316, %v545, %v552
      %v554 = vrot.slane %v549, 4
      %v556 = vshrl.u32 %v254, 16
      %v558 = vrot.slane %v556, 7
      %v559 = vshll.u32 %v254, 16
      %v561 = vor.u32 %v558, %v559
      %v562 = vrot.slane %v558, 4
      %v564 = vshrl.u32 %v255, 16
      %v566 = vrot.slane %v564, 7
      %v567 = vshll.u32 %v255, 16
      %v569 = vor.u32 %v566, %v567
      %v570 = vsel %vm316, %v562, %v569
      %v571 = vrot.slane %v566, 4
      %v573 = vshrl.u32 %v256, 16
      %v575 = vrot.slane %v573, 7
      %v576 = vshll.u32 %v256, 16
      %v578 = vor.u32 %v575, %v576
      %v579 = vrot.slane %v575, 4
      %v581 = vshrl.u32 %v257, 16
      %v583 = vrot.slane %v581, 7
      %v584 = vshll.u32 %v257, 16
      %v586 = vor.u32 %v583, %v584
      %v587 = vsel %vm316, %v579, %v586
      %v588 = vrot.slane %v583, 4
      %s637 = scalar_lea.vmem [#allocation2], 12
      %vm638 = vcmask 27648
      %vm639 = vsmask.f32 7938
      %vm640 = vmand %vm638, %vm639
      %v641 = vld [vmem:[%s637] sm:$0xf]
      %v642 = vsel %vm640, %v323, %v641
      %643 = vst [vmem:[%s637] sm:$0xf] %v642
      %644 = vst.msk [vmem:[%s637 + $0x4] sm:$0xf] %vm258, %v332
      %vm645 = vcmask 24576
      %vm646 = vmand %vm645, %vm314
      %v647 = vld [vmem:[%s637 + $0x8] sm:$0x1]
      %v648 = vsel %vm646, %v333, %v647
      %649 = vst [vmem:[%s637 + $0x8] sm:$0x1] %v648
      %v650 = vld [vmem:[%s637 + $0xc] sm:$0xf]
      %v651 = vsel %vm640, %v340, %v650
      %652 = vst [vmem:[%s637 + $0xc] sm:$0xf] %v651
      %653 = vst.msk [vmem:[%s637 + $0x10] sm:$0xf] %vm258, %v349
      %v654 = vld [vmem:[%s637 + $0x14] sm:$0x1]
      %v655 = vsel %vm646, %v350, %v654
      %656 = vst [vmem:[%s637 + $0x14] sm:$0x1] %v655
      %v657 = vld [vmem:[%s637 + $0x18] sm:$0xf]
      %v658 = vsel %vm640, %v357, %v657
      %659 = vst [vmem:[%s637 + $0x18] sm:$0xf] %v658
      %660 = vst.msk [vmem:[%s637 + $0x1c] sm:$0xf] %vm258, %v366
      %v661 = vld [vmem:[%s637 + $0x20] sm:$0x1]
      %v662 = vsel %vm646, %v367, %v661
      %663 = vst [vmem:[%s637 + $0x20] sm:$0x1] %v662
      %v664 = vld [vmem:[%s637 + $0x24] sm:$0xf]
      %v665 = vsel %vm640, %v374, %v664
      %666 = vst [vmem:[%s637 + $0x24] sm:$0xf] %v665
      %667 = vst.msk [vmem:[%s637 + $0x28] sm:$0xf] %vm258, %v383
      %v668 = vld [vmem:[%s637 + $0x2c] sm:$0x1]
      %v669 = vsel %vm646, %v384, %v668
      %670 = vst [vmem:[%s637 + $0x2c] sm:$0x1] %v669
      %v671 = vld [vmem:[%s637 + $0x30] sm:$0xf]
      %v672 = vsel %vm640, %v391, %v671
      %673 = vst [vmem:[%s637 + $0x30] sm:$0xf] %v672
      %674 = vst.msk [vmem:[%s637 + $0x34] sm:$0xf] %vm258, %v400
      %v675 = vld [vmem:[%s637 + $0x38] sm:$0x1]
      %v676 = vsel %vm646, %v401, %v675
      %677 = vst [vmem:[%s637 + $0x38] sm:$0x1] %v676
      %v678 = vld [vmem:[%s637 + $0x3c] sm:$0xf]
      %v679 = vsel %vm640, %v408, %v678
      %680 = vst [vmem:[%s637 + $0x3c] sm:$0xf] %v679
      %681 = vst.msk [vmem:[%s637 + $0x40] sm:$0xf] %vm258, %v417
      %v682 = vld [vmem:[%s637 + $0x44] sm:$0x1]
      %v683 = vsel %vm646, %v418, %v682
      %684 = vst [vmem:[%s637 + $0x44] sm:$0x1] %v683
      %v685 = vld [vmem:[%s637 + $0x48] sm:$0xf]
      %v686 = vsel %vm640, %v425, %v685
      %687 = vst [vmem:[%s637 + $0x48] sm:$0xf] %v686
      %688 = vst.msk [vmem:[%s637 + $0x4c] sm:$0xf] %vm258, %v434
      %v689 = vld [vmem:[%s637 + $0x50] sm:$0x1]
      %v690 = vsel %vm646, %v435, %v689
      %691 = vst [vmem:[%s637 + $0x50] sm:$0x1] %v690
      %v692 = vld [vmem:[%s637 + $0x54] sm:$0xf]
      %v693 = vsel %vm640, %v442, %v692
      %694 = vst [vmem:[%s637 + $0x54] sm:$0xf] %v693
      %695 = vst.msk [vmem:[%s637 + $0x58] sm:$0xf] %vm258, %v451
      %v696 = vld [vmem:[%s637 + $0x5c] sm:$0x1]
      %v697 = vsel %vm646, %v452, %v696
      %698 = vst [vmem:[%s637 + $0x5c] sm:$0x1] %v697
      %v699 = vld [vmem:[%s637 + $0x60] sm:$0xf]
      %v700 = vsel %vm640, %v459, %v699
      %701 = vst [vmem:[%s637 + $0x60] sm:$0xf] %v700
      %702 = vst.msk [vmem:[%s637 + $0x64] sm:$0xf] %vm258, %v468
      %v703 = vld [vmem:[%s637 + $0x68] sm:$0x1]
      %v704 = vsel %vm646, %v469, %v703
      %705 = vst [vmem:[%s637 + $0x68] sm:$0x1] %v704
      %v706 = vld [vmem:[%s637 + $0x6c] sm:$0xf]
      %v707 = vsel %vm640, %v476, %v706
      %708 = vst [vmem:[%s637 + $0x6c] sm:$0xf] %v707
      %709 = vst.msk [vmem:[%s637 + $0x70] sm:$0xf] %vm258, %v485
      %v710 = vld [vmem:[%s637 + $0x74] sm:$0x1]
      %v711 = vsel %vm646, %v486, %v710
      %712 = vst [vmem:[%s637 + $0x74] sm:$0x1] %v711
      %v713 = vld [vmem:[%s637 + $0x78] sm:$0xf]
      %v714 = vsel %vm640, %v493, %v713
      %715 = vst [vmem:[%s637 + $0x78] sm:$0xf] %v714
      %716 = vst.msk [vmem:[%s637 + $0x7c] sm:$0xf] %vm258, %v502
      %v717 = vld [vmem:[%s637 + $0x80] sm:$0x1]
      %v718 = vsel %vm646, %v503, %v717
      %719 = vst [vmem:[%s637 + $0x80] sm:$0x1] %v718
      %v720 = vld [vmem:[%s637 + $0x84] sm:$0xf]
      %v721 = vsel %vm640, %v510, %v720
      %722 = vst [vmem:[%s637 + $0x84] sm:$0xf] %v721
      %723 = vst.msk [vmem:[%s637 + $0x88] sm:$0xf] %vm258, %v519
      %v724 = vld [vmem:[%s637 + $0x8c] sm:$0x1]
      %v725 = vsel %vm646, %v520, %v724
      %726 = vst [vmem:[%s637 + $0x8c] sm:$0x1] %v725
      %v727 = vld [vmem:[%s637 + $0x90] sm:$0xf]
      %v728 = vsel %vm640, %v527, %v727
      %729 = vst [vmem:[%s637 + $0x90] sm:$0xf] %v728
      %730 = vst.msk [vmem:[%s637 + $0x94] sm:$0xf] %vm258, %v536
      %v731 = vld [vmem:[%s637 + $0x98] sm:$0x1]
      %v732 = vsel %vm646, %v537, %v731
      %733 = vst [vmem:[%s637 + $0x98] sm:$0x1] %v732
      %v734 = vld [vmem:[%s637 + $0x9c] sm:$0xf]
      %v735 = vsel %vm640, %v544, %v734
      %736 = vst [vmem:[%s637 + $0x9c] sm:$0xf] %v735
      %737 = vst.msk [vmem:[%s637 + $0xa0] sm:$0xf] %vm258, %v553
      %v738 = vld [vmem:[%s637 + $0xa4] sm:$0x1]
      %v739 = vsel %vm646, %v554, %v738
      %740 = vst [vmem:[%s637 + $0xa4] sm:$0x1] %v739
      %v741 = vld [vmem:[%s637 + $0xa8] sm:$0xf]
      %v742 = vsel %vm640, %v561, %v741
      %743 = vst [vmem:[%s637 + $0xa8] sm:$0xf] %v742
      %744 = vst.msk [vmem:[%s637 + $0xac] sm:$0xf] %vm258, %v570
      %v745 = vld [vmem:[%s637 + $0xb0] sm:$0x1]
      %v746 = vsel %vm646, %v571, %v745
      %747 = vst [vmem:[%s637 + $0xb0] sm:$0x1] %v746
      %v748 = vld [vmem:[%s637 + $0xb4] sm:$0xf]
      %v749 = vsel %vm640, %v578, %v748
      %750 = vst [vmem:[%s637 + $0xb4] sm:$0xf] %v749
      %751 = vst.msk [vmem:[%s637 + $0xb8] sm:$0xf] %vm258, %v587
      %v752 = vld [vmem:[%s637 + $0xbc] sm:$0x1]
      %v753 = vsel %vm646, %v588, %v752
      %754 = vst [vmem:[%s637 + $0xbc] sm:$0x1] %v753
      %v755 = vld [vmem:[%s1] sm:$0x3]
      %v756 = vld [vmem:[%s1 + $0x2] sm:$0x3]
      %v757 = vld [vmem:[%s1 + $0x4] sm:$0x3]
      %v758 = vld [vmem:[%s1 + $0x6] sm:$0x3]
      %v759 = vld [vmem:[%s1 + $0x8] sm:$0x3]
      %v760 = vld [vmem:[%s1 + $0xa] sm:$0x3]
      %v761 = vld [vmem:[%s1 + $0xc] sm:$0x3]
      %v762 = vld [vmem:[%s1 + $0xe] sm:$0x3]
      %v763 = vld [vmem:[%s1 + $0x10] sm:$0x3]
      %v764 = vld [vmem:[#allocation2] sm:$0xf]
      %v765 = vld [vmem:[#allocation2 + $0x4] sm:$0xf]
      %v766 = vld [vmem:[#allocation2 + $0xc] sm:$0xf]
      %v767 = vld [vmem:[#allocation2 + $0x10] sm:$0xf]
      %v768 = vld [vmem:[#allocation2 + $0x18] sm:$0xf]
      %v769 = vld [vmem:[#allocation2 + $0x1c] sm:$0xf]
      %v770 = vld [vmem:[#allocation2 + $0x24] sm:$0xf]
      %v771 = vld [vmem:[#allocation2 + $0x28] sm:$0xf]
      %v772 = vld [vmem:[#allocation2 + $0x30] sm:$0xf]
      %v773 = vld [vmem:[#allocation2 + $0x34] sm:$0xf]
      %v774 = vld [vmem:[#allocation2 + $0x3c] sm:$0xf]
      %v775 = vld [vmem:[#allocation2 + $0x40] sm:$0xf]
      %v776 = vld [vmem:[#allocation2 + $0x48] sm:$0xf]
      %v777 = vld [vmem:[#allocation2 + $0x4c] sm:$0xf]
      %v778 = vld [vmem:[#allocation2 + $0x54] sm:$0xf]
      %v779 = vld [vmem:[#allocation2 + $0x58] sm:$0xf]
      %v780 = vld [vmem:[#allocation2 + $0x60] sm:$0xf]
      %v781 = vld [vmem:[#allocation2 + $0x64] sm:$0xf]
      %v782 = vld [vmem:[#allocation2 + $0x6c] sm:$0xf]
      %v783 = vld [vmem:[#allocation2 + $0x70] sm:$0xf]
      %v784 = vld [vmem:[#allocation2 + $0x78] sm:$0xf]
      %v785 = vld [vmem:[#allocation2 + $0x7c] sm:$0xf]
      %v786 = vld [vmem:[#allocation2 + $0x84] sm:$0xf]
      %v787 = vld [vmem:[#allocation2 + $0x88] sm:$0xf]
      %v788 = vld [vmem:[#allocation2 + $0x90] sm:$0xf]
      %v789 = vld [vmem:[#allocation2 + $0x94] sm:$0xf]
      %v790 = vld [vmem:[#allocation2 + $0x9c] sm:$0xf]
      %v791 = vld [vmem:[#allocation2 + $0xa0] sm:$0xf]
      %v792 = vld [vmem:[#allocation2 + $0xa8] sm:$0xf]
      %v793 = vld [vmem:[#allocation2 + $0xac] sm:$0xf]
      %v794 = vld [vmem:[#allocation2 + $0xb4] sm:$0xf]
      %v795 = vld [vmem:[#allocation2 + $0xb8] sm:$0xf]
      %v796 = vld [vmem:[#allocation2 + $0x8] sm:$0x1]
      %v797 = vld [vmem:[#allocation2 + $0x14] sm:$0x1]
      %v798 = vld [vmem:[#allocation2 + $0x20] sm:$0x1]
      %v799 = vld [vmem:[#allocation2 + $0x2c] sm:$0x1]
      %v800 = vld [vmem:[#allocation2 + $0x38] sm:$0x1]
      %v801 = vld [vmem:[#allocation2 + $0x44] sm:$0x1]
      %v802 = vld [vmem:[#allocation2 + $0x50] sm:$0x1]
      %v803 = vld [vmem:[#allocation2 + $0x5c] sm:$0x1]
      %v804 = vld [vmem:[#allocation2 + $0x68] sm:$0x1]
      %v805 = vld [vmem:[#allocation2 + $0x74] sm:$0x1]
      %v806 = vld [vmem:[#allocation2 + $0x80] sm:$0x1]
      %v807 = vld [vmem:[#allocation2 + $0x8c] sm:$0x1]
      %v808 = vld [vmem:[#allocation2 + $0x98] sm:$0x1]
      %v809 = vld [vmem:[#allocation2 + $0xa4] sm:$0x1]
      %v810 = vld [vmem:[#allocation2 + $0xb0] sm:$0x1]
      %v811 = vld [vmem:[#allocation2 + $0xbc] sm:$0x1]
      %vm812 = vsmask.f32 3328
      %vm813 = vsmask.f32 7440
      %vm814 = vmor %vm812, %vm813
      %v816 = vshrl.u32 %v764, 16
      %v818 = vrot.slane %v816, 4
      %v819 = vshll.u32 %v764, 16
      %v821 = vrot.slane %v819, 5
      %v822 = vor.u32 %v818, %v821
      %v823 = vrot.slane %v822, 4
      %v825 = vshll.u32 %v765, 16
      %v827 = vrot.slane %v825, 5
      %v828 = vsel %vm814, %v823, %v827
      %v829 = vshrl.u32 %v765, 16
      %v831 = vrot.slane %v829, 4
      %v832 = vor.u32 %v831, %v827
      %v833 = vrot.slane %v832, 4
      %v835 = vshll.u32 %v796, 16
      %v837 = vrot.slane %v835, 5
      %v838 = vsel %vm814, %v833, %v837
      %v840 = vshrl.u32 %v766, 16
      %v842 = vrot.slane %v840, 4
      %v843 = vshll.u32 %v766, 16
      %v845 = vrot.slane %v843, 5
      %v846 = vor.u32 %v842, %v845
      %v847 = vrot.slane %v846, 4
      %v849 = vshll.u32 %v767, 16
      %v851 = vrot.slane %v849, 5
      %v852 = vsel %vm814, %v847, %v851
      %v853 = vshrl.u32 %v767, 16
      %v855 = vrot.slane %v853, 4
      %v856 = vor.u32 %v855, %v851
      %v857 = vrot.slane %v856, 4
      %v859 = vshll.u32 %v797, 16
      %v861 = vrot.slane %v859, 5
      %v862 = vsel %vm814, %v857, %v861
      %v864 = vshrl.u32 %v768, 16
      %v866 = vrot.slane %v864, 4
      %v867 = vshll.u32 %v768, 16
      %v869 = vrot.slane %v867, 5
      %v870 = vor.u32 %v866, %v869
      %v871 = vrot.slane %v870, 4
      %v873 = vshll.u32 %v769, 16
      %v875 = vrot.slane %v873, 5
      %v876 = vsel %vm814, %v871, %v875
      %v877 = vshrl.u32 %v769, 16
      %v879 = vrot.slane %v877, 4
      %v880 = vor.u32 %v879, %v875
      %v881 = vrot.slane %v880, 4
      %v883 = vshll.u32 %v798, 16
      %v885 = vrot.slane %v883, 5
      %v886 = vsel %vm814, %v881, %v885
      %v888 = vshrl.u32 %v770, 16
      %v890 = vrot.slane %v888, 4
      %v891 = vshll.u32 %v770, 16
      %v893 = vrot.slane %v891, 5
      %v894 = vor.u32 %v890, %v893
      %v895 = vrot.slane %v894, 4
      %v897 = vshll.u32 %v771, 16
      %v899 = vrot.slane %v897, 5
      %v900 = vsel %vm814, %v895, %v899
      %v901 = vshrl.u32 %v771, 16
      %v903 = vrot.slane %v901, 4
      %v904 = vor.u32 %v903, %v899
      %v905 = vrot.slane %v904, 4
      %v907 = vshll.u32 %v799, 16
      %v909 = vrot.slane %v907, 5
      %v910 = vsel %vm814, %v905, %v909
      %v912 = vshrl.u32 %v772, 16
      %v914 = vrot.slane %v912, 4
      %v915 = vshll.u32 %v772, 16
      %v917 = vrot.slane %v915, 5
      %v918 = vor.u32 %v914, %v917
      %v919 = vrot.slane %v918, 4
      %v921 = vshll.u32 %v773, 16
      %v923 = vrot.slane %v921, 5
      %v924 = vsel %vm814, %v919, %v923
      %v925 = vshrl.u32 %v773, 16
      %v927 = vrot.slane %v925, 4
      %v928 = vor.u32 %v927, %v923
      %v929 = vrot.slane %v928, 4
      %v931 = vshll.u32 %v800, 16
      %v933 = vrot.slane %v931, 5
      %v934 = vsel %vm814, %v929, %v933
      %v936 = vshrl.u32 %v774, 16
      %v938 = vrot.slane %v936, 4
      %v939 = vshll.u32 %v774, 16
      %v941 = vrot.slane %v939, 5
      %v942 = vor.u32 %v938, %v941
      %v943 = vrot.slane %v942, 4
      %v945 = vshll.u32 %v775, 16
      %v947 = vrot.slane %v945, 5
      %v948 = vsel %vm814, %v943, %v947
      %v949 = vshrl.u32 %v775, 16
      %v951 = vrot.slane %v949, 4
      %v952 = vor.u32 %v951, %v947
      %v953 = vrot.slane %v952, 4
      %v955 = vshll.u32 %v801, 16
      %v957 = vrot.slane %v955, 5
      %v958 = vsel %vm814, %v953, %v957
      %v960 = vshrl.u32 %v776, 16
      %v962 = vrot.slane %v960, 4
      %v963 = vshll.u32 %v776, 16
      %v965 = vrot.slane %v963, 5
      %v966 = vor.u32 %v962, %v965
      %v967 = vrot.slane %v966, 4
      %v969 = vshll.u32 %v777, 16
      %v971 = vrot.slane %v969, 5
      %v972 = vsel %vm814, %v967, %v971
      %v973 = vshrl.u32 %v777, 16
      %v975 = vrot.slane %v973, 4
      %v976 = vor.u32 %v975, %v971
      %v977 = vrot.slane %v976, 4
      %v979 = vshll.u32 %v802, 16
      %v981 = vrot.slane %v979, 5
      %v982 = vsel %vm814, %v977, %v981
      %v984 = vshrl.u32 %v778, 16
      %v986 = vrot.slane %v984, 4
      %v987 = vshll.u32 %v778, 16
      %v989 = vrot.slane %v987, 5
      %v990 = vor.u32 %v986, %v989
      %v991 = vrot.slane %v990, 4
      %v993 = vshll.u32 %v779, 16
      %v995 = vrot.slane %v993, 5
      %v996 = vsel %vm814, %v991, %v995
      %v997 = vshrl.u32 %v779, 16
      %v999 = vrot.slane %v997, 4
      %v1000 = vor.u32 %v999, %v995
      %v1001 = vrot.slane %v1000, 4
      %v1003 = vshll.u32 %v803, 16
      %v1005 = vrot.slane %v1003, 5
      %v1006 = vsel %vm814, %v1001, %v1005
      %v1008 = vshrl.u32 %v780, 16
      %v1010 = vrot.slane %v1008, 4
      %v1011 = vshll.u32 %v780, 16
      %v1013 = vrot.slane %v1011, 5
      %v1014 = vor.u32 %v1010, %v1013
      %v1015 = vrot.slane %v1014, 4
      %v1017 = vshll.u32 %v781, 16
      %v1019 = vrot.slane %v1017, 5
      %v1020 = vsel %vm814, %v1015, %v1019
      %v1021 = vshrl.u32 %v781, 16
      %v1023 = vrot.slane %v1021, 4
      %v1024 = vor.u32 %v1023, %v1019
      %v1025 = vrot.slane %v1024, 4
      %v1027 = vshll.u32 %v804, 16
      %v1029 = vrot.slane %v1027, 5
      %v1030 = vsel %vm814, %v1025, %v1029
      %v1032 = vshrl.u32 %v782, 16
      %v1034 = vrot.slane %v1032, 4
      %v1035 = vshll.u32 %v782, 16
      %v1037 = vrot.slane %v1035, 5
      %v1038 = vor.u32 %v1034, %v1037
      %v1039 = vrot.slane %v1038, 4
      %v1041 = vshll.u32 %v783, 16
      %v1043 = vrot.slane %v1041, 5
      %v1044 = vsel %vm814, %v1039, %v1043
      %v1045 = vshrl.u32 %v783, 16
      %v1047 = vrot.slane %v1045, 4
      %v1048 = vor.u32 %v1047, %v1043
      %v1049 = vrot.slane %v1048, 4
      %v1051 = vshll.u32 %v805, 16
      %v1053 = vrot.slane %v1051, 5
      %v1054 = vsel %vm814, %v1049, %v1053
      %v1056 = vshrl.u32 %v784, 16
      %v1058 = vrot.slane %v1056, 4
      %v1059 = vshll.u32 %v784, 16
      %v1061 = vrot.slane %v1059, 5
      %v1062 = vor.u32 %v1058, %v1061
      %v1063 = vrot.slane %v1062, 4
      %v1065 = vshll.u32 %v785, 16
      %v1067 = vrot.slane %v1065, 5
      %v1068 = vsel %vm814, %v1063, %v1067
      %v1069 = vshrl.u32 %v785, 16
      %v1071 = vrot.slane %v1069, 4
      %v1072 = vor.u32 %v1071, %v1067
      %v1073 = vrot.slane %v1072, 4
      %v1075 = vshll.u32 %v806, 16
      %v1077 = vrot.slane %v1075, 5
      %v1078 = vsel %vm814, %v1073, %v1077
      %v1080 = vshrl.u32 %v786, 16
      %v1082 = vrot.slane %v1080, 4
      %v1083 = vshll.u32 %v786, 16
      %v1085 = vrot.slane %v1083, 5
      %v1086 = vor.u32 %v1082, %v1085
      %v1087 = vrot.slane %v1086, 4
      %v1089 = vshll.u32 %v787, 16
      %v1091 = vrot.slane %v1089, 5
      %v1092 = vsel %vm814, %v1087, %v1091
      %v1093 = vshrl.u32 %v787, 16
      %v1095 = vrot.slane %v1093, 4
      %v1096 = vor.u32 %v1095, %v1091
      %v1097 = vrot.slane %v1096, 4
      %v1099 = vshll.u32 %v807, 16
      %v1101 = vrot.slane %v1099, 5
      %v1102 = vsel %vm814, %v1097, %v1101
      %v1104 = vshrl.u32 %v788, 16
      %v1106 = vrot.slane %v1104, 4
      %v1107 = vshll.u32 %v788, 16
      %v1109 = vrot.slane %v1107, 5
      %v1110 = vor.u32 %v1106, %v1109
      %v1111 = vrot.slane %v1110, 4
      %v1113 = vshll.u32 %v789, 16
      %v1115 = vrot.slane %v1113, 5
      %v1116 = vsel %vm814, %v1111, %v1115
      %v1117 = vshrl.u32 %v789, 16
      %v1119 = vrot.slane %v1117, 4
      %v1120 = vor.u32 %v1119, %v1115
      %v1121 = vrot.slane %v1120, 4
      %v1123 = vshll.u32 %v808, 16
      %v1125 = vrot.slane %v1123, 5
      %v1126 = vsel %vm814, %v1121, %v1125
      %v1128 = vshrl.u32 %v790, 16
      %v1130 = vrot.slane %v1128, 4
      %v1131 = vshll.u32 %v790, 16
      %v1133 = vrot.slane %v1131, 5
      %v1134 = vor.u32 %v1130, %v1133
      %v1135 = vrot.slane %v1134, 4
      %v1137 = vshll.u32 %v791, 16
      %v1139 = vrot.slane %v1137, 5
      %v1140 = vsel %vm814, %v1135, %v1139
      %v1141 = vshrl.u32 %v791, 16
      %v1143 = vrot.slane %v1141, 4
      %v1144 = vor.u32 %v1143, %v1139
      %v1145 = vrot.slane %v1144, 4
      %v1147 = vshll.u32 %v809, 16
      %v1149 = vrot.slane %v1147, 5
      %v1150 = vsel %vm814, %v1145, %v1149
      %v1152 = vshrl.u32 %v792, 16
      %v1154 = vrot.slane %v1152, 4
      %v1155 = vshll.u32 %v792, 16
      %v1157 = vrot.slane %v1155, 5
      %v1158 = vor.u32 %v1154, %v1157
      %v1159 = vrot.slane %v1158, 4
      %v1161 = vshll.u32 %v793, 16
      %v1163 = vrot.slane %v1161, 5
      %v1164 = vsel %vm814, %v1159, %v1163
      %v1165 = vshrl.u32 %v793, 16
      %v1167 = vrot.slane %v1165, 4
      %v1168 = vor.u32 %v1167, %v1163
      %v1169 = vrot.slane %v1168, 4
      %v1171 = vshll.u32 %v810, 16
      %v1173 = vrot.slane %v1171, 5
      %v1174 = vsel %vm814, %v1169, %v1173
      %v1176 = vshrl.u32 %v794, 16
      %v1178 = vrot.slane %v1176, 4
      %v1179 = vshll.u32 %v794, 16
      %v1181 = vrot.slane %v1179, 5
      %v1182 = vor.u32 %v1178, %v1181
      %v1183 = vrot.slane %v1182, 4
      %v1185 = vshll.u32 %v795, 16
      %v1187 = vrot.slane %v1185, 5
      %v1188 = vsel %vm814, %v1183, %v1187
      %v1189 = vshrl.u32 %v795, 16
      %v1191 = vrot.slane %v1189, 4
      %v1192 = vor.u32 %v1191, %v1187
      %v1193 = vrot.slane %v1192, 4
      %v1195 = vshll.u32 %v811, 16
      %v1197 = vrot.slane %v1195, 5
      %v1198 = vsel %vm814, %v1193, %v1197
      %v1199 = vunpack.c.l.b16 %v828
      %v1200 = vunpack.c.l.b16 %v838
      %v1201 = vunpack.c.l.b16 %v852
      %v1202 = vunpack.c.l.b16 %v862
      %v1203 = vunpack.c.l.b16 %v876
      %v1204 = vunpack.c.l.b16 %v886
      %v1205 = vunpack.c.l.b16 %v900
      %v1206 = vunpack.c.l.b16 %v910
      %v1207 = vunpack.c.l.b16 %v924
      %v1208 = vunpack.c.l.b16 %v934
      %v1209 = vunpack.c.l.b16 %v948
      %v1210 = vunpack.c.l.b16 %v958
      %v1211 = vunpack.c.l.b16 %v972
      %v1212 = vunpack.c.l.b16 %v982
      %v1213 = vunpack.c.l.b16 %v996
      %v1214 = vunpack.c.l.b16 %v1006
      %v1215 = vunpack.c.l.b16 %v1020
      %v1216 = vunpack.c.l.b16 %v1030
      %v1217 = vunpack.c.l.b16 %v1044
      %v1218 = vunpack.c.l.b16 %v1054
      %v1219 = vunpack.c.l.b16 %v1068
      %v1220 = vunpack.c.l.b16 %v1078
      %v1221 = vunpack.c.l.b16 %v1092
      %v1222 = vunpack.c.l.b16 %v1102
      %v1223 = vunpack.c.l.b16 %v1116
      %v1224 = vunpack.c.l.b16 %v1126
      %v1225 = vunpack.c.l.b16 %v1140
      %v1226 = vunpack.c.l.b16 %v1150
      %v1227 = vunpack.c.l.b16 %v1164
      %v1228 = vunpack.c.l.b16 %v1174
      %v1229 = vunpack.c.l.b16 %v1188
      %v1230 = vunpack.c.l.b16 %v1198
      %v1231 = vpack.c.b16 %v1200, %v1199
      %v1232 = vpack.c.b16 %v1202, %v1201
      %v1233 = vpack.c.b16 %v1204, %v1203
      %v1234 = vpack.c.b16 %v1206, %v1205
      %v1235 = vpack.c.b16 %v1208, %v1207
      %v1236 = vpack.c.b16 %v1210, %v1209
      %v1237 = vpack.c.b16 %v1212, %v1211
      %v1238 = vpack.c.b16 %v1214, %v1213
      %v1239 = vpack.c.b16 %v1216, %v1215
      %v1240 = vpack.c.b16 %v1218, %v1217
      %v1241 = vpack.c.b16 %v1220, %v1219
      %v1242 = vpack.c.b16 %v1222, %v1221
      %v1243 = vpack.c.b16 %v1224, %v1223
      %v1244 = vpack.c.b16 %v1226, %v1225
      %v1245 = vpack.c.b16 %v1228, %v1227
      %v1246 = vpack.c.b16 %v1230, %v1229
      %vm1247 = vcmask 31744
      %v1249 = vsel %vm1247, %v1231, 0
      %v1252 = vsel %vm1247, %v1232, 0
      %v1255 = vsel %vm1247, %v1233, 0
      %v1258 = vsel %vm1247, %v1234, 0
      %v1261 = vsel %vm1247, %v1235, 0
      %v1264 = vsel %vm1247, %v1236, 0
      %v1267 = vsel %vm1247, %v1237, 0
      %v1270 = vsel %vm1247, %v1238, 0
      %v1273 = vsel %vm1247, %v1239, 0
      %v1276 = vsel %vm1247, %v1240, 0
      %v1279 = vsel %vm1247, %v1241, 0
      %v1282 = vsel %vm1247, %v1242, 0
      %v1285 = vsel %vm1247, %v1243, 0
      %v1288 = vsel %vm1247, %v1244, 0
      %v1291 = vsel %vm1247, %v1245, 0
      %v1294 = vsel %vm1247, %v1246, 0
      %vm1296 = vcmask 1041408
      %v1298 = vsel %vm1296, %v756, 0
      %1300 = vmatprep.subr.bf16.mxu0 0
      %1301 = vmatpush1.bf16.msra.mxu0 %v1298
      %1302 = vmatprep.subr.bf16.mxu0 0
      %1303 = vmatpush1.bf16.msra.mxu0 0
      %1304 = vmatprep.subr.bf16.mxu0 0
      %1305 = vmatpush1.bf16.msra.mxu0 0
      %1306 = vmatprep.subr.bf16.mxu0 0
      %1307 = vmatpush1.bf16.msra.mxu0 0
      %1308 = vmatprep.subr.bf16.mxu0 0
      %1309 = vmatpush1.bf16.msra.mxu0 0
      %1310 = vmatprep.subr.bf16.mxu0 0
      %1311 = vmatpush1.bf16.msra.mxu0 0
      %1312 = vmatprep.subr.bf16.mxu0 0
      %1313 = vmatpush1.bf16.msra.mxu0 0
      %1314 = vmatprep.subr.bf16.mxu0 0
      %1315 = vmatpush1.bf16.msra.mxu0 0
      %1316 = vmatprep.subr.bf16.mxu0 0
      %1317 = vmatpush1.bf16.msra.mxu0 0
      %1318 = vmatprep.subr.bf16.mxu0 0
      %1319 = vmatpush1.bf16.msra.mxu0 0
      %1320 = vmatprep.subr.bf16.mxu0 0
      %1321 = vmatpush1.bf16.msra.mxu0 0
      %1322 = vmatprep.subr.bf16.mxu0 0
      %1323 = vmatpush1.bf16.msra.mxu0 0
      %1324 = vmatprep.subr.bf16.mxu0 0
      %1325 = vmatpush1.bf16.msra.mxu0 0
      %1326 = vmatprep.subr.bf16.mxu0 0
      %1327 = vmatpush1.bf16.msra.mxu0 0
      %1328 = vmatprep.subr.bf16.mxu0 0
      %1329 = vmatpush1.bf16.msra.mxu0 0
      %1330 = vmatprep.subr.bf16.mxu0 0
      %1331 = vmatpush1.bf16.msra.mxu0 0
      %1332 = vmatprep.mubr.bf16.mxu0 0
      %1333 = vmatmul.mubr.bf16.gmra.mrb[0].mxu0 %v1249
      %v1334 = vpop.f32.mrb[0].mxu0
      %v1335 = vadd.f32 0.0, %v1334
      %v1336 = vpop.f32.mrb[0].mxu0
      %v1337 = vpop.f32.mrb[0].mxu0
      %v1338 = vadd.f32 0.0, %v1337
      %v1339 = vpop.f32.mrb[0].mxu0
      %1340 = vmatprep.mubr.bf16.mxu0 0
      %1341 = vmatmul.mubr.bf16.gmra.mrb[0].mxu0 %v1252
      %v1342 = vpop.f32.mrb[0].mxu0
      %v1343 = vadd.f32 0.0, %v1342
      %v1344 = vpop.f32.mrb[0].mxu0
      %v1345 = vpop.f32.mrb[0].mxu0
      %v1346 = vadd.f32 0.0, %v1345
      %v1347 = vpop.f32.mrb[0].mxu0
      %1348 = vmatprep.mubr.bf16.mxu0 0
      %1349 = vmatmul.mubr.bf16.gmra.mrb[0].mxu0 %v1255
      %v1350 = vpop.f32.mrb[0].mxu0
      %v1351 = vadd.f32 0.0, %v1350
      %v1352 = vpop.f32.mrb[0].mxu0
      %v1353 = vpop.f32.mrb[0].mxu0
      %v1354 = vadd.f32 0.0, %v1353
      %v1355 = vpop.f32.mrb[0].mxu0
      %1356 = vmatprep.mubr.bf16.mxu0 0
      %1357 = vmatmul.mubr.bf16.gmra.mrb[0].mxu0 %v1258
      %v1358 = vpop.f32.mrb[0].mxu0
      %v1359 = vadd.f32 0.0, %v1358
      %v1360 = vpop.f32.mrb[0].mxu0
      %v1361 = vpop.f32.mrb[0].mxu0
      %v1362 = vadd.f32 0.0, %v1361
      %v1363 = vpop.f32.mrb[0].mxu0
      %1364 = vmatprep.mubr.bf16.mxu0 0
      %1365 = vmatmul.mubr.bf16.gmra.mrb[0].mxu0 %v1261
      %v1366 = vpop.f32.mrb[0].mxu0
      %v1367 = vadd.f32 0.0, %v1366
      %v1368 = vpop.f32.mrb[0].mxu0
      %v1369 = vpop.f32.mrb[0].mxu0
      %v1370 = vadd.f32 0.0, %v1369
      %v1371 = vpop.f32.mrb[0].mxu0
      %1372 = vmatprep.mubr.bf16.mxu0 0
      %1373 = vmatmul.mubr.bf16.gmra.mrb[0].mxu0 %v1264
      %v1374 = vpop.f32.mrb[0].mxu0
      %v1375 = vadd.f32 0.0, %v1374
      %v1376 = vpop.f32.mrb[0].mxu0
      %v1377 = vpop.f32.mrb[0].mxu0
      %v1378 = vadd.f32 0.0, %v1377
      %v1379 = vpop.f32.mrb[0].mxu0
      %1380 = vmatprep.mubr.bf16.mxu0 0
      %1381 = vmatmul.mubr.bf16.gmra.mrb[0].mxu0 %v1267
      %v1382 = vpop.f32.mrb[0].mxu0
      %v1383 = vadd.f32 0.0, %v1382
      %v1384 = vpop.f32.mrb[0].mxu0
      %v1385 = vpop.f32.mrb[0].mxu0
      %v1386 = vadd.f32 0.0, %v1385
      %v1387 = vpop.f32.mrb[0].mxu0
      %1388 = vmatprep.mubr.bf16.mxu0 0
      %1389 = vmatmul.mubr.bf16.gmra.mrb[0].mxu0 %v1270
      %v1390 = vpop.f32.mrb[0].mxu0
      %v1391 = vadd.f32 0.0, %v1390
      %v1392 = vpop.f32.mrb[0].mxu0
      %v1393 = vpop.f32.mrb[0].mxu0
      %v1394 = vadd.f32 0.0, %v1393
      %v1395 = vpop.f32.mrb[0].mxu0
      %1396 = vmatprep.mubr.bf16.mxu0 0
      %1397 = vmatmul.mubr.bf16.gmra.mrb[0].mxu0 %v1273
      %v1398 = vpop.f32.mrb[0].mxu0
      %v1399 = vadd.f32 0.0, %v1398
      %v1400 = vpop.f32.mrb[0].mxu0
      %v1401 = vpop.f32.mrb[0].mxu0
      %v1402 = vadd.f32 0.0, %v1401
      %v1403 = vpop.f32.mrb[0].mxu0
      %1404 = vmatprep.mubr.bf16.mxu0 0
      %1405 = vmatmul.mubr.bf16.gmra.mrb[0].mxu0 %v1276
      %v1406 = vpop.f32.mrb[0].mxu0
      %v1407 = vadd.f32 0.0, %v1406
      %v1408 = vpop.f32.mrb[0].mxu0
      %v1409 = vpop.f32.mrb[0].mxu0
      %v1410 = vadd.f32 0.0, %v1409
      %v1411 = vpop.f32.mrb[0].mxu0
      %1412 = vmatprep.mubr.bf16.mxu0 0
      %1413 = vmatmul.mubr.bf16.gmra.mrb[0].mxu0 %v1279
      %v1414 = vpop.f32.mrb[0].mxu0
      %v1415 = vadd.f32 0.0, %v1414
      %v1416 = vpop.f32.mrb[0].mxu0
      %v1417 = vpop.f32.mrb[0].mxu0
      %v1418 = vadd.f32 0.0, %v1417
      %v1419 = vpop.f32.mrb[0].mxu0
      %1420 = vmatprep.mubr.bf16.mxu0 0
      %1421 = vmatmul.mubr.bf16.gmra.mrb[0].mxu0 %v1282
      %v1422 = vpop.f32.mrb[0].mxu0
      %v1423 = vadd.f32 0.0, %v1422
      %v1424 = vpop.f32.mrb[0].mxu0
      %v1425 = vpop.f32.mrb[0].mxu0
      %v1426 = vadd.f32 0.0, %v1425
      %v1427 = vpop.f32.mrb[0].mxu0
      %1428 = vmatprep.mubr.bf16.mxu0 0
      %1429 = vmatmul.mubr.bf16.gmra.mrb[0].mxu0 %v1285
      %v1430 = vpop.f32.mrb[0].mxu0
      %v1431 = vadd.f32 0.0, %v1430
      %v1432 = vpop.f32.mrb[0].mxu0
      %v1433 = vpop.f32.mrb[0].mxu0
      %v1434 = vadd.f32 0.0, %v1433
      %v1435 = vpop.f32.mrb[0].mxu0
      %1436 = vmatprep.mubr.bf16.mxu0 0
      %1437 = vmatmul.mubr.bf16.gmra.mrb[0].mxu0 %v1288
      %v1438 = vpop.f32.mrb[0].mxu0
      %v1439 = vadd.f32 0.0, %v1438
      %v1440 = vpop.f32.mrb[0].mxu0
      %v1441 = vpop.f32.mrb[0].mxu0
      %v1442 = vadd.f32 0.0, %v1441
      %v1443 = vpop.f32.mrb[0].mxu0
      %1444 = vmatprep.mubr.bf16.mxu0 0
      %1445 = vmatmul.mubr.bf16.gmra.mrb[0].mxu0 %v1291
      %v1446 = vpop.f32.mrb[0].mxu0
      %v1447 = vadd.f32 0.0, %v1446
      %v1448 = vpop.f32.mrb[0].mxu0
      %v1449 = vpop.f32.mrb[0].mxu0
      %v1450 = vadd.f32 0.0, %v1449
      %v1451 = vpop.f32.mrb[0].mxu0
      %1452 = vmatprep.mubr.bf16.mxu0 0
      %1453 = vmatmul.mubr.bf16.gmra.mrb[0].mxu0 %v1294
      %v1454 = vpop.f32.mrb[0].mxu0
      %v1455 = vadd.f32 0.0, %v1454
      %v1456 = vpop.f32.mrb[0].mxu0
      %v1457 = vpop.f32.mrb[0].mxu0
      %v1458 = vadd.f32 0.0, %v1457
      %v1459 = vpop.f32.mrb[0].mxu0
      %1460 = vdwg.mxu0
      %v1493 = vunpack.c.l.b16 %v764
      %v1494 = vunpack.c.l.b16 %v765
      %v1495 = vunpack.c.l.b16 %v766
      %v1496 = vunpack.c.l.b16 %v767
      %v1497 = vunpack.c.l.b16 %v768
      %v1498 = vunpack.c.l.b16 %v769
      %v1499 = vunpack.c.l.b16 %v770
      %v1500 = vunpack.c.l.b16 %v771
      %v1501 = vunpack.c.l.b16 %v772
      %v1502 = vunpack.c.l.b16 %v773
      %v1503 = vunpack.c.l.b16 %v774
      %v1504 = vunpack.c.l.b16 %v775
      %v1505 = vunpack.c.l.b16 %v776
      %v1506 = vunpack.c.l.b16 %v777
      %v1507 = vunpack.c.l.b16 %v778
      %v1508 = vunpack.c.l.b16 %v779
      %v1509 = vunpack.c.l.b16 %v780
      %v1510 = vunpack.c.l.b16 %v781
      %v1511 = vunpack.c.l.b16 %v782
      %v1512 = vunpack.c.l.b16 %v783
      %v1513 = vunpack.c.l.b16 %v784
      %v1514 = vunpack.c.l.b16 %v785
      %v1515 = vunpack.c.l.b16 %v786
      %v1516 = vunpack.c.l.b16 %v787
      %v1517 = vunpack.c.l.b16 %v788
      %v1518 = vunpack.c.l.b16 %v789
      %v1519 = vunpack.c.l.b16 %v790
      %v1520 = vunpack.c.l.b16 %v791
      %v1521 = vunpack.c.l.b16 %v792
      %v1522 = vunpack.c.l.b16 %v793
      %v1523 = vunpack.c.l.b16 %v794
      %v1524 = vunpack.c.l.b16 %v795
      %v1525 = vpack.c.b16 %v1494, %v1493
      %v1526 = vpack.c.b16 %v1496, %v1495
      %v1527 = vpack.c.b16 %v1498, %v1497
      %v1528 = vpack.c.b16 %v1500, %v1499
      %v1529 = vpack.c.b16 %v1502, %v1501
      %v1530 = vpack.c.b16 %v1504, %v1503
      %v1531 = vpack.c.b16 %v1506, %v1505
      %v1532 = vpack.c.b16 %v1508, %v1507
      %v1533 = vpack.c.b16 %v1510, %v1509
      %v1534 = vpack.c.b16 %v1512, %v1511
      %v1535 = vpack.c.b16 %v1514, %v1513
      %v1536 = vpack.c.b16 %v1516, %v1515
      %v1537 = vpack.c.b16 %v1518, %v1517
      %v1538 = vpack.c.b16 %v1520, %v1519
      %v1539 = vpack.c.b16 %v1522, %v1521
      %v1540 = vpack.c.b16 %v1524, %v1523
      %v1542 = vsel %vm1247, %v1525, 0
      %v1545 = vsel %vm1247, %v1526, 0
      %v1548 = vsel %vm1247, %v1527, 0
      %v1551 = vsel %vm1247, %v1528, 0
      %v1554 = vsel %vm1247, %v1529, 0
      %v1557 = vsel %vm1247, %v1530, 0
      %v1560 = vsel %vm1247, %v1531, 0
      %v1563 = vsel %vm1247, %v1532, 0
      %v1566 = vsel %vm1247, %v1533, 0
      %v1569 = vsel %vm1247, %v1534, 0
      %v1572 = vsel %vm1247, %v1535, 0
      %v1575 = vsel %vm1247, %v1536, 0
      %v1578 = vsel %vm1247, %v1537, 0
      %v1581 = vsel %vm1247, %v1538, 0
      %v1584 = vsel %vm1247, %v1539, 0
      %v1587 = vsel %vm1247, %v1540, 0
      %v1590 = vsel %vm1296, %v755, 0
      %1592 = vmatprep.subr.bf16.mxu0 0
      %1593 = vmatpush1.bf16.msra.mxu0 %v1590
      %1594 = vmatprep.subr.bf16.mxu0 0
      %1595 = vmatpush1.bf16.msra.mxu0 0
      %1596 = vmatprep.subr.bf16.mxu0 0
      %1597 = vmatpush1.bf16.msra.mxu0 0
      %1598 = vmatprep.subr.bf16.mxu0 0
      %1599 = vmatpush1.bf16.msra.mxu0 0
      %1600 = vmatprep.subr.bf16.mxu0 0
      %1601 = vmatpush1.bf16.msra.mxu0 0
      %1602 = vmatprep.subr.bf16.mxu0 0
      %1603 = vmatpush1.bf16.msra.mxu0 0
      %1604 = vmatprep.subr.bf16.mxu0 0
      %1605 = vmatpush1.bf16.msra.mxu0 0
      %1606 = vmatprep.subr.bf16.mxu0 0
      %1607 = vmatpush1.bf16.msra.mxu0 0
      %1608 = vmatprep.subr.bf16.mxu0 0
      %1609 = vmatpush1.bf16.msra.mxu0 0
      %1610 = vmatprep.subr.bf16.mxu0 0
      %1611 = vmatpush1.bf16.msra.mxu0 0
      %1612 = vmatprep.subr.bf16.mxu0 0
      %1613 = vmatpush1.bf16.msra.mxu0 0
      %1614 = vmatprep.subr.bf16.mxu0 0
      %1615 = vmatpush1.bf16.msra.mxu0 0
      %1616 = vmatprep.subr.bf16.mxu0 0
      %1617 = vmatpush1.bf16.msra.mxu0 0
      %1618 = vmatprep.subr.bf16.mxu0 0
      %1619 = vmatpush1.bf16.msra.mxu0 0
      %1620 = vmatprep.subr.bf16.mxu0 0
      %1621 = vmatpush1.bf16.msra.mxu0 0
      %1622 = vmatprep.subr.bf16.mxu0 0
      %1623 = vmatpush1.bf16.msra.mxu0 0
      %1624 = vmatprep.mubr.bf16.mxu0 0
      %1625 = vmatmul.mubr.bf16.gmra.mrb[0].mxu0 %v1542
      %v1626 = vpop.f32.mrb[0].mxu0
      %v1627 = vadd.f32 %v1335, %v1626
      %v1628 = vpop.f32.mrb[0].mxu0
      %v1629 = vpop.f32.mrb[0].mxu0
      %v1630 = vadd.f32 %v1338, %v1629
      %v1631 = vpop.f32.mrb[0].mxu0
      %1632 = vmatprep.mubr.bf16.mxu0 0
      %1633 = vmatmul.mubr.bf16.gmra.mrb[0].mxu0 %v1545
      %v1634 = vpop.f32.mrb[0].mxu0
      %v1635 = vadd.f32 %v1343, %v1634
      %v1636 = vpop.f32.mrb[0].mxu0
      %v1637 = vpop.f32.mrb[0].mxu0
      %v1638 = vadd.f32 %v1346, %v1637
      %v1639 = vpop.f32.mrb[0].mxu0
      %1640 = vmatprep.mubr.bf16.mxu0 0
      %1641 = vmatmul.mubr.bf16.gmra.mrb[0].mxu0 %v1548
      %v1642 = vpop.f32.mrb[0].mxu0
      %v1643 = vadd.f32 %v1351, %v1642
      %v1644 = vpop.f32.mrb[0].mxu0
      %v1645 = vpop.f32.mrb[0].mxu0
      %v1646 = vadd.f32 %v1354, %v1645
      %v1647 = vpop.f32.mrb[0].mxu0
      %1648 = vmatprep.mubr.bf16.mxu0 0
      %1649 = vmatmul.mubr.bf16.gmra.mrb[0].mxu0 %v1551
      %v1650 = vpop.f32.mrb[0].mxu0
      %v1651 = vadd.f32 %v1359, %v1650
      %v1652 = vpop.f32.mrb[0].mxu0
      %v1653 = vpop.f32.mrb[0].mxu0
      %v1654 = vadd.f32 %v1362, %v1653
      %v1655 = vpop.f32.mrb[0].mxu0
      %1656 = vmatprep.mubr.bf16.mxu0 0
      %1657 = vmatmul.mubr.bf16.gmra.mrb[0].mxu0 %v1554
      %v1658 = vpop.f32.mrb[0].mxu0
      %v1659 = vadd.f32 %v1367, %v1658
      %v1660 = vpop.f32.mrb[0].mxu0
      %v1661 = vpop.f32.mrb[0].mxu0
      %v1662 = vadd.f32 %v1370, %v1661
      %v1663 = vpop.f32.mrb[0].mxu0
      %1664 = vmatprep.mubr.bf16.mxu0 0
      %1665 = vmatmul.mubr.bf16.gmra.mrb[0].mxu0 %v1557
      %v1666 = vpop.f32.mrb[0].mxu0
      %v1667 = vadd.f32 %v1375, %v1666
      %v1668 = vpop.f32.mrb[0].mxu0
      %v1669 = vpop.f32.mrb[0].mxu0
      %v1670 = vadd.f32 %v1378, %v1669
      %v1671 = vpop.f32.mrb[0].mxu0
      %1672 = vmatprep.mubr.bf16.mxu0 0
      %1673 = vmatmul.mubr.bf16.gmra.mrb[0].mxu0 %v1560
      %v1674 = vpop.f32.mrb[0].mxu0
      %v1675 = vadd.f32 %v1383, %v1674
      %v1676 = vpop.f32.mrb[0].mxu0
      %v1677 = vpop.f32.mrb[0].mxu0
      %v1678 = vadd.f32 %v1386, %v1677
      %v1679 = vpop.f32.mrb[0].mxu0
      %1680 = vmatprep.mubr.bf16.mxu0 0
      %1681 = vmatmul.mubr.bf16.gmra.mrb[0].mxu0 %v1563
      %v1682 = vpop.f32.mrb[0].mxu0
      %v1683 = vadd.f32 %v1391, %v1682
      %v1684 = vpop.f32.mrb[0].mxu0
      %v1685 = vpop.f32.mrb[0].mxu0
      %v1686 = vadd.f32 %v1394, %v1685
      %v1687 = vpop.f32.mrb[0].mxu0
      %1688 = vmatprep.mubr.bf16.mxu0 0
      %1689 = vmatmul.mubr.bf16.gmra.mrb[0].mxu0 %v1566
      %v1690 = vpop.f32.mrb[0].mxu0
      %v1691 = vadd.f32 %v1399, %v1690
      %v1692 = vpop.f32.mrb[0].mxu0
      %v1693 = vpop.f32.mrb[0].mxu0
      %v1694 = vadd.f32 %v1402, %v1693
      %v1695 = vpop.f32.mrb[0].mxu0
      %1696 = vmatprep.mubr.bf16.mxu0 0
      %1697 = vmatmul.mubr.bf16.gmra.mrb[0].mxu0 %v1569
      %v1698 = vpop.f32.mrb[0].mxu0
      %v1699 = vadd.f32 %v1407, %v1698
      %v1700 = vpop.f32.mrb[0].mxu0
      %v1701 = vpop.f32.mrb[0].mxu0
      %v1702 = vadd.f32 %v1410, %v1701
      %v1703 = vpop.f32.mrb[0].mxu0
      %1704 = vmatprep.mubr.bf16.mxu0 0
      %1705 = vmatmul.mubr.bf16.gmra.mrb[0].mxu0 %v1572
      %v1706 = vpop.f32.mrb[0].mxu0
      %v1707 = vadd.f32 %v1415, %v1706
      %v1708 = vpop.f32.mrb[0].mxu0
      %v1709 = vpop.f32.mrb[0].mxu0
      %v1710 = vadd.f32 %v1418, %v1709
      %v1711 = vpop.f32.mrb[0].mxu0
      %1712 = vmatprep.mubr.bf16.mxu0 0
      %1713 = vmatmul.mubr.bf16.gmra.mrb[0].mxu0 %v1575
      %v1714 = vpop.f32.mrb[0].mxu0
      %v1715 = vadd.f32 %v1423, %v1714
      %v1716 = vpop.f32.mrb[0].mxu0
      %v1717 = vpop.f32.mrb[0].mxu0
      %v1718 = vadd.f32 %v1426, %v1717
      %v1719 = vpop.f32.mrb[0].mxu0
      %1720 = vmatprep.mubr.bf16.mxu0 0
      %1721 = vmatmul.mubr.bf16.gmra.mrb[0].mxu0 %v1578
      %v1722 = vpop.f32.mrb[0].mxu0
      %v1723 = vadd.f32 %v1431, %v1722
      %v1724 = vpop.f32.mrb[0].mxu0
      %v1725 = vpop.f32.mrb[0].mxu0
      %v1726 = vadd.f32 %v1434, %v1725
      %v1727 = vpop.f32.mrb[0].mxu0
      %1728 = vmatprep.mubr.bf16.mxu0 0
      %1729 = vmatmul.mubr.bf16.gmra.mrb[0].mxu0 %v1581
      %v1730 = vpop.f32.mrb[0].mxu0
      %v1731 = vadd.f32 %v1439, %v1730
      %v1732 = vpop.f32.mrb[0].mxu0
      %v1733 = vpop.f32.mrb[0].mxu0
      %v1734 = vadd.f32 %v1442, %v1733
      %v1735 = vpop.f32.mrb[0].mxu0
      %1736 = vmatprep.mubr.bf16.mxu0 0
      %1737 = vmatmul.mubr.bf16.gmra.mrb[0].mxu0 %v1584
      %v1738 = vpop.f32.mrb[0].mxu0
      %v1739 = vadd.f32 %v1447, %v1738
      %v1740 = vpop.f32.mrb[0].mxu0
      %v1741 = vpop.f32.mrb[0].mxu0
      %v1742 = vadd.f32 %v1450, %v1741
      %v1743 = vpop.f32.mrb[0].mxu0
      %1744 = vmatprep.mubr.bf16.mxu0 0
      %1745 = vmatmul.mubr.bf16.gmra.mrb[0].mxu0 %v1587
      %v1746 = vpop.f32.mrb[0].mxu0
      %v1747 = vadd.f32 %v1455, %v1746
      %v1748 = vpop.f32.mrb[0].mxu0
      %v1749 = vpop.f32.mrb[0].mxu0
      %v1750 = vadd.f32 %v1458, %v1749
      %v1751 = vpop.f32.mrb[0].mxu0
      %1752 = vdwg.mxu0
      %v1753 = vld [vmem:[#allocation2] sm:$0xe]
      %v1754 = vld [vmem:[#allocation2 + $0xc] sm:$0xe]
      %v1755 = vld [vmem:[#allocation2 + $0x18] sm:$0xe]
      %v1756 = vld [vmem:[#allocation2 + $0x24] sm:$0xe]
      %v1757 = vld [vmem:[#allocation2 + $0x30] sm:$0xe]
      %v1758 = vld [vmem:[#allocation2 + $0x3c] sm:$0xe]
      %v1759 = vld [vmem:[#allocation2 + $0x48] sm:$0xe]
      %v1760 = vld [vmem:[#allocation2 + $0x54] sm:$0xe]
      %v1761 = vld [vmem:[#allocation2 + $0x60] sm:$0xe]
      %v1762 = vld [vmem:[#allocation2 + $0x6c] sm:$0xe]
      %v1763 = vld [vmem:[#allocation2 + $0x78] sm:$0xe]
      %v1764 = vld [vmem:[#allocation2 + $0x84] sm:$0xe]
      %v1765 = vld [vmem:[#allocation2 + $0x90] sm:$0xe]
      %v1766 = vld [vmem:[#allocation2 + $0x9c] sm:$0xe]
      %v1767 = vld [vmem:[#allocation2 + $0xa8] sm:$0xe]
      %v1768 = vld [vmem:[#allocation2 + $0xb4] sm:$0xe]
      %vm1801 = vcmask 1042432
      %vm1802 = vcmask 1046532
      %vm1803 = vmor %vm1801, %vm1802
      %v1804 = vrot.slane %v1753, 5
      %v1805 = vrot.slane %v1804, 4
      %v1806 = vrot.slane %v765, 5
      %v1807 = vsel %vm1803, %v1805, %v1806
      %v1808 = vrot.slane %v1806, 4
      %v1809 = vrot.slane %v796, 5
      %v1810 = vsel %vm1803, %v1808, %v1809
      %v1811 = vrot.slane %v1754, 5
      %v1812 = vrot.slane %v1811, 4
      %v1813 = vrot.slane %v767, 5
      %v1814 = vsel %vm1803, %v1812, %v1813
      %v1815 = vrot.slane %v1813, 4
      %v1816 = vrot.slane %v797, 5
      %v1817 = vsel %vm1803, %v1815, %v1816
      %v1818 = vrot.slane %v1755, 5
      %v1819 = vrot.slane %v1818, 4
      %v1820 = vrot.slane %v769, 5
      %v1821 = vsel %vm1803, %v1819, %v1820
      %v1822 = vrot.slane %v1820, 4
      %v1823 = vrot.slane %v798, 5
      %v1824 = vsel %vm1803, %v1822, %v1823
      %v1825 = vrot.slane %v1756, 5
      %v1826 = vrot.slane %v1825, 4
      %v1827 = vrot.slane %v771, 5
      %v1828 = vsel %vm1803, %v1826, %v1827
      %v1829 = vrot.slane %v1827, 4
      %v1830 = vrot.slane %v799, 5
      %v1831 = vsel %vm1803, %v1829, %v1830
      %v1832 = vrot.slane %v1757, 5
      %v1833 = vrot.slane %v1832, 4
      %v1834 = vrot.slane %v773, 5
      %v1835 = vsel %vm1803, %v1833, %v1834
      %v1836 = vrot.slane %v1834, 4
      %v1837 = vrot.slane %v800, 5
      %v1838 = vsel %vm1803, %v1836, %v1837
      %v1839 = vrot.slane %v1758, 5
      %v1840 = vrot.slane %v1839, 4
      %v1841 = vrot.slane %v775, 5
      %v1842 = vsel %vm1803, %v1840, %v1841
      %v1843 = vrot.slane %v1841, 4
      %v1844 = vrot.slane %v801, 5
      %v1845 = vsel %vm1803, %v1843, %v1844
      %v1846 = vrot.slane %v1759, 5
      %v1847 = vrot.slane %v1846, 4
      %v1848 = vrot.slane %v777, 5
      %v1849 = vsel %vm1803, %v1847, %v1848
      %v1850 = vrot.slane %v1848, 4
      %v1851 = vrot.slane %v802, 5
      %v1852 = vsel %vm1803, %v1850, %v1851
      %v1853 = vrot.slane %v1760, 5
      %v1854 = vrot.slane %v1853, 4
      %v1855 = vrot.slane %v779, 5
      %v1856 = vsel %vm1803, %v1854, %v1855
      %v1857 = vrot.slane %v1855, 4
      %v1858 = vrot.slane %v803, 5
      %v1859 = vsel %vm1803, %v1857, %v1858
      %v1860 = vrot.slane %v1761, 5
      %v1861 = vrot.slane %v1860, 4
      %v1862 = vrot.slane %v781, 5
      %v1863 = vsel %vm1803, %v1861, %v1862
      %v1864 = vrot.slane %v1862, 4
      %v1865 = vrot.slane %v804, 5
      %v1866 = vsel %vm1803, %v1864, %v1865
      %v1867 = vrot.slane %v1762, 5
      %v1868 = vrot.slane %v1867, 4
      %v1869 = vrot.slane %v783, 5
      %v1870 = vsel %vm1803, %v1868, %v1869
      %v1871 = vrot.slane %v1869, 4
      %v1872 = vrot.slane %v805, 5
      %v1873 = vsel %vm1803, %v1871, %v1872
      %v1874 = vrot.slane %v1763, 5
      %v1875 = vrot.slane %v1874, 4
      %v1876 = vrot.slane %v785, 5
      %v1877 = vsel %vm1803, %v1875, %v1876
      %v1878 = vrot.slane %v1876, 4
      %v1879 = vrot.slane %v806, 5
      %v1880 = vsel %vm1803, %v1878, %v1879
      %v1881 = vrot.slane %v1764, 5
      %v1882 = vrot.slane %v1881, 4
      %v1883 = vrot.slane %v787, 5
      %v1884 = vsel %vm1803, %v1882, %v1883
      %v1885 = vrot.slane %v1883, 4
      %v1886 = vrot.slane %v807, 5
      %v1887 = vsel %vm1803, %v1885, %v1886
      %v1888 = vrot.slane %v1765, 5
      %v1889 = vrot.slane %v1888, 4
      %v1890 = vrot.slane %v789, 5
      %v1891 = vsel %vm1803, %v1889, %v1890
      %v1892 = vrot.slane %v1890, 4
      %v1893 = vrot.slane %v808, 5
      %v1894 = vsel %vm1803, %v1892, %v1893
      %v1895 = vrot.slane %v1766, 5
      %v1896 = vrot.slane %v1895, 4
      %v1897 = vrot.slane %v791, 5
      %v1898 = vsel %vm1803, %v1896, %v1897
      %v1899 = vrot.slane %v1897, 4
      %v1900 = vrot.slane %v809, 5
      %v1901 = vsel %vm1803, %v1899, %v1900
      %v1902 = vrot.slane %v1767, 5
      %v1903 = vrot.slane %v1902, 4
      %v1904 = vrot.slane %v793, 5
      %v1905 = vsel %vm1803, %v1903, %v1904
      %v1906 = vrot.slane %v1904, 4
      %v1907 = vrot.slane %v810, 5
      %v1908 = vsel %vm1803, %v1906, %v1907
      %v1909 = vrot.slane %v1768, 5
      %v1910 = vrot.slane %v1909, 4
      %v1911 = vrot.slane %v795, 5
      %v1912 = vsel %vm1803, %v1910, %v1911
      %v1913 = vrot.slane %v1911, 4
      %v1914 = vrot.slane %v811, 5
      %v1915 = vsel %vm1803, %v1913, %v1914
      %v1916 = vunpack.c.l.b16 %v1807
      %v1917 = vunpack.c.l.b16 %v1810
      %v1918 = vunpack.c.l.b16 %v1814
      %v1919 = vunpack.c.l.b16 %v1817
      %v1920 = vunpack.c.l.b16 %v1821
      %v1921 = vunpack.c.l.b16 %v1824
      %v1922 = vunpack.c.l.b16 %v1828
      %v1923 = vunpack.c.l.b16 %v1831
      %v1924 = vunpack.c.l.b16 %v1835
      %v1925 = vunpack.c.l.b16 %v1838
      %v1926 = vunpack.c.l.b16 %v1842
      %v1927 = vunpack.c.l.b16 %v1845
      %v1928 = vunpack.c.l.b16 %v1849
      %v1929 = vunpack.c.l.b16 %v1852
      %v1930 = vunpack.c.l.b16 %v1856
      %v1931 = vunpack.c.l.b16 %v1859
      %v1932 = vunpack.c.l.b16 %v1863
      %v1933 = vunpack.c.l.b16 %v1866
      %v1934 = vunpack.c.l.b16 %v1870
      %v1935 = vunpack.c.l.b16 %v1873
      %v1936 = vunpack.c.l.b16 %v1877
      %v1937 = vunpack.c.l.b16 %v1880
      %v1938 = vunpack.c.l.b16 %v1884
      %v1939 = vunpack.c.l.b16 %v1887
      %v1940 = vunpack.c.l.b16 %v1891
      %v1941 = vunpack.c.l.b16 %v1894
      %v1942 = vunpack.c.l.b16 %v1898
      %v1943 = vunpack.c.l.b16 %v1901
      %v1944 = vunpack.c.l.b16 %v1905
      %v1945 = vunpack.c.l.b16 %v1908
      %v1946 = vunpack.c.l.b16 %v1912
      %v1947 = vunpack.c.l.b16 %v1915
      %v1948 = vpack.c.b16 %v1917, %v1916
      %v1949 = vpack.c.b16 %v1919, %v1918
      %v1950 = vpack.c.b16 %v1921, %v1920
      %v1951 = vpack.c.b16 %v1923, %v1922
      %v1952 = vpack.c.b16 %v1925, %v1924
      %v1953 = vpack.c.b16 %v1927, %v1926
      %v1954 = vpack.c.b16 %v1929, %v1928
      %v1955 = vpack.c.b16 %v1931, %v1930
      %v1956 = vpack.c.b16 %v1933, %v1932
      %v1957 = vpack.c.b16 %v1935, %v1934
      %v1958 = vpack.c.b16 %v1937, %v1936
      %v1959 = vpack.c.b16 %v1939, %v1938
      %v1960 = vpack.c.b16 %v1941, %v1940
      %v1961 = vpack.c.b16 %v1943, %v1942
      %v1962 = vpack.c.b16 %v1945, %v1944
      %v1963 = vpack.c.b16 %v1947, %v1946
      %v1965 = vsel %vm1247, %v1948, 0
      %v1968 = vsel %vm1247, %v1949, 0
      %v1971 = vsel %vm1247, %v1950, 0
      %v1974 = vsel %vm1247, %v1951, 0
      %v1977 = vsel %vm1247, %v1952, 0
      %v1980 = vsel %vm1247, %v1953, 0
      %v1983 = vsel %vm1247, %v1954, 0
      %v1986 = vsel %vm1247, %v1955, 0
      %v1989 = vsel %vm1247, %v1956, 0
      %v1992 = vsel %vm1247, %v1957, 0
      %v1995 = vsel %vm1247, %v1958, 0
      %v1998 = vsel %vm1247, %v1959, 0
      %v2001 = vsel %vm1247, %v1960, 0
      %v2004 = vsel %vm1247, %v1961, 0
      %v2007 = vsel %vm1247, %v1962, 0
      %v2010 = vsel %vm1247, %v1963, 0
      %v2013 = vsel %vm1296, %v757, 0
      %2015 = vmatprep.subr.bf16.mxu0 0
      %2016 = vmatpush1.bf16.msra.mxu0 %v2013
      %2017 = vmatprep.subr.bf16.mxu0 0
      %2018 = vmatpush1.bf16.msra.mxu0 0
      %2019 = vmatprep.subr.bf16.mxu0 0
      %2020 = vmatpush1.bf16.msra.mxu0 0
      %2021 = vmatprep.subr.bf16.mxu0 0
      %2022 = vmatpush1.bf16.msra.mxu0 0
      %2023 = vmatprep.subr.bf16.mxu0 0
      %2024 = vmatpush1.bf16.msra.mxu0 0
      %2025 = vmatprep.subr.bf16.mxu0 0
      %2026 = vmatpush1.bf16.msra.mxu0 0
      %2027 = vmatprep.subr.bf16.mxu0 0
      %2028 = vmatpush1.bf16.msra.mxu0 0
      %2029 = vmatprep.subr.bf16.mxu0 0
      %2030 = vmatpush1.bf16.msra.mxu0 0
      %2031 = vmatprep.subr.bf16.mxu0 0
      %2032 = vmatpush1.bf16.msra.mxu0 0
      %2033 = vmatprep.subr.bf16.mxu0 0
      %2034 = vmatpush1.bf16.msra.mxu0 0
      %2035 = vmatprep.subr.bf16.mxu0 0
      %2036 = vmatpush1.bf16.msra.mxu0 0
      %2037 = vmatprep.subr.bf16.mxu0 0
      %2038 = vmatpush1.bf16.msra.mxu0 0
      %2039 = vmatprep.subr.bf16.mxu0 0
      %2040 = vmatpush1.bf16.msra.mxu0 0
      %2041 = vmatprep.subr.bf16.mxu0 0
      %2042 = vmatpush1.bf16.msra.mxu0 0
      %2043 = vmatprep.subr.bf16.mxu0 0
      %2044 = vmatpush1.bf16.msra.mxu0 0
      %2045 = vmatprep.subr.bf16.mxu0 0
      %2046 = vmatpush1.bf16.msra.mxu0 0
      %2047 = vmatprep.mubr.bf16.mxu0 0
      %2048 = vmatmul.mubr.bf16.gmra.mrb[0].mxu0 %v1965
      %v2049 = vpop.f32.mrb[0].mxu0
      %v2050 = vadd.f32 0.0, %v2049
      %v2051 = vpop.f32.mrb[0].mxu0
      %v2052 = vpop.f32.mrb[0].mxu0
      %v2053 = vadd.f32 0.0, %v2052
      %v2054 = vpop.f32.mrb[0].mxu0
      %2055 = vmatprep.mubr.bf16.mxu0 0
      %2056 = vmatmul.mubr.bf16.gmra.mrb[0].mxu0 %v1968
      %v2057 = vpop.f32.mrb[0].mxu0
      %v2058 = vadd.f32 0.0, %v2057
      %v2059 = vpop.f32.mrb[0].mxu0
      %v2060 = vpop.f32.mrb[0].mxu0
      %v2061 = vadd.f32 0.0, %v2060
      %v2062 = vpop.f32.mrb[0].mxu0
      %2063 = vmatprep.mubr.bf16.mxu0 0
      %2064 = vmatmul.mubr.bf16.gmra.mrb[0].mxu0 %v1971
      %v2065 = vpop.f32.mrb[0].mxu0
      %v2066 = vadd.f32 0.0, %v2065
      %v2067 = vpop.f32.mrb[0].mxu0
      %v2068 = vpop.f32.mrb[0].mxu0
      %v2069 = vadd.f32 0.0, %v2068
      %v2070 = vpop.f32.mrb[0].mxu0
      %2071 = vmatprep.mubr.bf16.mxu0 0
      %2072 = vmatmul.mubr.bf16.gmra.mrb[0].mxu0 %v1974
      %v2073 = vpop.f32.mrb[0].mxu0
      %v2074 = vadd.f32 0.0, %v2073
      %v2075 = vpop.f32.mrb[0].mxu0
      %v2076 = vpop.f32.mrb[0].mxu0
      %v2077 = vadd.f32 0.0, %v2076
      %v2078 = vpop.f32.mrb[0].mxu0
      %2079 = vmatprep.mubr.bf16.mxu0 0
      %2080 = vmatmul.mubr.bf16.gmra.mrb[0].mxu0 %v1977
      %v2081 = vpop.f32.mrb[0].mxu0
      %v2082 = vadd.f32 0.0, %v2081
      %v2083 = vpop.f32.mrb[0].mxu0
      %v2084 = vpop.f32.mrb[0].mxu0
      %v2085 = vadd.f32 0.0, %v2084
      %v2086 = vpop.f32.mrb[0].mxu0
      %2087 = vmatprep.mubr.bf16.mxu0 0
      %2088 = vmatmul.mubr.bf16.gmra.mrb[0].mxu0 %v1980
      %v2089 = vpop.f32.mrb[0].mxu0
      %v2090 = vadd.f32 0.0, %v2089
      %v2091 = vpop.f32.mrb[0].mxu0
      %v2092 = vpop.f32.mrb[0].mxu0
      %v2093 = vadd.f32 0.0, %v2092
      %v2094 = vpop.f32.mrb[0].mxu0
      %2095 = vmatprep.mubr.bf16.mxu0 0
      %2096 = vmatmul.mubr.bf16.gmra.mrb[0].mxu0 %v1983
      %v2097 = vpop.f32.mrb[0].mxu0
      %v2098 = vadd.f32 0.0, %v2097
      %v2099 = vpop.f32.mrb[0].mxu0
      %v2100 = vpop.f32.mrb[0].mxu0
      %v2101 = vadd.f32 0.0, %v2100
      %v2102 = vpop.f32.mrb[0].mxu0
      %2103 = vmatprep.mubr.bf16.mxu0 0
      %2104 = vmatmul.mubr.bf16.gmra.mrb[0].mxu0 %v1986
      %v2105 = vpop.f32.mrb[0].mxu0
      %v2106 = vadd.f32 0.0, %v2105
      %v2107 = vpop.f32.mrb[0].mxu0
      %v2108 = vpop.f32.mrb[0].mxu0
      %v2109 = vadd.f32 0.0, %v2108
      %v2110 = vpop.f32.mrb[0].mxu0
      %2111 = vmatprep.mubr.bf16.mxu0 0
      %2112 = vmatmul.mubr.bf16.gmra.mrb[0].mxu0 %v1989
      %v2113 = vpop.f32.mrb[0].mxu0
      %v2114 = vadd.f32 0.0, %v2113
      %v2115 = vpop.f32.mrb[0].mxu0
      %v2116 = vpop.f32.mrb[0].mxu0
      %v2117 = vadd.f32 0.0, %v2116
      %v2118 = vpop.f32.mrb[0].mxu0
      %2119 = vmatprep.mubr.bf16.mxu0 0
      %2120 = vmatmul.mubr.bf16.gmra.mrb[0].mxu0 %v1992
      %v2121 = vpop.f32.mrb[0].mxu0
      %v2122 = vadd.f32 0.0, %v2121
      %v2123 = vpop.f32.mrb[0].mxu0
      %v2124 = vpop.f32.mrb[0].mxu0
      %v2125 = vadd.f32 0.0, %v2124
      %v2126 = vpop.f32.mrb[0].mxu0
      %2127 = vmatprep.mubr.bf16.mxu0 0
      %2128 = vmatmul.mubr.bf16.gmra.mrb[0].mxu0 %v1995
      %v2129 = vpop.f32.mrb[0].mxu0
      %v2130 = vadd.f32 0.0, %v2129
      %v2131 = vpop.f32.mrb[0].mxu0
      %v2132 = vpop.f32.mrb[0].mxu0
      %v2133 = vadd.f32 0.0, %v2132
      %v2134 = vpop.f32.mrb[0].mxu0
      %2135 = vmatprep.mubr.bf16.mxu0 0
      %2136 = vmatmul.mubr.bf16.gmra.mrb[0].mxu0 %v1998
      %v2137 = vpop.f32.mrb[0].mxu0
      %v2138 = vadd.f32 0.0, %v2137
      %v2139 = vpop.f32.mrb[0].mxu0
      %v2140 = vpop.f32.mrb[0].mxu0
      %v2141 = vadd.f32 0.0, %v2140
      %v2142 = vpop.f32.mrb[0].mxu0
      %2143 = vmatprep.mubr.bf16.mxu0 0
      %2144 = vmatmul.mubr.bf16.gmra.mrb[0].mxu0 %v2001
      %v2145 = vpop.f32.mrb[0].mxu0
      %v2146 = vadd.f32 0.0, %v2145
      %v2147 = vpop.f32.mrb[0].mxu0
      %v2148 = vpop.f32.mrb[0].mxu0
      %v2149 = vadd.f32 0.0, %v2148
      %v2150 = vpop.f32.mrb[0].mxu0
      %2151 = vmatprep.mubr.bf16.mxu0 0
      %2152 = vmatmul.mubr.bf16.gmra.mrb[0].mxu0 %v2004
      %v2153 = vpop.f32.mrb[0].mxu0
      %v2154 = vadd.f32 0.0, %v2153
      %v2155 = vpop.f32.mrb[0].mxu0
      %v2156 = vpop.f32.mrb[0].mxu0
      %v2157 = vadd.f32 0.0, %v2156
      %v2158 = vpop.f32.mrb[0].mxu0
      %2159 = vmatprep.mubr.bf16.mxu0 0
      %2160 = vmatmul.mubr.bf16.gmra.mrb[0].mxu0 %v2007
      %v2161 = vpop.f32.mrb[0].mxu0
      %v2162 = vadd.f32 0.0, %v2161
      %v2163 = vpop.f32.mrb[0].mxu0
      %v2164 = vpop.f32.mrb[0].mxu0
      %v2165 = vadd.f32 0.0, %v2164
      %v2166 = vpop.f32.mrb[0].mxu0
      %2167 = vmatprep.mubr.bf16.mxu0 0
      %2168 = vmatmul.mubr.bf16.gmra.mrb[0].mxu0 %v2010
      %v2169 = vpop.f32.mrb[0].mxu0
      %v2170 = vadd.f32 0.0, %v2169
      %v2171 = vpop.f32.mrb[0].mxu0
      %v2172 = vpop.f32.mrb[0].mxu0
      %v2173 = vadd.f32 0.0, %v2172
      %v2174 = vpop.f32.mrb[0].mxu0
      %2175 = vdwg.mxu0
      %v2176 = vadd.f32 %v1627, %v2050
      %v2177 = vadd.f32 %v1630, %v2053
      %v2178 = vadd.f32 %v1635, %v2058
      %v2179 = vadd.f32 %v1638, %v2061
      %v2180 = vadd.f32 %v1643, %v2066
      %v2181 = vadd.f32 %v1646, %v2069
      %v2182 = vadd.f32 %v1651, %v2074
      %v2183 = vadd.f32 %v1654, %v2077
      %v2184 = vadd.f32 %v1659, %v2082
      %v2185 = vadd.f32 %v1662, %v2085
      %v2186 = vadd.f32 %v1667, %v2090
      %v2187 = vadd.f32 %v1670, %v2093
      %v2188 = vadd.f32 %v1675, %v2098
      %v2189 = vadd.f32 %v1678, %v2101
      %v2190 = vadd.f32 %v1683, %v2106
      %v2191 = vadd.f32 %v1686, %v2109
      %v2192 = vadd.f32 %v1691, %v2114
      %v2193 = vadd.f32 %v1694, %v2117
      %v2194 = vadd.f32 %v1699, %v2122
      %v2195 = vadd.f32 %v1702, %v2125
      %v2196 = vadd.f32 %v1707, %v2130
      %v2197 = vadd.f32 %v1710, %v2133
      %v2198 = vadd.f32 %v1715, %v2138
      %v2199 = vadd.f32 %v1718, %v2141
      %v2200 = vadd.f32 %v1723, %v2146
      %v2201 = vadd.f32 %v1726, %v2149
      %v2202 = vadd.f32 %v1731, %v2154
      %v2203 = vadd.f32 %v1734, %v2157
      %v2204 = vadd.f32 %v1739, %v2162
      %v2205 = vadd.f32 %v1742, %v2165
      %v2206 = vadd.f32 %v1747, %v2170
      %v2207 = vadd.f32 %v1750, %v2173
      %v2208 = vld [vmem:[%s637] sm:$0xf]
      %v2209 = vld [vmem:[%s637 + $0x4] sm:$0xf]
      %v2210 = vld [vmem:[%s637 + $0xc] sm:$0xf]
      %v2211 = vld [vmem:[%s637 + $0x10] sm:$0xf]
      %v2212 = vld [vmem:[%s637 + $0x18] sm:$0xf]
      %v2213 = vld [vmem:[%s637 + $0x1c] sm:$0xf]
      %v2214 = vld [vmem:[%s637 + $0x24] sm:$0xf]
      %v2215 = vld [vmem:[%s637 + $0x28] sm:$0xf]
      %v2216 = vld [vmem:[%s637 + $0x30] sm:$0xf]
      %v2217 = vld [vmem:[%s637 + $0x34] sm:$0xf]
      %v2218 = vld [vmem:[%s637 + $0x3c] sm:$0xf]
      %v2219 = vld [vmem:[%s637 + $0x40] sm:$0xf]
      %v2220 = vld [vmem:[%s637 + $0x48] sm:$0xf]
      %v2221 = vld [vmem:[%s637 + $0x4c] sm:$0xf]
      %v2222 = vld [vmem:[%s637 + $0x54] sm:$0xf]
      %v2223 = vld [vmem:[%s637 + $0x58] sm:$0xf]
      %v2224 = vld [vmem:[%s637 + $0x60] sm:$0xf]
      %v2225 = vld [vmem:[%s637 + $0x64] sm:$0xf]
      %v2226 = vld [vmem:[%s637 + $0x6c] sm:$0xf]
      %v2227 = vld [vmem:[%s637 + $0x70] sm:$0xf]
      %v2228 = vld [vmem:[%s637 + $0x78] sm:$0xf]
      %v2229 = vld [vmem:[%s637 + $0x7c] sm:$0xf]
      %v2230 = vld [vmem:[%s637 + $0x84] sm:$0xf]
      %v2231 = vld [vmem:[%s637 + $0x88] sm:$0xf]
      %v2232 = vld [vmem:[%s637 + $0x90] sm:$0xf]
      %v2233 = vld [vmem:[%s637 + $0x94] sm:$0xf]
      %v2234 = vld [vmem:[%s637 + $0x9c] sm:$0xf]
      %v2235 = vld [vmem:[%s637 + $0xa0] sm:$0xf]
      %v2236 = vld [vmem:[%s637 + $0xa8] sm:$0xf]
      %v2237 = vld [vmem:[%s637 + $0xac] sm:$0xf]
      %v2238 = vld [vmem:[%s637 + $0xb4] sm:$0xf]
      %v2239 = vld [vmem:[%s637 + $0xb8] sm:$0xf]
      %v2272 = vunpack.c.l.b16 %v2208
      %v2273 = vunpack.c.l.b16 %v2209
      %v2274 = vunpack.c.l.b16 %v2210
      %v2275 = vunpack.c.l.b16 %v2211
      %v2276 = vunpack.c.l.b16 %v2212
      %v2277 = vunpack.c.l.b16 %v2213
      %v2278 = vunpack.c.l.b16 %v2214
      %v2279 = vunpack.c.l.b16 %v2215
      %v2280 = vunpack.c.l.b16 %v2216
      %v2281 = vunpack.c.l.b16 %v2217
      %v2282 = vunpack.c.l.b16 %v2218
      %v2283 = vunpack.c.l.b16 %v2219
      %v2284 = vunpack.c.l.b16 %v2220
      %v2285 = vunpack.c.l.b16 %v2221
      %v2286 = vunpack.c.l.b16 %v2222
      %v2287 = vunpack.c.l.b16 %v2223
      %v2288 = vunpack.c.l.b16 %v2224
      %v2289 = vunpack.c.l.b16 %v2225
      %v2290 = vunpack.c.l.b16 %v2226
      %v2291 = vunpack.c.l.b16 %v2227
      %v2292 = vunpack.c.l.b16 %v2228
      %v2293 = vunpack.c.l.b16 %v2229
      %v2294 = vunpack.c.l.b16 %v2230
      %v2295 = vunpack.c.l.b16 %v2231
      %v2296 = vunpack.c.l.b16 %v2232
      %v2297 = vunpack.c.l.b16 %v2233
      %v2298 = vunpack.c.l.b16 %v2234
      %v2299 = vunpack.c.l.b16 %v2235
      %v2300 = vunpack.c.l.b16 %v2236
      %v2301 = vunpack.c.l.b16 %v2237
      %v2302 = vunpack.c.l.b16 %v2238
      %v2303 = vunpack.c.l.b16 %v2239
      %v2304 = vpack.c.b16 %v2273, %v2272
      %v2305 = vpack.c.b16 %v2275, %v2274
      %v2306 = vpack.c.b16 %v2277, %v2276
      %v2307 = vpack.c.b16 %v2279, %v2278
      %v2308 = vpack.c.b16 %v2281, %v2280
      %v2309 = vpack.c.b16 %v2283, %v2282
      %v2310 = vpack.c.b16 %v2285, %v2284
      %v2311 = vpack.c.b16 %v2287, %v2286
      %v2312 = vpack.c.b16 %v2289, %v2288
      %v2313 = vpack.c.b16 %v2291, %v2290
      %v2314 = vpack.c.b16 %v2293, %v2292
      %v2315 = vpack.c.b16 %v2295, %v2294
      %v2316 = vpack.c.b16 %v2297, %v2296
      %v2317 = vpack.c.b16 %v2299, %v2298
      %v2318 = vpack.c.b16 %v2301, %v2300
      %v2319 = vpack.c.b16 %v2303, %v2302
      %v2321 = vsel %vm1247, %v2304, 0
      %v2324 = vsel %vm1247, %v2305, 0
      %v2327 = vsel %vm1247, %v2306, 0
      %v2330 = vsel %vm1247, %v2307, 0
      %v2333 = vsel %vm1247, %v2308, 0
      %v2336 = vsel %vm1247, %v2309, 0
      %v2339 = vsel %vm1247, %v2310, 0
      %v2342 = vsel %vm1247, %v2311, 0
      %v2345 = vsel %vm1247, %v2312, 0
      %v2348 = vsel %vm1247, %v2313, 0
      %v2351 = vsel %vm1247, %v2314, 0
      %v2354 = vsel %vm1247, %v2315, 0
      %v2357 = vsel %vm1247, %v2316, 0
      %v2360 = vsel %vm1247, %v2317, 0
      %v2363 = vsel %vm1247, %v2318, 0
      %v2366 = vsel %vm1247, %v2319, 0
      %v2369 = vsel %vm1296, %v758, 0
      %2371 = vmatprep.subr.bf16.mxu0 0
      %2372 = vmatpush1.bf16.msra.mxu0 %v2369
      %2373 = vmatprep.subr.bf16.mxu0 0
      %2374 = vmatpush1.bf16.msra.mxu0 0
      %2375 = vmatprep.subr.bf16.mxu0 0
      %2376 = vmatpush1.bf16.msra.mxu0 0
      %2377 = vmatprep.subr.bf16.mxu0 0
      %2378 = vmatpush1.bf16.msra.mxu0 0
      %2379 = vmatprep.subr.bf16.mxu0 0
      %2380 = vmatpush1.bf16.msra.mxu0 0
      %2381 = vmatprep.subr.bf16.mxu0 0
      %2382 = vmatpush1.bf16.msra.mxu0 0
      %2383 = vmatprep.subr.bf16.mxu0 0
      %2384 = vmatpush1.bf16.msra.mxu0 0
      %2385 = vmatprep.subr.bf16.mxu0 0
      %2386 = vmatpush1.bf16.msra.mxu0 0
      %2387 = vmatprep.subr.bf16.mxu0 0
      %2388 = vmatpush1.bf16.msra.mxu0 0
      %2389 = vmatprep.subr.bf16.mxu0 0
      %2390 = vmatpush1.bf16.msra.mxu0 0
      %2391 = vmatprep.subr.bf16.mxu0 0
      %2392 = vmatpush1.bf16.msra.mxu0 0
      %2393 = vmatprep.subr.bf16.mxu0 0
      %2394 = vmatpush1.bf16.msra.mxu0 0
      %2395 = vmatprep.subr.bf16.mxu0 0
      %2396 = vmatpush1.bf16.msra.mxu0 0
      %2397 = vmatprep.subr.bf16.mxu0 0
      %2398 = vmatpush1.bf16.msra.mxu0 0
      %2399 = vmatprep.subr.bf16.mxu0 0
      %2400 = vmatpush1.bf16.msra.mxu0 0
      %2401 = vmatprep.subr.bf16.mxu0 0
      %2402 = vmatpush1.bf16.msra.mxu0 0
      %2403 = vmatprep.mubr.bf16.mxu0 0
      %2404 = vmatmul.mubr.bf16.gmra.mrb[0].mxu0 %v2321
      %v2405 = vpop.f32.mrb[0].mxu0
      %v2406 = vadd.f32 0.0, %v2405
      %v2407 = vpop.f32.mrb[0].mxu0
      %v2408 = vpop.f32.mrb[0].mxu0
      %v2409 = vadd.f32 0.0, %v2408
      %v2410 = vpop.f32.mrb[0].mxu0
      %2411 = vmatprep.mubr.bf16.mxu0 0
      %2412 = vmatmul.mubr.bf16.gmra.mrb[0].mxu0 %v2324
      %v2413 = vpop.f32.mrb[0].mxu0
      %v2414 = vadd.f32 0.0, %v2413
      %v2415 = vpop.f32.mrb[0].mxu0
      %v2416 = vpop.f32.mrb[0].mxu0
      %v2417 = vadd.f32 0.0, %v2416
      %v2418 = vpop.f32.mrb[0].mxu0
      %2419 = vmatprep.mubr.bf16.mxu0 0
      %2420 = vmatmul.mubr.bf16.gmra.mrb[0].mxu0 %v2327
      %v2421 = vpop.f32.mrb[0].mxu0
      %v2422 = vadd.f32 0.0, %v2421
      %v2423 = vpop.f32.mrb[0].mxu0
      %v2424 = vpop.f32.mrb[0].mxu0
      %v2425 = vadd.f32 0.0, %v2424
      %v2426 = vpop.f32.mrb[0].mxu0
      %2427 = vmatprep.mubr.bf16.mxu0 0
      %2428 = vmatmul.mubr.bf16.gmra.mrb[0].mxu0 %v2330
      %v2429 = vpop.f32.mrb[0].mxu0
      %v2430 = vadd.f32 0.0, %v2429
      %v2431 = vpop.f32.mrb[0].mxu0
      %v2432 = vpop.f32.mrb[0].mxu0
      %v2433 = vadd.f32 0.0, %v2432
      %v2434 = vpop.f32.mrb[0].mxu0
      %2435 = vmatprep.mubr.bf16.mxu0 0
      %2436 = vmatmul.mubr.bf16.gmra.mrb[0].mxu0 %v2333
      %v2437 = vpop.f32.mrb[0].mxu0
      %v2438 = vadd.f32 0.0, %v2437
      %v2439 = vpop.f32.mrb[0].mxu0
      %v2440 = vpop.f32.mrb[0].mxu0
      %v2441 = vadd.f32 0.0, %v2440
      %v2442 = vpop.f32.mrb[0].mxu0
      %2443 = vmatprep.mubr.bf16.mxu0 0
      %2444 = vmatmul.mubr.bf16.gmra.mrb[0].mxu0 %v2336
      %v2445 = vpop.f32.mrb[0].mxu0
      %v2446 = vadd.f32 0.0, %v2445
      %v2447 = vpop.f32.mrb[0].mxu0
      %v2448 = vpop.f32.mrb[0].mxu0
      %v2449 = vadd.f32 0.0, %v2448
      %v2450 = vpop.f32.mrb[0].mxu0
      %2451 = vmatprep.mubr.bf16.mxu0 0
      %2452 = vmatmul.mubr.bf16.gmra.mrb[0].mxu0 %v2339
      %v2453 = vpop.f32.mrb[0].mxu0
      %v2454 = vadd.f32 0.0, %v2453
      %v2455 = vpop.f32.mrb[0].mxu0
      %v2456 = vpop.f32.mrb[0].mxu0
      %v2457 = vadd.f32 0.0, %v2456
      %v2458 = vpop.f32.mrb[0].mxu0
      %2459 = vmatprep.mubr.bf16.mxu0 0
      %2460 = vmatmul.mubr.bf16.gmra.mrb[0].mxu0 %v2342
      %v2461 = vpop.f32.mrb[0].mxu0
      %v2462 = vadd.f32 0.0, %v2461
      %v2463 = vpop.f32.mrb[0].mxu0
      %v2464 = vpop.f32.mrb[0].mxu0
      %v2465 = vadd.f32 0.0, %v2464
      %v2466 = vpop.f32.mrb[0].mxu0
      %2467 = vmatprep.mubr.bf16.mxu0 0
      %2468 = vmatmul.mubr.bf16.gmra.mrb[0].mxu0 %v2345
      %v2469 = vpop.f32.mrb[0].mxu0
      %v2470 = vadd.f32 0.0, %v2469
      %v2471 = vpop.f32.mrb[0].mxu0
      %v2472 = vpop.f32.mrb[0].mxu0
      %v2473 = vadd.f32 0.0, %v2472
      %v2474 = vpop.f32.mrb[0].mxu0
      %2475 = vmatprep.mubr.bf16.mxu0 0
      %2476 = vmatmul.mubr.bf16.gmra.mrb[0].mxu0 %v2348
      %v2477 = vpop.f32.mrb[0].mxu0
      %v2478 = vadd.f32 0.0, %v2477
      %v2479 = vpop.f32.mrb[0].mxu0
      %v2480 = vpop.f32.mrb[0].mxu0
      %v2481 = vadd.f32 0.0, %v2480
      %v2482 = vpop.f32.mrb[0].mxu0
      %2483 = vmatprep.mubr.bf16.mxu0 0
      %2484 = vmatmul.mubr.bf16.gmra.mrb[0].mxu0 %v2351
      %v2485 = vpop.f32.mrb[0].mxu0
      %v2486 = vadd.f32 0.0, %v2485
      %v2487 = vpop.f32.mrb[0].mxu0
      %v2488 = vpop.f32.mrb[0].mxu0
      %v2489 = vadd.f32 0.0, %v2488
      %v2490 = vpop.f32.mrb[0].mxu0
      %2491 = vmatprep.mubr.bf16.mxu0 0
      %2492 = vmatmul.mubr.bf16.gmra.mrb[0].mxu0 %v2354
      %v2493 = vpop.f32.mrb[0].mxu0
      %v2494 = vadd.f32 0.0, %v2493
      %v2495 = vpop.f32.mrb[0].mxu0
      %v2496 = vpop.f32.mrb[0].mxu0
      %v2497 = vadd.f32 0.0, %v2496
      %v2498 = vpop.f32.mrb[0].mxu0
      %2499 = vmatprep.mubr.bf16.mxu0 0
      %2500 = vmatmul.mubr.bf16.gmra.mrb[0].mxu0 %v2357
      %v2501 = vpop.f32.mrb[0].mxu0
      %v2502 = vadd.f32 0.0, %v2501
      %v2503 = vpop.f32.mrb[0].mxu0
      %v2504 = vpop.f32.mrb[0].mxu0
      %v2505 = vadd.f32 0.0, %v2504
      %v2506 = vpop.f32.mrb[0].mxu0
      %2507 = vmatprep.mubr.bf16.mxu0 0
      %2508 = vmatmul.mubr.bf16.gmra.mrb[0].mxu0 %v2360
      %v2509 = vpop.f32.mrb[0].mxu0
      %v2510 = vadd.f32 0.0, %v2509
      %v2511 = vpop.f32.mrb[0].mxu0
      %v2512 = vpop.f32.mrb[0].mxu0
      %v2513 = vadd.f32 0.0, %v2512
      %v2514 = vpop.f32.mrb[0].mxu0
      %2515 = vmatprep.mubr.bf16.mxu0 0
      %2516 = vmatmul.mubr.bf16.gmra.mrb[0].mxu0 %v2363
      %v2517 = vpop.f32.mrb[0].mxu0
      %v2518 = vadd.f32 0.0, %v2517
      %v2519 = vpop.f32.mrb[0].mxu0
      %v2520 = vpop.f32.mrb[0].mxu0
      %v2521 = vadd.f32 0.0, %v2520
      %v2522 = vpop.f32.mrb[0].mxu0
      %2523 = vmatprep.mubr.bf16.mxu0 0
      %2524 = vmatmul.mubr.bf16.gmra.mrb[0].mxu0 %v2366
      %v2525 = vpop.f32.mrb[0].mxu0
      %v2526 = vadd.f32 0.0, %v2525
      %v2527 = vpop.f32.mrb[0].mxu0
      %v2528 = vpop.f32.mrb[0].mxu0
      %v2529 = vadd.f32 0.0, %v2528
      %v2530 = vpop.f32.mrb[0].mxu0
      %2531 = vdwg.mxu0
      %v2532 = vadd.f32 %v2176, %v2406
      %v2533 = vadd.f32 %v2177, %v2409
      %v2534 = vadd.f32 %v2178, %v2414
      %v2535 = vadd.f32 %v2179, %v2417
      %v2536 = vadd.f32 %v2180, %v2422
      %v2537 = vadd.f32 %v2181, %v2425
      %v2538 = vadd.f32 %v2182, %v2430
      %v2539 = vadd.f32 %v2183, %v2433
      %v2540 = vadd.f32 %v2184, %v2438
      %v2541 = vadd.f32 %v2185, %v2441
      %v2542 = vadd.f32 %v2186, %v2446
      %v2543 = vadd.f32 %v2187, %v2449
      %v2544 = vadd.f32 %v2188, %v2454
      %v2545 = vadd.f32 %v2189, %v2457
      %v2546 = vadd.f32 %v2190, %v2462
      %v2547 = vadd.f32 %v2191, %v2465
      %v2548 = vadd.f32 %v2192, %v2470
      %v2549 = vadd.f32 %v2193, %v2473
      %v2550 = vadd.f32 %v2194, %v2478
      %v2551 = vadd.f32 %v2195, %v2481
      %v2552 = vadd.f32 %v2196, %v2486
      %v2553 = vadd.f32 %v2197, %v2489
      %v2554 = vadd.f32 %v2198, %v2494
      %v2555 = vadd.f32 %v2199, %v2497
      %v2556 = vadd.f32 %v2200, %v2502
      %v2557 = vadd.f32 %v2201, %v2505
      %v2558 = vadd.f32 %v2202, %v2510
      %v2559 = vadd.f32 %v2203, %v2513
      %v2560 = vadd.f32 %v2204, %v2518
      %v2561 = vadd.f32 %v2205, %v2521
      %v2562 = vadd.f32 %v2206, %v2526
      %v2563 = vadd.f32 %v2207, %v2529
      %v2564 = vld [vmem:[%s637] sm:$0xf]
      %v2565 = vld [vmem:[%s637 + $0x4] sm:$0xf]
      %v2566 = vld [vmem:[%s637 + $0x8] sm:$0x1]
      %v2567 = vld [vmem:[%s637 + $0xc] sm:$0xf]
      %v2568 = vld [vmem:[%s637 + $0x10] sm:$0xf]
      %v2569 = vld [vmem:[%s637 + $0x14] sm:$0x1]
      %v2570 = vld [vmem:[%s637 + $0x18] sm:$0xf]
      %v2571 = vld [vmem:[%s637 + $0x1c] sm:$0xf]
      %v2572 = vld [vmem:[%s637 + $0x20] sm:$0x1]
      %v2573 = vld [vmem:[%s637 + $0x24] sm:$0xf]
      %v2574 = vld [vmem:[%s637 + $0x28] sm:$0xf]
      %v2575 = vld [vmem:[%s637 + $0x2c] sm:$0x1]
      %v2576 = vld [vmem:[%s637 + $0x30] sm:$0xf]
      %v2577 = vld [vmem:[%s637 + $0x34] sm:$0xf]
      %v2578 = vld [vmem:[%s637 + $0x38] sm:$0x1]
      %v2579 = vld [vmem:[%s637 + $0x3c] sm:$0xf]
      %v2580 = vld [vmem:[%s637 + $0x40] sm:$0xf]
      %v2581 = vld [vmem:[%s637 + $0x44] sm:$0x1]
      %v2582 = vld [vmem:[%s637 + $0x48] sm:$0xf]
      %v2583 = vld [vmem:[%s637 + $0x4c] sm:$0xf]
      %v2584 = vld [vmem:[%s637 + $0x50] sm:$0x1]
      %v2585 = vld [vmem:[%s637 + $0x54] sm:$0xf]
      %v2586 = vld [vmem:[%s637 + $0x58] sm:$0xf]
      %v2587 = vld [vmem:[%s637 + $0x5c] sm:$0x1]
      %v2588 = vld [vmem:[%s637 + $0x60] sm:$0xf]
      %v2589 = vld [vmem:[%s637 + $0x64] sm:$0xf]
      %v2590 = vld [vmem:[%s637 + $0x68] sm:$0x1]
      %v2591 = vld [vmem:[%s637 + $0x6c] sm:$0xf]
      %v2592 = vld [vmem:[%s637 + $0x70] sm:$0xf]
      %v2593 = vld [vmem:[%s637 + $0x74] sm:$0x1]
      %v2594 = vld [vmem:[%s637 + $0x78] sm:$0xf]
      %v2595 = vld [vmem:[%s637 + $0x7c] sm:$0xf]
      %v2596 = vld [vmem:[%s637 + $0x80] sm:$0x1]
      %v2597 = vld [vmem:[%s637 + $0x84] sm:$0xf]
      %v2598 = vld [vmem:[%s637 + $0x88] sm:$0xf]
      %v2599 = vld [vmem:[%s637 + $0x8c] sm:$0x1]
      %v2600 = vld [vmem:[%s637 + $0x90] sm:$0xf]
      %v2601 = vld [vmem:[%s637 + $0x94] sm:$0xf]
      %v2602 = vld [vmem:[%s637 + $0x98] sm:$0x1]
      %v2603 = vld [vmem:[%s637 + $0x9c] sm:$0xf]
      %v2604 = vld [vmem:[%s637 + $0xa0] sm:$0xf]
      %v2605 = vld [vmem:[%s637 + $0xa4] sm:$0x1]
      %v2606 = vld [vmem:[%s637 + $0xa8] sm:$0xf]
      %v2607 = vld [vmem:[%s637 + $0xac] sm:$0xf]
      %v2608 = vld [vmem:[%s637 + $0xb0] sm:$0x1]
      %v2609 = vld [vmem:[%s637 + $0xb4] sm:$0xf]
      %v2610 = vld [vmem:[%s637 + $0xb8] sm:$0xf]
      %v2611 = vld [vmem:[%s637 + $0xbc] sm:$0x1]
      %v2613 = vshrl.u32 %v2564, 16
      %v2615 = vrot.slane %v2613, 4
      %v2616 = vshll.u32 %v2564, 16
      %v2618 = vrot.slane %v2616, 5
      %v2619 = vor.u32 %v2615, %v2618
      %v2620 = vrot.slane %v2619, 4
      %v2622 = vshll.u32 %v2565, 16
      %v2624 = vrot.slane %v2622, 5
      %v2625 = vsel %vm814, %v2620, %v2624
      %v2626 = vshrl.u32 %v2565, 16
      %v2628 = vrot.slane %v2626, 4
      %v2629 = vor.u32 %v2628, %v2624
      %v2630 = vrot.slane %v2629, 4
      %v2632 = vshll.u32 %v2566, 16
      %v2634 = vrot.slane %v2632, 5
      %v2635 = vsel %vm814, %v2630, %v2634
      %v2637 = vshrl.u32 %v2567, 16
      %v2639 = vrot.slane %v2637, 4
      %v2640 = vshll.u32 %v2567, 16
      %v2642 = vrot.slane %v2640, 5
      %v2643 = vor.u32 %v2639, %v2642
      %v2644 = vrot.slane %v2643, 4
      %v2646 = vshll.u32 %v2568, 16
      %v2648 = vrot.slane %v2646, 5
      %v2649 = vsel %vm814, %v2644, %v2648
      %v2650 = vshrl.u32 %v2568, 16
      %v2652 = vrot.slane %v2650, 4
      %v2653 = vor.u32 %v2652, %v2648
      %v2654 = vrot.slane %v2653, 4
      %v2656 = vshll.u32 %v2569, 16
      %v2658 = vrot.slane %v2656, 5
      %v2659 = vsel %vm814, %v2654, %v2658
      %v2661 = vshrl.u32 %v2570, 16
      %v2663 = vrot.slane %v2661, 4
      %v2664 = vshll.u32 %v2570, 16
      %v2666 = vrot.slane %v2664, 5
      %v2667 = vor.u32 %v2663, %v2666
      %v2668 = vrot.slane %v2667, 4
      %v2670 = vshll.u32 %v2571, 16
      %v2672 = vrot.slane %v2670, 5
      %v2673 = vsel %vm814, %v2668, %v2672
      %v2674 = vshrl.u32 %v2571, 16
      %v2676 = vrot.slane %v2674, 4
      %v2677 = vor.u32 %v2676, %v2672
      %v2678 = vrot.slane %v2677, 4
      %v2680 = vshll.u32 %v2572, 16
      %v2682 = vrot.slane %v2680, 5
      %v2683 = vsel %vm814, %v2678, %v2682
      %v2685 = vshrl.u32 %v2573, 16
      %v2687 = vrot.slane %v2685, 4
      %v2688 = vshll.u32 %v2573, 16
      %v2690 = vrot.slane %v2688, 5
      %v2691 = vor.u32 %v2687, %v2690
      %v2692 = vrot.slane %v2691, 4
      %v2694 = vshll.u32 %v2574, 16
      %v2696 = vrot.slane %v2694, 5
      %v2697 = vsel %vm814, %v2692, %v2696
      %v2698 = vshrl.u32 %v2574, 16
      %v2700 = vrot.slane %v2698, 4
      %v2701 = vor.u32 %v2700, %v2696
      %v2702 = vrot.slane %v2701, 4
      %v2704 = vshll.u32 %v2575, 16
      %v2706 = vrot.slane %v2704, 5
      %v2707 = vsel %vm814, %v2702, %v2706
      %v2709 = vshrl.u32 %v2576, 16
      %v2711 = vrot.slane %v2709, 4
      %v2712 = vshll.u32 %v2576, 16
      %v2714 = vrot.slane %v2712, 5
      %v2715 = vor.u32 %v2711, %v2714
      %v2716 = vrot.slane %v2715, 4
      %v2718 = vshll.u32 %v2577, 16
      %v2720 = vrot.slane %v2718, 5
      %v2721 = vsel %vm814, %v2716, %v2720
      %v2722 = vshrl.u32 %v2577, 16
      %v2724 = vrot.slane %v2722, 4
      %v2725 = vor.u32 %v2724, %v2720
      %v2726 = vrot.slane %v2725, 4
      %v2728 = vshll.u32 %v2578, 16
      %v2730 = vrot.slane %v2728, 5
      %v2731 = vsel %vm814, %v2726, %v2730
      %v2733 = vshrl.u32 %v2579, 16
      %v2735 = vrot.slane %v2733, 4
      %v2736 = vshll.u32 %v2579, 16
      %v2738 = vrot.slane %v2736, 5
      %v2739 = vor.u32 %v2735, %v2738
      %v2740 = vrot.slane %v2739, 4
      %v2742 = vshll.u32 %v2580, 16
      %v2744 = vrot.slane %v2742, 5
      %v2745 = vsel %vm814, %v2740, %v2744
      %v2746 = vshrl.u32 %v2580, 16
      %v2748 = vrot.slane %v2746, 4
      %v2749 = vor.u32 %v2748, %v2744
      %v2750 = vrot.slane %v2749, 4
      %v2752 = vshll.u32 %v2581, 16
      %v2754 = vrot.slane %v2752, 5
      %v2755 = vsel %vm814, %v2750, %v2754
      %v2757 = vshrl.u32 %v2582, 16
      %v2759 = vrot.slane %v2757, 4
      %v2760 = vshll.u32 %v2582, 16
      %v2762 = vrot.slane %v2760, 5
      %v2763 = vor.u32 %v2759, %v2762
      %v2764 = vrot.slane %v2763, 4
      %v2766 = vshll.u32 %v2583, 16
      %v2768 = vrot.slane %v2766, 5
      %v2769 = vsel %vm814, %v2764, %v2768
      %v2770 = vshrl.u32 %v2583, 16
      %v2772 = vrot.slane %v2770, 4
      %v2773 = vor.u32 %v2772, %v2768
      %v2774 = vrot.slane %v2773, 4
      %v2776 = vshll.u32 %v2584, 16
      %v2778 = vrot.slane %v2776, 5
      %v2779 = vsel %vm814, %v2774, %v2778
      %v2781 = vshrl.u32 %v2585, 16
      %v2783 = vrot.slane %v2781, 4
      %v2784 = vshll.u32 %v2585, 16
      %v2786 = vrot.slane %v2784, 5
      %v2787 = vor.u32 %v2783, %v2786
      %v2788 = vrot.slane %v2787, 4
      %v2790 = vshll.u32 %v2586, 16
      %v2792 = vrot.slane %v2790, 5
      %v2793 = vsel %vm814, %v2788, %v2792
      %v2794 = vshrl.u32 %v2586, 16
      %v2796 = vrot.slane %v2794, 4
      %v2797 = vor.u32 %v2796, %v2792
      %v2798 = vrot.slane %v2797, 4
      %v2800 = vshll.u32 %v2587, 16
      %v2802 = vrot.slane %v2800, 5
      %v2803 = vsel %vm814, %v2798, %v2802
      %v2805 = vshrl.u32 %v2588, 16
      %v2807 = vrot.slane %v2805, 4
      %v2808 = vshll.u32 %v2588, 16
      %v2810 = vrot.slane %v2808, 5
      %v2811 = vor.u32 %v2807, %v2810
      %v2812 = vrot.slane %v2811, 4
      %v2814 = vshll.u32 %v2589, 16
      %v2816 = vrot.slane %v2814, 5
      %v2817 = vsel %vm814, %v2812, %v2816
      %v2818 = vshrl.u32 %v2589, 16
      %v2820 = vrot.slane %v2818, 4
      %v2821 = vor.u32 %v2820, %v2816
      %v2822 = vrot.slane %v2821, 4
      %v2824 = vshll.u32 %v2590, 16
      %v2826 = vrot.slane %v2824, 5
      %v2827 = vsel %vm814, %v2822, %v2826
      %v2829 = vshrl.u32 %v2591, 16
      %v2831 = vrot.slane %v2829, 4
      %v2832 = vshll.u32 %v2591, 16
      %v2834 = vrot.slane %v2832, 5
      %v2835 = vor.u32 %v2831, %v2834
      %v2836 = vrot.slane %v2835, 4
      %v2838 = vshll.u32 %v2592, 16
      %v2840 = vrot.slane %v2838, 5
      %v2841 = vsel %vm814, %v2836, %v2840
      %v2842 = vshrl.u32 %v2592, 16
      %v2844 = vrot.slane %v2842, 4
      %v2845 = vor.u32 %v2844, %v2840
      %v2846 = vrot.slane %v2845, 4
      %v2848 = vshll.u32 %v2593, 16
      %v2850 = vrot.slane %v2848, 5
      %v2851 = vsel %vm814, %v2846, %v2850
      %v2853 = vshrl.u32 %v2594, 16
      %v2855 = vrot.slane %v2853, 4
      %v2856 = vshll.u32 %v2594, 16
      %v2858 = vrot.slane %v2856, 5
      %v2859 = vor.u32 %v2855, %v2858
      %v2860 = vrot.slane %v2859, 4
      %v2862 = vshll.u32 %v2595, 16
      %v2864 = vrot.slane %v2862, 5
      %v2865 = vsel %vm814, %v2860, %v2864
      %v2866 = vshrl.u32 %v2595, 16
      %v2868 = vrot.slane %v2866, 4
      %v2869 = vor.u32 %v2868, %v2864
      %v2870 = vrot.slane %v2869, 4
      %v2872 = vshll.u32 %v2596, 16
      %v2874 = vrot.slane %v2872, 5
      %v2875 = vsel %vm814, %v2870, %v2874
      %v2877 = vshrl.u32 %v2597, 16
      %v2879 = vrot.slane %v2877, 4
      %v2880 = vshll.u32 %v2597, 16
      %v2882 = vrot.slane %v2880, 5
      %v2883 = vor.u32 %v2879, %v2882
      %v2884 = vrot.slane %v2883, 4
      %v2886 = vshll.u32 %v2598, 16
      %v2888 = vrot.slane %v2886, 5
      %v2889 = vsel %vm814, %v2884, %v2888
      %v2890 = vshrl.u32 %v2598, 16
      %v2892 = vrot.slane %v2890, 4
      %v2893 = vor.u32 %v2892, %v2888
      %v2894 = vrot.slane %v2893, 4
      %v2896 = vshll.u32 %v2599, 16
      %v2898 = vrot.slane %v2896, 5
      %v2899 = vsel %vm814, %v2894, %v2898
      %v2901 = vshrl.u32 %v2600, 16
      %v2903 = vrot.slane %v2901, 4
      %v2904 = vshll.u32 %v2600, 16
      %v2906 = vrot.slane %v2904, 5
      %v2907 = vor.u32 %v2903, %v2906
      %v2908 = vrot.slane %v2907, 4
      %v2910 = vshll.u32 %v2601, 16
      %v2912 = vrot.slane %v2910, 5
      %v2913 = vsel %vm814, %v2908, %v2912
      %v2914 = vshrl.u32 %v2601, 16
      %v2916 = vrot.slane %v2914, 4
      %v2917 = vor.u32 %v2916, %v2912
      %v2918 = vrot.slane %v2917, 4
      %v2920 = vshll.u32 %v2602, 16
      %v2922 = vrot.slane %v2920, 5
      %v2923 = vsel %vm814, %v2918, %v2922
      %v2925 = vshrl.u32 %v2603, 16
      %v2927 = vrot.slane %v2925, 4
      %v2928 = vshll.u32 %v2603, 16
      %v2930 = vrot.slane %v2928, 5
      %v2931 = vor.u32 %v2927, %v2930
      %v2932 = vrot.slane %v2931, 4
      %v2934 = vshll.u32 %v2604, 16
      %v2936 = vrot.slane %v2934, 5
      %v2937 = vsel %vm814, %v2932, %v2936
      %v2938 = vshrl.u32 %v2604, 16
      %v2940 = vrot.slane %v2938, 4
      %v2941 = vor.u32 %v2940, %v2936
      %v2942 = vrot.slane %v2941, 4
      %v2944 = vshll.u32 %v2605, 16
      %v2946 = vrot.slane %v2944, 5
      %v2947 = vsel %vm814, %v2942, %v2946
      %v2949 = vshrl.u32 %v2606, 16
      %v2951 = vrot.slane %v2949, 4
      %v2952 = vshll.u32 %v2606, 16
      %v2954 = vrot.slane %v2952, 5
      %v2955 = vor.u32 %v2951, %v2954
      %v2956 = vrot.slane %v2955, 4
      %v2958 = vshll.u32 %v2607, 16
      %v2960 = vrot.slane %v2958, 5
      %v2961 = vsel %vm814, %v2956, %v2960
      %v2962 = vshrl.u32 %v2607, 16
      %v2964 = vrot.slane %v2962, 4
      %v2965 = vor.u32 %v2964, %v2960
      %v2966 = vrot.slane %v2965, 4
      %v2968 = vshll.u32 %v2608, 16
      %v2970 = vrot.slane %v2968, 5
      %v2971 = vsel %vm814, %v2966, %v2970
      %v2973 = vshrl.u32 %v2609, 16
      %v2975 = vrot.slane %v2973, 4
      %v2976 = vshll.u32 %v2609, 16
      %v2978 = vrot.slane %v2976, 5
      %v2979 = vor.u32 %v2975, %v2978
      %v2980 = vrot.slane %v2979, 4
      %v2982 = vshll.u32 %v2610, 16
      %v2984 = vrot.slane %v2982, 5
      %v2985 = vsel %vm814, %v2980, %v2984
      %v2986 = vshrl.u32 %v2610, 16
      %v2988 = vrot.slane %v2986, 4
      %v2989 = vor.u32 %v2988, %v2984
      %v2990 = vrot.slane %v2989, 4
      %v2992 = vshll.u32 %v2611, 16
      %v2994 = vrot.slane %v2992, 5
      %v2995 = vsel %vm814, %v2990, %v2994
      %v2996 = vunpack.c.l.b16 %v2625
      %v2997 = vunpack.c.l.b16 %v2635
      %v2998 = vunpack.c.l.b16 %v2649
      %v2999 = vunpack.c.l.b16 %v2659
      %v3000 = vunpack.c.l.b16 %v2673
      %v3001 = vunpack.c.l.b16 %v2683
      %v3002 = vunpack.c.l.b16 %v2697
      %v3003 = vunpack.c.l.b16 %v2707
      %v3004 = vunpack.c.l.b16 %v2721
      %v3005 = vunpack.c.l.b16 %v2731
      %v3006 = vunpack.c.l.b16 %v2745
      %v3007 = vunpack.c.l.b16 %v2755
      %v3008 = vunpack.c.l.b16 %v2769
      %v3009 = vunpack.c.l.b16 %v2779
      %v3010 = vunpack.c.l.b16 %v2793
      %v3011 = vunpack.c.l.b16 %v2803
      %v3012 = vunpack.c.l.b16 %v2817
      %v3013 = vunpack.c.l.b16 %v2827
      %v3014 = vunpack.c.l.b16 %v2841
      %v3015 = vunpack.c.l.b16 %v2851
      %v3016 = vunpack.c.l.b16 %v2865
      %v3017 = vunpack.c.l.b16 %v2875
      %v3018 = vunpack.c.l.b16 %v2889
      %v3019 = vunpack.c.l.b16 %v2899
      %v3020 = vunpack.c.l.b16 %v2913
      %v3021 = vunpack.c.l.b16 %v2923
      %v3022 = vunpack.c.l.b16 %v2937
      %v3023 = vunpack.c.l.b16 %v2947
      %v3024 = vunpack.c.l.b16 %v2961
      %v3025 = vunpack.c.l.b16 %v2971
      %v3026 = vunpack.c.l.b16 %v2985
      %v3027 = vunpack.c.l.b16 %v2995
      %v3028 = vpack.c.b16 %v2997, %v2996
      %v3029 = vpack.c.b16 %v2999, %v2998
      %v3030 = vpack.c.b16 %v3001, %v3000
      %v3031 = vpack.c.b16 %v3003, %v3002
      %v3032 = vpack.c.b16 %v3005, %v3004
      %v3033 = vpack.c.b16 %v3007, %v3006
      %v3034 = vpack.c.b16 %v3009, %v3008
      %v3035 = vpack.c.b16 %v3011, %v3010
      %v3036 = vpack.c.b16 %v3013, %v3012
      %v3037 = vpack.c.b16 %v3015, %v3014
      %v3038 = vpack.c.b16 %v3017, %v3016
      %v3039 = vpack.c.b16 %v3019, %v3018
      %v3040 = vpack.c.b16 %v3021, %v3020
      %v3041 = vpack.c.b16 %v3023, %v3022
      %v3042 = vpack.c.b16 %v3025, %v3024
      %v3043 = vpack.c.b16 %v3027, %v3026
      %v3045 = vsel %vm1247, %v3028, 0
      %v3048 = vsel %vm1247, %v3029, 0
      %v3051 = vsel %vm1247, %v3030, 0
      %v3054 = vsel %vm1247, %v3031, 0
      %v3057 = vsel %vm1247, %v3032, 0
      %v3060 = vsel %vm1247, %v3033, 0
      %v3063 = vsel %vm1247, %v3034, 0
      %v3066 = vsel %vm1247, %v3035, 0
      %v3069 = vsel %vm1247, %v3036, 0
      %v3072 = vsel %vm1247, %v3037, 0
      %v3075 = vsel %vm1247, %v3038, 0
      %v3078 = vsel %vm1247, %v3039, 0
      %v3081 = vsel %vm1247, %v3040, 0
      %v3084 = vsel %vm1247, %v3041, 0
      %v3087 = vsel %vm1247, %v3042, 0
      %v3090 = vsel %vm1247, %v3043, 0
      %v3093 = vsel %vm1296, %v759, 0
      %3095 = vmatprep.subr.bf16.mxu0 0
      %3096 = vmatpush1.bf16.msra.mxu0 %v3093
      %3097 = vmatprep.subr.bf16.mxu0 0
      %3098 = vmatpush1.bf16.msra.mxu0 0
      %3099 = vmatprep.subr.bf16.mxu0 0
      %3100 = vmatpush1.bf16.msra.mxu0 0
      %3101 = vmatprep.subr.bf16.mxu0 0
      %3102 = vmatpush1.bf16.msra.mxu0 0
      %3103 = vmatprep.subr.bf16.mxu0 0
      %3104 = vmatpush1.bf16.msra.mxu0 0
      %3105 = vmatprep.subr.bf16.mxu0 0
      %3106 = vmatpush1.bf16.msra.mxu0 0
      %3107 = vmatprep.subr.bf16.mxu0 0
      %3108 = vmatpush1.bf16.msra.mxu0 0
      %3109 = vmatprep.subr.bf16.mxu0 0
      %3110 = vmatpush1.bf16.msra.mxu0 0
      %3111 = vmatprep.subr.bf16.mxu0 0
      %3112 = vmatpush1.bf16.msra.mxu0 0
      %3113 = vmatprep.subr.bf16.mxu0 0
      %3114 = vmatpush1.bf16.msra.mxu0 0
      %3115 = vmatprep.subr.bf16.mxu0 0
      %3116 = vmatpush1.bf16.msra.mxu0 0
      %3117 = vmatprep.subr.bf16.mxu0 0
      %3118 = vmatpush1.bf16.msra.mxu0 0
      %3119 = vmatprep.subr.bf16.mxu0 0
      %3120 = vmatpush1.bf16.msra.mxu0 0
      %3121 = vmatprep.subr.bf16.mxu0 0
      %3122 = vmatpush1.bf16.msra.mxu0 0
      %3123 = vmatprep.subr.bf16.mxu0 0
      %3124 = vmatpush1.bf16.msra.mxu0 0
      %3125 = vmatprep.subr.bf16.mxu0 0
      %3126 = vmatpush1.bf16.msra.mxu0 0
      %3127 = vmatprep.mubr.bf16.mxu0 0
      %3128 = vmatmul.mubr.bf16.gmra.mrb[0].mxu0 %v3045
      %v3129 = vpop.f32.mrb[0].mxu0
      %v3130 = vadd.f32 0.0, %v3129
      %v3131 = vpop.f32.mrb[0].mxu0
      %v3132 = vpop.f32.mrb[0].mxu0
      %v3133 = vadd.f32 0.0, %v3132
      %v3134 = vpop.f32.mrb[0].mxu0
      %3135 = vmatprep.mubr.bf16.mxu0 0
      %3136 = vmatmul.mubr.bf16.gmra.mrb[0].mxu0 %v3048
      %v3137 = vpop.f32.mrb[0].mxu0
      %v3138 = vadd.f32 0.0, %v3137
      %v3139 = vpop.f32.mrb[0].mxu0
      %v3140 = vpop.f32.mrb[0].mxu0
      %v3141 = vadd.f32 0.0, %v3140
      %v3142 = vpop.f32.mrb[0].mxu0
      %3143 = vmatprep.mubr.bf16.mxu0 0
      %3144 = vmatmul.mubr.bf16.gmra.mrb[0].mxu0 %v3051
      %v3145 = vpop.f32.mrb[0].mxu0
      %v3146 = vadd.f32 0.0, %v3145
      %v3147 = vpop.f32.mrb[0].mxu0
      %v3148 = vpop.f32.mrb[0].mxu0
      %v3149 = vadd.f32 0.0, %v3148
      %v3150 = vpop.f32.mrb[0].mxu0
      %3151 = vmatprep.mubr.bf16.mxu0 0
      %3152 = vmatmul.mubr.bf16.gmra.mrb[0].mxu0 %v3054
      %v3153 = vpop.f32.mrb[0].mxu0
      %v3154 = vadd.f32 0.0, %v3153
      %v3155 = vpop.f32.mrb[0].mxu0
      %v3156 = vpop.f32.mrb[0].mxu0
      %v3157 = vadd.f32 0.0, %v3156
      %v3158 = vpop.f32.mrb[0].mxu0
      %3159 = vmatprep.mubr.bf16.mxu0 0
      %3160 = vmatmul.mubr.bf16.gmra.mrb[0].mxu0 %v3057
      %v3161 = vpop.f32.mrb[0].mxu0
      %v3162 = vadd.f32 0.0, %v3161
      %v3163 = vpop.f32.mrb[0].mxu0
      %v3164 = vpop.f32.mrb[0].mxu0
      %v3165 = vadd.f32 0.0, %v3164
      %v3166 = vpop.f32.mrb[0].mxu0
      %3167 = vmatprep.mubr.bf16.mxu0 0
      %3168 = vmatmul.mubr.bf16.gmra.mrb[0].mxu0 %v3060
      %v3169 = vpop.f32.mrb[0].mxu0
      %v3170 = vadd.f32 0.0, %v3169
      %v3171 = vpop.f32.mrb[0].mxu0
      %v3172 = vpop.f32.mrb[0].mxu0
      %v3173 = vadd.f32 0.0, %v3172
      %v3174 = vpop.f32.mrb[0].mxu0
      %3175 = vmatprep.mubr.bf16.mxu0 0
      %3176 = vmatmul.mubr.bf16.gmra.mrb[0].mxu0 %v3063
      %v3177 = vpop.f32.mrb[0].mxu0
      %v3178 = vadd.f32 0.0, %v3177
      %v3179 = vpop.f32.mrb[0].mxu0
      %v3180 = vpop.f32.mrb[0].mxu0
      %v3181 = vadd.f32 0.0, %v3180
      %v3182 = vpop.f32.mrb[0].mxu0
      %3183 = vmatprep.mubr.bf16.mxu0 0
      %3184 = vmatmul.mubr.bf16.gmra.mrb[0].mxu0 %v3066
      %v3185 = vpop.f32.mrb[0].mxu0
      %v3186 = vadd.f32 0.0, %v3185
      %v3187 = vpop.f32.mrb[0].mxu0
      %v3188 = vpop.f32.mrb[0].mxu0
      %v3189 = vadd.f32 0.0, %v3188
      %v3190 = vpop.f32.mrb[0].mxu0
      %3191 = vmatprep.mubr.bf16.mxu0 0
      %3192 = vmatmul.mubr.bf16.gmra.mrb[0].mxu0 %v3069
      %v3193 = vpop.f32.mrb[0].mxu0
      %v3194 = vadd.f32 0.0, %v3193
      %v3195 = vpop.f32.mrb[0].mxu0
      %v3196 = vpop.f32.mrb[0].mxu0
      %v3197 = vadd.f32 0.0, %v3196
      %v3198 = vpop.f32.mrb[0].mxu0
      %3199 = vmatprep.mubr.bf16.mxu0 0
      %3200 = vmatmul.mubr.bf16.gmra.mrb[0].mxu0 %v3072
      %v3201 = vpop.f32.mrb[0].mxu0
      %v3202 = vadd.f32 0.0, %v3201
      %v3203 = vpop.f32.mrb[0].mxu0
      %v3204 = vpop.f32.mrb[0].mxu0
      %v3205 = vadd.f32 0.0, %v3204
      %v3206 = vpop.f32.mrb[0].mxu0
      %3207 = vmatprep.mubr.bf16.mxu0 0
      %3208 = vmatmul.mubr.bf16.gmra.mrb[0].mxu0 %v3075
      %v3209 = vpop.f32.mrb[0].mxu0
      %v3210 = vadd.f32 0.0, %v3209
      %v3211 = vpop.f32.mrb[0].mxu0
      %v3212 = vpop.f32.mrb[0].mxu0
      %v3213 = vadd.f32 0.0, %v3212
      %v3214 = vpop.f32.mrb[0].mxu0
      %3215 = vmatprep.mubr.bf16.mxu0 0
      %3216 = vmatmul.mubr.bf16.gmra.mrb[0].mxu0 %v3078
      %v3217 = vpop.f32.mrb[0].mxu0
      %v3218 = vadd.f32 0.0, %v3217
      %v3219 = vpop.f32.mrb[0].mxu0
      %v3220 = vpop.f32.mrb[0].mxu0
      %v3221 = vadd.f32 0.0, %v3220
      %v3222 = vpop.f32.mrb[0].mxu0
      %3223 = vmatprep.mubr.bf16.mxu0 0
      %3224 = vmatmul.mubr.bf16.gmra.mrb[0].mxu0 %v3081
      %v3225 = vpop.f32.mrb[0].mxu0
      %v3226 = vadd.f32 0.0, %v3225
      %v3227 = vpop.f32.mrb[0].mxu0
      %v3228 = vpop.f32.mrb[0].mxu0
      %v3229 = vadd.f32 0.0, %v3228
      %v3230 = vpop.f32.mrb[0].mxu0
      %3231 = vmatprep.mubr.bf16.mxu0 0
      %3232 = vmatmul.mubr.bf16.gmra.mrb[0].mxu0 %v3084
      %v3233 = vpop.f32.mrb[0].mxu0
      %v3234 = vadd.f32 0.0, %v3233
      %v3235 = vpop.f32.mrb[0].mxu0
      %v3236 = vpop.f32.mrb[0].mxu0
      %v3237 = vadd.f32 0.0, %v3236
      %v3238 = vpop.f32.mrb[0].mxu0
      %3239 = vmatprep.mubr.bf16.mxu0 0
      %3240 = vmatmul.mubr.bf16.gmra.mrb[0].mxu0 %v3087
      %v3241 = vpop.f32.mrb[0].mxu0
      %v3242 = vadd.f32 0.0, %v3241
      %v3243 = vpop.f32.mrb[0].mxu0
      %v3244 = vpop.f32.mrb[0].mxu0
      %v3245 = vadd.f32 0.0, %v3244
      %v3246 = vpop.f32.mrb[0].mxu0
      %3247 = vmatprep.mubr.bf16.mxu0 0
      %3248 = vmatmul.mubr.bf16.gmra.mrb[0].mxu0 %v3090
      %v3249 = vpop.f32.mrb[0].mxu0
      %v3250 = vadd.f32 0.0, %v3249
      %v3251 = vpop.f32.mrb[0].mxu0
      %v3252 = vpop.f32.mrb[0].mxu0
      %v3253 = vadd.f32 0.0, %v3252
      %v3254 = vpop.f32.mrb[0].mxu0
      %3255 = vdwg.mxu0
      %v3256 = vadd.f32 %v2532, %v3130
      %v3257 = vadd.f32 %v2533, %v3133
      %v3258 = vadd.f32 %v2534, %v3138
      %v3259 = vadd.f32 %v2535, %v3141
      %v3260 = vadd.f32 %v2536, %v3146
      %v3261 = vadd.f32 %v2537, %v3149
      %v3262 = vadd.f32 %v2538, %v3154
      %v3263 = vadd.f32 %v2539, %v3157
      %v3264 = vadd.f32 %v2540, %v3162
      %v3265 = vadd.f32 %v2541, %v3165
      %v3266 = vadd.f32 %v2542, %v3170
      %v3267 = vadd.f32 %v2543, %v3173
      %v3268 = vadd.f32 %v2544, %v3178
      %v3269 = vadd.f32 %v2545, %v3181
      %v3270 = vadd.f32 %v2546, %v3186
      %v3271 = vadd.f32 %v2547, %v3189
      %v3272 = vadd.f32 %v2548, %v3194
      %v3273 = vadd.f32 %v2549, %v3197
      %v3274 = vadd.f32 %v2550, %v3202
      %v3275 = vadd.f32 %v2551, %v3205
      %v3276 = vadd.f32 %v2552, %v3210
      %v3277 = vadd.f32 %v2553, %v3213
      %v3278 = vadd.f32 %v2554, %v3218
      %v3279 = vadd.f32 %v2555, %v3221
      %v3280 = vadd.f32 %v2556, %v3226
      %v3281 = vadd.f32 %v2557, %v3229
      %v3282 = vadd.f32 %v2558, %v3234
      %v3283 = vadd.f32 %v2559, %v3237
      %v3284 = vadd.f32 %v2560, %v3242
      %v3285 = vadd.f32 %v2561, %v3245
      %v3286 = vadd.f32 %v2562, %v3250
      %v3287 = vadd.f32 %v2563, %v3253
      %v3288 = vld [vmem:[%s637] sm:$0xe]
      %v3289 = vld [vmem:[%s637 + $0xc] sm:$0xe]
      %v3290 = vld [vmem:[%s637 + $0x18] sm:$0xe]
      %v3291 = vld [vmem:[%s637 + $0x24] sm:$0xe]
      %v3292 = vld [vmem:[%s637 + $0x30] sm:$0xe]
      %v3293 = vld [vmem:[%s637 + $0x3c] sm:$0xe]
      %v3294 = vld [vmem:[%s637 + $0x48] sm:$0xe]
      %v3295 = vld [vmem:[%s637 + $0x54] sm:$0xe]
      %v3296 = vld [vmem:[%s637 + $0x60] sm:$0xe]
      %v3297 = vld [vmem:[%s637 + $0x6c] sm:$0xe]
      %v3298 = vld [vmem:[%s637 + $0x78] sm:$0xe]
      %v3299 = vld [vmem:[%s637 + $0x84] sm:$0xe]
      %v3300 = vld [vmem:[%s637 + $0x90] sm:$0xe]
      %v3301 = vld [vmem:[%s637 + $0x9c] sm:$0xe]
      %v3302 = vld [vmem:[%s637 + $0xa8] sm:$0xe]
      %v3303 = vld [vmem:[%s637 + $0xb4] sm:$0xe]
      %v3352 = vrot.slane %v3288, 5
      %v3353 = vrot.slane %v3352, 4
      %v3354 = vrot.slane %v2565, 5
      %v3355 = vsel %vm1803, %v3353, %v3354
      %v3356 = vrot.slane %v3354, 4
      %v3357 = vrot.slane %v2566, 5
      %v3358 = vsel %vm1803, %v3356, %v3357
      %v3359 = vrot.slane %v3289, 5
      %v3360 = vrot.slane %v3359, 4
      %v3361 = vrot.slane %v2568, 5
      %v3362 = vsel %vm1803, %v3360, %v3361
      %v3363 = vrot.slane %v3361, 4
      %v3364 = vrot.slane %v2569, 5
      %v3365 = vsel %vm1803, %v3363, %v3364
      %v3366 = vrot.slane %v3290, 5
      %v3367 = vrot.slane %v3366, 4
      %v3368 = vrot.slane %v2571, 5
      %v3369 = vsel %vm1803, %v3367, %v3368
      %v3370 = vrot.slane %v3368, 4
      %v3371 = vrot.slane %v2572, 5
      %v3372 = vsel %vm1803, %v3370, %v3371
      %v3373 = vrot.slane %v3291, 5
      %v3374 = vrot.slane %v3373, 4
      %v3375 = vrot.slane %v2574, 5
      %v3376 = vsel %vm1803, %v3374, %v3375
      %v3377 = vrot.slane %v3375, 4
      %v3378 = vrot.slane %v2575, 5
      %v3379 = vsel %vm1803, %v3377, %v3378
      %v3380 = vrot.slane %v3292, 5
      %v3381 = vrot.slane %v3380, 4
      %v3382 = vrot.slane %v2577, 5
      %v3383 = vsel %vm1803, %v3381, %v3382
      %v3384 = vrot.slane %v3382, 4
      %v3385 = vrot.slane %v2578, 5
      %v3386 = vsel %vm1803, %v3384, %v3385
      %v3387 = vrot.slane %v3293, 5
      %v3388 = vrot.slane %v3387, 4
      %v3389 = vrot.slane %v2580, 5
      %v3390 = vsel %vm1803, %v3388, %v3389
      %v3391 = vrot.slane %v3389, 4
      %v3392 = vrot.slane %v2581, 5
      %v3393 = vsel %vm1803, %v3391, %v3392
      %v3394 = vrot.slane %v3294, 5
      %v3395 = vrot.slane %v3394, 4
      %v3396 = vrot.slane %v2583, 5
      %v3397 = vsel %vm1803, %v3395, %v3396
      %v3398 = vrot.slane %v3396, 4
      %v3399 = vrot.slane %v2584, 5
      %v3400 = vsel %vm1803, %v3398, %v3399
      %v3401 = vrot.slane %v3295, 5
      %v3402 = vrot.slane %v3401, 4
      %v3403 = vrot.slane %v2586, 5
      %v3404 = vsel %vm1803, %v3402, %v3403
      %v3405 = vrot.slane %v3403, 4
      %v3406 = vrot.slane %v2587, 5
      %v3407 = vsel %vm1803, %v3405, %v3406
      %v3408 = vrot.slane %v3296, 5
      %v3409 = vrot.slane %v3408, 4
      %v3410 = vrot.slane %v2589, 5
      %v3411 = vsel %vm1803, %v3409, %v3410
      %v3412 = vrot.slane %v3410, 4
      %v3413 = vrot.slane %v2590, 5
      %v3414 = vsel %vm1803, %v3412, %v3413
      %v3415 = vrot.slane %v3297, 5
      %v3416 = vrot.slane %v3415, 4
      %v3417 = vrot.slane %v2592, 5
      %v3418 = vsel %vm1803, %v3416, %v3417
      %v3419 = vrot.slane %v3417, 4
      %v3420 = vrot.slane %v2593, 5
      %v3421 = vsel %vm1803, %v3419, %v3420
      %v3422 = vrot.slane %v3298, 5
      %v3423 = vrot.slane %v3422, 4
      %v3424 = vrot.slane %v2595, 5
      %v3425 = vsel %vm1803, %v3423, %v3424
      %v3426 = vrot.slane %v3424, 4
      %v3427 = vrot.slane %v2596, 5
      %v3428 = vsel %vm1803, %v3426, %v3427
      %v3429 = vrot.slane %v3299, 5
      %v3430 = vrot.slane %v3429, 4
      %v3431 = vrot.slane %v2598, 5
      %v3432 = vsel %vm1803, %v3430, %v3431
      %v3433 = vrot.slane %v3431, 4
      %v3434 = vrot.slane %v2599, 5
      %v3435 = vsel %vm1803, %v3433, %v3434
      %v3436 = vrot.slane %v3300, 5
      %v3437 = vrot.slane %v3436, 4
      %v3438 = vrot.slane %v2601, 5
      %v3439 = vsel %vm1803, %v3437, %v3438
      %v3440 = vrot.slane %v3438, 4
      %v3441 = vrot.slane %v2602, 5
      %v3442 = vsel %vm1803, %v3440, %v3441
      %v3443 = vrot.slane %v3301, 5
      %v3444 = vrot.slane %v3443, 4
      %v3445 = vrot.slane %v2604, 5
      %v3446 = vsel %vm1803, %v3444, %v3445
      %v3447 = vrot.slane %v3445, 4
      %v3448 = vrot.slane %v2605, 5
      %v3449 = vsel %vm1803, %v3447, %v3448
      %v3450 = vrot.slane %v3302, 5
      %v3451 = vrot.slane %v3450, 4
      %v3452 = vrot.slane %v2607, 5
      %v3453 = vsel %vm1803, %v3451, %v3452
      %v3454 = vrot.slane %v3452, 4
      %v3455 = vrot.slane %v2608, 5
      %v3456 = vsel %vm1803, %v3454, %v3455
      %v3457 = vrot.slane %v3303, 5
      %v3458 = vrot.slane %v3457, 4
      %v3459 = vrot.slane %v2610, 5
      %v3460 = vsel %vm1803, %v3458, %v3459
      %v3461 = vrot.slane %v3459, 4
      %v3462 = vrot.slane %v2611, 5
      %v3463 = vsel %vm1803, %v3461, %v3462
      %v3464 = vunpack.c.l.b16 %v3355
      %v3465 = vunpack.c.l.b16 %v3358
      %v3466 = vunpack.c.l.b16 %v3362
      %v3467 = vunpack.c.l.b16 %v3365
      %v3468 = vunpack.c.l.b16 %v3369
      %v3469 = vunpack.c.l.b16 %v3372
      %v3470 = vunpack.c.l.b16 %v3376
      %v3471 = vunpack.c.l.b16 %v3379
      %v3472 = vunpack.c.l.b16 %v3383
      %v3473 = vunpack.c.l.b16 %v3386
      %v3474 = vunpack.c.l.b16 %v3390
      %v3475 = vunpack.c.l.b16 %v3393
      %v3476 = vunpack.c.l.b16 %v3397
      %v3477 = vunpack.c.l.b16 %v3400
      %v3478 = vunpack.c.l.b16 %v3404
      %v3479 = vunpack.c.l.b16 %v3407
      %v3480 = vunpack.c.l.b16 %v3411
      %v3481 = vunpack.c.l.b16 %v3414
      %v3482 = vunpack.c.l.b16 %v3418
      %v3483 = vunpack.c.l.b16 %v3421
      %v3484 = vunpack.c.l.b16 %v3425
      %v3485 = vunpack.c.l.b16 %v3428
      %v3486 = vunpack.c.l.b16 %v3432
      %v3487 = vunpack.c.l.b16 %v3435
      %v3488 = vunpack.c.l.b16 %v3439
      %v3489 = vunpack.c.l.b16 %v3442
      %v3490 = vunpack.c.l.b16 %v3446
      %v3491 = vunpack.c.l.b16 %v3449
      %v3492 = vunpack.c.l.b16 %v3453
      %v3493 = vunpack.c.l.b16 %v3456
      %v3494 = vunpack.c.l.b16 %v3460
      %v3495 = vunpack.c.l.b16 %v3463
      %v3496 = vpack.c.b16 %v3465, %v3464
      %v3497 = vpack.c.b16 %v3467, %v3466
      %v3498 = vpack.c.b16 %v3469, %v3468
      %v3499 = vpack.c.b16 %v3471, %v3470
      %v3500 = vpack.c.b16 %v3473, %v3472
      %v3501 = vpack.c.b16 %v3475, %v3474
      %v3502 = vpack.c.b16 %v3477, %v3476
      %v3503 = vpack.c.b16 %v3479, %v3478
      %v3504 = vpack.c.b16 %v3481, %v3480
      %v3505 = vpack.c.b16 %v3483, %v3482
      %v3506 = vpack.c.b16 %v3485, %v3484
      %v3507 = vpack.c.b16 %v3487, %v3486
      %v3508 = vpack.c.b16 %v3489, %v3488
      %v3509 = vpack.c.b16 %v3491, %v3490
      %v3510 = vpack.c.b16 %v3493, %v3492
      %v3511 = vpack.c.b16 %v3495, %v3494
      %v3513 = vsel %vm1247, %v3496, 0
      %v3516 = vsel %vm1247, %v3497, 0
      %v3519 = vsel %vm1247, %v3498, 0
      %v3522 = vsel %vm1247, %v3499, 0
      %v3525 = vsel %vm1247, %v3500, 0
      %v3528 = vsel %vm1247, %v3501, 0
      %v3531 = vsel %vm1247, %v3502, 0
      %v3534 = vsel %vm1247, %v3503, 0
      %v3537 = vsel %vm1247, %v3504, 0
      %v3540 = vsel %vm1247, %v3505, 0
      %v3543 = vsel %vm1247, %v3506, 0
      %v3546 = vsel %vm1247, %v3507, 0
      %v3549 = vsel %vm1247, %v3508, 0
      %v3552 = vsel %vm1247, %v3509, 0
      %v3555 = vsel %vm1247, %v3510, 0
      %v3558 = vsel %vm1247, %v3511, 0
      %v3561 = vsel %vm1296, %v760, 0
      %3563 = vmatprep.subr.bf16.mxu0 0
      %3564 = vmatpush1.bf16.msra.mxu0 %v3561
      %3565 = vmatprep.subr.bf16.mxu0 0
      %3566 = vmatpush1.bf16.msra.mxu0 0
      %3567 = vmatprep.subr.bf16.mxu0 0
      %3568 = vmatpush1.bf16.msra.mxu0 0
      %3569 = vmatprep.subr.bf16.mxu0 0
      %3570 = vmatpush1.bf16.msra.mxu0 0
      %3571 = vmatprep.subr.bf16.mxu0 0
      %3572 = vmatpush1.bf16.msra.mxu0 0
      %3573 = vmatprep.subr.bf16.mxu0 0
      %3574 = vmatpush1.bf16.msra.mxu0 0
      %3575 = vmatprep.subr.bf16.mxu0 0
      %3576 = vmatpush1.bf16.msra.mxu0 0
      %3577 = vmatprep.subr.bf16.mxu0 0
      %3578 = vmatpush1.bf16.msra.mxu0 0
      %3579 = vmatprep.subr.bf16.mxu0 0
      %3580 = vmatpush1.bf16.msra.mxu0 0
      %3581 = vmatprep.subr.bf16.mxu0 0
      %3582 = vmatpush1.bf16.msra.mxu0 0
      %3583 = vmatprep.subr.bf16.mxu0 0
      %3584 = vmatpush1.bf16.msra.mxu0 0
      %3585 = vmatprep.subr.bf16.mxu0 0
      %3586 = vmatpush1.bf16.msra.mxu0 0
      %3587 = vmatprep.subr.bf16.mxu0 0
      %3588 = vmatpush1.bf16.msra.mxu0 0
      %3589 = vmatprep.subr.bf16.mxu0 0
      %3590 = vmatpush1.bf16.msra.mxu0 0
      %3591 = vmatprep.subr.bf16.mxu0 0
      %3592 = vmatpush1.bf16.msra.mxu0 0
      %3593 = vmatprep.subr.bf16.mxu0 0
      %3594 = vmatpush1.bf16.msra.mxu0 0
      %3595 = vmatprep.mubr.bf16.mxu0 0
      %3596 = vmatmul.mubr.bf16.gmra.mrb[0].mxu0 %v3513
      %v3597 = vpop.f32.mrb[0].mxu0
      %v3598 = vadd.f32 0.0, %v3597
      %v3599 = vpop.f32.mrb[0].mxu0
      %v3600 = vpop.f32.mrb[0].mxu0
      %v3601 = vadd.f32 0.0, %v3600
      %v3602 = vpop.f32.mrb[0].mxu0
      %3603 = vmatprep.mubr.bf16.mxu0 0
      %3604 = vmatmul.mubr.bf16.gmra.mrb[0].mxu0 %v3516
      %v3605 = vpop.f32.mrb[0].mxu0
      %v3606 = vadd.f32 0.0, %v3605
      %v3607 = vpop.f32.mrb[0].mxu0
      %v3608 = vpop.f32.mrb[0].mxu0
      %v3609 = vadd.f32 0.0, %v3608
      %v3610 = vpop.f32.mrb[0].mxu0
      %3611 = vmatprep.mubr.bf16.mxu0 0
      %3612 = vmatmul.mubr.bf16.gmra.mrb[0].mxu0 %v3519
      %v3613 = vpop.f32.mrb[0].mxu0
      %v3614 = vadd.f32 0.0, %v3613
      %v3615 = vpop.f32.mrb[0].mxu0
      %v3616 = vpop.f32.mrb[0].mxu0
      %v3617 = vadd.f32 0.0, %v3616
      %v3618 = vpop.f32.mrb[0].mxu0
      %3619 = vmatprep.mubr.bf16.mxu0 0
      %3620 = vmatmul.mubr.bf16.gmra.mrb[0].mxu0 %v3522
      %v3621 = vpop.f32.mrb[0].mxu0
      %v3622 = vadd.f32 0.0, %v3621
      %v3623 = vpop.f32.mrb[0].mxu0
      %v3624 = vpop.f32.mrb[0].mxu0
      %v3625 = vadd.f32 0.0, %v3624
      %v3626 = vpop.f32.mrb[0].mxu0
      %3627 = vmatprep.mubr.bf16.mxu0 0
      %3628 = vmatmul.mubr.bf16.gmra.mrb[0].mxu0 %v3525
      %v3629 = vpop.f32.mrb[0].mxu0
      %v3630 = vadd.f32 0.0, %v3629
      %v3631 = vpop.f32.mrb[0].mxu0
      %v3632 = vpop.f32.mrb[0].mxu0
      %v3633 = vadd.f32 0.0, %v3632
      %v3634 = vpop.f32.mrb[0].mxu0
      %3635 = vmatprep.mubr.bf16.mxu0 0
      %3636 = vmatmul.mubr.bf16.gmra.mrb[0].mxu0 %v3528
      %v3637 = vpop.f32.mrb[0].mxu0
      %v3638 = vadd.f32 0.0, %v3637
      %v3639 = vpop.f32.mrb[0].mxu0
      %v3640 = vpop.f32.mrb[0].mxu0
      %v3641 = vadd.f32 0.0, %v3640
      %v3642 = vpop.f32.mrb[0].mxu0
      %3643 = vmatprep.mubr.bf16.mxu0 0
      %3644 = vmatmul.mubr.bf16.gmra.mrb[0].mxu0 %v3531
      %v3645 = vpop.f32.mrb[0].mxu0
      %v3646 = vadd.f32 0.0, %v3645
      %v3647 = vpop.f32.mrb[0].mxu0
      %v3648 = vpop.f32.mrb[0].mxu0
      %v3649 = vadd.f32 0.0, %v3648
      %v3650 = vpop.f32.mrb[0].mxu0
      %3651 = vmatprep.mubr.bf16.mxu0 0
      %3652 = vmatmul.mubr.bf16.gmra.mrb[0].mxu0 %v3534
      %v3653 = vpop.f32.mrb[0].mxu0
      %v3654 = vadd.f32 0.0, %v3653
      %v3655 = vpop.f32.mrb[0].mxu0
      %v3656 = vpop.f32.mrb[0].mxu0
      %v3657 = vadd.f32 0.0, %v3656
      %v3658 = vpop.f32.mrb[0].mxu0
      %3659 = vmatprep.mubr.bf16.mxu0 0
      %3660 = vmatmul.mubr.bf16.gmra.mrb[0].mxu0 %v3537
      %v3661 = vpop.f32.mrb[0].mxu0
      %v3662 = vadd.f32 0.0, %v3661
      %v3663 = vpop.f32.mrb[0].mxu0
      %v3664 = vpop.f32.mrb[0].mxu0
      %v3665 = vadd.f32 0.0, %v3664
      %v3666 = vpop.f32.mrb[0].mxu0
      %3667 = vmatprep.mubr.bf16.mxu0 0
      %3668 = vmatmul.mubr.bf16.gmra.mrb[0].mxu0 %v3540
      %v3669 = vpop.f32.mrb[0].mxu0
      %v3670 = vadd.f32 0.0, %v3669
      %v3671 = vpop.f32.mrb[0].mxu0
      %v3672 = vpop.f32.mrb[0].mxu0
      %v3673 = vadd.f32 0.0, %v3672
      %v3674 = vpop.f32.mrb[0].mxu0
      %3675 = vmatprep.mubr.bf16.mxu0 0
      %3676 = vmatmul.mubr.bf16.gmra.mrb[0].mxu0 %v3543
      %v3677 = vpop.f32.mrb[0].mxu0
      %v3678 = vadd.f32 0.0, %v3677
      %v3679 = vpop.f32.mrb[0].mxu0
      %v3680 = vpop.f32.mrb[0].mxu0
      %v3681 = vadd.f32 0.0, %v3680
      %v3682 = vpop.f32.mrb[0].mxu0
      %3683 = vmatprep.mubr.bf16.mxu0 0
      %3684 = vmatmul.mubr.bf16.gmra.mrb[0].mxu0 %v3546
      %v3685 = vpop.f32.mrb[0].mxu0
      %v3686 = vadd.f32 0.0, %v3685
      %v3687 = vpop.f32.mrb[0].mxu0
      %v3688 = vpop.f32.mrb[0].mxu0
      %v3689 = vadd.f32 0.0, %v3688
      %v3690 = vpop.f32.mrb[0].mxu0
      %3691 = vmatprep.mubr.bf16.mxu0 0
      %3692 = vmatmul.mubr.bf16.gmra.mrb[0].mxu0 %v3549
      %v3693 = vpop.f32.mrb[0].mxu0
      %v3694 = vadd.f32 0.0, %v3693
      %v3695 = vpop.f32.mrb[0].mxu0
      %v3696 = vpop.f32.mrb[0].mxu0
      %v3697 = vadd.f32 0.0, %v3696
      %v3698 = vpop.f32.mrb[0].mxu0
      %3699 = vmatprep.mubr.bf16.mxu0 0
      %3700 = vmatmul.mubr.bf16.gmra.mrb[0].mxu0 %v3552
      %v3701 = vpop.f32.mrb[0].mxu0
      %v3702 = vadd.f32 0.0, %v3701
      %v3703 = vpop.f32.mrb[0].mxu0
      %v3704 = vpop.f32.mrb[0].mxu0
      %v3705 = vadd.f32 0.0, %v3704
      %v3706 = vpop.f32.mrb[0].mxu0
      %3707 = vmatprep.mubr.bf16.mxu0 0
      %3708 = vmatmul.mubr.bf16.gmra.mrb[0].mxu0 %v3555
      %v3709 = vpop.f32.mrb[0].mxu0
      %v3710 = vadd.f32 0.0, %v3709
      %v3711 = vpop.f32.mrb[0].mxu0
      %v3712 = vpop.f32.mrb[0].mxu0
      %v3713 = vadd.f32 0.0, %v3712
      %v3714 = vpop.f32.mrb[0].mxu0
      %3715 = vmatprep.mubr.bf16.mxu0 0
      %3716 = vmatmul.mubr.bf16.gmra.mrb[0].mxu0 %v3558
      %v3717 = vpop.f32.mrb[0].mxu0
      %v3718 = vadd.f32 0.0, %v3717
      %v3719 = vpop.f32.mrb[0].mxu0
      %v3720 = vpop.f32.mrb[0].mxu0
      %v3721 = vadd.f32 0.0, %v3720
      %v3722 = vpop.f32.mrb[0].mxu0
      %3723 = vdwg.mxu0
      %v3724 = vadd.f32 %v3256, %v3598
      %v3725 = vadd.f32 %v3257, %v3601
      %v3726 = vadd.f32 %v3258, %v3606
      %v3727 = vadd.f32 %v3259, %v3609
      %v3728 = vadd.f32 %v3260, %v3614
      %v3729 = vadd.f32 %v3261, %v3617
      %v3730 = vadd.f32 %v3262, %v3622
      %v3731 = vadd.f32 %v3263, %v3625
      %v3732 = vadd.f32 %v3264, %v3630
      %v3733 = vadd.f32 %v3265, %v3633
      %v3734 = vadd.f32 %v3266, %v3638
      %v3735 = vadd.f32 %v3267, %v3641
      %v3736 = vadd.f32 %v3268, %v3646
      %v3737 = vadd.f32 %v3269, %v3649
      %v3738 = vadd.f32 %v3270, %v3654
      %v3739 = vadd.f32 %v3271, %v3657
      %v3740 = vadd.f32 %v3272, %v3662
      %v3741 = vadd.f32 %v3273, %v3665
      %v3742 = vadd.f32 %v3274, %v3670
      %v3743 = vadd.f32 %v3275, %v3673
      %v3744 = vadd.f32 %v3276, %v3678
      %v3745 = vadd.f32 %v3277, %v3681
      %v3746 = vadd.f32 %v3278, %v3686
      %v3747 = vadd.f32 %v3279, %v3689
      %v3748 = vadd.f32 %v3280, %v3694
      %v3749 = vadd.f32 %v3281, %v3697
      %v3750 = vadd.f32 %v3282, %v3702
      %v3751 = vadd.f32 %v3283, %v3705
      %v3752 = vadd.f32 %v3284, %v3710
      %v3753 = vadd.f32 %v3285, %v3713
      %v3754 = vadd.f32 %v3286, %v3718
      %v3755 = vadd.f32 %v3287, %v3721
      %s3756 = scalar_lea.vmem [#allocation2], 24
      %v3757 = vld [vmem:[%s3756] sm:$0xf]
      %v3758 = vld [vmem:[%s3756 + $0x4] sm:$0xf]
      %v3759 = vld [vmem:[%s3756 + $0xc] sm:$0xf]
      %v3760 = vld [vmem:[%s3756 + $0x10] sm:$0xf]
      %v3761 = vld [vmem:[%s3756 + $0x18] sm:$0xf]
      %v3762 = vld [vmem:[%s3756 + $0x1c] sm:$0xf]
      %v3763 = vld [vmem:[%s3756 + $0x24] sm:$0xf]
      %v3764 = vld [vmem:[%s3756 + $0x28] sm:$0xf]
      %v3765 = vld [vmem:[%s3756 + $0x30] sm:$0xf]
      %v3766 = vld [vmem:[%s3756 + $0x34] sm:$0xf]
      %v3767 = vld [vmem:[%s3756 + $0x3c] sm:$0xf]
      %v3768 = vld [vmem:[%s3756 + $0x40] sm:$0xf]
      %v3769 = vld [vmem:[%s3756 + $0x48] sm:$0xf]
      %v3770 = vld [vmem:[%s3756 + $0x4c] sm:$0xf]
      %v3771 = vld [vmem:[%s3756 + $0x54] sm:$0xf]
      %v3772 = vld [vmem:[%s3756 + $0x58] sm:$0xf]
      %v3773 = vld [vmem:[%s3756 + $0x60] sm:$0xf]
      %v3774 = vld [vmem:[%s3756 + $0x64] sm:$0xf]
      %v3775 = vld [vmem:[%s3756 + $0x6c] sm:$0xf]
      %v3776 = vld [vmem:[%s3756 + $0x70] sm:$0xf]
      %v3777 = vld [vmem:[%s3756 + $0x78] sm:$0xf]
      %v3778 = vld [vmem:[%s3756 + $0x7c] sm:$0xf]
      %v3779 = vld [vmem:[%s3756 + $0x84] sm:$0xf]
      %v3780 = vld [vmem:[%s3756 + $0x88] sm:$0xf]
      %v3781 = vld [vmem:[%s3756 + $0x90] sm:$0xf]
      %v3782 = vld [vmem:[%s3756 + $0x94] sm:$0xf]
      %v3783 = vld [vmem:[%s3756 + $0x9c] sm:$0xf]
      %v3784 = vld [vmem:[%s3756 + $0xa0] sm:$0xf]
      %v3785 = vld [vmem:[%s3756 + $0xa8] sm:$0xf]
      %v3786 = vld [vmem:[%s3756 + $0xac] sm:$0xf]
      %v3787 = vld [vmem:[%s3756 + $0xb4] sm:$0xf]
      %v3788 = vld [vmem:[%s3756 + $0xb8] sm:$0xf]
      %v3821 = vunpack.c.l.b16 %v3757
      %v3822 = vunpack.c.l.b16 %v3758
      %v3823 = vunpack.c.l.b16 %v3759
      %v3824 = vunpack.c.l.b16 %v3760
      %v3825 = vunpack.c.l.b16 %v3761
      %v3826 = vunpack.c.l.b16 %v3762
      %v3827 = vunpack.c.l.b16 %v3763
      %v3828 = vunpack.c.l.b16 %v3764
      %v3829 = vunpack.c.l.b16 %v3765
      %v3830 = vunpack.c.l.b16 %v3766
      %v3831 = vunpack.c.l.b16 %v3767
      %v3832 = vunpack.c.l.b16 %v3768
      %v3833 = vunpack.c.l.b16 %v3769
      %v3834 = vunpack.c.l.b16 %v3770
      %v3835 = vunpack.c.l.b16 %v3771
      %v3836 = vunpack.c.l.b16 %v3772
      %v3837 = vunpack.c.l.b16 %v3773
      %v3838 = vunpack.c.l.b16 %v3774
      %v3839 = vunpack.c.l.b16 %v3775
      %v3840 = vunpack.c.l.b16 %v3776
      %v3841 = vunpack.c.l.b16 %v3777
      %v3842 = vunpack.c.l.b16 %v3778
      %v3843 = vunpack.c.l.b16 %v3779
      %v3844 = vunpack.c.l.b16 %v3780
      %v3845 = vunpack.c.l.b16 %v3781
      %v3846 = vunpack.c.l.b16 %v3782
      %v3847 = vunpack.c.l.b16 %v3783
      %v3848 = vunpack.c.l.b16 %v3784
      %v3849 = vunpack.c.l.b16 %v3785
      %v3850 = vunpack.c.l.b16 %v3786
      %v3851 = vunpack.c.l.b16 %v3787
      %v3852 = vunpack.c.l.b16 %v3788
      %v3853 = vpack.c.b16 %v3822, %v3821
      %v3854 = vpack.c.b16 %v3824, %v3823
      %v3855 = vpack.c.b16 %v3826, %v3825
      %v3856 = vpack.c.b16 %v3828, %v3827
      %v3857 = vpack.c.b16 %v3830, %v3829
      %v3858 = vpack.c.b16 %v3832, %v3831
      %v3859 = vpack.c.b16 %v3834, %v3833
      %v3860 = vpack.c.b16 %v3836, %v3835
      %v3861 = vpack.c.b16 %v3838, %v3837
      %v3862 = vpack.c.b16 %v3840, %v3839
      %v3863 = vpack.c.b16 %v3842, %v3841
      %v3864 = vpack.c.b16 %v3844, %v3843
      %v3865 = vpack.c.b16 %v3846, %v3845
      %v3866 = vpack.c.b16 %v3848, %v3847
      %v3867 = vpack.c.b16 %v3850, %v3849
      %v3868 = vpack.c.b16 %v3852, %v3851
      %v3870 = vsel %vm1247, %v3853, 0
      %v3873 = vsel %vm1247, %v3854, 0
      %v3876 = vsel %vm1247, %v3855, 0
      %v3879 = vsel %vm1247, %v3856, 0
      %v3882 = vsel %vm1247, %v3857, 0
      %v3885 = vsel %vm1247, %v3858, 0
      %v3888 = vsel %vm1247, %v3859, 0
      %v3891 = vsel %vm1247, %v3860, 0
      %v3894 = vsel %vm1247, %v3861, 0
      %v3897 = vsel %vm1247, %v3862, 0
      %v3900 = vsel %vm1247, %v3863, 0
      %v3903 = vsel %vm1247, %v3864, 0
      %v3906 = vsel %vm1247, %v3865, 0
      %v3909 = vsel %vm1247, %v3866, 0
      %v3912 = vsel %vm1247, %v3867, 0
      %v3915 = vsel %vm1247, %v3868, 0
      %v3918 = vsel %vm1296, %v761, 0
      %3920 = vmatprep.subr.bf16.mxu0 0
      %3921 = vmatpush1.bf16.msra.mxu0 %v3918
      %3922 = vmatprep.subr.bf16.mxu0 0
      %3923 = vmatpush1.bf16.msra.mxu0 0
      %3924 = vmatprep.subr.bf16.mxu0 0
      %3925 = vmatpush1.bf16.msra.mxu0 0
      %3926 = vmatprep.subr.bf16.mxu0 0
      %3927 = vmatpush1.bf16.msra.mxu0 0
      %3928 = vmatprep.subr.bf16.mxu0 0
      %3929 = vmatpush1.bf16.msra.mxu0 0
      %3930 = vmatprep.subr.bf16.mxu0 0
      %3931 = vmatpush1.bf16.msra.mxu0 0
      %3932 = vmatprep.subr.bf16.mxu0 0
      %3933 = vmatpush1.bf16.msra.mxu0 0
      %3934 = vmatprep.subr.bf16.mxu0 0
      %3935 = vmatpush1.bf16.msra.mxu0 0
      %3936 = vmatprep.subr.bf16.mxu0 0
      %3937 = vmatpush1.bf16.msra.mxu0 0
      %3938 = vmatprep.subr.bf16.mxu0 0
      %3939 = vmatpush1.bf16.msra.mxu0 0
      %3940 = vmatprep.subr.bf16.mxu0 0
      %3941 = vmatpush1.bf16.msra.mxu0 0
      %3942 = vmatprep.subr.bf16.mxu0 0
      %3943 = vmatpush1.bf16.msra.mxu0 0
      %3944 = vmatprep.subr.bf16.mxu0 0
      %3945 = vmatpush1.bf16.msra.mxu0 0
      %3946 = vmatprep.subr.bf16.mxu0 0
      %3947 = vmatpush1.bf16.msra.mxu0 0
      %3948 = vmatprep.subr.bf16.mxu0 0
      %3949 = vmatpush1.bf16.msra.mxu0 0
      %3950 = vmatprep.subr.bf16.mxu0 0
      %3951 = vmatpush1.bf16.msra.mxu0 0
      %3952 = vmatprep.mubr.bf16.mxu0 0
      %3953 = vmatmul.mubr.bf16.gmra.mrb[0].mxu0 %v3870
      %v3954 = vpop.f32.mrb[0].mxu0
      %v3955 = vadd.f32 0.0, %v3954
      %v3956 = vpop.f32.mrb[0].mxu0
      %v3957 = vpop.f32.mrb[0].mxu0
      %v3958 = vadd.f32 0.0, %v3957
      %v3959 = vpop.f32.mrb[0].mxu0
      %3960 = vmatprep.mubr.bf16.mxu0 0
      %3961 = vmatmul.mubr.bf16.gmra.mrb[0].mxu0 %v3873
      %v3962 = vpop.f32.mrb[0].mxu0
      %v3963 = vadd.f32 0.0, %v3962
      %v3964 = vpop.f32.mrb[0].mxu0
      %v3965 = vpop.f32.mrb[0].mxu0
      %v3966 = vadd.f32 0.0, %v3965
      %v3967 = vpop.f32.mrb[0].mxu0
      %3968 = vmatprep.mubr.bf16.mxu0 0
      %3969 = vmatmul.mubr.bf16.gmra.mrb[0].mxu0 %v3876
      %v3970 = vpop.f32.mrb[0].mxu0
      %v3971 = vadd.f32 0.0, %v3970
      %v3972 = vpop.f32.mrb[0].mxu0
      %v3973 = vpop.f32.mrb[0].mxu0
      %v3974 = vadd.f32 0.0, %v3973
      %v3975 = vpop.f32.mrb[0].mxu0
      %3976 = vmatprep.mubr.bf16.mxu0 0
      %3977 = vmatmul.mubr.bf16.gmra.mrb[0].mxu0 %v3879
      %v3978 = vpop.f32.mrb[0].mxu0
      %v3979 = vadd.f32 0.0, %v3978
      %v3980 = vpop.f32.mrb[0].mxu0
      %v3981 = vpop.f32.mrb[0].mxu0
      %v3982 = vadd.f32 0.0, %v3981
      %v3983 = vpop.f32.mrb[0].mxu0
      %3984 = vmatprep.mubr.bf16.mxu0 0
      %3985 = vmatmul.mubr.bf16.gmra.mrb[0].mxu0 %v3882
      %v3986 = vpop.f32.mrb[0].mxu0
      %v3987 = vadd.f32 0.0, %v3986
      %v3988 = vpop.f32.mrb[0].mxu0
      %v3989 = vpop.f32.mrb[0].mxu0
      %v3990 = vadd.f32 0.0, %v3989
      %v3991 = vpop.f32.mrb[0].mxu0
      %3992 = vmatprep.mubr.bf16.mxu0 0
      %3993 = vmatmul.mubr.bf16.gmra.mrb[0].mxu0 %v3885
      %v3994 = vpop.f32.mrb[0].mxu0
      %v3995 = vadd.f32 0.0, %v3994
      %v3996 = vpop.f32.mrb[0].mxu0
      %v3997 = vpop.f32.mrb[0].mxu0
      %v3998 = vadd.f32 0.0, %v3997
      %v3999 = vpop.f32.mrb[0].mxu0
      %4000 = vmatprep.mubr.bf16.mxu0 0
      %4001 = vmatmul.mubr.bf16.gmra.mrb[0].mxu0 %v3888
      %v4002 = vpop.f32.mrb[0].mxu0
      %v4003 = vadd.f32 0.0, %v4002
      %v4004 = vpop.f32.mrb[0].mxu0
      %v4005 = vpop.f32.mrb[0].mxu0
      %v4006 = vadd.f32 0.0, %v4005
      %v4007 = vpop.f32.mrb[0].mxu0
      %4008 = vmatprep.mubr.bf16.mxu0 0
      %4009 = vmatmul.mubr.bf16.gmra.mrb[0].mxu0 %v3891
      %v4010 = vpop.f32.mrb[0].mxu0
      %v4011 = vadd.f32 0.0, %v4010
      %v4012 = vpop.f32.mrb[0].mxu0
      %v4013 = vpop.f32.mrb[0].mxu0
      %v4014 = vadd.f32 0.0, %v4013
      %v4015 = vpop.f32.mrb[0].mxu0
      %4016 = vmatprep.mubr.bf16.mxu0 0
      %4017 = vmatmul.mubr.bf16.gmra.mrb[0].mxu0 %v3894
      %v4018 = vpop.f32.mrb[0].mxu0
      %v4019 = vadd.f32 0.0, %v4018
      %v4020 = vpop.f32.mrb[0].mxu0
      %v4021 = vpop.f32.mrb[0].mxu0
      %v4022 = vadd.f32 0.0, %v4021
      %v4023 = vpop.f32.mrb[0].mxu0
      %4024 = vmatprep.mubr.bf16.mxu0 0
      %4025 = vmatmul.mubr.bf16.gmra.mrb[0].mxu0 %v3897
      %v4026 = vpop.f32.mrb[0].mxu0
      %v4027 = vadd.f32 0.0, %v4026
      %v4028 = vpop.f32.mrb[0].mxu0
      %v4029 = vpop.f32.mrb[0].mxu0
      %v4030 = vadd.f32 0.0, %v4029
      %v4031 = vpop.f32.mrb[0].mxu0
      %4032 = vmatprep.mubr.bf16.mxu0 0
      %4033 = vmatmul.mubr.bf16.gmra.mrb[0].mxu0 %v3900
      %v4034 = vpop.f32.mrb[0].mxu0
      %v4035 = vadd.f32 0.0, %v4034
      %v4036 = vpop.f32.mrb[0].mxu0
      %v4037 = vpop.f32.mrb[0].mxu0
      %v4038 = vadd.f32 0.0, %v4037
      %v4039 = vpop.f32.mrb[0].mxu0
      %4040 = vmatprep.mubr.bf16.mxu0 0
      %4041 = vmatmul.mubr.bf16.gmra.mrb[0].mxu0 %v3903
      %v4042 = vpop.f32.mrb[0].mxu0
      %v4043 = vadd.f32 0.0, %v4042
      %v4044 = vpop.f32.mrb[0].mxu0
      %v4045 = vpop.f32.mrb[0].mxu0
      %v4046 = vadd.f32 0.0, %v4045
      %v4047 = vpop.f32.mrb[0].mxu0
      %4048 = vmatprep.mubr.bf16.mxu0 0
      %4049 = vmatmul.mubr.bf16.gmra.mrb[0].mxu0 %v3906
      %v4050 = vpop.f32.mrb[0].mxu0
      %v4051 = vadd.f32 0.0, %v4050
      %v4052 = vpop.f32.mrb[0].mxu0
      %v4053 = vpop.f32.mrb[0].mxu0
      %v4054 = vadd.f32 0.0, %v4053
      %v4055 = vpop.f32.mrb[0].mxu0
      %4056 = vmatprep.mubr.bf16.mxu0 0
      %4057 = vmatmul.mubr.bf16.gmra.mrb[0].mxu0 %v3909
      %v4058 = vpop.f32.mrb[0].mxu0
      %v4059 = vadd.f32 0.0, %v4058
      %v4060 = vpop.f32.mrb[0].mxu0
      %v4061 = vpop.f32.mrb[0].mxu0
      %v4062 = vadd.f32 0.0, %v4061
      %v4063 = vpop.f32.mrb[0].mxu0
      %4064 = vmatprep.mubr.bf16.mxu0 0
      %4065 = vmatmul.mubr.bf16.gmra.mrb[0].mxu0 %v3912
      %v4066 = vpop.f32.mrb[0].mxu0
      %v4067 = vadd.f32 0.0, %v4066
      %v4068 = vpop.f32.mrb[0].mxu0
      %v4069 = vpop.f32.mrb[0].mxu0
      %v4070 = vadd.f32 0.0, %v4069
      %v4071 = vpop.f32.mrb[0].mxu0
      %4072 = vmatprep.mubr.bf16.mxu0 0
      %4073 = vmatmul.mubr.bf16.gmra.mrb[0].mxu0 %v3915
      %v4074 = vpop.f32.mrb[0].mxu0
      %v4075 = vadd.f32 0.0, %v4074
      %v4076 = vpop.f32.mrb[0].mxu0
      %v4077 = vpop.f32.mrb[0].mxu0
      %v4078 = vadd.f32 0.0, %v4077
      %v4079 = vpop.f32.mrb[0].mxu0
      %4080 = vdwg.mxu0
      %v4081 = vadd.f32 %v3724, %v3955
      %v4082 = vadd.f32 %v3725, %v3958
      %v4083 = vadd.f32 %v3726, %v3963
      %v4084 = vadd.f32 %v3727, %v3966
      %v4085 = vadd.f32 %v3728, %v3971
      %v4086 = vadd.f32 %v3729, %v3974
      %v4087 = vadd.f32 %v3730, %v3979
      %v4088 = vadd.f32 %v3731, %v3982
      %v4089 = vadd.f32 %v3732, %v3987
      %v4090 = vadd.f32 %v3733, %v3990
      %v4091 = vadd.f32 %v3734, %v3995
      %v4092 = vadd.f32 %v3735, %v3998
      %v4093 = vadd.f32 %v3736, %v4003
      %v4094 = vadd.f32 %v3737, %v4006
      %v4095 = vadd.f32 %v3738, %v4011
      %v4096 = vadd.f32 %v3739, %v4014
      %v4097 = vadd.f32 %v3740, %v4019
      %v4098 = vadd.f32 %v3741, %v4022
      %v4099 = vadd.f32 %v3742, %v4027
      %v4100 = vadd.f32 %v3743, %v4030
      %v4101 = vadd.f32 %v3744, %v4035
      %v4102 = vadd.f32 %v3745, %v4038
      %v4103 = vadd.f32 %v3746, %v4043
      %v4104 = vadd.f32 %v3747, %v4046
      %v4105 = vadd.f32 %v3748, %v4051
      %v4106 = vadd.f32 %v3749, %v4054
      %v4107 = vadd.f32 %v3750, %v4059
      %v4108 = vadd.f32 %v3751, %v4062
      %v4109 = vadd.f32 %v3752, %v4067
      %v4110 = vadd.f32 %v3753, %v4070
      %v4111 = vadd.f32 %v3754, %v4075
      %v4112 = vadd.f32 %v3755, %v4078
      %v4113 = vld [vmem:[%s3756] sm:$0xf]
      %v4114 = vld [vmem:[%s3756 + $0x4] sm:$0xf]
      %v4115 = vld [vmem:[%s3756 + $0x8] sm:$0x1]
      %v4116 = vld [vmem:[%s3756 + $0xc] sm:$0xf]
      %v4117 = vld [vmem:[%s3756 + $0x10] sm:$0xf]
      %v4118 = vld [vmem:[%s3756 + $0x14] sm:$0x1]
      %v4119 = vld [vmem:[%s3756 + $0x18] sm:$0xf]
      %v4120 = vld [vmem:[%s3756 + $0x1c] sm:$0xf]
      %v4121 = vld [vmem:[%s3756 + $0x20] sm:$0x1]
      %v4122 = vld [vmem:[%s3756 + $0x24] sm:$0xf]
      %v4123 = vld [vmem:[%s3756 + $0x28] sm:$0xf]
      %v4124 = vld [vmem:[%s3756 + $0x2c] sm:$0x1]
      %v4125 = vld [vmem:[%s3756 + $0x30] sm:$0xf]
      %v4126 = vld [vmem:[%s3756 + $0x34] sm:$0xf]
      %v4127 = vld [vmem:[%s3756 + $0x38] sm:$0x1]
      %v4128 = vld [vmem:[%s3756 + $0x3c] sm:$0xf]
      %v4129 = vld [vmem:[%s3756 + $0x40] sm:$0xf]
      %v4130 = vld [vmem:[%s3756 + $0x44] sm:$0x1]
      %v4131 = vld [vmem:[%s3756 + $0x48] sm:$0xf]
      %v4132 = vld [vmem:[%s3756 + $0x4c] sm:$0xf]
      %v4133 = vld [vmem:[%s3756 + $0x50] sm:$0x1]
      %v4134 = vld [vmem:[%s3756 + $0x54] sm:$0xf]
      %v4135 = vld [vmem:[%s3756 + $0x58] sm:$0xf]
      %v4136 = vld [vmem:[%s3756 + $0x5c] sm:$0x1]
      %v4137 = vld [vmem:[%s3756 + $0x60] sm:$0xf]
      %v4138 = vld [vmem:[%s3756 + $0x64] sm:$0xf]
      %v4139 = vld [vmem:[%s3756 + $0x68] sm:$0x1]
      %v4140 = vld [vmem:[%s3756 + $0x6c] sm:$0xf]
      %v4141 = vld [vmem:[%s3756 + $0x70] sm:$0xf]
      %v4142 = vld [vmem:[%s3756 + $0x74] sm:$0x1]
      %v4143 = vld [vmem:[%s3756 + $0x78] sm:$0xf]
      %v4144 = vld [vmem:[%s3756 + $0x7c] sm:$0xf]
      %v4145 = vld [vmem:[%s3756 + $0x80] sm:$0x1]
      %v4146 = vld [vmem:[%s3756 + $0x84] sm:$0xf]
      %v4147 = vld [vmem:[%s3756 + $0x88] sm:$0xf]
      %v4148 = vld [vmem:[%s3756 + $0x8c] sm:$0x1]
      %v4149 = vld [vmem:[%s3756 + $0x90] sm:$0xf]
      %v4150 = vld [vmem:[%s3756 + $0x94] sm:$0xf]
      %v4151 = vld [vmem:[%s3756 + $0x98] sm:$0x1]
      %v4152 = vld [vmem:[%s3756 + $0x9c] sm:$0xf]
      %v4153 = vld [vmem:[%s3756 + $0xa0] sm:$0xf]
      %v4154 = vld [vmem:[%s3756 + $0xa4] sm:$0x1]
      %v4155 = vld [vmem:[%s3756 + $0xa8] sm:$0xf]
      %v4156 = vld [vmem:[%s3756 + $0xac] sm:$0xf]
      %v4157 = vld [vmem:[%s3756 + $0xb0] sm:$0x1]
      %v4158 = vld [vmem:[%s3756 + $0xb4] sm:$0xf]
      %v4159 = vld [vmem:[%s3756 + $0xb8] sm:$0xf]
      %v4160 = vld [vmem:[%s3756 + $0xbc] sm:$0x1]
      %v4162 = vshrl.u32 %v4113, 16
      %v4164 = vrot.slane %v4162, 4
      %v4165 = vshll.u32 %v4113, 16
      %v4167 = vrot.slane %v4165, 5
      %v4168 = vor.u32 %v4164, %v4167
      %v4169 = vrot.slane %v4168, 4
      %v4171 = vshll.u32 %v4114, 16
      %v4173 = vrot.slane %v4171, 5
      %v4174 = vsel %vm814, %v4169, %v4173
      %v4175 = vshrl.u32 %v4114, 16
      %v4177 = vrot.slane %v4175, 4
      %v4178 = vor.u32 %v4177, %v4173
      %v4179 = vrot.slane %v4178, 4
      %v4181 = vshll.u32 %v4115, 16
      %v4183 = vrot.slane %v4181, 5
      %v4184 = vsel %vm814, %v4179, %v4183
      %v4186 = vshrl.u32 %v4116, 16
      %v4188 = vrot.slane %v4186, 4
      %v4189 = vshll.u32 %v4116, 16
      %v4191 = vrot.slane %v4189, 5
      %v4192 = vor.u32 %v4188, %v4191
      %v4193 = vrot.slane %v4192, 4
      %v4195 = vshll.u32 %v4117, 16
      %v4197 = vrot.slane %v4195, 5
      %v4198 = vsel %vm814, %v4193, %v4197
      %v4199 = vshrl.u32 %v4117, 16
      %v4201 = vrot.slane %v4199, 4
      %v4202 = vor.u32 %v4201, %v4197
      %v4203 = vrot.slane %v4202, 4
      %v4205 = vshll.u32 %v4118, 16
      %v4207 = vrot.slane %v4205, 5
      %v4208 = vsel %vm814, %v4203, %v4207
      %v4210 = vshrl.u32 %v4119, 16
      %v4212 = vrot.slane %v4210, 4
      %v4213 = vshll.u32 %v4119, 16
      %v4215 = vrot.slane %v4213, 5
      %v4216 = vor.u32 %v4212, %v4215
      %v4217 = vrot.slane %v4216, 4
      %v4219 = vshll.u32 %v4120, 16
      %v4221 = vrot.slane %v4219, 5
      %v4222 = vsel %vm814, %v4217, %v4221
      %v4223 = vshrl.u32 %v4120, 16
      %v4225 = vrot.slane %v4223, 4
      %v4226 = vor.u32 %v4225, %v4221
      %v4227 = vrot.slane %v4226, 4
      %v4229 = vshll.u32 %v4121, 16
      %v4231 = vrot.slane %v4229, 5
      %v4232 = vsel %vm814, %v4227, %v4231
      %v4234 = vshrl.u32 %v4122, 16
      %v4236 = vrot.slane %v4234, 4
      %v4237 = vshll.u32 %v4122, 16
      %v4239 = vrot.slane %v4237, 5
      %v4240 = vor.u32 %v4236, %v4239
      %v4241 = vrot.slane %v4240, 4
      %v4243 = vshll.u32 %v4123, 16
      %v4245 = vrot.slane %v4243, 5
      %v4246 = vsel %vm814, %v4241, %v4245
      %v4247 = vshrl.u32 %v4123, 16
      %v4249 = vrot.slane %v4247, 4
      %v4250 = vor.u32 %v4249, %v4245
      %v4251 = vrot.slane %v4250, 4
      %v4253 = vshll.u32 %v4124, 16
      %v4255 = vrot.slane %v4253, 5
      %v4256 = vsel %vm814, %v4251, %v4255
      %v4258 = vshrl.u32 %v4125, 16
      %v4260 = vrot.slane %v4258, 4
      %v4261 = vshll.u32 %v4125, 16
      %v4263 = vrot.slane %v4261, 5
      %v4264 = vor.u32 %v4260, %v4263
      %v4265 = vrot.slane %v4264, 4
      %v4267 = vshll.u32 %v4126, 16
      %v4269 = vrot.slane %v4267, 5
      %v4270 = vsel %vm814, %v4265, %v4269
      %v4271 = vshrl.u32 %v4126, 16
      %v4273 = vrot.slane %v4271, 4
      %v4274 = vor.u32 %v4273, %v4269
      %v4275 = vrot.slane %v4274, 4
      %v4277 = vshll.u32 %v4127, 16
      %v4279 = vrot.slane %v4277, 5
      %v4280 = vsel %vm814, %v4275, %v4279
      %v4282 = vshrl.u32 %v4128, 16
      %v4284 = vrot.slane %v4282, 4
      %v4285 = vshll.u32 %v4128, 16
      %v4287 = vrot.slane %v4285, 5
      %v4288 = vor.u32 %v4284, %v4287
      %v4289 = vrot.slane %v4288, 4
      %v4291 = vshll.u32 %v4129, 16
      %v4293 = vrot.slane %v4291, 5
      %v4294 = vsel %vm814, %v4289, %v4293
      %v4295 = vshrl.u32 %v4129, 16
      %v4297 = vrot.slane %v4295, 4
      %v4298 = vor.u32 %v4297, %v4293
      %v4299 = vrot.slane %v4298, 4
      %v4301 = vshll.u32 %v4130, 16
      %v4303 = vrot.slane %v4301, 5
      %v4304 = vsel %vm814, %v4299, %v4303
      %v4306 = vshrl.u32 %v4131, 16
      %v4308 = vrot.slane %v4306, 4
      %v4309 = vshll.u32 %v4131, 16
      %v4311 = vrot.slane %v4309, 5
      %v4312 = vor.u32 %v4308, %v4311
      %v4313 = vrot.slane %v4312, 4
      %v4315 = vshll.u32 %v4132, 16
      %v4317 = vrot.slane %v4315, 5
      %v4318 = vsel %vm814, %v4313, %v4317
      %v4319 = vshrl.u32 %v4132, 16
      %v4321 = vrot.slane %v4319, 4
      %v4322 = vor.u32 %v4321, %v4317
      %v4323 = vrot.slane %v4322, 4
      %v4325 = vshll.u32 %v4133, 16
      %v4327 = vrot.slane %v4325, 5
      %v4328 = vsel %vm814, %v4323, %v4327
      %v4330 = vshrl.u32 %v4134, 16
      %v4332 = vrot.slane %v4330, 4
      %v4333 = vshll.u32 %v4134, 16
      %v4335 = vrot.slane %v4333, 5
      %v4336 = vor.u32 %v4332, %v4335
      %v4337 = vrot.slane %v4336, 4
      %v4339 = vshll.u32 %v4135, 16
      %v4341 = vrot.slane %v4339, 5
      %v4342 = vsel %vm814, %v4337, %v4341
      %v4343 = vshrl.u32 %v4135, 16
      %v4345 = vrot.slane %v4343, 4
      %v4346 = vor.u32 %v4345, %v4341
      %v4347 = vrot.slane %v4346, 4
      %v4349 = vshll.u32 %v4136, 16
      %v4351 = vrot.slane %v4349, 5
      %v4352 = vsel %vm814, %v4347, %v4351
      %v4354 = vshrl.u32 %v4137, 16
      %v4356 = vrot.slane %v4354, 4
      %v4357 = vshll.u32 %v4137, 16
      %v4359 = vrot.slane %v4357, 5
      %v4360 = vor.u32 %v4356, %v4359
      %v4361 = vrot.slane %v4360, 4
      %v4363 = vshll.u32 %v4138, 16
      %v4365 = vrot.slane %v4363, 5
      %v4366 = vsel %vm814, %v4361, %v4365
      %v4367 = vshrl.u32 %v4138, 16
      %v4369 = vrot.slane %v4367, 4
      %v4370 = vor.u32 %v4369, %v4365
      %v4371 = vrot.slane %v4370, 4
      %v4373 = vshll.u32 %v4139, 16
      %v4375 = vrot.slane %v4373, 5
      %v4376 = vsel %vm814, %v4371, %v4375
      %v4378 = vshrl.u32 %v4140, 16
      %v4380 = vrot.slane %v4378, 4
      %v4381 = vshll.u32 %v4140, 16
      %v4383 = vrot.slane %v4381, 5
      %v4384 = vor.u32 %v4380, %v4383
      %v4385 = vrot.slane %v4384, 4
      %v4387 = vshll.u32 %v4141, 16
      %v4389 = vrot.slane %v4387, 5
      %v4390 = vsel %vm814, %v4385, %v4389
      %v4391 = vshrl.u32 %v4141, 16
      %v4393 = vrot.slane %v4391, 4
      %v4394 = vor.u32 %v4393, %v4389
      %v4395 = vrot.slane %v4394, 4
      %v4397 = vshll.u32 %v4142, 16
      %v4399 = vrot.slane %v4397, 5
      %v4400 = vsel %vm814, %v4395, %v4399
      %v4402 = vshrl.u32 %v4143, 16
      %v4404 = vrot.slane %v4402, 4
      %v4405 = vshll.u32 %v4143, 16
      %v4407 = vrot.slane %v4405, 5
      %v4408 = vor.u32 %v4404, %v4407
      %v4409 = vrot.slane %v4408, 4
      %v4411 = vshll.u32 %v4144, 16
      %v4413 = vrot.slane %v4411, 5
      %v4414 = vsel %vm814, %v4409, %v4413
      %v4415 = vshrl.u32 %v4144, 16
      %v4417 = vrot.slane %v4415, 4
      %v4418 = vor.u32 %v4417, %v4413
      %v4419 = vrot.slane %v4418, 4
      %v4421 = vshll.u32 %v4145, 16
      %v4423 = vrot.slane %v4421, 5
      %v4424 = vsel %vm814, %v4419, %v4423
      %v4426 = vshrl.u32 %v4146, 16
      %v4428 = vrot.slane %v4426, 4
      %v4429 = vshll.u32 %v4146, 16
      %v4431 = vrot.slane %v4429, 5
      %v4432 = vor.u32 %v4428, %v4431
      %v4433 = vrot.slane %v4432, 4
      %v4435 = vshll.u32 %v4147, 16
      %v4437 = vrot.slane %v4435, 5
      %v4438 = vsel %vm814, %v4433, %v4437
      %v4439 = vshrl.u32 %v4147, 16
      %v4441 = vrot.slane %v4439, 4
      %v4442 = vor.u32 %v4441, %v4437
      %v4443 = vrot.slane %v4442, 4
      %v4445 = vshll.u32 %v4148, 16
      %v4447 = vrot.slane %v4445, 5
      %v4448 = vsel %vm814, %v4443, %v4447
      %v4450 = vshrl.u32 %v4149, 16
      %v4452 = vrot.slane %v4450, 4
      %v4453 = vshll.u32 %v4149, 16
      %v4455 = vrot.slane %v4453, 5
      %v4456 = vor.u32 %v4452, %v4455
      %v4457 = vrot.slane %v4456, 4
      %v4459 = vshll.u32 %v4150, 16
      %v4461 = vrot.slane %v4459, 5
      %v4462 = vsel %vm814, %v4457, %v4461
      %v4463 = vshrl.u32 %v4150, 16
      %v4465 = vrot.slane %v4463, 4
      %v4466 = vor.u32 %v4465, %v4461
      %v4467 = vrot.slane %v4466, 4
      %v4469 = vshll.u32 %v4151, 16
      %v4471 = vrot.slane %v4469, 5
      %v4472 = vsel %vm814, %v4467, %v4471
      %v4474 = vshrl.u32 %v4152, 16
      %v4476 = vrot.slane %v4474, 4
      %v4477 = vshll.u32 %v4152, 16
      %v4479 = vrot.slane %v4477, 5
      %v4480 = vor.u32 %v4476, %v4479
      %v4481 = vrot.slane %v4480, 4
      %v4483 = vshll.u32 %v4153, 16
      %v4485 = vrot.slane %v4483, 5
      %v4486 = vsel %vm814, %v4481, %v4485
      %v4487 = vshrl.u32 %v4153, 16
      %v4489 = vrot.slane %v4487, 4
      %v4490 = vor.u32 %v4489, %v4485
      %v4491 = vrot.slane %v4490, 4
      %v4493 = vshll.u32 %v4154, 16
      %v4495 = vrot.slane %v4493, 5
      %v4496 = vsel %vm814, %v4491, %v4495
      %v4498 = vshrl.u32 %v4155, 16
      %v4500 = vrot.slane %v4498, 4
      %v4501 = vshll.u32 %v4155, 16
      %v4503 = vrot.slane %v4501, 5
      %v4504 = vor.u32 %v4500, %v4503
      %v4505 = vrot.slane %v4504, 4
      %v4507 = vshll.u32 %v4156, 16
      %v4509 = vrot.slane %v4507, 5
      %v4510 = vsel %vm814, %v4505, %v4509
      %v4511 = vshrl.u32 %v4156, 16
      %v4513 = vrot.slane %v4511, 4
      %v4514 = vor.u32 %v4513, %v4509
      %v4515 = vrot.slane %v4514, 4
      %v4517 = vshll.u32 %v4157, 16
      %v4519 = vrot.slane %v4517, 5
      %v4520 = vsel %vm814, %v4515, %v4519
      %v4522 = vshrl.u32 %v4158, 16
      %v4524 = vrot.slane %v4522, 4
      %v4525 = vshll.u32 %v4158, 16
      %v4527 = vrot.slane %v4525, 5
      %v4528 = vor.u32 %v4524, %v4527
      %v4529 = vrot.slane %v4528, 4
      %v4531 = vshll.u32 %v4159, 16
      %v4533 = vrot.slane %v4531, 5
      %v4534 = vsel %vm814, %v4529, %v4533
      %v4535 = vshrl.u32 %v4159, 16
      %v4537 = vrot.slane %v4535, 4
      %v4538 = vor.u32 %v4537, %v4533
      %v4539 = vrot.slane %v4538, 4
      %v4541 = vshll.u32 %v4160, 16
      %v4543 = vrot.slane %v4541, 5
      %v4544 = vsel %vm814, %v4539, %v4543
      %v4545 = vunpack.c.l.b16 %v4174
      %v4546 = vunpack.c.l.b16 %v4184
      %v4547 = vunpack.c.l.b16 %v4198
      %v4548 = vunpack.c.l.b16 %v4208
      %v4549 = vunpack.c.l.b16 %v4222
      %v4550 = vunpack.c.l.b16 %v4232
      %v4551 = vunpack.c.l.b16 %v4246
      %v4552 = vunpack.c.l.b16 %v4256
      %v4553 = vunpack.c.l.b16 %v4270
      %v4554 = vunpack.c.l.b16 %v4280
      %v4555 = vunpack.c.l.b16 %v4294
      %v4556 = vunpack.c.l.b16 %v4304
      %v4557 = vunpack.c.l.b16 %v4318
      %v4558 = vunpack.c.l.b16 %v4328
      %v4559 = vunpack.c.l.b16 %v4342
      %v4560 = vunpack.c.l.b16 %v4352
      %v4561 = vunpack.c.l.b16 %v4366
      %v4562 = vunpack.c.l.b16 %v4376
      %v4563 = vunpack.c.l.b16 %v4390
      %v4564 = vunpack.c.l.b16 %v4400
      %v4565 = vunpack.c.l.b16 %v4414
      %v4566 = vunpack.c.l.b16 %v4424
      %v4567 = vunpack.c.l.b16 %v4438
      %v4568 = vunpack.c.l.b16 %v4448
      %v4569 = vunpack.c.l.b16 %v4462
      %v4570 = vunpack.c.l.b16 %v4472
      %v4571 = vunpack.c.l.b16 %v4486
      %v4572 = vunpack.c.l.b16 %v4496
      %v4573 = vunpack.c.l.b16 %v4510
      %v4574 = vunpack.c.l.b16 %v4520
      %v4575 = vunpack.c.l.b16 %v4534
      %v4576 = vunpack.c.l.b16 %v4544
      %v4577 = vpack.c.b16 %v4546, %v4545
      %v4578 = vpack.c.b16 %v4548, %v4547
      %v4579 = vpack.c.b16 %v4550, %v4549
      %v4580 = vpack.c.b16 %v4552, %v4551
      %v4581 = vpack.c.b16 %v4554, %v4553
      %v4582 = vpack.c.b16 %v4556, %v4555
      %v4583 = vpack.c.b16 %v4558, %v4557
      %v4584 = vpack.c.b16 %v4560, %v4559
      %v4585 = vpack.c.b16 %v4562, %v4561
      %v4586 = vpack.c.b16 %v4564, %v4563
      %v4587 = vpack.c.b16 %v4566, %v4565
      %v4588 = vpack.c.b16 %v4568, %v4567
      %v4589 = vpack.c.b16 %v4570, %v4569
      %v4590 = vpack.c.b16 %v4572, %v4571
      %v4591 = vpack.c.b16 %v4574, %v4573
      %v4592 = vpack.c.b16 %v4576, %v4575
      %v4594 = vsel %vm1247, %v4577, 0
      %v4597 = vsel %vm1247, %v4578, 0
      %v4600 = vsel %vm1247, %v4579, 0
      %v4603 = vsel %vm1247, %v4580, 0
      %v4606 = vsel %vm1247, %v4581, 0
      %v4609 = vsel %vm1247, %v4582, 0
      %v4612 = vsel %vm1247, %v4583, 0
      %v4615 = vsel %vm1247, %v4584, 0
      %v4618 = vsel %vm1247, %v4585, 0
      %v4621 = vsel %vm1247, %v4586, 0
      %v4624 = vsel %vm1247, %v4587, 0
      %v4627 = vsel %vm1247, %v4588, 0
      %v4630 = vsel %vm1247, %v4589, 0
      %v4633 = vsel %vm1247, %v4590, 0
      %v4636 = vsel %vm1247, %v4591, 0
      %v4639 = vsel %vm1247, %v4592, 0
      %v4642 = vsel %vm1296, %v762, 0
      %4644 = vmatprep.subr.bf16.mxu0 0
      %4645 = vmatpush1.bf16.msra.mxu0 %v4642
      %4646 = vmatprep.subr.bf16.mxu0 0
      %4647 = vmatpush1.bf16.msra.mxu0 0
      %4648 = vmatprep.subr.bf16.mxu0 0
      %4649 = vmatpush1.bf16.msra.mxu0 0
      %4650 = vmatprep.subr.bf16.mxu0 0
      %4651 = vmatpush1.bf16.msra.mxu0 0
      %4652 = vmatprep.subr.bf16.mxu0 0
      %4653 = vmatpush1.bf16.msra.mxu0 0
      %4654 = vmatprep.subr.bf16.mxu0 0
      %4655 = vmatpush1.bf16.msra.mxu0 0
      %4656 = vmatprep.subr.bf16.mxu0 0
      %4657 = vmatpush1.bf16.msra.mxu0 0
      %4658 = vmatprep.subr.bf16.mxu0 0
      %4659 = vmatpush1.bf16.msra.mxu0 0
      %4660 = vmatprep.subr.bf16.mxu0 0
      %4661 = vmatpush1.bf16.msra.mxu0 0
      %4662 = vmatprep.subr.bf16.mxu0 0
      %4663 = vmatpush1.bf16.msra.mxu0 0
      %4664 = vmatprep.subr.bf16.mxu0 0
      %4665 = vmatpush1.bf16.msra.mxu0 0
      %4666 = vmatprep.subr.bf16.mxu0 0
      %4667 = vmatpush1.bf16.msra.mxu0 0
      %4668 = vmatprep.subr.bf16.mxu0 0
      %4669 = vmatpush1.bf16.msra.mxu0 0
      %4670 = vmatprep.subr.bf16.mxu0 0
      %4671 = vmatpush1.bf16.msra.mxu0 0
      %4672 = vmatprep.subr.bf16.mxu0 0
      %4673 = vmatpush1.bf16.msra.mxu0 0
      %4674 = vmatprep.subr.bf16.mxu0 0
      %4675 = vmatpush1.bf16.msra.mxu0 0
      %4676 = vmatprep.mubr.bf16.mxu0 0
      %4677 = vmatmul.mubr.bf16.gmra.mrb[0].mxu0 %v4594
      %v4678 = vpop.f32.mrb[0].mxu0
      %v4679 = vadd.f32 0.0, %v4678
      %v4680 = vpop.f32.mrb[0].mxu0
      %v4681 = vpop.f32.mrb[0].mxu0
      %v4682 = vadd.f32 0.0, %v4681
      %v4683 = vpop.f32.mrb[0].mxu0
      %4684 = vmatprep.mubr.bf16.mxu0 0
      %4685 = vmatmul.mubr.bf16.gmra.mrb[0].mxu0 %v4597
      %v4686 = vpop.f32.mrb[0].mxu0
      %v4687 = vadd.f32 0.0, %v4686
      %v4688 = vpop.f32.mrb[0].mxu0
      %v4689 = vpop.f32.mrb[0].mxu0
      %v4690 = vadd.f32 0.0, %v4689
      %v4691 = vpop.f32.mrb[0].mxu0
      %4692 = vmatprep.mubr.bf16.mxu0 0
      %4693 = vmatmul.mubr.bf16.gmra.mrb[0].mxu0 %v4600
      %v4694 = vpop.f32.mrb[0].mxu0
      %v4695 = vadd.f32 0.0, %v4694
      %v4696 = vpop.f32.mrb[0].mxu0
      %v4697 = vpop.f32.mrb[0].mxu0
      %v4698 = vadd.f32 0.0, %v4697
      %v4699 = vpop.f32.mrb[0].mxu0
      %4700 = vmatprep.mubr.bf16.mxu0 0
      %4701 = vmatmul.mubr.bf16.gmra.mrb[0].mxu0 %v4603
      %v4702 = vpop.f32.mrb[0].mxu0
      %v4703 = vadd.f32 0.0, %v4702
      %v4704 = vpop.f32.mrb[0].mxu0
      %v4705 = vpop.f32.mrb[0].mxu0
      %v4706 = vadd.f32 0.0, %v4705
      %v4707 = vpop.f32.mrb[0].mxu0
      %4708 = vmatprep.mubr.bf16.mxu0 0
      %4709 = vmatmul.mubr.bf16.gmra.mrb[0].mxu0 %v4606
      %v4710 = vpop.f32.mrb[0].mxu0
      %v4711 = vadd.f32 0.0, %v4710
      %v4712 = vpop.f32.mrb[0].mxu0
      %v4713 = vpop.f32.mrb[0].mxu0
      %v4714 = vadd.f32 0.0, %v4713
      %v4715 = vpop.f32.mrb[0].mxu0
      %4716 = vmatprep.mubr.bf16.mxu0 0
      %4717 = vmatmul.mubr.bf16.gmra.mrb[0].mxu0 %v4609
      %v4718 = vpop.f32.mrb[0].mxu0
      %v4719 = vadd.f32 0.0, %v4718
      %v4720 = vpop.f32.mrb[0].mxu0
      %v4721 = vpop.f32.mrb[0].mxu0
      %v4722 = vadd.f32 0.0, %v4721
      %v4723 = vpop.f32.mrb[0].mxu0
      %4724 = vmatprep.mubr.bf16.mxu0 0
      %4725 = vmatmul.mubr.bf16.gmra.mrb[0].mxu0 %v4612
      %v4726 = vpop.f32.mrb[0].mxu0
      %v4727 = vadd.f32 0.0, %v4726
      %v4728 = vpop.f32.mrb[0].mxu0
      %v4729 = vpop.f32.mrb[0].mxu0
      %v4730 = vadd.f32 0.0, %v4729
      %v4731 = vpop.f32.mrb[0].mxu0
      %4732 = vmatprep.mubr.bf16.mxu0 0
      %4733 = vmatmul.mubr.bf16.gmra.mrb[0].mxu0 %v4615
      %v4734 = vpop.f32.mrb[0].mxu0
      %v4735 = vadd.f32 0.0, %v4734
      %v4736 = vpop.f32.mrb[0].mxu0
      %v4737 = vpop.f32.mrb[0].mxu0
      %v4738 = vadd.f32 0.0, %v4737
      %v4739 = vpop.f32.mrb[0].mxu0
      %4740 = vmatprep.mubr.bf16.mxu0 0
      %4741 = vmatmul.mubr.bf16.gmra.mrb[0].mxu0 %v4618
      %v4742 = vpop.f32.mrb[0].mxu0
      %v4743 = vadd.f32 0.0, %v4742
      %v4744 = vpop.f32.mrb[0].mxu0
      %v4745 = vpop.f32.mrb[0].mxu0
      %v4746 = vadd.f32 0.0, %v4745
      %v4747 = vpop.f32.mrb[0].mxu0
      %4748 = vmatprep.mubr.bf16.mxu0 0
      %4749 = vmatmul.mubr.bf16.gmra.mrb[0].mxu0 %v4621
      %v4750 = vpop.f32.mrb[0].mxu0
      %v4751 = vadd.f32 0.0, %v4750
      %v4752 = vpop.f32.mrb[0].mxu0
      %v4753 = vpop.f32.mrb[0].mxu0
      %v4754 = vadd.f32 0.0, %v4753
      %v4755 = vpop.f32.mrb[0].mxu0
      %4756 = vmatprep.mubr.bf16.mxu0 0
      %4757 = vmatmul.mubr.bf16.gmra.mrb[0].mxu0 %v4624
      %v4758 = vpop.f32.mrb[0].mxu0
      %v4759 = vadd.f32 0.0, %v4758
      %v4760 = vpop.f32.mrb[0].mxu0
      %v4761 = vpop.f32.mrb[0].mxu0
      %v4762 = vadd.f32 0.0, %v4761
      %v4763 = vpop.f32.mrb[0].mxu0
      %4764 = vmatprep.mubr.bf16.mxu0 0
      %4765 = vmatmul.mubr.bf16.gmra.mrb[0].mxu0 %v4627
      %v4766 = vpop.f32.mrb[0].mxu0
      %v4767 = vadd.f32 0.0, %v4766
      %v4768 = vpop.f32.mrb[0].mxu0
      %v4769 = vpop.f32.mrb[0].mxu0
      %v4770 = vadd.f32 0.0, %v4769
      %v4771 = vpop.f32.mrb[0].mxu0
      %4772 = vmatprep.mubr.bf16.mxu0 0
      %4773 = vmatmul.mubr.bf16.gmra.mrb[0].mxu0 %v4630
      %v4774 = vpop.f32.mrb[0].mxu0
      %v4775 = vadd.f32 0.0, %v4774
      %v4776 = vpop.f32.mrb[0].mxu0
      %v4777 = vpop.f32.mrb[0].mxu0
      %v4778 = vadd.f32 0.0, %v4777
      %v4779 = vpop.f32.mrb[0].mxu0
      %4780 = vmatprep.mubr.bf16.mxu0 0
      %4781 = vmatmul.mubr.bf16.gmra.mrb[0].mxu0 %v4633
      %v4782 = vpop.f32.mrb[0].mxu0
      %v4783 = vadd.f32 0.0, %v4782
      %v4784 = vpop.f32.mrb[0].mxu0
      %v4785 = vpop.f32.mrb[0].mxu0
      %v4786 = vadd.f32 0.0, %v4785
      %v4787 = vpop.f32.mrb[0].mxu0
      %4788 = vmatprep.mubr.bf16.mxu0 0
      %4789 = vmatmul.mubr.bf16.gmra.mrb[0].mxu0 %v4636
      %v4790 = vpop.f32.mrb[0].mxu0
      %v4791 = vadd.f32 0.0, %v4790
      %v4792 = vpop.f32.mrb[0].mxu0
      %v4793 = vpop.f32.mrb[0].mxu0
      %v4794 = vadd.f32 0.0, %v4793
      %v4795 = vpop.f32.mrb[0].mxu0
      %4796 = vmatprep.mubr.bf16.mxu0 0
      %4797 = vmatmul.mubr.bf16.gmra.mrb[0].mxu0 %v4639
      %v4798 = vpop.f32.mrb[0].mxu0
      %v4799 = vadd.f32 0.0, %v4798
      %v4800 = vpop.f32.mrb[0].mxu0
      %v4801 = vpop.f32.mrb[0].mxu0
      %v4802 = vadd.f32 0.0, %v4801
      %v4803 = vpop.f32.mrb[0].mxu0
      %4804 = vdwg.mxu0
      %v4805 = vadd.f32 %v4081, %v4679
      %v4806 = vadd.f32 %v4082, %v4682
      %v4807 = vadd.f32 %v4083, %v4687
      %v4808 = vadd.f32 %v4084, %v4690
      %v4809 = vadd.f32 %v4085, %v4695
      %v4810 = vadd.f32 %v4086, %v4698
      %v4811 = vadd.f32 %v4087, %v4703
      %v4812 = vadd.f32 %v4088, %v4706
      %v4813 = vadd.f32 %v4089, %v4711
      %v4814 = vadd.f32 %v4090, %v4714
      %v4815 = vadd.f32 %v4091, %v4719
      %v4816 = vadd.f32 %v4092, %v4722
      %v4817 = vadd.f32 %v4093, %v4727
      %v4818 = vadd.f32 %v4094, %v4730
      %v4819 = vadd.f32 %v4095, %v4735
      %v4820 = vadd.f32 %v4096, %v4738
      %v4821 = vadd.f32 %v4097, %v4743
      %v4822 = vadd.f32 %v4098, %v4746
      %v4823 = vadd.f32 %v4099, %v4751
      %v4824 = vadd.f32 %v4100, %v4754
      %v4825 = vadd.f32 %v4101, %v4759
      %v4826 = vadd.f32 %v4102, %v4762
      %v4827 = vadd.f32 %v4103, %v4767
      %v4828 = vadd.f32 %v4104, %v4770
      %v4829 = vadd.f32 %v4105, %v4775
      %v4830 = vadd.f32 %v4106, %v4778
      %v4831 = vadd.f32 %v4107, %v4783
      %v4832 = vadd.f32 %v4108, %v4786
      %v4833 = vadd.f32 %v4109, %v4791
      %v4834 = vadd.f32 %v4110, %v4794
      %v4835 = vadd.f32 %v4111, %v4799
      %v4836 = vadd.f32 %v4112, %v4802
      %v4837 = vld [vmem:[%s3756] sm:$0xe]
      %v4838 = vld [vmem:[%s3756 + $0xc] sm:$0xe]
      %v4839 = vld [vmem:[%s3756 + $0x18] sm:$0xe]
      %v4840 = vld [vmem:[%s3756 + $0x24] sm:$0xe]
      %v4841 = vld [vmem:[%s3756 + $0x30] sm:$0xe]
      %v4842 = vld [vmem:[%s3756 + $0x3c] sm:$0xe]
      %v4843 = vld [vmem:[%s3756 + $0x48] sm:$0xe]
      %v4844 = vld [vmem:[%s3756 + $0x54] sm:$0xe]
      %v4845 = vld [vmem:[%s3756 + $0x60] sm:$0xe]
      %v4846 = vld [vmem:[%s3756 + $0x6c] sm:$0xe]
      %v4847 = vld [vmem:[%s3756 + $0x78] sm:$0xe]
      %v4848 = vld [vmem:[%s3756 + $0x84] sm:$0xe]
      %v4849 = vld [vmem:[%s3756 + $0x90] sm:$0xe]
      %v4850 = vld [vmem:[%s3756 + $0x9c] sm:$0xe]
      %v4851 = vld [vmem:[%s3756 + $0xa8] sm:$0xe]
      %v4852 = vld [vmem:[%s3756 + $0xb4] sm:$0xe]
      %v4901 = vrot.slane %v4837, 5
      %v4902 = vrot.slane %v4901, 4
      %v4903 = vrot.slane %v4114, 5
      %v4904 = vsel %vm1803, %v4902, %v4903
      %v4905 = vrot.slane %v4903, 4
      %v4906 = vrot.slane %v4115, 5
      %v4907 = vsel %vm1803, %v4905, %v4906
      %v4908 = vrot.slane %v4838, 5
      %v4909 = vrot.slane %v4908, 4
      %v4910 = vrot.slane %v4117, 5
      %v4911 = vsel %vm1803, %v4909, %v4910
      %v4912 = vrot.slane %v4910, 4
      %v4913 = vrot.slane %v4118, 5
      %v4914 = vsel %vm1803, %v4912, %v4913
      %v4915 = vrot.slane %v4839, 5
      %v4916 = vrot.slane %v4915, 4
      %v4917 = vrot.slane %v4120, 5
      %v4918 = vsel %vm1803, %v4916, %v4917
      %v4919 = vrot.slane %v4917, 4
      %v4920 = vrot.slane %v4121, 5
      %v4921 = vsel %vm1803, %v4919, %v4920
      %v4922 = vrot.slane %v4840, 5
      %v4923 = vrot.slane %v4922, 4
      %v4924 = vrot.slane %v4123, 5
      %v4925 = vsel %vm1803, %v4923, %v4924
      %v4926 = vrot.slane %v4924, 4
      %v4927 = vrot.slane %v4124, 5
      %v4928 = vsel %vm1803, %v4926, %v4927
      %v4929 = vrot.slane %v4841, 5
      %v4930 = vrot.slane %v4929, 4
      %v4931 = vrot.slane %v4126, 5
      %v4932 = vsel %vm1803, %v4930, %v4931
      %v4933 = vrot.slane %v4931, 4
      %v4934 = vrot.slane %v4127, 5
      %v4935 = vsel %vm1803, %v4933, %v4934
      %v4936 = vrot.slane %v4842, 5
      %v4937 = vrot.slane %v4936, 4
      %v4938 = vrot.slane %v4129, 5
      %v4939 = vsel %vm1803, %v4937, %v4938
      %v4940 = vrot.slane %v4938, 4
      %v4941 = vrot.slane %v4130, 5
      %v4942 = vsel %vm1803, %v4940, %v4941
      %v4943 = vrot.slane %v4843, 5
      %v4944 = vrot.slane %v4943, 4
      %v4945 = vrot.slane %v4132, 5
      %v4946 = vsel %vm1803, %v4944, %v4945
      %v4947 = vrot.slane %v4945, 4
      %v4948 = vrot.slane %v4133, 5
      %v4949 = vsel %vm1803, %v4947, %v4948
      %v4950 = vrot.slane %v4844, 5
      %v4951 = vrot.slane %v4950, 4
      %v4952 = vrot.slane %v4135, 5
      %v4953 = vsel %vm1803, %v4951, %v4952
      %v4954 = vrot.slane %v4952, 4
      %v4955 = vrot.slane %v4136, 5
      %v4956 = vsel %vm1803, %v4954, %v4955
      %v4957 = vrot.slane %v4845, 5
      %v4958 = vrot.slane %v4957, 4
      %v4959 = vrot.slane %v4138, 5
      %v4960 = vsel %vm1803, %v4958, %v4959
      %v4961 = vrot.slane %v4959, 4
      %v4962 = vrot.slane %v4139, 5
      %v4963 = vsel %vm1803, %v4961, %v4962
      %v4964 = vrot.slane %v4846, 5
      %v4965 = vrot.slane %v4964, 4
      %v4966 = vrot.slane %v4141, 5
      %v4967 = vsel %vm1803, %v4965, %v4966
      %v4968 = vrot.slane %v4966, 4
      %v4969 = vrot.slane %v4142, 5
      %v4970 = vsel %vm1803, %v4968, %v4969
      %v4971 = vrot.slane %v4847, 5
      %v4972 = vrot.slane %v4971, 4
      %v4973 = vrot.slane %v4144, 5
      %v4974 = vsel %vm1803, %v4972, %v4973
      %v4975 = vrot.slane %v4973, 4
      %v4976 = vrot.slane %v4145, 5
      %v4977 = vsel %vm1803, %v4975, %v4976
      %v4978 = vrot.slane %v4848, 5
      %v4979 = vrot.slane %v4978, 4
      %v4980 = vrot.slane %v4147, 5
      %v4981 = vsel %vm1803, %v4979, %v4980
      %v4982 = vrot.slane %v4980, 4
      %v4983 = vrot.slane %v4148, 5
      %v4984 = vsel %vm1803, %v4982, %v4983
      %v4985 = vrot.slane %v4849, 5
      %v4986 = vrot.slane %v4985, 4
      %v4987 = vrot.slane %v4150, 5
      %v4988 = vsel %vm1803, %v4986, %v4987
      %v4989 = vrot.slane %v4987, 4
      %v4990 = vrot.slane %v4151, 5
      %v4991 = vsel %vm1803, %v4989, %v4990
      %v4992 = vrot.slane %v4850, 5
      %v4993 = vrot.slane %v4992, 4
      %v4994 = vrot.slane %v4153, 5
      %v4995 = vsel %vm1803, %v4993, %v4994
      %v4996 = vrot.slane %v4994, 4
      %v4997 = vrot.slane %v4154, 5
      %v4998 = vsel %vm1803, %v4996, %v4997
      %v4999 = vrot.slane %v4851, 5
      %v5000 = vrot.slane %v4999, 4
      %v5001 = vrot.slane %v4156, 5
      %v5002 = vsel %vm1803, %v5000, %v5001
      %v5003 = vrot.slane %v5001, 4
      %v5004 = vrot.slane %v4157, 5
      %v5005 = vsel %vm1803, %v5003, %v5004
      %v5006 = vrot.slane %v4852, 5
      %v5007 = vrot.slane %v5006, 4
      %v5008 = vrot.slane %v4159, 5
      %v5009 = vsel %vm1803, %v5007, %v5008
      %v5010 = vrot.slane %v5008, 4
      %v5011 = vrot.slane %v4160, 5
      %v5012 = vsel %vm1803, %v5010, %v5011
      %v5013 = vunpack.c.l.b16 %v4904
      %v5014 = vunpack.c.l.b16 %v4907
      %v5015 = vunpack.c.l.b16 %v4911
      %v5016 = vunpack.c.l.b16 %v4914
      %v5017 = vunpack.c.l.b16 %v4918
      %v5018 = vunpack.c.l.b16 %v4921
      %v5019 = vunpack.c.l.b16 %v4925
      %v5020 = vunpack.c.l.b16 %v4928
      %v5021 = vunpack.c.l.b16 %v4932
      %v5022 = vunpack.c.l.b16 %v4935
      %v5023 = vunpack.c.l.b16 %v4939
      %v5024 = vunpack.c.l.b16 %v4942
      %v5025 = vunpack.c.l.b16 %v4946
      %v5026 = vunpack.c.l.b16 %v4949
      %v5027 = vunpack.c.l.b16 %v4953
      %v5028 = vunpack.c.l.b16 %v4956
      %v5029 = vunpack.c.l.b16 %v4960
      %v5030 = vunpack.c.l.b16 %v4963
      %v5031 = vunpack.c.l.b16 %v4967
      %v5032 = vunpack.c.l.b16 %v4970
      %v5033 = vunpack.c.l.b16 %v4974
      %v5034 = vunpack.c.l.b16 %v4977
      %v5035 = vunpack.c.l.b16 %v4981
      %v5036 = vunpack.c.l.b16 %v4984
      %v5037 = vunpack.c.l.b16 %v4988
      %v5038 = vunpack.c.l.b16 %v4991
      %v5039 = vunpack.c.l.b16 %v4995
      %v5040 = vunpack.c.l.b16 %v4998
      %v5041 = vunpack.c.l.b16 %v5002
      %v5042 = vunpack.c.l.b16 %v5005
      %v5043 = vunpack.c.l.b16 %v5009
      %v5044 = vunpack.c.l.b16 %v5012
      %v5045 = vpack.c.b16 %v5014, %v5013
      %v5046 = vpack.c.b16 %v5016, %v5015
      %v5047 = vpack.c.b16 %v5018, %v5017
      %v5048 = vpack.c.b16 %v5020, %v5019
      %v5049 = vpack.c.b16 %v5022, %v5021
      %v5050 = vpack.c.b16 %v5024, %v5023
      %v5051 = vpack.c.b16 %v5026, %v5025
      %v5052 = vpack.c.b16 %v5028, %v5027
      %v5053 = vpack.c.b16 %v5030, %v5029
      %v5054 = vpack.c.b16 %v5032, %v5031
      %v5055 = vpack.c.b16 %v5034, %v5033
      %v5056 = vpack.c.b16 %v5036, %v5035
      %v5057 = vpack.c.b16 %v5038, %v5037
      %v5058 = vpack.c.b16 %v5040, %v5039
      %v5059 = vpack.c.b16 %v5042, %v5041
      %v5060 = vpack.c.b16 %v5044, %v5043
      %v5062 = vsel %vm1247, %v5045, 0
      %v5065 = vsel %vm1247, %v5046, 0
      %v5068 = vsel %vm1247, %v5047, 0
      %v5071 = vsel %vm1247, %v5048, 0
      %v5074 = vsel %vm1247, %v5049, 0
      %v5077 = vsel %vm1247, %v5050, 0
      %v5080 = vsel %vm1247, %v5051, 0
      %v5083 = vsel %vm1247, %v5052, 0
      %v5086 = vsel %vm1247, %v5053, 0
      %v5089 = vsel %vm1247, %v5054, 0
      %v5092 = vsel %vm1247, %v5055, 0
      %v5095 = vsel %vm1247, %v5056, 0
      %v5098 = vsel %vm1247, %v5057, 0
      %v5101 = vsel %vm1247, %v5058, 0
      %v5104 = vsel %vm1247, %v5059, 0
      %v5107 = vsel %vm1247, %v5060, 0
      %v5110 = vsel %vm1296, %v763, 0
      %5112 = vmatprep.subr.bf16.mxu0 0
      %5113 = vmatpush1.bf16.msra.mxu0 %v5110
      %5114 = vmatprep.subr.bf16.mxu0 0
      %5115 = vmatpush1.bf16.msra.mxu0 0
      %5116 = vmatprep.subr.bf16.mxu0 0
      %5117 = vmatpush1.bf16.msra.mxu0 0
      %5118 = vmatprep.subr.bf16.mxu0 0
      %5119 = vmatpush1.bf16.msra.mxu0 0
      %5120 = vmatprep.subr.bf16.mxu0 0
      %5121 = vmatpush1.bf16.msra.mxu0 0
      %5122 = vmatprep.subr.bf16.mxu0 0
      %5123 = vmatpush1.bf16.msra.mxu0 0
      %5124 = vmatprep.subr.bf16.mxu0 0
      %5125 = vmatpush1.bf16.msra.mxu0 0
      %5126 = vmatprep.subr.bf16.mxu0 0
      %5127 = vmatpush1.bf16.msra.mxu0 0
      %5128 = vmatprep.subr.bf16.mxu0 0
      %5129 = vmatpush1.bf16.msra.mxu0 0
      %5130 = vmatprep.subr.bf16.mxu0 0
      %5131 = vmatpush1.bf16.msra.mxu0 0
      %5132 = vmatprep.subr.bf16.mxu0 0
      %5133 = vmatpush1.bf16.msra.mxu0 0
      %5134 = vmatprep.subr.bf16.mxu0 0
      %5135 = vmatpush1.bf16.msra.mxu0 0
      %5136 = vmatprep.subr.bf16.mxu0 0
      %5137 = vmatpush1.bf16.msra.mxu0 0
      %5138 = vmatprep.subr.bf16.mxu0 0
      %5139 = vmatpush1.bf16.msra.mxu0 0
      %5140 = vmatprep.subr.bf16.mxu0 0
      %5141 = vmatpush1.bf16.msra.mxu0 0
      %5142 = vmatprep.subr.bf16.mxu0 0
      %5143 = vmatpush1.bf16.msra.mxu0 0
      %5144 = vmatprep.mubr.bf16.mxu0 0
      %5145 = vmatmul.mubr.bf16.gmra.mrb[0].mxu0 %v5062
      %v5146 = vpop.f32.mrb[0].mxu0
      %v5147 = vadd.f32 0.0, %v5146
      %v5148 = vpop.f32.mrb[0].mxu0
      %v5149 = vpop.f32.mrb[0].mxu0
      %v5150 = vadd.f32 0.0, %v5149
      %v5151 = vpop.f32.mrb[0].mxu0
      %5152 = vmatprep.mubr.bf16.mxu0 0
      %5153 = vmatmul.mubr.bf16.gmra.mrb[0].mxu0 %v5065
      %v5154 = vpop.f32.mrb[0].mxu0
      %v5155 = vadd.f32 0.0, %v5154
      %v5156 = vpop.f32.mrb[0].mxu0
      %v5157 = vpop.f32.mrb[0].mxu0
      %v5158 = vadd.f32 0.0, %v5157
      %v5159 = vpop.f32.mrb[0].mxu0
      %5160 = vmatprep.mubr.bf16.mxu0 0
      %5161 = vmatmul.mubr.bf16.gmra.mrb[0].mxu0 %v5068
      %v5162 = vpop.f32.mrb[0].mxu0
      %v5163 = vadd.f32 0.0, %v5162
      %v5164 = vpop.f32.mrb[0].mxu0
      %v5165 = vpop.f32.mrb[0].mxu0
      %v5166 = vadd.f32 0.0, %v5165
      %v5167 = vpop.f32.mrb[0].mxu0
      %5168 = vmatprep.mubr.bf16.mxu0 0
      %5169 = vmatmul.mubr.bf16.gmra.mrb[0].mxu0 %v5071
      %v5170 = vpop.f32.mrb[0].mxu0
      %v5171 = vadd.f32 0.0, %v5170
      %v5172 = vpop.f32.mrb[0].mxu0
      %v5173 = vpop.f32.mrb[0].mxu0
      %v5174 = vadd.f32 0.0, %v5173
      %v5175 = vpop.f32.mrb[0].mxu0
      %5176 = vmatprep.mubr.bf16.mxu0 0
      %5177 = vmatmul.mubr.bf16.gmra.mrb[0].mxu0 %v5074
      %v5178 = vpop.f32.mrb[0].mxu0
      %v5179 = vadd.f32 0.0, %v5178
      %v5180 = vpop.f32.mrb[0].mxu0
      %v5181 = vpop.f32.mrb[0].mxu0
      %v5182 = vadd.f32 0.0, %v5181
      %v5183 = vpop.f32.mrb[0].mxu0
      %5184 = vmatprep.mubr.bf16.mxu0 0
      %5185 = vmatmul.mubr.bf16.gmra.mrb[0].mxu0 %v5077
      %v5186 = vpop.f32.mrb[0].mxu0
      %v5187 = vadd.f32 0.0, %v5186
      %v5188 = vpop.f32.mrb[0].mxu0
      %v5189 = vpop.f32.mrb[0].mxu0
      %v5190 = vadd.f32 0.0, %v5189
      %v5191 = vpop.f32.mrb[0].mxu0
      %5192 = vmatprep.mubr.bf16.mxu0 0
      %5193 = vmatmul.mubr.bf16.gmra.mrb[0].mxu0 %v5080
      %v5194 = vpop.f32.mrb[0].mxu0
      %v5195 = vadd.f32 0.0, %v5194
      %v5196 = vpop.f32.mrb[0].mxu0
      %v5197 = vpop.f32.mrb[0].mxu0
      %v5198 = vadd.f32 0.0, %v5197
      %v5199 = vpop.f32.mrb[0].mxu0
      %5200 = vmatprep.mubr.bf16.mxu0 0
      %5201 = vmatmul.mubr.bf16.gmra.mrb[0].mxu0 %v5083
      %v5202 = vpop.f32.mrb[0].mxu0
      %v5203 = vadd.f32 0.0, %v5202
      %v5204 = vpop.f32.mrb[0].mxu0
      %v5205 = vpop.f32.mrb[0].mxu0
      %v5206 = vadd.f32 0.0, %v5205
      %v5207 = vpop.f32.mrb[0].mxu0
      %5208 = vmatprep.mubr.bf16.mxu0 0
      %5209 = vmatmul.mubr.bf16.gmra.mrb[0].mxu0 %v5086
      %v5210 = vpop.f32.mrb[0].mxu0
      %v5211 = vadd.f32 0.0, %v5210
      %v5212 = vpop.f32.mrb[0].mxu0
      %v5213 = vpop.f32.mrb[0].mxu0
      %v5214 = vadd.f32 0.0, %v5213
      %v5215 = vpop.f32.mrb[0].mxu0
      %5216 = vmatprep.mubr.bf16.mxu0 0
      %5217 = vmatmul.mubr.bf16.gmra.mrb[0].mxu0 %v5089
      %v5218 = vpop.f32.mrb[0].mxu0
      %v5219 = vadd.f32 0.0, %v5218
      %v5220 = vpop.f32.mrb[0].mxu0
      %v5221 = vpop.f32.mrb[0].mxu0
      %v5222 = vadd.f32 0.0, %v5221
      %v5223 = vpop.f32.mrb[0].mxu0
      %5224 = vmatprep.mubr.bf16.mxu0 0
      %5225 = vmatmul.mubr.bf16.gmra.mrb[0].mxu0 %v5092
      %v5226 = vpop.f32.mrb[0].mxu0
      %v5227 = vadd.f32 0.0, %v5226
      %v5228 = vpop.f32.mrb[0].mxu0
      %v5229 = vpop.f32.mrb[0].mxu0
      %v5230 = vadd.f32 0.0, %v5229
      %v5231 = vpop.f32.mrb[0].mxu0
      %5232 = vmatprep.mubr.bf16.mxu0 0
      %5233 = vmatmul.mubr.bf16.gmra.mrb[0].mxu0 %v5095
      %v5234 = vpop.f32.mrb[0].mxu0
      %v5235 = vadd.f32 0.0, %v5234
      %v5236 = vpop.f32.mrb[0].mxu0
      %v5237 = vpop.f32.mrb[0].mxu0
      %v5238 = vadd.f32 0.0, %v5237
      %v5239 = vpop.f32.mrb[0].mxu0
      %5240 = vmatprep.mubr.bf16.mxu0 0
      %5241 = vmatmul.mubr.bf16.gmra.mrb[0].mxu0 %v5098
      %v5242 = vpop.f32.mrb[0].mxu0
      %v5243 = vadd.f32 0.0, %v5242
      %v5244 = vpop.f32.mrb[0].mxu0
      %v5245 = vpop.f32.mrb[0].mxu0
      %v5246 = vadd.f32 0.0, %v5245
      %v5247 = vpop.f32.mrb[0].mxu0
      %5248 = vmatprep.mubr.bf16.mxu0 0
      %5249 = vmatmul.mubr.bf16.gmra.mrb[0].mxu0 %v5101
      %v5250 = vpop.f32.mrb[0].mxu0
      %v5251 = vadd.f32 0.0, %v5250
      %v5252 = vpop.f32.mrb[0].mxu0
      %v5253 = vpop.f32.mrb[0].mxu0
      %v5254 = vadd.f32 0.0, %v5253
      %v5255 = vpop.f32.mrb[0].mxu0
      %5256 = vmatprep.mubr.bf16.mxu0 0
      %5257 = vmatmul.mubr.bf16.gmra.mrb[0].mxu0 %v5104
      %v5258 = vpop.f32.mrb[0].mxu0
      %v5259 = vadd.f32 0.0, %v5258
      %v5260 = vpop.f32.mrb[0].mxu0
      %v5261 = vpop.f32.mrb[0].mxu0
      %v5262 = vadd.f32 0.0, %v5261
      %v5263 = vpop.f32.mrb[0].mxu0
      %5264 = vmatprep.mubr.bf16.mxu0 0
      %5265 = vmatmul.mubr.bf16.gmra.mrb[0].mxu0 %v5107
      %v5266 = vpop.f32.mrb[0].mxu0
      %v5267 = vadd.f32 0.0, %v5266
      %v5268 = vpop.f32.mrb[0].mxu0
      %v5269 = vpop.f32.mrb[0].mxu0
      %v5270 = vadd.f32 0.0, %v5269
      %v5271 = vpop.f32.mrb[0].mxu0
      %5272 = vdwg.mxu0
      %v5273 = vadd.f32 %v4805, %v5147
      %v5274 = vadd.f32 %v4806, %v5150
      %v5275 = vadd.f32 %v4807, %v5155
      %v5276 = vadd.f32 %v4808, %v5158
      %v5277 = vadd.f32 %v4809, %v5163
      %v5278 = vadd.f32 %v4810, %v5166
      %v5279 = vadd.f32 %v4811, %v5171
      %v5280 = vadd.f32 %v4812, %v5174
      %v5281 = vadd.f32 %v4813, %v5179
      %v5282 = vadd.f32 %v4814, %v5182
      %v5283 = vadd.f32 %v4815, %v5187
      %v5284 = vadd.f32 %v4816, %v5190
      %v5285 = vadd.f32 %v4817, %v5195
      %v5286 = vadd.f32 %v4818, %v5198
      %v5287 = vadd.f32 %v4819, %v5203
      %v5288 = vadd.f32 %v4820, %v5206
      %v5289 = vadd.f32 %v4821, %v5211
      %v5290 = vadd.f32 %v4822, %v5214
      %v5291 = vadd.f32 %v4823, %v5219
      %v5292 = vadd.f32 %v4824, %v5222
      %v5293 = vadd.f32 %v4825, %v5227
      %v5294 = vadd.f32 %v4826, %v5230
      %v5295 = vadd.f32 %v4827, %v5235
      %v5296 = vadd.f32 %v4828, %v5238
      %v5297 = vadd.f32 %v4829, %v5243
      %v5298 = vadd.f32 %v4830, %v5246
      %v5299 = vadd.f32 %v4831, %v5251
      %v5300 = vadd.f32 %v4832, %v5254
      %v5301 = vadd.f32 %v4833, %v5259
      %v5302 = vadd.f32 %v4834, %v5262
      %v5303 = vadd.f32 %v4835, %v5267
      %v5304 = vadd.f32 %v4836, %v5270
      %v5305 = vld [vmem:[%s2] sm:$0x1]
      %v5307 = vlaneseq
      %v5308 = vshrl.u32 %v5307, 7
      %v5309 = vsub.s32 0, %v5308
      %v5310 = vrot.slane %v5305, %v5309
      %v5312 = vadd.f32 %v5273, %v5310
      %v5313 = vadd.f32 %v5274, %v5310
      %v5314 = vadd.f32 %v5275, %v5310
      %v5315 = vadd.f32 %v5276, %v5310
      %v5316 = vadd.f32 %v5277, %v5310
      %v5317 = vadd.f32 %v5278, %v5310
      %v5318 = vadd.f32 %v5279, %v5310
      %v5319 = vadd.f32 %v5280, %v5310
      %v5320 = vadd.f32 %v5281, %v5310
      %v5321 = vadd.f32 %v5282, %v5310
      %v5322 = vadd.f32 %v5283, %v5310
      %v5323 = vadd.f32 %v5284, %v5310
      %v5324 = vadd.f32 %v5285, %v5310
      %v5325 = vadd.f32 %v5286, %v5310
      %v5326 = vadd.f32 %v5287, %v5310
      %v5327 = vadd.f32 %v5288, %v5310
      %v5328 = vadd.f32 %v5289, %v5310
      %v5329 = vadd.f32 %v5290, %v5310
      %v5330 = vadd.f32 %v5291, %v5310
      %v5331 = vadd.f32 %v5292, %v5310
      %v5332 = vadd.f32 %v5293, %v5310
      %v5333 = vadd.f32 %v5294, %v5310
      %v5334 = vadd.f32 %v5295, %v5310
      %v5335 = vadd.f32 %v5296, %v5310
      %v5336 = vadd.f32 %v5297, %v5310
      %v5337 = vadd.f32 %v5298, %v5310
      %v5338 = vadd.f32 %v5299, %v5310
      %v5339 = vadd.f32 %v5300, %v5310
      %v5340 = vadd.f32 %v5301, %v5310
      %v5341 = vadd.f32 %v5302, %v5310
      %v5342 = vadd.f32 %v5303, %v5310
      %v5343 = vadd.f32 %v5304, %v5310
      %v5344 = vmax.f32 %v5312, 0.0
      %v5345 = vmax.f32 %v5313, 0.0
      %v5346 = vmax.f32 %v5314, 0.0
      %v5347 = vmax.f32 %v5315, 0.0
      %v5348 = vmax.f32 %v5316, 0.0
      %v5349 = vmax.f32 %v5317, 0.0
      %v5350 = vmax.f32 %v5318, 0.0
      %v5351 = vmax.f32 %v5319, 0.0
      %v5352 = vmax.f32 %v5320, 0.0
      %v5353 = vmax.f32 %v5321, 0.0
      %v5354 = vmax.f32 %v5322, 0.0
      %v5355 = vmax.f32 %v5323, 0.0
      %v5356 = vmax.f32 %v5324, 0.0
      %v5357 = vmax.f32 %v5325, 0.0
      %v5358 = vmax.f32 %v5326, 0.0
      %v5359 = vmax.f32 %v5327, 0.0
      %v5360 = vmax.f32 %v5328, 0.0
      %v5361 = vmax.f32 %v5329, 0.0
      %v5362 = vmax.f32 %v5330, 0.0
      %v5363 = vmax.f32 %v5331, 0.0
      %v5364 = vmax.f32 %v5332, 0.0
      %v5365 = vmax.f32 %v5333, 0.0
      %v5366 = vmax.f32 %v5334, 0.0
      %v5367 = vmax.f32 %v5335, 0.0
      %v5368 = vmax.f32 %v5336, 0.0
      %v5369 = vmax.f32 %v5337, 0.0
      %v5370 = vmax.f32 %v5338, 0.0
      %v5371 = vmax.f32 %v5339, 0.0
      %v5372 = vmax.f32 %v5340, 0.0
      %v5373 = vmax.f32 %v5341, 0.0
      %v5374 = vmax.f32 %v5342, 0.0
      %v5375 = vmax.f32 %v5343, 0.0
      %v5376 = vmin.f32 %v5344, 6.0
      %v5377 = vmin.f32 %v5345, 6.0
      %v5378 = vmin.f32 %v5346, 6.0
      %v5379 = vmin.f32 %v5347, 6.0
      %v5380 = vmin.f32 %v5348, 6.0
      %v5381 = vmin.f32 %v5349, 6.0
      %v5382 = vmin.f32 %v5350, 6.0
      %v5383 = vmin.f32 %v5351, 6.0
      %v5384 = vmin.f32 %v5352, 6.0
      %v5385 = vmin.f32 %v5353, 6.0
      %v5386 = vmin.f32 %v5354, 6.0
      %v5387 = vmin.f32 %v5355, 6.0
      %v5388 = vmin.f32 %v5356, 6.0
      %v5389 = vmin.f32 %v5357, 6.0
      %v5390 = vmin.f32 %v5358, 6.0
      %v5391 = vmin.f32 %v5359, 6.0
      %v5392 = vmin.f32 %v5360, 6.0
      %v5393 = vmin.f32 %v5361, 6.0
      %v5394 = vmin.f32 %v5362, 6.0
      %v5395 = vmin.f32 %v5363, 6.0
      %v5396 = vmin.f32 %v5364, 6.0
      %v5397 = vmin.f32 %v5365, 6.0
      %v5398 = vmin.f32 %v5366, 6.0
      %v5399 = vmin.f32 %v5367, 6.0
      %v5400 = vmin.f32 %v5368, 6.0
      %v5401 = vmin.f32 %v5369, 6.0
      %v5402 = vmin.f32 %v5370, 6.0
      %v5403 = vmin.f32 %v5371, 6.0
      %v5404 = vmin.f32 %v5372, 6.0
      %v5405 = vmin.f32 %v5373, 6.0
      %v5406 = vmin.f32 %v5374, 6.0
      %v5407 = vmin.f32 %v5375, 6.0
      %v5408 = vpack.c.bf16 %v5377, %v5376
      %v5409 = vpack.c.bf16 %v5379, %v5378
      %v5410 = vpack.c.bf16 %v5381, %v5380
      %v5411 = vpack.c.bf16 %v5383, %v5382
      %v5412 = vpack.c.bf16 %v5385, %v5384
      %v5413 = vpack.c.bf16 %v5387, %v5386
      %v5414 = vpack.c.bf16 %v5389, %v5388
      %v5415 = vpack.c.bf16 %v5391, %v5390
      %v5416 = vpack.c.bf16 %v5393, %v5392
      %v5417 = vpack.c.bf16 %v5395, %v5394
      %v5418 = vpack.c.bf16 %v5397, %v5396
      %v5419 = vpack.c.bf16 %v5399, %v5398
      %v5420 = vpack.c.bf16 %v5401, %v5400
      %v5421 = vpack.c.bf16 %v5403, %v5402
      %v5422 = vpack.c.bf16 %v5405, %v5404
      %v5423 = vpack.c.bf16 %v5407, %v5406
      %vm5424 = vcmask 60416
      %5425 = vst.msk [vmem:[#allocation3] sm:$0xf] %vm5424, 0
      %5426 = vst.msk [vmem:[#allocation3 + $0x4] sm:$0xf] %vm5424, 0
      %vm5427 = vcmask 57344
      %5428 = vst.msk [vmem:[#allocation3 + $0x8] sm:$0x1] %vm5427, 0
      %5429 = vst.msk [vmem:[#allocation3 + $0xc] sm:$0xf] %vm5424, 0
      %5430 = vst.msk [vmem:[#allocation3 + $0x10] sm:$0xf] %vm5424, 0
      %5431 = vst.msk [vmem:[#allocation3 + $0x14] sm:$0x1] %vm5427, 0
      %5432 = vst.msk [vmem:[#allocation3 + $0x18] sm:$0xf] %vm5424, 0
      %5433 = vst.msk [vmem:[#allocation3 + $0x1c] sm:$0xf] %vm5424, 0
      %5434 = vst.msk [vmem:[#allocation3 + $0x20] sm:$0x1] %vm5427, 0
      %5435 = vst.msk [vmem:[#allocation3 + $0x24] sm:$0xf] %vm5424, 0
      %5436 = vst.msk [vmem:[#allocation3 + $0x28] sm:$0xf] %vm5424, 0
      %5437 = vst.msk [vmem:[#allocation3 + $0x2c] sm:$0x1] %vm5427, 0
      %5438 = vst.msk [vmem:[#allocation3 + $0x30] sm:$0xf] %vm5424, 0
      %5439 = vst.msk [vmem:[#allocation3 + $0x34] sm:$0xf] %vm5424, 0
      %5440 = vst.msk [vmem:[#allocation3 + $0x38] sm:$0x1] %vm5427, 0
      %5441 = vst.msk [vmem:[#allocation3 + $0x3c] sm:$0xf] %vm5424, 0
      %5442 = vst.msk [vmem:[#allocation3 + $0x40] sm:$0xf] %vm5424, 0
      %5443 = vst.msk [vmem:[#allocation3 + $0x44] sm:$0x1] %vm5427, 0
      %5444 = vst.msk [vmem:[#allocation3 + $0x48] sm:$0xf] %vm5424, 0
      %5445 = vst.msk [vmem:[#allocation3 + $0x4c] sm:$0xf] %vm5424, 0
      %5446 = vst.msk [vmem:[#allocation3 + $0x50] sm:$0x1] %vm5427, 0
      %5447 = vst.msk [vmem:[#allocation3 + $0x54] sm:$0xf] %vm5424, 0
      %5448 = vst.msk [vmem:[#allocation3 + $0x58] sm:$0xf] %vm5424, 0
      %5449 = vst.msk [vmem:[#allocation3 + $0x5c] sm:$0x1] %vm5427, 0
      %5450 = vst.msk [vmem:[#allocation3 + $0x60] sm:$0xf] %vm5424, 0
      %5451 = vst.msk [vmem:[#allocation3 + $0x64] sm:$0xf] %vm5424, 0
      %5452 = vst.msk [vmem:[#allocation3 + $0x68] sm:$0x1] %vm5427, 0
      %5453 = vst.msk [vmem:[#allocation3 + $0x6c] sm:$0xf] %vm5424, 0
      %5454 = vst.msk [vmem:[#allocation3 + $0x70] sm:$0xf] %vm5424, 0
      %5455 = vst.msk [vmem:[#allocation3 + $0x74] sm:$0x1] %vm5427, 0
      %5456 = vst.msk [vmem:[#allocation3 + $0x78] sm:$0xf] %vm5424, 0
      %5457 = vst.msk [vmem:[#allocation3 + $0x7c] sm:$0xf] %vm5424, 0
      %5458 = vst.msk [vmem:[#allocation3 + $0x80] sm:$0x1] %vm5427, 0
      %5459 = vst.msk [vmem:[#allocation3 + $0x84] sm:$0xf] %vm5424, 0
      %5460 = vst.msk [vmem:[#allocation3 + $0x88] sm:$0xf] %vm5424, 0
      %5461 = vst.msk [vmem:[#allocation3 + $0x8c] sm:$0x1] %vm5427, 0
      %5462 = vst.msk [vmem:[#allocation3 + $0x90] sm:$0xf] %vm5424, 0
      %5463 = vst.msk [vmem:[#allocation3 + $0x94] sm:$0xf] %vm5424, 0
      %5464 = vst.msk [vmem:[#allocation3 + $0x98] sm:$0x1] %vm5427, 0
      %5465 = vst.msk [vmem:[#allocation3 + $0x9c] sm:$0xf] %vm5424, 0
      %5466 = vst.msk [vmem:[#allocation3 + $0xa0] sm:$0xf] %vm5424, 0
      %5467 = vst.msk [vmem:[#allocation3 + $0xa4] sm:$0x1] %vm5427, 0
      %5468 = vst.msk [vmem:[#allocation3 + $0xa8] sm:$0xf] %vm5424, 0
      %5469 = vst.msk [vmem:[#allocation3 + $0xac] sm:$0xf] %vm5424, 0
      %5470 = vst.msk [vmem:[#allocation3 + $0xb0] sm:$0x1] %vm5427, 0
      %5471 = vst.msk [vmem:[#allocation3 + $0xb4] sm:$0xf] %vm5424, 0
      %5472 = vst.msk [vmem:[#allocation3 + $0xb8] sm:$0xf] %vm5424, 0
      %5473 = vst.msk [vmem:[#allocation3 + $0xbc] sm:$0x1] %vm5427, 0
      %5474 = vst.msk [vmem:[#allocation3 + $0xc0] sm:$0xf] %vm5424, 0
      %5475 = vst.msk [vmem:[#allocation3 + $0xc4] sm:$0xf] %vm5424, 0
      %5476 = vst.msk [vmem:[#allocation3 + $0xc8] sm:$0x1] %vm5427, 0
      %5477 = vst.msk [vmem:[#allocation3 + $0xcc] sm:$0xf] %vm5424, 0
      %5478 = vst.msk [vmem:[#allocation3 + $0xd0] sm:$0xf] %vm5424, 0
      %5479 = vst.msk [vmem:[#allocation3 + $0xd4] sm:$0x1] %vm5427, 0
      %v5496 = vunpack.c.l.b16 %v5408
      %v5497 = vunpack.c.h.b16 %v5408
      %v5498 = vunpack.c.l.b16 %v5409
      %v5499 = vunpack.c.h.b16 %v5409
      %v5500 = vunpack.c.l.b16 %v5410
      %v5501 = vunpack.c.h.b16 %v5410
      %v5502 = vunpack.c.l.b16 %v5411
      %v5503 = vunpack.c.h.b16 %v5411
      %v5504 = vunpack.c.l.b16 %v5412
      %v5505 = vunpack.c.h.b16 %v5412
      %v5506 = vunpack.c.l.b16 %v5413
      %v5507 = vunpack.c.h.b16 %v5413
      %v5508 = vunpack.c.l.b16 %v5414
      %v5509 = vunpack.c.h.b16 %v5414
      %v5510 = vunpack.c.l.b16 %v5415
      %v5511 = vunpack.c.h.b16 %v5415
      %v5512 = vunpack.c.l.b16 %v5416
      %v5513 = vunpack.c.h.b16 %v5416
      %v5514 = vunpack.c.l.b16 %v5417
      %v5515 = vunpack.c.h.b16 %v5417
      %v5516 = vunpack.c.l.b16 %v5418
      %v5517 = vunpack.c.h.b16 %v5418
      %v5518 = vunpack.c.l.b16 %v5419
      %v5519 = vunpack.c.h.b16 %v5419
      %v5520 = vunpack.c.l.b16 %v5420
      %v5521 = vunpack.c.h.b16 %v5420
      %v5522 = vunpack.c.l.b16 %v5421
      %v5523 = vunpack.c.h.b16 %v5421
      %v5524 = vunpack.c.l.b16 %v5422
      %v5525 = vunpack.c.h.b16 %v5422
      %v5526 = vunpack.c.l.b16 %v5423
      %v5527 = vunpack.c.h.b16 %v5423
      %v5528 = vpack.c.b16 %v5496, %v5496
      %v5529 = vpack.c.b16 %v5497, %v5497
      %v5530 = vpack.c.b16 %v5498, %v5498
      %v5531 = vpack.c.b16 %v5499, %v5499
      %v5532 = vpack.c.b16 %v5500, %v5500
      %v5533 = vpack.c.b16 %v5501, %v5501
      %v5534 = vpack.c.b16 %v5502, %v5502
      %v5535 = vpack.c.b16 %v5503, %v5503
      %v5536 = vpack.c.b16 %v5504, %v5504
      %v5537 = vpack.c.b16 %v5505, %v5505
      %v5538 = vpack.c.b16 %v5506, %v5506
      %v5539 = vpack.c.b16 %v5507, %v5507
      %v5540 = vpack.c.b16 %v5508, %v5508
      %v5541 = vpack.c.b16 %v5509, %v5509
      %v5542 = vpack.c.b16 %v5510, %v5510
      %v5543 = vpack.c.b16 %v5511, %v5511
      %v5544 = vpack.c.b16 %v5512, %v5512
      %v5545 = vpack.c.b16 %v5513, %v5513
      %v5546 = vpack.c.b16 %v5514, %v5514
      %v5547 = vpack.c.b16 %v5515, %v5515
      %v5548 = vpack.c.b16 %v5516, %v5516
      %v5549 = vpack.c.b16 %v5517, %v5517
      %v5550 = vpack.c.b16 %v5518, %v5518
      %v5551 = vpack.c.b16 %v5519, %v5519
      %v5552 = vpack.c.b16 %v5520, %v5520
      %v5553 = vpack.c.b16 %v5521, %v5521
      %v5554 = vpack.c.b16 %v5522, %v5522
      %v5555 = vpack.c.b16 %v5523, %v5523
      %v5556 = vpack.c.b16 %v5524, %v5524
      %v5557 = vpack.c.b16 %v5525, %v5525
      %v5558 = vpack.c.b16 %v5526, %v5526
      %v5559 = vpack.c.b16 %v5527, %v5527
      %v5561 = vshrl.u32 %v5528, 16
      %v5563 = vrot.slane %v5561, 7
      %v5564 = vshll.u32 %v5528, 16
      %v5566 = vor.u32 %v5563, %v5564
      %v5567 = vrot.slane %v5563, 4
      %v5569 = vshrl.u32 %v5529, 16
      %v5571 = vrot.slane %v5569, 7
      %v5572 = vshll.u32 %v5529, 16
      %v5574 = vor.u32 %v5571, %v5572
      %v5575 = vsel %vm316, %v5567, %v5574
      %v5576 = vrot.slane %v5571, 4
      %v5578 = vshrl.u32 %v5530, 16
      %v5580 = vrot.slane %v5578, 7
      %v5581 = vshll.u32 %v5530, 16
      %v5583 = vor.u32 %v5580, %v5581
      %v5584 = vrot.slane %v5580, 4
      %v5586 = vshrl.u32 %v5531, 16
      %v5588 = vrot.slane %v5586, 7
      %v5589 = vshll.u32 %v5531, 16
      %v5591 = vor.u32 %v5588, %v5589
      %v5592 = vsel %vm316, %v5584, %v5591
      %v5593 = vrot.slane %v5588, 4
      %v5595 = vshrl.u32 %v5532, 16
      %v5597 = vrot.slane %v5595, 7
      %v5598 = vshll.u32 %v5532, 16
      %v5600 = vor.u32 %v5597, %v5598
      %v5601 = vrot.slane %v5597, 4
      %v5603 = vshrl.u32 %v5533, 16
      %v5605 = vrot.slane %v5603, 7
      %v5606 = vshll.u32 %v5533, 16
      %v5608 = vor.u32 %v5605, %v5606
      %v5609 = vsel %vm316, %v5601, %v5608
      %v5610 = vrot.slane %v5605, 4
      %v5612 = vshrl.u32 %v5534, 16
      %v5614 = vrot.slane %v5612, 7
      %v5615 = vshll.u32 %v5534, 16
      %v5617 = vor.u32 %v5614, %v5615
      %v5618 = vrot.slane %v5614, 4
      %v5620 = vshrl.u32 %v5535, 16
      %v5622 = vrot.slane %v5620, 7
      %v5623 = vshll.u32 %v5535, 16
      %v5625 = vor.u32 %v5622, %v5623
      %v5626 = vsel %vm316, %v5618, %v5625
      %v5627 = vrot.slane %v5622, 4
      %v5629 = vshrl.u32 %v5536, 16
      %v5631 = vrot.slane %v5629, 7
      %v5632 = vshll.u32 %v5536, 16
      %v5634 = vor.u32 %v5631, %v5632
      %v5635 = vrot.slane %v5631, 4
      %v5637 = vshrl.u32 %v5537, 16
      %v5639 = vrot.slane %v5637, 7
      %v5640 = vshll.u32 %v5537, 16
      %v5642 = vor.u32 %v5639, %v5640
      %v5643 = vsel %vm316, %v5635, %v5642
      %v5644 = vrot.slane %v5639, 4
      %v5646 = vshrl.u32 %v5538, 16
      %v5648 = vrot.slane %v5646, 7
      %v5649 = vshll.u32 %v5538, 16
      %v5651 = vor.u32 %v5648, %v5649
      %v5652 = vrot.slane %v5648, 4
      %v5654 = vshrl.u32 %v5539, 16
      %v5656 = vrot.slane %v5654, 7
      %v5657 = vshll.u32 %v5539, 16
      %v5659 = vor.u32 %v5656, %v5657
      %v5660 = vsel %vm316, %v5652, %v5659
      %v5661 = vrot.slane %v5656, 4
      %v5663 = vshrl.u32 %v5540, 16
      %v5665 = vrot.slane %v5663, 7
      %v5666 = vshll.u32 %v5540, 16
      %v5668 = vor.u32 %v5665, %v5666
      %v5669 = vrot.slane %v5665, 4
      %v5671 = vshrl.u32 %v5541, 16
      %v5673 = vrot.slane %v5671, 7
      %v5674 = vshll.u32 %v5541, 16
      %v5676 = vor.u32 %v5673, %v5674
      %v5677 = vsel %vm316, %v5669, %v5676
      %v5678 = vrot.slane %v5673, 4
      %v5680 = vshrl.u32 %v5542, 16
      %v5682 = vrot.slane %v5680, 7
      %v5683 = vshll.u32 %v5542, 16
      %v5685 = vor.u32 %v5682, %v5683
      %v5686 = vrot.slane %v5682, 4
      %v5688 = vshrl.u32 %v5543, 16
      %v5690 = vrot.slane %v5688, 7
      %v5691 = vshll.u32 %v5543, 16
      %v5693 = vor.u32 %v5690, %v5691
      %v5694 = vsel %vm316, %v5686, %v5693
      %v5695 = vrot.slane %v5690, 4
      %v5697 = vshrl.u32 %v5544, 16
      %v5699 = vrot.slane %v5697, 7
      %v5700 = vshll.u32 %v5544, 16
      %v5702 = vor.u32 %v5699, %v5700
      %v5703 = vrot.slane %v5699, 4
      %v5705 = vshrl.u32 %v5545, 16
      %v5707 = vrot.slane %v5705, 7
      %v5708 = vshll.u32 %v5545, 16
      %v5710 = vor.u32 %v5707, %v5708
      %v5711 = vsel %vm316, %v5703, %v5710
      %v5712 = vrot.slane %v5707, 4
      %v5714 = vshrl.u32 %v5546, 16
      %v5716 = vrot.slane %v5714, 7
      %v5717 = vshll.u32 %v5546, 16
      %v5719 = vor.u32 %v5716, %v5717
      %v5720 = vrot.slane %v5716, 4
      %v5722 = vshrl.u32 %v5547, 16
      %v5724 = vrot.slane %v5722, 7
      %v5725 = vshll.u32 %v5547, 16
      %v5727 = vor.u32 %v5724, %v5725
      %v5728 = vsel %vm316, %v5720, %v5727
      %v5729 = vrot.slane %v5724, 4
      %v5731 = vshrl.u32 %v5548, 16
      %v5733 = vrot.slane %v5731, 7
      %v5734 = vshll.u32 %v5548, 16
      %v5736 = vor.u32 %v5733, %v5734
      %v5737 = vrot.slane %v5733, 4
      %v5739 = vshrl.u32 %v5549, 16
      %v5741 = vrot.slane %v5739, 7
      %v5742 = vshll.u32 %v5549, 16
      %v5744 = vor.u32 %v5741, %v5742
      %v5745 = vsel %vm316, %v5737, %v5744
      %v5746 = vrot.slane %v5741, 4
      %v5748 = vshrl.u32 %v5550, 16
      %v5750 = vrot.slane %v5748, 7
      %v5751 = vshll.u32 %v5550, 16
      %v5753 = vor.u32 %v5750, %v5751
      %v5754 = vrot.slane %v5750, 4
      %v5756 = vshrl.u32 %v5551, 16
      %v5758 = vrot.slane %v5756, 7
      %v5759 = vshll.u32 %v5551, 16
      %v5761 = vor.u32 %v5758, %v5759
      %v5762 = vsel %vm316, %v5754, %v5761
      %v5763 = vrot.slane %v5758, 4
      %v5765 = vshrl.u32 %v5552, 16
      %v5767 = vrot.slane %v5765, 7
      %v5768 = vshll.u32 %v5552, 16
      %v5770 = vor.u32 %v5767, %v5768
      %v5771 = vrot.slane %v5767, 4
      %v5773 = vshrl.u32 %v5553, 16
      %v5775 = vrot.slane %v5773, 7
      %v5776 = vshll.u32 %v5553, 16
      %v5778 = vor.u32 %v5775, %v5776
      %v5779 = vsel %vm316, %v5771, %v5778
      %v5780 = vrot.slane %v5775, 4
      %v5782 = vshrl.u32 %v5554, 16
      %v5784 = vrot.slane %v5782, 7
      %v5785 = vshll.u32 %v5554, 16
      %v5787 = vor.u32 %v5784, %v5785
      %v5788 = vrot.slane %v5784, 4
      %v5790 = vshrl.u32 %v5555, 16
      %v5792 = vrot.slane %v5790, 7
      %v5793 = vshll.u32 %v5555, 16
      %v5795 = vor.u32 %v5792, %v5793
      %v5796 = vsel %vm316, %v5788, %v5795
      %v5797 = vrot.slane %v5792, 4
      %v5799 = vshrl.u32 %v5556, 16
      %v5801 = vrot.slane %v5799, 7
      %v5802 = vshll.u32 %v5556, 16
      %v5804 = vor.u32 %v5801, %v5802
      %v5805 = vrot.slane %v5801, 4
      %v5807 = vshrl.u32 %v5557, 16
      %v5809 = vrot.slane %v5807, 7
      %v5810 = vshll.u32 %v5557, 16
      %v5812 = vor.u32 %v5809, %v5810
      %v5813 = vsel %vm316, %v5805, %v5812
      %v5814 = vrot.slane %v5809, 4
      %v5816 = vshrl.u32 %v5558, 16
      %v5818 = vrot.slane %v5816, 7
      %v5819 = vshll.u32 %v5558, 16
      %v5821 = vor.u32 %v5818, %v5819
      %v5822 = vrot.slane %v5818, 4
      %v5824 = vshrl.u32 %v5559, 16
      %v5826 = vrot.slane %v5824, 7
      %v5827 = vshll.u32 %v5559, 16
      %v5829 = vor.u32 %v5826, %v5827
      %v5830 = vsel %vm316, %v5822, %v5829
      %v5831 = vrot.slane %v5826, 4
      %s5880 = scalar_lea.vmem [#allocation3], 12
      %vm5881 = vcmask 60416
      %vm5882 = vmand %vm5881, %vm639
      %v5883 = vld [vmem:[%s5880] sm:$0xf]
      %v5884 = vsel %vm5882, %v5566, %v5883
      %5885 = vst [vmem:[%s5880] sm:$0xf] %v5884
      %5886 = vst.msk [vmem:[%s5880 + $0x4] sm:$0xf] %vm5424, %v5575
      %vm5887 = vcmask 57344
      %vm5888 = vmand %vm5887, %vm314
      %v5889 = vld [vmem:[%s5880 + $0x8] sm:$0x1]
      %v5890 = vsel %vm5888, %v5576, %v5889
      %5891 = vst [vmem:[%s5880 + $0x8] sm:$0x1] %v5890
      %v5892 = vld [vmem:[%s5880 + $0xc] sm:$0xf]
      %v5893 = vsel %vm5882, %v5583, %v5892
      %5894 = vst [vmem:[%s5880 + $0xc] sm:$0xf] %v5893
      %5895 = vst.msk [vmem:[%s5880 + $0x10] sm:$0xf] %vm5424, %v5592
      %v5896 = vld [vmem:[%s5880 + $0x14] sm:$0x1]
      %v5897 = vsel %vm5888, %v5593, %v5896
      %5898 = vst [vmem:[%s5880 + $0x14] sm:$0x1] %v5897
      %v5899 = vld [vmem:[%s5880 + $0x18] sm:$0xf]
      %v5900 = vsel %vm5882, %v5600, %v5899
      %5901 = vst [vmem:[%s5880 + $0x18] sm:$0xf] %v5900
      %5902 = vst.msk [vmem:[%s5880 + $0x1c] sm:$0xf] %vm5424, %v5609
      %v5903 = vld [vmem:[%s5880 + $0x20] sm:$0x1]
      %v5904 = vsel %vm5888, %v5610, %v5903
      %5905 = vst [vmem:[%s5880 + $0x20] sm:$0x1] %v5904
      %v5906 = vld [vmem:[%s5880 + $0x24] sm:$0xf]
      %v5907 = vsel %vm5882, %v5617, %v5906
      %5908 = vst [vmem:[%s5880 + $0x24] sm:$0xf] %v5907
      %5909 = vst.msk [vmem:[%s5880 + $0x28] sm:$0xf] %vm5424, %v5626
      %v5910 = vld [vmem:[%s5880 + $0x2c] sm:$0x1]
      %v5911 = vsel %vm5888, %v5627, %v5910
      %5912 = vst [vmem:[%s5880 + $0x2c] sm:$0x1] %v5911
      %v5913 = vld [vmem:[%s5880 + $0x30] sm:$0xf]
      %v5914 = vsel %vm5882, %v5634, %v5913
      %5915 = vst [vmem:[%s5880 + $0x30] sm:$0xf] %v5914
      %5916 = vst.msk [vmem:[%s5880 + $0x34] sm:$0xf] %vm5424, %v5643
      %v5917 = vld [vmem:[%s5880 + $0x38] sm:$0x1]
      %v5918 = vsel %vm5888, %v5644, %v5917
      %5919 = vst [vmem:[%s5880 + $0x38] sm:$0x1] %v5918
      %v5920 = vld [vmem:[%s5880 + $0x3c] sm:$0xf]
      %v5921 = vsel %vm5882, %v5651, %v5920
      %5922 = vst [vmem:[%s5880 + $0x3c] sm:$0xf] %v5921
      %5923 = vst.msk [vmem:[%s5880 + $0x40] sm:$0xf] %vm5424, %v5660
      %v5924 = vld [vmem:[%s5880 + $0x44] sm:$0x1]
      %v5925 = vsel %vm5888, %v5661, %v5924
      %5926 = vst [vmem:[%s5880 + $0x44] sm:$0x1] %v5925
      %v5927 = vld [vmem:[%s5880 + $0x48] sm:$0xf]
      %v5928 = vsel %vm5882, %v5668, %v5927
      %5929 = vst [vmem:[%s5880 + $0x48] sm:$0xf] %v5928
      %5930 = vst.msk [vmem:[%s5880 + $0x4c] sm:$0xf] %vm5424, %v5677
      %v5931 = vld [vmem:[%s5880 + $0x50] sm:$0x1]
      %v5932 = vsel %vm5888, %v5678, %v5931
      %5933 = vst [vmem:[%s5880 + $0x50] sm:$0x1] %v5932
      %v5934 = vld [vmem:[%s5880 + $0x54] sm:$0xf]
      %v5935 = vsel %vm5882, %v5685, %v5934
      %5936 = vst [vmem:[%s5880 + $0x54] sm:$0xf] %v5935
      %5937 = vst.msk [vmem:[%s5880 + $0x58] sm:$0xf] %vm5424, %v5694
      %v5938 = vld [vmem:[%s5880 + $0x5c] sm:$0x1]
      %v5939 = vsel %vm5888, %v5695, %v5938
      %5940 = vst [vmem:[%s5880 + $0x5c] sm:$0x1] %v5939
      %v5941 = vld [vmem:[%s5880 + $0x60] sm:$0xf]
      %v5942 = vsel %vm5882, %v5702, %v5941
      %5943 = vst [vmem:[%s5880 + $0x60] sm:$0xf] %v5942
      %5944 = vst.msk [vmem:[%s5880 + $0x64] sm:$0xf] %vm5424, %v5711
      %v5945 = vld [vmem:[%s5880 + $0x68] sm:$0x1]
      %v5946 = vsel %vm5888, %v5712, %v5945
      %5947 = vst [vmem:[%s5880 + $0x68] sm:$0x1] %v5946
      %v5948 = vld [vmem:[%s5880 + $0x6c] sm:$0xf]
      %v5949 = vsel %vm5882, %v5719, %v5948
      %5950 = vst [vmem:[%s5880 + $0x6c] sm:$0xf] %v5949
      %5951 = vst.msk [vmem:[%s5880 + $0x70] sm:$0xf] %vm5424, %v5728
      %v5952 = vld [vmem:[%s5880 + $0x74] sm:$0x1]
      %v5953 = vsel %vm5888, %v5729, %v5952
      %5954 = vst [vmem:[%s5880 + $0x74] sm:$0x1] %v5953
      %v5955 = vld [vmem:[%s5880 + $0x78] sm:$0xf]
      %v5956 = vsel %vm5882, %v5736, %v5955
      %5957 = vst [vmem:[%s5880 + $0x78] sm:$0xf] %v5956
      %5958 = vst.msk [vmem:[%s5880 + $0x7c] sm:$0xf] %vm5424, %v5745
      %v5959 = vld [vmem:[%s5880 + $0x80] sm:$0x1]
      %v5960 = vsel %vm5888, %v5746, %v5959
      %5961 = vst [vmem:[%s5880 + $0x80] sm:$0x1] %v5960
      %v5962 = vld [vmem:[%s5880 + $0x84] sm:$0xf]
      %v5963 = vsel %vm5882, %v5753, %v5962
      %5964 = vst [vmem:[%s5880 + $0x84] sm:$0xf] %v5963
      %5965 = vst.msk [vmem:[%s5880 + $0x88] sm:$0xf] %vm5424, %v5762
      %v5966 = vld [vmem:[%s5880 + $0x8c] sm:$0x1]
      %v5967 = vsel %vm5888, %v5763, %v5966
      %5968 = vst [vmem:[%s5880 + $0x8c] sm:$0x1] %v5967
      %v5969 = vld [vmem:[%s5880 + $0x90] sm:$0xf]
      %v5970 = vsel %vm5882, %v5770, %v5969
      %5971 = vst [vmem:[%s5880 + $0x90] sm:$0xf] %v5970
      %5972 = vst.msk [vmem:[%s5880 + $0x94] sm:$0xf] %vm5424, %v5779
      %v5973 = vld [vmem:[%s5880 + $0x98] sm:$0x1]
      %v5974 = vsel %vm5888, %v5780, %v5973
      %5975 = vst [vmem:[%s5880 + $0x98] sm:$0x1] %v5974
      %v5976 = vld [vmem:[%s5880 + $0x9c] sm:$0xf]
      %v5977 = vsel %vm5882, %v5787, %v5976
      %5978 = vst [vmem:[%s5880 + $0x9c] sm:$0xf] %v5977
      %5979 = vst.msk [vmem:[%s5880 + $0xa0] sm:$0xf] %vm5424, %v5796
      %v5980 = vld [vmem:[%s5880 + $0xa4] sm:$0x1]
      %v5981 = vsel %vm5888, %v5797, %v5980
      %5982 = vst [vmem:[%s5880 + $0xa4] sm:$0x1] %v5981
      %v5983 = vld [vmem:[%s5880 + $0xa8] sm:$0xf]
      %v5984 = vsel %vm5882, %v5804, %v5983
      %5985 = vst [vmem:[%s5880 + $0xa8] sm:$0xf] %v5984
      %5986 = vst.msk [vmem:[%s5880 + $0xac] sm:$0xf] %vm5424, %v5813
      %v5987 = vld [vmem:[%s5880 + $0xb0] sm:$0x1]
      %v5988 = vsel %vm5888, %v5814, %v5987
      %5989 = vst [vmem:[%s5880 + $0xb0] sm:$0x1] %v5988
      %v5990 = vld [vmem:[%s5880 + $0xb4] sm:$0xf]
      %v5991 = vsel %vm5882, %v5821, %v5990
      %5992 = vst [vmem:[%s5880 + $0xb4] sm:$0xf] %v5991
      %5993 = vst.msk [vmem:[%s5880 + $0xb8] sm:$0xf] %vm5424, %v5830
      %v5994 = vld [vmem:[%s5880 + $0xbc] sm:$0x1]
      %v5995 = vsel %vm5888, %v5831, %v5994
      %5996 = vst [vmem:[%s5880 + $0xbc] sm:$0x1] %v5995
      %v5997 = vld [vmem:[%s3] sm:$0xf]
      %v5998 = vld [vmem:[%s3 + $0x4] sm:$0xf]
      %v5999 = vld [vmem:[%s3 + $0x8] sm:$0xf]
      %v6000 = vld [vmem:[%s3 + $0xc] sm:$0xf]
      %v6001 = vld [vmem:[%s3 + $0x10] sm:$0xf]
      %v6002 = vld [vmem:[%s3 + $0x14] sm:$0xf]
      %v6003 = vld [vmem:[%s3 + $0x18] sm:$0xf]
      %v6004 = vld [vmem:[%s3 + $0x1c] sm:$0xf]
      %v6005 = vld [vmem:[%s3 + $0x20] sm:$0xf]
      %v6006 = vld [vmem:[#allocation3] sm:$0xf]
      %v6007 = vld [vmem:[#allocation3 + $0x4] sm:$0xf]
      %v6008 = vld [vmem:[#allocation3 + $0xc] sm:$0xf]
      %v6009 = vld [vmem:[#allocation3 + $0x10] sm:$0xf]
      %v6010 = vld [vmem:[#allocation3 + $0x18] sm:$0xf]
      %v6011 = vld [vmem:[#allocation3 + $0x1c] sm:$0xf]
      %v6012 = vld [vmem:[#allocation3 + $0x24] sm:$0xf]
      %v6013 = vld [vmem:[#allocation3 + $0x28] sm:$0xf]
      %v6014 = vld [vmem:[#allocation3 + $0x30] sm:$0xf]
      %v6015 = vld [vmem:[#allocation3 + $0x34] sm:$0xf]
      %v6016 = vld [vmem:[#allocation3 + $0x3c] sm:$0xf]
      %v6017 = vld [vmem:[#allocation3 + $0x40] sm:$0xf]
      %v6018 = vld [vmem:[#allocation3 + $0x48] sm:$0xf]
      %v6019 = vld [vmem:[#allocation3 + $0x4c] sm:$0xf]
      %v6020 = vld [vmem:[#allocation3 + $0x54] sm:$0xf]
      %v6021 = vld [vmem:[#allocation3 + $0x58] sm:$0xf]
      %v6022 = vld [vmem:[#allocation3 + $0x60] sm:$0xf]
      %v6023 = vld [vmem:[#allocation3 + $0x64] sm:$0xf]
      %v6024 = vld [vmem:[#allocation3 + $0x6c] sm:$0xf]
      %v6025 = vld [vmem:[#allocation3 + $0x70] sm:$0xf]
      %v6026 = vld [vmem:[#allocation3 + $0x78] sm:$0xf]
      %v6027 = vld [vmem:[#allocation3 + $0x7c] sm:$0xf]
      %v6028 = vld [vmem:[#allocation3 + $0x84] sm:$0xf]
      %v6029 = vld [vmem:[#allocation3 + $0x88] sm:$0xf]
      %v6030 = vld [vmem:[#allocation3 + $0x90] sm:$0xf]
      %v6031 = vld [vmem:[#allocation3 + $0x94] sm:$0xf]
      %v6032 = vld [vmem:[#allocation3 + $0x9c] sm:$0xf]
      %v6033 = vld [vmem:[#allocation3 + $0xa0] sm:$0xf]
      %v6034 = vld [vmem:[#allocation3 + $0xa8] sm:$0xf]
      %v6035 = vld [vmem:[#allocation3 + $0xac] sm:$0xf]
      %v6036 = vld [vmem:[#allocation3 + $0xb4] sm:$0xf]
      %v6037 = vld [vmem:[#allocation3 + $0xb8] sm:$0xf]
      %v6038 = vld [vmem:[#allocation3 + $0x8] sm:$0x1]
      %v6039 = vld [vmem:[#allocation3 + $0x14] sm:$0x1]
      %v6040 = vld [vmem:[#allocation3 + $0x20] sm:$0x1]
      %v6041 = vld [vmem:[#allocation3 + $0x2c] sm:$0x1]
      %v6042 = vld [vmem:[#allocation3 + $0x38] sm:$0x1]
      %v6043 = vld [vmem:[#allocation3 + $0x44] sm:$0x1]
      %v6044 = vld [vmem:[#allocation3 + $0x50] sm:$0x1]
      %v6045 = vld [vmem:[#allocation3 + $0x5c] sm:$0x1]
      %v6046 = vld [vmem:[#allocation3 + $0x68] sm:$0x1]
      %v6047 = vld [vmem:[#allocation3 + $0x74] sm:$0x1]
      %v6048 = vld [vmem:[#allocation3 + $0x80] sm:$0x1]
      %v6049 = vld [vmem:[#allocation3 + $0x8c] sm:$0x1]
      %v6050 = vld [vmem:[#allocation3 + $0x98] sm:$0x1]
      %v6051 = vld [vmem:[#allocation3 + $0xa4] sm:$0x1]
      %v6052 = vld [vmem:[#allocation3 + $0xb0] sm:$0x1]
      %v6053 = vld [vmem:[#allocation3 + $0xbc] sm:$0x1]
      %v6055 = vshrl.u32 %v6006, 16
      %v6057 = vrot.slane %v6055, 4
      %v6058 = vshll.u32 %v6006, 16
      %v6060 = vrot.slane %v6058, 5
      %v6061 = vor.u32 %v6057, %v6060
      %v6062 = vrot.slane %v6061, 4
      %v6064 = vshll.u32 %v6007, 16
      %v6066 = vrot.slane %v6064, 5
      %v6067 = vsel %vm814, %v6062, %v6066
      %v6068 = vshrl.u32 %v6007, 16
      %v6070 = vrot.slane %v6068, 4
      %v6071 = vor.u32 %v6070, %v6066
      %v6072 = vrot.slane %v6071, 4
      %v6074 = vshll.u32 %v6038, 16
      %v6076 = vrot.slane %v6074, 5
      %v6077 = vsel %vm814, %v6072, %v6076
      %v6079 = vshrl.u32 %v6008, 16
      %v6081 = vrot.slane %v6079, 4
      %v6082 = vshll.u32 %v6008, 16
      %v6084 = vrot.slane %v6082, 5
      %v6085 = vor.u32 %v6081, %v6084
      %v6086 = vrot.slane %v6085, 4
      %v6088 = vshll.u32 %v6009, 16
      %v6090 = vrot.slane %v6088, 5
      %v6091 = vsel %vm814, %v6086, %v6090
      %v6092 = vshrl.u32 %v6009, 16
      %v6094 = vrot.slane %v6092, 4
      %v6095 = vor.u32 %v6094, %v6090
      %v6096 = vrot.slane %v6095, 4
      %v6098 = vshll.u32 %v6039, 16
      %v6100 = vrot.slane %v6098, 5
      %v6101 = vsel %vm814, %v6096, %v6100
      %v6103 = vshrl.u32 %v6010, 16
      %v6105 = vrot.slane %v6103, 4
      %v6106 = vshll.u32 %v6010, 16
      %v6108 = vrot.slane %v6106, 5
      %v6109 = vor.u32 %v6105, %v6108
      %v6110 = vrot.slane %v6109, 4
      %v6112 = vshll.u32 %v6011, 16
      %v6114 = vrot.slane %v6112, 5
      %v6115 = vsel %vm814, %v6110, %v6114
      %v6116 = vshrl.u32 %v6011, 16
      %v6118 = vrot.slane %v6116, 4
      %v6119 = vor.u32 %v6118, %v6114
      %v6120 = vrot.slane %v6119, 4
      %v6122 = vshll.u32 %v6040, 16
      %v6124 = vrot.slane %v6122, 5
      %v6125 = vsel %vm814, %v6120, %v6124
      %v6127 = vshrl.u32 %v6012, 16
      %v6129 = vrot.slane %v6127, 4
      %v6130 = vshll.u32 %v6012, 16
      %v6132 = vrot.slane %v6130, 5
      %v6133 = vor.u32 %v6129, %v6132
      %v6134 = vrot.slane %v6133, 4
      %v6136 = vshll.u32 %v6013, 16
      %v6138 = vrot.slane %v6136, 5
      %v6139 = vsel %vm814, %v6134, %v6138
      %v6140 = vshrl.u32 %v6013, 16
      %v6142 = vrot.slane %v6140, 4
      %v6143 = vor.u32 %v6142, %v6138
      %v6144 = vrot.slane %v6143, 4
      %v6146 = vshll.u32 %v6041, 16
      %v6148 = vrot.slane %v6146, 5
      %v6149 = vsel %vm814, %v6144, %v6148
      %v6151 = vshrl.u32 %v6014, 16
      %v6153 = vrot.slane %v6151, 4
      %v6154 = vshll.u32 %v6014, 16
      %v6156 = vrot.slane %v6154, 5
      %v6157 = vor.u32 %v6153, %v6156
      %v6158 = vrot.slane %v6157, 4
      %v6160 = vshll.u32 %v6015, 16
      %v6162 = vrot.slane %v6160, 5
      %v6163 = vsel %vm814, %v6158, %v6162
      %v6164 = vshrl.u32 %v6015, 16
      %v6166 = vrot.slane %v6164, 4
      %v6167 = vor.u32 %v6166, %v6162
      %v6168 = vrot.slane %v6167, 4
      %v6170 = vshll.u32 %v6042, 16
      %v6172 = vrot.slane %v6170, 5
      %v6173 = vsel %vm814, %v6168, %v6172
      %v6175 = vshrl.u32 %v6016, 16
      %v6177 = vrot.slane %v6175, 4
      %v6178 = vshll.u32 %v6016, 16
      %v6180 = vrot.slane %v6178, 5
      %v6181 = vor.u32 %v6177, %v6180
      %v6182 = vrot.slane %v6181, 4
      %v6184 = vshll.u32 %v6017, 16
      %v6186 = vrot.slane %v6184, 5
      %v6187 = vsel %vm814, %v6182, %v6186
      %v6188 = vshrl.u32 %v6017, 16
      %v6190 = vrot.slane %v6188, 4
      %v6191 = vor.u32 %v6190, %v6186
      %v6192 = vrot.slane %v6191, 4
      %v6194 = vshll.u32 %v6043, 16
      %v6196 = vrot.slane %v6194, 5
      %v6197 = vsel %vm814, %v6192, %v6196
      %v6199 = vshrl.u32 %v6018, 16
      %v6201 = vrot.slane %v6199, 4
      %v6202 = vshll.u32 %v6018, 16
      %v6204 = vrot.slane %v6202, 5
      %v6205 = vor.u32 %v6201, %v6204
      %v6206 = vrot.slane %v6205, 4
      %v6208 = vshll.u32 %v6019, 16
      %v6210 = vrot.slane %v6208, 5
      %v6211 = vsel %vm814, %v6206, %v6210
      %v6212 = vshrl.u32 %v6019, 16
      %v6214 = vrot.slane %v6212, 4
      %v6215 = vor.u32 %v6214, %v6210
      %v6216 = vrot.slane %v6215, 4
      %v6218 = vshll.u32 %v6044, 16
      %v6220 = vrot.slane %v6218, 5
      %v6221 = vsel %vm814, %v6216, %v6220
      %v6223 = vshrl.u32 %v6020, 16
      %v6225 = vrot.slane %v6223, 4
      %v6226 = vshll.u32 %v6020, 16
      %v6228 = vrot.slane %v6226, 5
      %v6229 = vor.u32 %v6225, %v6228
      %v6230 = vrot.slane %v6229, 4
      %v6232 = vshll.u32 %v6021, 16
      %v6234 = vrot.slane %v6232, 5
      %v6235 = vsel %vm814, %v6230, %v6234
      %v6236 = vshrl.u32 %v6021, 16
      %v6238 = vrot.slane %v6236, 4
      %v6239 = vor.u32 %v6238, %v6234
      %v6240 = vrot.slane %v6239, 4
      %v6242 = vshll.u32 %v6045, 16
      %v6244 = vrot.slane %v6242, 5
      %v6245 = vsel %vm814, %v6240, %v6244
      %v6247 = vshrl.u32 %v6022, 16
      %v6249 = vrot.slane %v6247, 4
      %v6250 = vshll.u32 %v6022, 16
      %v6252 = vrot.slane %v6250, 5
      %v6253 = vor.u32 %v6249, %v6252
      %v6254 = vrot.slane %v6253, 4
      %v6256 = vshll.u32 %v6023, 16
      %v6258 = vrot.slane %v6256, 5
      %v6259 = vsel %vm814, %v6254, %v6258
      %v6260 = vshrl.u32 %v6023, 16
      %v6262 = vrot.slane %v6260, 4
      %v6263 = vor.u32 %v6262, %v6258
      %v6264 = vrot.slane %v6263, 4
      %v6266 = vshll.u32 %v6046, 16
      %v6268 = vrot.slane %v6266, 5
      %v6269 = vsel %vm814, %v6264, %v6268
      %v6271 = vshrl.u32 %v6024, 16
      %v6273 = vrot.slane %v6271, 4
      %v6274 = vshll.u32 %v6024, 16
      %v6276 = vrot.slane %v6274, 5
      %v6277 = vor.u32 %v6273, %v6276
      %v6278 = vrot.slane %v6277, 4
      %v6280 = vshll.u32 %v6025, 16
      %v6282 = vrot.slane %v6280, 5
      %v6283 = vsel %vm814, %v6278, %v6282
      %v6284 = vshrl.u32 %v6025, 16
      %v6286 = vrot.slane %v6284, 4
      %v6287 = vor.u32 %v6286, %v6282
      %v6288 = vrot.slane %v6287, 4
      %v6290 = vshll.u32 %v6047, 16
      %v6292 = vrot.slane %v6290, 5
      %v6293 = vsel %vm814, %v6288, %v6292
      %v6295 = vshrl.u32 %v6026, 16
      %v6297 = vrot.slane %v6295, 4
      %v6298 = vshll.u32 %v6026, 16
      %v6300 = vrot.slane %v6298, 5
      %v6301 = vor.u32 %v6297, %v6300
      %v6302 = vrot.slane %v6301, 4
      %v6304 = vshll.u32 %v6027, 16
      %v6306 = vrot.slane %v6304, 5
      %v6307 = vsel %vm814, %v6302, %v6306
      %v6308 = vshrl.u32 %v6027, 16
      %v6310 = vrot.slane %v6308, 4
      %v6311 = vor.u32 %v6310, %v6306
      %v6312 = vrot.slane %v6311, 4
      %v6314 = vshll.u32 %v6048, 16
      %v6316 = vrot.slane %v6314, 5
      %v6317 = vsel %vm814, %v6312, %v6316
      %v6319 = vshrl.u32 %v6028, 16
      %v6321 = vrot.slane %v6319, 4
      %v6322 = vshll.u32 %v6028, 16
      %v6324 = vrot.slane %v6322, 5
      %v6325 = vor.u32 %v6321, %v6324
      %v6326 = vrot.slane %v6325, 4
      %v6328 = vshll.u32 %v6029, 16
      %v6330 = vrot.slane %v6328, 5
      %v6331 = vsel %vm814, %v6326, %v6330
      %v6332 = vshrl.u32 %v6029, 16
      %v6334 = vrot.slane %v6332, 4
      %v6335 = vor.u32 %v6334, %v6330
      %v6336 = vrot.slane %v6335, 4
      %v6338 = vshll.u32 %v6049, 16
      %v6340 = vrot.slane %v6338, 5
      %v6341 = vsel %vm814, %v6336, %v6340
      %v6343 = vshrl.u32 %v6030, 16
      %v6345 = vrot.slane %v6343, 4
      %v6346 = vshll.u32 %v6030, 16
      %v6348 = vrot.slane %v6346, 5
      %v6349 = vor.u32 %v6345, %v6348
      %v6350 = vrot.slane %v6349, 4
      %v6352 = vshll.u32 %v6031, 16
      %v6354 = vrot.slane %v6352, 5
      %v6355 = vsel %vm814, %v6350, %v6354
      %v6356 = vshrl.u32 %v6031, 16
      %v6358 = vrot.slane %v6356, 4
      %v6359 = vor.u32 %v6358, %v6354
      %v6360 = vrot.slane %v6359, 4
      %v6362 = vshll.u32 %v6050, 16
      %v6364 = vrot.slane %v6362, 5
      %v6365 = vsel %vm814, %v6360, %v6364
      %v6367 = vshrl.u32 %v6032, 16
      %v6369 = vrot.slane %v6367, 4
      %v6370 = vshll.u32 %v6032, 16
      %v6372 = vrot.slane %v6370, 5
      %v6373 = vor.u32 %v6369, %v6372
      %v6374 = vrot.slane %v6373, 4
      %v6376 = vshll.u32 %v6033, 16
      %v6378 = vrot.slane %v6376, 5
      %v6379 = vsel %vm814, %v6374, %v6378
      %v6380 = vshrl.u32 %v6033, 16
      %v6382 = vrot.slane %v6380, 4
      %v6383 = vor.u32 %v6382, %v6378
      %v6384 = vrot.slane %v6383, 4
      %v6386 = vshll.u32 %v6051, 16
      %v6388 = vrot.slane %v6386, 5
      %v6389 = vsel %vm814, %v6384, %v6388
      %v6391 = vshrl.u32 %v6034, 16
      %v6393 = vrot.slane %v6391, 4
      %v6394 = vshll.u32 %v6034, 16
      %v6396 = vrot.slane %v6394, 5
      %v6397 = vor.u32 %v6393, %v6396
      %v6398 = vrot.slane %v6397, 4
      %v6400 = vshll.u32 %v6035, 16
      %v6402 = vrot.slane %v6400, 5
      %v6403 = vsel %vm814, %v6398, %v6402
      %v6404 = vshrl.u32 %v6035, 16
      %v6406 = vrot.slane %v6404, 4
      %v6407 = vor.u32 %v6406, %v6402
      %v6408 = vrot.slane %v6407, 4
      %v6410 = vshll.u32 %v6052, 16
      %v6412 = vrot.slane %v6410, 5
      %v6413 = vsel %vm814, %v6408, %v6412
      %v6415 = vshrl.u32 %v6036, 16
      %v6417 = vrot.slane %v6415, 4
      %v6418 = vshll.u32 %v6036, 16
      %v6420 = vrot.slane %v6418, 5
      %v6421 = vor.u32 %v6417, %v6420
      %v6422 = vrot.slane %v6421, 4
      %v6424 = vshll.u32 %v6037, 16
      %v6426 = vrot.slane %v6424, 5
      %v6427 = vsel %vm814, %v6422, %v6426
      %v6428 = vshrl.u32 %v6037, 16
      %v6430 = vrot.slane %v6428, 4
      %v6431 = vor.u32 %v6430, %v6426
      %v6432 = vrot.slane %v6431, 4
      %v6434 = vshll.u32 %v6053, 16
      %v6436 = vrot.slane %v6434, 5
      %v6437 = vsel %vm814, %v6432, %v6436
      %v6438 = vunpack.c.l.b16 %v6067
      %v6439 = vunpack.c.l.b16 %v6077
      %v6440 = vunpack.c.l.b16 %v6091
      %v6441 = vunpack.c.l.b16 %v6101
      %v6442 = vunpack.c.l.b16 %v6115
      %v6443 = vunpack.c.l.b16 %v6125
      %v6444 = vunpack.c.l.b16 %v6139
      %v6445 = vunpack.c.l.b16 %v6149
      %v6446 = vunpack.c.l.b16 %v6163
      %v6447 = vunpack.c.l.b16 %v6173
      %v6448 = vunpack.c.l.b16 %v6187
      %v6449 = vunpack.c.l.b16 %v6197
      %v6450 = vunpack.c.l.b16 %v6211
      %v6451 = vunpack.c.l.b16 %v6221
      %v6452 = vunpack.c.l.b16 %v6235
      %v6453 = vunpack.c.l.b16 %v6245
      %v6454 = vunpack.c.l.b16 %v6259
      %v6455 = vunpack.c.l.b16 %v6269
      %v6456 = vunpack.c.l.b16 %v6283
      %v6457 = vunpack.c.l.b16 %v6293
      %v6458 = vunpack.c.l.b16 %v6307
      %v6459 = vunpack.c.l.b16 %v6317
      %v6460 = vunpack.c.l.b16 %v6331
      %v6461 = vunpack.c.l.b16 %v6341
      %v6462 = vunpack.c.l.b16 %v6355
      %v6463 = vunpack.c.l.b16 %v6365
      %v6464 = vunpack.c.l.b16 %v6379
      %v6465 = vunpack.c.l.b16 %v6389
      %v6466 = vunpack.c.l.b16 %v6403
      %v6467 = vunpack.c.l.b16 %v6413
      %v6468 = vunpack.c.l.b16 %v6427
      %v6469 = vunpack.c.l.b16 %v6437
      %v6470 = vpack.c.b16 %v6439, %v6438
      %v6471 = vpack.c.b16 %v6441, %v6440
      %v6472 = vpack.c.b16 %v6443, %v6442
      %v6473 = vpack.c.b16 %v6445, %v6444
      %v6474 = vpack.c.b16 %v6447, %v6446
      %v6475 = vpack.c.b16 %v6449, %v6448
      %v6476 = vpack.c.b16 %v6451, %v6450
      %v6477 = vpack.c.b16 %v6453, %v6452
      %v6478 = vpack.c.b16 %v6455, %v6454
      %v6479 = vpack.c.b16 %v6457, %v6456
      %v6480 = vpack.c.b16 %v6459, %v6458
      %v6481 = vpack.c.b16 %v6461, %v6460
      %v6482 = vpack.c.b16 %v6463, %v6462
      %v6483 = vpack.c.b16 %v6465, %v6464
      %v6484 = vpack.c.b16 %v6467, %v6466
      %v6485 = vpack.c.b16 %v6469, %v6468
      %vm6486 = vcmask 64512
      %v6488 = vsel %vm6486, %v6470, 0
      %v6491 = vsel %vm6486, %v6471, 0
      %v6494 = vsel %vm6486, %v6472, 0
      %v6497 = vsel %vm6486, %v6473, 0
      %v6500 = vsel %vm6486, %v6474, 0
      %v6503 = vsel %vm6486, %v6475, 0
      %v6506 = vsel %vm6486, %v6476, 0
      %v6509 = vsel %vm6486, %v6477, 0
      %v6512 = vsel %vm6486, %v6478, 0
      %v6515 = vsel %vm6486, %v6479, 0
      %v6518 = vsel %vm6486, %v6480, 0
      %v6521 = vsel %vm6486, %v6481, 0
      %v6524 = vsel %vm6486, %v6482, 0
      %v6527 = vsel %vm6486, %v6483, 0
      %v6530 = vsel %vm6486, %v6484, 0
      %v6533 = vsel %vm6486, %v6485, 0
      %vm6535 = vcmask 1043456
      %v6537 = vsel %vm6535, %v5998, 0
      %6539 = vmatprep.subr.bf16.mxu0 0
      %6540 = vmatpush1.bf16.msra.mxu0 %v6537
      %6541 = vmatprep.subr.bf16.mxu0 0
      %6542 = vmatpush1.bf16.msra.mxu0 0
      %6543 = vmatprep.subr.bf16.mxu0 0
      %6544 = vmatpush1.bf16.msra.mxu0 0
      %6545 = vmatprep.subr.bf16.mxu0 0
      %6546 = vmatpush1.bf16.msra.mxu0 0
      %6547 = vmatprep.subr.bf16.mxu0 0
      %6548 = vmatpush1.bf16.msra.mxu0 0
      %6549 = vmatprep.subr.bf16.mxu0 0
      %6550 = vmatpush1.bf16.msra.mxu0 0
      %6551 = vmatprep.subr.bf16.mxu0 0
      %6552 = vmatpush1.bf16.msra.mxu0 0
      %6553 = vmatprep.subr.bf16.mxu0 0
      %6554 = vmatpush1.bf16.msra.mxu0 0
      %6555 = vmatprep.subr.bf16.mxu0 0
      %6556 = vmatpush1.bf16.msra.mxu0 0
      %6557 = vmatprep.subr.bf16.mxu0 0
      %6558 = vmatpush1.bf16.msra.mxu0 0
      %6559 = vmatprep.subr.bf16.mxu0 0
      %6560 = vmatpush1.bf16.msra.mxu0 0
      %6561 = vmatprep.subr.bf16.mxu0 0
      %6562 = vmatpush1.bf16.msra.mxu0 0
      %6563 = vmatprep.subr.bf16.mxu0 0
      %6564 = vmatpush1.bf16.msra.mxu0 0
      %6565 = vmatprep.subr.bf16.mxu0 0
      %6566 = vmatpush1.bf16.msra.mxu0 0
      %6567 = vmatprep.subr.bf16.mxu0 0
      %6568 = vmatpush1.bf16.msra.mxu0 0
      %6569 = vmatprep.subr.bf16.mxu0 0
      %6570 = vmatpush1.bf16.msra.mxu0 0
      %6571 = vmatprep.mubr.bf16.mxu0 0
      %6572 = vmatmul.mubr.bf16.gmra.mrb[0].mxu0 %v6488
      %v6573 = vpop.f32.mrb[0].mxu0
      %v6574 = vadd.f32 0.0, %v6573
      %v6575 = vpop.f32.mrb[0].mxu0
      %v6576 = vpop.f32.mrb[0].mxu0
      %v6577 = vadd.f32 0.0, %v6576
      %v6578 = vpop.f32.mrb[0].mxu0
      %6579 = vmatprep.mubr.bf16.mxu0 0
      %6580 = vmatmul.mubr.bf16.gmra.mrb[0].mxu0 %v6491
      %v6581 = vpop.f32.mrb[0].mxu0
      %v6582 = vadd.f32 0.0, %v6581
      %v6583 = vpop.f32.mrb[0].mxu0
      %v6584 = vpop.f32.mrb[0].mxu0
      %v6585 = vadd.f32 0.0, %v6584
      %v6586 = vpop.f32.mrb[0].mxu0
      %6587 = vmatprep.mubr.bf16.mxu0 0
      %6588 = vmatmul.mubr.bf16.gmra.mrb[0].mxu0 %v6494
      %v6589 = vpop.f32.mrb[0].mxu0
      %v6590 = vadd.f32 0.0, %v6589
      %v6591 = vpop.f32.mrb[0].mxu0
      %v6592 = vpop.f32.mrb[0].mxu0
      %v6593 = vadd.f32 0.0, %v6592
      %v6594 = vpop.f32.mrb[0].mxu0
      %6595 = vmatprep.mubr.bf16.mxu0 0
      %6596 = vmatmul.mubr.bf16.gmra.mrb[0].mxu0 %v6497
      %v6597 = vpop.f32.mrb[0].mxu0
      %v6598 = vadd.f32 0.0, %v6597
      %v6599 = vpop.f32.mrb[0].mxu0
      %v6600 = vpop.f32.mrb[0].mxu0
      %v6601 = vadd.f32 0.0, %v6600
      %v6602 = vpop.f32.mrb[0].mxu0
      %6603 = vmatprep.mubr.bf16.mxu0 0
      %6604 = vmatmul.mubr.bf16.gmra.mrb[0].mxu0 %v6500
      %v6605 = vpop.f32.mrb[0].mxu0
      %v6606 = vadd.f32 0.0, %v6605
      %v6607 = vpop.f32.mrb[0].mxu0
      %v6608 = vpop.f32.mrb[0].mxu0
      %v6609 = vadd.f32 0.0, %v6608
      %v6610 = vpop.f32.mrb[0].mxu0
      %6611 = vmatprep.mubr.bf16.mxu0 0
      %6612 = vmatmul.mubr.bf16.gmra.mrb[0].mxu0 %v6503
      %v6613 = vpop.f32.mrb[0].mxu0
      %v6614 = vadd.f32 0.0, %v6613
      %v6615 = vpop.f32.mrb[0].mxu0
      %v6616 = vpop.f32.mrb[0].mxu0
      %v6617 = vadd.f32 0.0, %v6616
      %v6618 = vpop.f32.mrb[0].mxu0
      %6619 = vmatprep.mubr.bf16.mxu0 0
      %6620 = vmatmul.mubr.bf16.gmra.mrb[0].mxu0 %v6506
      %v6621 = vpop.f32.mrb[0].mxu0
      %v6622 = vadd.f32 0.0, %v6621
      %v6623 = vpop.f32.mrb[0].mxu0
      %v6624 = vpop.f32.mrb[0].mxu0
      %v6625 = vadd.f32 0.0, %v6624
      %v6626 = vpop.f32.mrb[0].mxu0
      %6627 = vmatprep.mubr.bf16.mxu0 0
      %6628 = vmatmul.mubr.bf16.gmra.mrb[0].mxu0 %v6509
      %v6629 = vpop.f32.mrb[0].mxu0
      %v6630 = vadd.f32 0.0, %v6629
      %v6631 = vpop.f32.mrb[0].mxu0
      %v6632 = vpop.f32.mrb[0].mxu0
      %v6633 = vadd.f32 0.0, %v6632
      %v6634 = vpop.f32.mrb[0].mxu0
      %6635 = vmatprep.mubr.bf16.mxu0 0
      %6636 = vmatmul.mubr.bf16.gmra.mrb[0].mxu0 %v6512
      %v6637 = vpop.f32.mrb[0].mxu0
      %v6638 = vadd.f32 0.0, %v6637
      %v6639 = vpop.f32.mrb[0].mxu0
      %v6640 = vpop.f32.mrb[0].mxu0
      %v6641 = vadd.f32 0.0, %v6640
      %v6642 = vpop.f32.mrb[0].mxu0
      %6643 = vmatprep.mubr.bf16.mxu0 0
      %6644 = vmatmul.mubr.bf16.gmra.mrb[0].mxu0 %v6515
      %v6645 = vpop.f32.mrb[0].mxu0
      %v6646 = vadd.f32 0.0, %v6645
      %v6647 = vpop.f32.mrb[0].mxu0
      %v6648 = vpop.f32.mrb[0].mxu0
      %v6649 = vadd.f32 0.0, %v6648
      %v6650 = vpop.f32.mrb[0].mxu0
      %6651 = vmatprep.mubr.bf16.mxu0 0
      %6652 = vmatmul.mubr.bf16.gmra.mrb[0].mxu0 %v6518
      %v6653 = vpop.f32.mrb[0].mxu0
      %v6654 = vadd.f32 0.0, %v6653
      %v6655 = vpop.f32.mrb[0].mxu0
      %v6656 = vpop.f32.mrb[0].mxu0
      %v6657 = vadd.f32 0.0, %v6656
      %v6658 = vpop.f32.mrb[0].mxu0
      %6659 = vmatprep.mubr.bf16.mxu0 0
      %6660 = vmatmul.mubr.bf16.gmra.mrb[0].mxu0 %v6521
      %v6661 = vpop.f32.mrb[0].mxu0
      %v6662 = vadd.f32 0.0, %v6661
      %v6663 = vpop.f32.mrb[0].mxu0
      %v6664 = vpop.f32.mrb[0].mxu0
      %v6665 = vadd.f32 0.0, %v6664
      %v6666 = vpop.f32.mrb[0].mxu0
      %6667 = vmatprep.mubr.bf16.mxu0 0
      %6668 = vmatmul.mubr.bf16.gmra.mrb[0].mxu0 %v6524
      %v6669 = vpop.f32.mrb[0].mxu0
      %v6670 = vadd.f32 0.0, %v6669
      %v6671 = vpop.f32.mrb[0].mxu0
      %v6672 = vpop.f32.mrb[0].mxu0
      %v6673 = vadd.f32 0.0, %v6672
      %v6674 = vpop.f32.mrb[0].mxu0
      %6675 = vmatprep.mubr.bf16.mxu0 0
      %6676 = vmatmul.mubr.bf16.gmra.mrb[0].mxu0 %v6527
      %v6677 = vpop.f32.mrb[0].mxu0
      %v6678 = vadd.f32 0.0, %v6677
      %v6679 = vpop.f32.mrb[0].mxu0
      %v6680 = vpop.f32.mrb[0].mxu0
      %v6681 = vadd.f32 0.0, %v6680
      %v6682 = vpop.f32.mrb[0].mxu0
      %6683 = vmatprep.mubr.bf16.mxu0 0
      %6684 = vmatmul.mubr.bf16.gmra.mrb[0].mxu0 %v6530
      %v6685 = vpop.f32.mrb[0].mxu0
      %v6686 = vadd.f32 0.0, %v6685
      %v6687 = vpop.f32.mrb[0].mxu0
      %v6688 = vpop.f32.mrb[0].mxu0
      %v6689 = vadd.f32 0.0, %v6688
      %v6690 = vpop.f32.mrb[0].mxu0
      %6691 = vmatprep.mubr.bf16.mxu0 0
      %6692 = vmatmul.mubr.bf16.gmra.mrb[0].mxu0 %v6533
      %v6693 = vpop.f32.mrb[0].mxu0
      %v6694 = vadd.f32 0.0, %v6693
      %v6695 = vpop.f32.mrb[0].mxu0
      %v6696 = vpop.f32.mrb[0].mxu0
      %v6697 = vadd.f32 0.0, %v6696
      %v6698 = vpop.f32.mrb[0].mxu0
      %6699 = vdwg.mxu0
      %v6732 = vunpack.c.l.b16 %v6006
      %v6733 = vunpack.c.l.b16 %v6007
      %v6734 = vunpack.c.l.b16 %v6008
      %v6735 = vunpack.c.l.b16 %v6009
      %v6736 = vunpack.c.l.b16 %v6010
      %v6737 = vunpack.c.l.b16 %v6011
      %v6738 = vunpack.c.l.b16 %v6012
      %v6739 = vunpack.c.l.b16 %v6013
      %v6740 = vunpack.c.l.b16 %v6014
      %v6741 = vunpack.c.l.b16 %v6015
      %v6742 = vunpack.c.l.b16 %v6016
      %v6743 = vunpack.c.l.b16 %v6017
      %v6744 = vunpack.c.l.b16 %v6018
      %v6745 = vunpack.c.l.b16 %v6019
      %v6746 = vunpack.c.l.b16 %v6020
      %v6747 = vunpack.c.l.b16 %v6021
      %v6748 = vunpack.c.l.b16 %v6022
      %v6749 = vunpack.c.l.b16 %v6023
      %v6750 = vunpack.c.l.b16 %v6024
      %v6751 = vunpack.c.l.b16 %v6025
      %v6752 = vunpack.c.l.b16 %v6026
      %v6753 = vunpack.c.l.b16 %v6027
      %v6754 = vunpack.c.l.b16 %v6028
      %v6755 = vunpack.c.l.b16 %v6029
      %v6756 = vunpack.c.l.b16 %v6030
      %v6757 = vunpack.c.l.b16 %v6031
      %v6758 = vunpack.c.l.b16 %v6032
      %v6759 = vunpack.c.l.b16 %v6033
      %v6760 = vunpack.c.l.b16 %v6034
      %v6761 = vunpack.c.l.b16 %v6035
      %v6762 = vunpack.c.l.b16 %v6036
      %v6763 = vunpack.c.l.b16 %v6037
      %v6764 = vpack.c.b16 %v6733, %v6732
      %v6765 = vpack.c.b16 %v6735, %v6734
      %v6766 = vpack.c.b16 %v6737, %v6736
      %v6767 = vpack.c.b16 %v6739, %v6738
      %v6768 = vpack.c.b16 %v6741, %v6740
      %v6769 = vpack.c.b16 %v6743, %v6742
      %v6770 = vpack.c.b16 %v6745, %v6744
      %v6771 = vpack.c.b16 %v6747, %v6746
      %v6772 = vpack.c.b16 %v6749, %v6748
      %v6773 = vpack.c.b16 %v6751, %v6750
      %v6774 = vpack.c.b16 %v6753, %v6752
      %v6775 = vpack.c.b16 %v6755, %v6754
      %v6776 = vpack.c.b16 %v6757, %v6756
      %v6777 = vpack.c.b16 %v6759, %v6758
      %v6778 = vpack.c.b16 %v6761, %v6760
      %v6779 = vpack.c.b16 %v6763, %v6762
      %v6781 = vsel %vm6486, %v6764, 0
      %v6784 = vsel %vm6486, %v6765, 0
      %v6787 = vsel %vm6486, %v6766, 0
      %v6790 = vsel %vm6486, %v6767, 0
      %v6793 = vsel %vm6486, %v6768, 0
      %v6796 = vsel %vm6486, %v6769, 0
      %v6799 = vsel %vm6486, %v6770, 0
      %v6802 = vsel %vm6486, %v6771, 0
      %v6805 = vsel %vm6486, %v6772, 0
      %v6808 = vsel %vm6486, %v6773, 0
      %v6811 = vsel %vm6486, %v6774, 0
      %v6814 = vsel %vm6486, %v6775, 0
      %v6817 = vsel %vm6486, %v6776, 0
      %v6820 = vsel %vm6486, %v6777, 0
      %v6823 = vsel %vm6486, %v6778, 0
      %v6826 = vsel %vm6486, %v6779, 0
      %v6829 = vsel %vm6535, %v5997, 0
      %6831 = vmatprep.subr.bf16.mxu0 0
      %6832 = vmatpush1.bf16.msra.mxu0 %v6829
      %6833 = vmatprep.subr.bf16.mxu0 0
      %6834 = vmatpush1.bf16.msra.mxu0 0
      %6835 = vmatprep.subr.bf16.mxu0 0
      %6836 = vmatpush1.bf16.msra.mxu0 0
      %6837 = vmatprep.subr.bf16.mxu0 0
      %6838 = vmatpush1.bf16.msra.mxu0 0
      %6839 = vmatprep.subr.bf16.mxu0 0
      %6840 = vmatpush1.bf16.msra.mxu0 0
      %6841 = vmatprep.subr.bf16.mxu0 0
      %6842 = vmatpush1.bf16.msra.mxu0 0
      %6843 = vmatprep.subr.bf16.mxu0 0
      %6844 = vmatpush1.bf16.msra.mxu0 0
      %6845 = vmatprep.subr.bf16.mxu0 0
      %6846 = vmatpush1.bf16.msra.mxu0 0
      %6847 = vmatprep.subr.bf16.mxu0 0
      %6848 = vmatpush1.bf16.msra.mxu0 0
      %6849 = vmatprep.subr.bf16.mxu0 0
      %6850 = vmatpush1.bf16.msra.mxu0 0
      %6851 = vmatprep.subr.bf16.mxu0 0
      %6852 = vmatpush1.bf16.msra.mxu0 0
      %6853 = vmatprep.subr.bf16.mxu0 0
      %6854 = vmatpush1.bf16.msra.mxu0 0
      %6855 = vmatprep.subr.bf16.mxu0 0
      %6856 = vmatpush1.bf16.msra.mxu0 0
      %6857 = vmatprep.subr.bf16.mxu0 0
      %6858 = vmatpush1.bf16.msra.mxu0 0
      %6859 = vmatprep.subr.bf16.mxu0 0
      %6860 = vmatpush1.bf16.msra.mxu0 0
      %6861 = vmatprep.subr.bf16.mxu0 0
      %6862 = vmatpush1.bf16.msra.mxu0 0
      %6863 = vmatprep.mubr.bf16.mxu0 0
      %6864 = vmatmul.mubr.bf16.gmra.mrb[0].mxu0 %v6781
      %v6865 = vpop.f32.mrb[0].mxu0
      %v6866 = vadd.f32 %v6574, %v6865
      %v6867 = vpop.f32.mrb[0].mxu0
      %v6868 = vpop.f32.mrb[0].mxu0
      %v6869 = vadd.f32 %v6577, %v6868
      %v6870 = vpop.f32.mrb[0].mxu0
      %6871 = vmatprep.mubr.bf16.mxu0 0
      %6872 = vmatmul.mubr.bf16.gmra.mrb[0].mxu0 %v6784
      %v6873 = vpop.f32.mrb[0].mxu0
      %v6874 = vadd.f32 %v6582, %v6873
      %v6875 = vpop.f32.mrb[0].mxu0
      %v6876 = vpop.f32.mrb[0].mxu0
      %v6877 = vadd.f32 %v6585, %v6876
      %v6878 = vpop.f32.mrb[0].mxu0
      %6879 = vmatprep.mubr.bf16.mxu0 0
      %6880 = vmatmul.mubr.bf16.gmra.mrb[0].mxu0 %v6787
      %v6881 = vpop.f32.mrb[0].mxu0
      %v6882 = vadd.f32 %v6590, %v6881
      %v6883 = vpop.f32.mrb[0].mxu0
      %v6884 = vpop.f32.mrb[0].mxu0
      %v6885 = vadd.f32 %v6593, %v6884
      %v6886 = vpop.f32.mrb[0].mxu0
      %6887 = vmatprep.mubr.bf16.mxu0 0
      %6888 = vmatmul.mubr.bf16.gmra.mrb[0].mxu0 %v6790
      %v6889 = vpop.f32.mrb[0].mxu0
      %v6890 = vadd.f32 %v6598, %v6889
      %v6891 = vpop.f32.mrb[0].mxu0
      %v6892 = vpop.f32.mrb[0].mxu0
      %v6893 = vadd.f32 %v6601, %v6892
      %v6894 = vpop.f32.mrb[0].mxu0
      %6895 = vmatprep.mubr.bf16.mxu0 0
      %6896 = vmatmul.mubr.bf16.gmra.mrb[0].mxu0 %v6793
      %v6897 = vpop.f32.mrb[0].mxu0
      %v6898 = vadd.f32 %v6606, %v6897
      %v6899 = vpop.f32.mrb[0].mxu0
      %v6900 = vpop.f32.mrb[0].mxu0
      %v6901 = vadd.f32 %v6609, %v6900
      %v6902 = vpop.f32.mrb[0].mxu0
      %6903 = vmatprep.mubr.bf16.mxu0 0
      %6904 = vmatmul.mubr.bf16.gmra.mrb[0].mxu0 %v6796
      %v6905 = vpop.f32.mrb[0].mxu0
      %v6906 = vadd.f32 %v6614, %v6905
      %v6907 = vpop.f32.mrb[0].mxu0
      %v6908 = vpop.f32.mrb[0].mxu0
      %v6909 = vadd.f32 %v6617, %v6908
      %v6910 = vpop.f32.mrb[0].mxu0
      %6911 = vmatprep.mubr.bf16.mxu0 0
      %6912 = vmatmul.mubr.bf16.gmra.mrb[0].mxu0 %v6799
      %v6913 = vpop.f32.mrb[0].mxu0
      %v6914 = vadd.f32 %v6622, %v6913
      %v6915 = vpop.f32.mrb[0].mxu0
      %v6916 = vpop.f32.mrb[0].mxu0
      %v6917 = vadd.f32 %v6625, %v6916
      %v6918 = vpop.f32.mrb[0].mxu0
      %6919 = vmatprep.mubr.bf16.mxu0 0
      %6920 = vmatmul.mubr.bf16.gmra.mrb[0].mxu0 %v6802
      %v6921 = vpop.f32.mrb[0].mxu0
      %v6922 = vadd.f32 %v6630, %v6921
      %v6923 = vpop.f32.mrb[0].mxu0
      %v6924 = vpop.f32.mrb[0].mxu0
      %v6925 = vadd.f32 %v6633, %v6924
      %v6926 = vpop.f32.mrb[0].mxu0
      %6927 = vmatprep.mubr.bf16.mxu0 0
      %6928 = vmatmul.mubr.bf16.gmra.mrb[0].mxu0 %v6805
      %v6929 = vpop.f32.mrb[0].mxu0
      %v6930 = vadd.f32 %v6638, %v6929
      %v6931 = vpop.f32.mrb[0].mxu0
      %v6932 = vpop.f32.mrb[0].mxu0
      %v6933 = vadd.f32 %v6641, %v6932
      %v6934 = vpop.f32.mrb[0].mxu0
      %6935 = vmatprep.mubr.bf16.mxu0 0
      %6936 = vmatmul.mubr.bf16.gmra.mrb[0].mxu0 %v6808
      %v6937 = vpop.f32.mrb[0].mxu0
      %v6938 = vadd.f32 %v6646, %v6937
      %v6939 = vpop.f32.mrb[0].mxu0
      %v6940 = vpop.f32.mrb[0].mxu0
      %v6941 = vadd.f32 %v6649, %v6940
      %v6942 = vpop.f32.mrb[0].mxu0
      %6943 = vmatprep.mubr.bf16.mxu0 0
      %6944 = vmatmul.mubr.bf16.gmra.mrb[0].mxu0 %v6811
      %v6945 = vpop.f32.mrb[0].mxu0
      %v6946 = vadd.f32 %v6654, %v6945
      %v6947 = vpop.f32.mrb[0].mxu0
      %v6948 = vpop.f32.mrb[0].mxu0
      %v6949 = vadd.f32 %v6657, %v6948
      %v6950 = vpop.f32.mrb[0].mxu0
      %6951 = vmatprep.mubr.bf16.mxu0 0
      %6952 = vmatmul.mubr.bf16.gmra.mrb[0].mxu0 %v6814
      %v6953 = vpop.f32.mrb[0].mxu0
      %v6954 = vadd.f32 %v6662, %v6953
      %v6955 = vpop.f32.mrb[0].mxu0
      %v6956 = vpop.f32.mrb[0].mxu0
      %v6957 = vadd.f32 %v6665, %v6956
      %v6958 = vpop.f32.mrb[0].mxu0
      %6959 = vmatprep.mubr.bf16.mxu0 0
      %6960 = vmatmul.mubr.bf16.gmra.mrb[0].mxu0 %v6817
      %v6961 = vpop.f32.mrb[0].mxu0
      %v6962 = vadd.f32 %v6670, %v6961
      %v6963 = vpop.f32.mrb[0].mxu0
      %v6964 = vpop.f32.mrb[0].mxu0
      %v6965 = vadd.f32 %v6673, %v6964
      %v6966 = vpop.f32.mrb[0].mxu0
      %6967 = vmatprep.mubr.bf16.mxu0 0
      %6968 = vmatmul.mubr.bf16.gmra.mrb[0].mxu0 %v6820
      %v6969 = vpop.f32.mrb[0].mxu0
      %v6970 = vadd.f32 %v6678, %v6969
      %v6971 = vpop.f32.mrb[0].mxu0
      %v6972 = vpop.f32.mrb[0].mxu0
      %v6973 = vadd.f32 %v6681, %v6972
      %v6974 = vpop.f32.mrb[0].mxu0
      %6975 = vmatprep.mubr.bf16.mxu0 0
      %6976 = vmatmul.mubr.bf16.gmra.mrb[0].mxu0 %v6823
      %v6977 = vpop.f32.mrb[0].mxu0
      %v6978 = vadd.f32 %v6686, %v6977
      %v6979 = vpop.f32.mrb[0].mxu0
      %v6980 = vpop.f32.mrb[0].mxu0
      %v6981 = vadd.f32 %v6689, %v6980
      %v6982 = vpop.f32.mrb[0].mxu0
      %6983 = vmatprep.mubr.bf16.mxu0 0
      %6984 = vmatmul.mubr.bf16.gmra.mrb[0].mxu0 %v6826
      %v6985 = vpop.f32.mrb[0].mxu0
      %v6986 = vadd.f32 %v6694, %v6985
      %v6987 = vpop.f32.mrb[0].mxu0
      %v6988 = vpop.f32.mrb[0].mxu0
      %v6989 = vadd.f32 %v6697, %v6988
      %v6990 = vpop.f32.mrb[0].mxu0
      %6991 = vdwg.mxu0
      %v6992 = vld [vmem:[#allocation3] sm:$0xe]
      %v6993 = vld [vmem:[#allocation3 + $0xc] sm:$0xe]
      %v6994 = vld [vmem:[#allocation3 + $0x18] sm:$0xe]
      %v6995 = vld [vmem:[#allocation3 + $0x24] sm:$0xe]
      %v6996 = vld [vmem:[#allocation3 + $0x30] sm:$0xe]
      %v6997 = vld [vmem:[#allocation3 + $0x3c] sm:$0xe]
      %v6998 = vld [vmem:[#allocation3 + $0x48] sm:$0xe]
      %v6999 = vld [vmem:[#allocation3 + $0x54] sm:$0xe]
      %v7000 = vld [vmem:[#allocation3 + $0x60] sm:$0xe]
      %v7001 = vld [vmem:[#allocation3 + $0x6c] sm:$0xe]
      %v7002 = vld [vmem:[#allocation3 + $0x78] sm:$0xe]
      %v7003 = vld [vmem:[#allocation3 + $0x84] sm:$0xe]
      %v7004 = vld [vmem:[#allocation3 + $0x90] sm:$0xe]
      %v7005 = vld [vmem:[#allocation3 + $0x9c] sm:$0xe]
      %v7006 = vld [vmem:[#allocation3 + $0xa8] sm:$0xe]
      %v7007 = vld [vmem:[#allocation3 + $0xb4] sm:$0xe]
      %v7040 = vrot.slane %v6992, 5
      %v7041 = vrot.slane %v7040, 4
      %v7042 = vrot.slane %v6007, 5
      %v7043 = vsel %vm1803, %v7041, %v7042
      %v7044 = vrot.slane %v7042, 4
      %v7045 = vrot.slane %v6038, 5
      %v7046 = vsel %vm1803, %v7044, %v7045
      %v7047 = vrot.slane %v6993, 5
      %v7048 = vrot.slane %v7047, 4
      %v7049 = vrot.slane %v6009, 5
      %v7050 = vsel %vm1803, %v7048, %v7049
      %v7051 = vrot.slane %v7049, 4
      %v7052 = vrot.slane %v6039, 5
      %v7053 = vsel %vm1803, %v7051, %v7052
      %v7054 = vrot.slane %v6994, 5
      %v7055 = vrot.slane %v7054, 4
      %v7056 = vrot.slane %v6011, 5
      %v7057 = vsel %vm1803, %v7055, %v7056
      %v7058 = vrot.slane %v7056, 4
      %v7059 = vrot.slane %v6040, 5
      %v7060 = vsel %vm1803, %v7058, %v7059
      %v7061 = vrot.slane %v6995, 5
      %v7062 = vrot.slane %v7061, 4
      %v7063 = vrot.slane %v6013, 5
      %v7064 = vsel %vm1803, %v7062, %v7063
      %v7065 = vrot.slane %v7063, 4
      %v7066 = vrot.slane %v6041, 5
      %v7067 = vsel %vm1803, %v7065, %v7066
      %v7068 = vrot.slane %v6996, 5
      %v7069 = vrot.slane %v7068, 4
      %v7070 = vrot.slane %v6015, 5
      %v7071 = vsel %vm1803, %v7069, %v7070
      %v7072 = vrot.slane %v7070, 4
      %v7073 = vrot.slane %v6042, 5
      %v7074 = vsel %vm1803, %v7072, %v7073
      %v7075 = vrot.slane %v6997, 5
      %v7076 = vrot.slane %v7075, 4
      %v7077 = vrot.slane %v6017, 5
      %v7078 = vsel %vm1803, %v7076, %v7077
      %v7079 = vrot.slane %v7077, 4
      %v7080 = vrot.slane %v6043, 5
      %v7081 = vsel %vm1803, %v7079, %v7080
      %v7082 = vrot.slane %v6998, 5
      %v7083 = vrot.slane %v7082, 4
      %v7084 = vrot.slane %v6019, 5
      %v7085 = vsel %vm1803, %v7083, %v7084
      %v7086 = vrot.slane %v7084, 4
      %v7087 = vrot.slane %v6044, 5
      %v7088 = vsel %vm1803, %v7086, %v7087
      %v7089 = vrot.slane %v6999, 5
      %v7090 = vrot.slane %v7089, 4
      %v7091 = vrot.slane %v6021, 5
      %v7092 = vsel %vm1803, %v7090, %v7091
      %v7093 = vrot.slane %v7091, 4
      %v7094 = vrot.slane %v6045, 5
      %v7095 = vsel %vm1803, %v7093, %v7094
      %v7096 = vrot.slane %v7000, 5
      %v7097 = vrot.slane %v7096, 4
      %v7098 = vrot.slane %v6023, 5
      %v7099 = vsel %vm1803, %v7097, %v7098
      %v7100 = vrot.slane %v7098, 4
      %v7101 = vrot.slane %v6046, 5
      %v7102 = vsel %vm1803, %v7100, %v7101
      %v7103 = vrot.slane %v7001, 5
      %v7104 = vrot.slane %v7103, 4
      %v7105 = vrot.slane %v6025, 5
      %v7106 = vsel %vm1803, %v7104, %v7105
      %v7107 = vrot.slane %v7105, 4
      %v7108 = vrot.slane %v6047, 5
      %v7109 = vsel %vm1803, %v7107, %v7108
      %v7110 = vrot.slane %v7002, 5
      %v7111 = vrot.slane %v7110, 4
      %v7112 = vrot.slane %v6027, 5
      %v7113 = vsel %vm1803, %v7111, %v7112
      %v7114 = vrot.slane %v7112, 4
      %v7115 = vrot.slane %v6048, 5
      %v7116 = vsel %vm1803, %v7114, %v7115
      %v7117 = vrot.slane %v7003, 5
      %v7118 = vrot.slane %v7117, 4
      %v7119 = vrot.slane %v6029, 5
      %v7120 = vsel %vm1803, %v7118, %v7119
      %v7121 = vrot.slane %v7119, 4
      %v7122 = vrot.slane %v6049, 5
      %v7123 = vsel %vm1803, %v7121, %v7122
      %v7124 = vrot.slane %v7004, 5
      %v7125 = vrot.slane %v7124, 4
      %v7126 = vrot.slane %v6031, 5
      %v7127 = vsel %vm1803, %v7125, %v7126
      %v7128 = vrot.slane %v7126, 4
      %v7129 = vrot.slane %v6050, 5
      %v7130 = vsel %vm1803, %v7128, %v7129
      %v7131 = vrot.slane %v7005, 5
      %v7132 = vrot.slane %v7131, 4
      %v7133 = vrot.slane %v6033, 5
      %v7134 = vsel %vm1803, %v7132, %v7133
      %v7135 = vrot.slane %v7133, 4
      %v7136 = vrot.slane %v6051, 5
      %v7137 = vsel %vm1803, %v7135, %v7136
      %v7138 = vrot.slane %v7006, 5
      %v7139 = vrot.slane %v7138, 4
      %v7140 = vrot.slane %v6035, 5
      %v7141 = vsel %vm1803, %v7139, %v7140
      %v7142 = vrot.slane %v7140, 4
      %v7143 = vrot.slane %v6052, 5
      %v7144 = vsel %vm1803, %v7142, %v7143
      %v7145 = vrot.slane %v7007, 5
      %v7146 = vrot.slane %v7145, 4
      %v7147 = vrot.slane %v6037, 5
      %v7148 = vsel %vm1803, %v7146, %v7147
      %v7149 = vrot.slane %v7147, 4
      %v7150 = vrot.slane %v6053, 5
      %v7151 = vsel %vm1803, %v7149, %v7150
      %v7152 = vunpack.c.l.b16 %v7043
      %v7153 = vunpack.c.l.b16 %v7046
      %v7154 = vunpack.c.l.b16 %v7050
      %v7155 = vunpack.c.l.b16 %v7053
      %v7156 = vunpack.c.l.b16 %v7057
      %v7157 = vunpack.c.l.b16 %v7060
      %v7158 = vunpack.c.l.b16 %v7064
      %v7159 = vunpack.c.l.b16 %v7067
      %v7160 = vunpack.c.l.b16 %v7071
      %v7161 = vunpack.c.l.b16 %v7074
      %v7162 = vunpack.c.l.b16 %v7078
      %v7163 = vunpack.c.l.b16 %v7081
      %v7164 = vunpack.c.l.b16 %v7085
      %v7165 = vunpack.c.l.b16 %v7088
      %v7166 = vunpack.c.l.b16 %v7092
      %v7167 = vunpack.c.l.b16 %v7095
      %v7168 = vunpack.c.l.b16 %v7099
      %v7169 = vunpack.c.l.b16 %v7102
      %v7170 = vunpack.c.l.b16 %v7106
      %v7171 = vunpack.c.l.b16 %v7109
      %v7172 = vunpack.c.l.b16 %v7113
      %v7173 = vunpack.c.l.b16 %v7116
      %v7174 = vunpack.c.l.b16 %v7120
      %v7175 = vunpack.c.l.b16 %v7123
      %v7176 = vunpack.c.l.b16 %v7127
      %v7177 = vunpack.c.l.b16 %v7130
      %v7178 = vunpack.c.l.b16 %v7134
      %v7179 = vunpack.c.l.b16 %v7137
      %v7180 = vunpack.c.l.b16 %v7141
      %v7181 = vunpack.c.l.b16 %v7144
      %v7182 = vunpack.c.l.b16 %v7148
      %v7183 = vunpack.c.l.b16 %v7151
      %v7184 = vpack.c.b16 %v7153, %v7152
      %v7185 = vpack.c.b16 %v7155, %v7154
      %v7186 = vpack.c.b16 %v7157, %v7156
      %v7187 = vpack.c.b16 %v7159, %v7158
      %v7188 = vpack.c.b16 %v7161, %v7160
      %v7189 = vpack.c.b16 %v7163, %v7162
      %v7190 = vpack.c.b16 %v7165, %v7164
      %v7191 = vpack.c.b16 %v7167, %v7166
      %v7192 = vpack.c.b16 %v7169, %v7168
      %v7193 = vpack.c.b16 %v7171, %v7170
      %v7194 = vpack.c.b16 %v7173, %v7172
      %v7195 = vpack.c.b16 %v7175, %v7174
      %v7196 = vpack.c.b16 %v7177, %v7176
      %v7197 = vpack.c.b16 %v7179, %v7178
      %v7198 = vpack.c.b16 %v7181, %v7180
      %v7199 = vpack.c.b16 %v7183, %v7182
      %v7201 = vsel %vm6486, %v7184, 0
      %v7204 = vsel %vm6486, %v7185, 0
      %v7207 = vsel %vm6486, %v7186, 0
      %v7210 = vsel %vm6486, %v7187, 0
      %v7213 = vsel %vm6486, %v7188, 0
      %v7216 = vsel %vm6486, %v7189, 0
      %v7219 = vsel %vm6486, %v7190, 0
      %v7222 = vsel %vm6486, %v7191, 0
      %v7225 = vsel %vm6486, %v7192, 0
      %v7228 = vsel %vm6486, %v7193, 0
      %v7231 = vsel %vm6486, %v7194, 0
      %v7234 = vsel %vm6486, %v7195, 0
      %v7237 = vsel %vm6486, %v7196, 0
      %v7240 = vsel %vm6486, %v7197, 0
      %v7243 = vsel %vm6486, %v7198, 0
      %v7246 = vsel %vm6486, %v7199, 0
      %v7249 = vsel %vm6535, %v5999, 0
      %7251 = vmatprep.subr.bf16.mxu0 0
      %7252 = vmatpush1.bf16.msra.mxu0 %v7249
      %7253 = vmatprep.subr.bf16.mxu0 0
      %7254 = vmatpush1.bf16.msra.mxu0 0
      %7255 = vmatprep.subr.bf16.mxu0 0
      %7256 = vmatpush1.bf16.msra.mxu0 0
      %7257 = vmatprep.subr.bf16.mxu0 0
      %7258 = vmatpush1.bf16.msra.mxu0 0
      %7259 = vmatprep.subr.bf16.mxu0 0
      %7260 = vmatpush1.bf16.msra.mxu0 0
      %7261 = vmatprep.subr.bf16.mxu0 0
      %7262 = vmatpush1.bf16.msra.mxu0 0
      %7263 = vmatprep.subr.bf16.mxu0 0
      %7264 = vmatpush1.bf16.msra.mxu0 0
      %7265 = vmatprep.subr.bf16.mxu0 0
      %7266 = vmatpush1.bf16.msra.mxu0 0
      %7267 = vmatprep.subr.bf16.mxu0 0
      %7268 = vmatpush1.bf16.msra.mxu0 0
      %7269 = vmatprep.subr.bf16.mxu0 0
      %7270 = vmatpush1.bf16.msra.mxu0 0
      %7271 = vmatprep.subr.bf16.mxu0 0
      %7272 = vmatpush1.bf16.msra.mxu0 0
      %7273 = vmatprep.subr.bf16.mxu0 0
      %7274 = vmatpush1.bf16.msra.mxu0 0
      %7275 = vmatprep.subr.bf16.mxu0 0
      %7276 = vmatpush1.bf16.msra.mxu0 0
      %7277 = vmatprep.subr.bf16.mxu0 0
      %7278 = vmatpush1.bf16.msra.mxu0 0
      %7279 = vmatprep.subr.bf16.mxu0 0
      %7280 = vmatpush1.bf16.msra.mxu0 0
      %7281 = vmatprep.subr.bf16.mxu0 0
      %7282 = vmatpush1.bf16.msra.mxu0 0
      %7283 = vmatprep.mubr.bf16.mxu0 0
      %7284 = vmatmul.mubr.bf16.gmra.mrb[0].mxu0 %v7201
      %v7285 = vpop.f32.mrb[0].mxu0
      %v7286 = vadd.f32 0.0, %v7285
      %v7287 = vpop.f32.mrb[0].mxu0
      %v7288 = vpop.f32.mrb[0].mxu0
      %v7289 = vadd.f32 0.0, %v7288
      %v7290 = vpop.f32.mrb[0].mxu0
      %7291 = vmatprep.mubr.bf16.mxu0 0
      %7292 = vmatmul.mubr.bf16.gmra.mrb[0].mxu0 %v7204
      %v7293 = vpop.f32.mrb[0].mxu0
      %v7294 = vadd.f32 0.0, %v7293
      %v7295 = vpop.f32.mrb[0].mxu0
      %v7296 = vpop.f32.mrb[0].mxu0
      %v7297 = vadd.f32 0.0, %v7296
      %v7298 = vpop.f32.mrb[0].mxu0
      %7299 = vmatprep.mubr.bf16.mxu0 0
      %7300 = vmatmul.mubr.bf16.gmra.mrb[0].mxu0 %v7207
      %v7301 = vpop.f32.mrb[0].mxu0
      %v7302 = vadd.f32 0.0, %v7301
      %v7303 = vpop.f32.mrb[0].mxu0
      %v7304 = vpop.f32.mrb[0].mxu0
      %v7305 = vadd.f32 0.0, %v7304
      %v7306 = vpop.f32.mrb[0].mxu0
      %7307 = vmatprep.mubr.bf16.mxu0 0
      %7308 = vmatmul.mubr.bf16.gmra.mrb[0].mxu0 %v7210
      %v7309 = vpop.f32.mrb[0].mxu0
      %v7310 = vadd.f32 0.0, %v7309
      %v7311 = vpop.f32.mrb[0].mxu0
      %v7312 = vpop.f32.mrb[0].mxu0
      %v7313 = vadd.f32 0.0, %v7312
      %v7314 = vpop.f32.mrb[0].mxu0
      %7315 = vmatprep.mubr.bf16.mxu0 0
      %7316 = vmatmul.mubr.bf16.gmra.mrb[0].mxu0 %v7213
      %v7317 = vpop.f32.mrb[0].mxu0
      %v7318 = vadd.f32 0.0, %v7317
      %v7319 = vpop.f32.mrb[0].mxu0
      %v7320 = vpop.f32.mrb[0].mxu0
      %v7321 = vadd.f32 0.0, %v7320
      %v7322 = vpop.f32.mrb[0].mxu0
      %7323 = vmatprep.mubr.bf16.mxu0 0
      %7324 = vmatmul.mubr.bf16.gmra.mrb[0].mxu0 %v7216
      %v7325 = vpop.f32.mrb[0].mxu0
      %v7326 = vadd.f32 0.0, %v7325
      %v7327 = vpop.f32.mrb[0].mxu0
      %v7328 = vpop.f32.mrb[0].mxu0
      %v7329 = vadd.f32 0.0, %v7328
      %v7330 = vpop.f32.mrb[0].mxu0
      %7331 = vmatprep.mubr.bf16.mxu0 0
      %7332 = vmatmul.mubr.bf16.gmra.mrb[0].mxu0 %v7219
      %v7333 = vpop.f32.mrb[0].mxu0
      %v7334 = vadd.f32 0.0, %v7333
      %v7335 = vpop.f32.mrb[0].mxu0
      %v7336 = vpop.f32.mrb[0].mxu0
      %v7337 = vadd.f32 0.0, %v7336
      %v7338 = vpop.f32.mrb[0].mxu0
      %7339 = vmatprep.mubr.bf16.mxu0 0
      %7340 = vmatmul.mubr.bf16.gmra.mrb[0].mxu0 %v7222
      %v7341 = vpop.f32.mrb[0].mxu0
      %v7342 = vadd.f32 0.0, %v7341
      %v7343 = vpop.f32.mrb[0].mxu0
      %v7344 = vpop.f32.mrb[0].mxu0
      %v7345 = vadd.f32 0.0, %v7344
      %v7346 = vpop.f32.mrb[0].mxu0
      %7347 = vmatprep.mubr.bf16.mxu0 0
      %7348 = vmatmul.mubr.bf16.gmra.mrb[0].mxu0 %v7225
      %v7349 = vpop.f32.mrb[0].mxu0
      %v7350 = vadd.f32 0.0, %v7349
      %v7351 = vpop.f32.mrb[0].mxu0
      %v7352 = vpop.f32.mrb[0].mxu0
      %v7353 = vadd.f32 0.0, %v7352
      %v7354 = vpop.f32.mrb[0].mxu0
      %7355 = vmatprep.mubr.bf16.mxu0 0
      %7356 = vmatmul.mubr.bf16.gmra.mrb[0].mxu0 %v7228
      %v7357 = vpop.f32.mrb[0].mxu0
      %v7358 = vadd.f32 0.0, %v7357
      %v7359 = vpop.f32.mrb[0].mxu0
      %v7360 = vpop.f32.mrb[0].mxu0
      %v7361 = vadd.f32 0.0, %v7360
      %v7362 = vpop.f32.mrb[0].mxu0
      %7363 = vmatprep.mubr.bf16.mxu0 0
      %7364 = vmatmul.mubr.bf16.gmra.mrb[0].mxu0 %v7231
      %v7365 = vpop.f32.mrb[0].mxu0
      %v7366 = vadd.f32 0.0, %v7365
      %v7367 = vpop.f32.mrb[0].mxu0
      %v7368 = vpop.f32.mrb[0].mxu0
      %v7369 = vadd.f32 0.0, %v7368
      %v7370 = vpop.f32.mrb[0].mxu0
      %7371 = vmatprep.mubr.bf16.mxu0 0
      %7372 = vmatmul.mubr.bf16.gmra.mrb[0].mxu0 %v7234
      %v7373 = vpop.f32.mrb[0].mxu0
      %v7374 = vadd.f32 0.0, %v7373
      %v7375 = vpop.f32.mrb[0].mxu0
      %v7376 = vpop.f32.mrb[0].mxu0
      %v7377 = vadd.f32 0.0, %v7376
      %v7378 = vpop.f32.mrb[0].mxu0
      %7379 = vmatprep.mubr.bf16.mxu0 0
      %7380 = vmatmul.mubr.bf16.gmra.mrb[0].mxu0 %v7237
      %v7381 = vpop.f32.mrb[0].mxu0
      %v7382 = vadd.f32 0.0, %v7381
      %v7383 = vpop.f32.mrb[0].mxu0
      %v7384 = vpop.f32.mrb[0].mxu0
      %v7385 = vadd.f32 0.0, %v7384
      %v7386 = vpop.f32.mrb[0].mxu0
      %7387 = vmatprep.mubr.bf16.mxu0 0
      %7388 = vmatmul.mubr.bf16.gmra.mrb[0].mxu0 %v7240
      %v7389 = vpop.f32.mrb[0].mxu0
      %v7390 = vadd.f32 0.0, %v7389
      %v7391 = vpop.f32.mrb[0].mxu0
      %v7392 = vpop.f32.mrb[0].mxu0
      %v7393 = vadd.f32 0.0, %v7392
      %v7394 = vpop.f32.mrb[0].mxu0
      %7395 = vmatprep.mubr.bf16.mxu0 0
      %7396 = vmatmul.mubr.bf16.gmra.mrb[0].mxu0 %v7243
      %v7397 = vpop.f32.mrb[0].mxu0
      %v7398 = vadd.f32 0.0, %v7397
      %v7399 = vpop.f32.mrb[0].mxu0
      %v7400 = vpop.f32.mrb[0].mxu0
      %v7401 = vadd.f32 0.0, %v7400
      %v7402 = vpop.f32.mrb[0].mxu0
      %7403 = vmatprep.mubr.bf16.mxu0 0
      %7404 = vmatmul.mubr.bf16.gmra.mrb[0].mxu0 %v7246
      %v7405 = vpop.f32.mrb[0].mxu0
      %v7406 = vadd.f32 0.0, %v7405
      %v7407 = vpop.f32.mrb[0].mxu0
      %v7408 = vpop.f32.mrb[0].mxu0
      %v7409 = vadd.f32 0.0, %v7408
      %v7410 = vpop.f32.mrb[0].mxu0
      %7411 = vdwg.mxu0
      %v7412 = vadd.f32 %v6866, %v7286
      %v7413 = vadd.f32 %v6869, %v7289
      %v7414 = vadd.f32 %v6874, %v7294
      %v7415 = vadd.f32 %v6877, %v7297
      %v7416 = vadd.f32 %v6882, %v7302
      %v7417 = vadd.f32 %v6885, %v7305
      %v7418 = vadd.f32 %v6890, %v7310
      %v7419 = vadd.f32 %v6893, %v7313
      %v7420 = vadd.f32 %v6898, %v7318
      %v7421 = vadd.f32 %v6901, %v7321
      %v7422 = vadd.f32 %v6906, %v7326
      %v7423 = vadd.f32 %v6909, %v7329
      %v7424 = vadd.f32 %v6914, %v7334
      %v7425 = vadd.f32 %v6917, %v7337
      %v7426 = vadd.f32 %v6922, %v7342
      %v7427 = vadd.f32 %v6925, %v7345
      %v7428 = vadd.f32 %v6930, %v7350
      %v7429 = vadd.f32 %v6933, %v7353
      %v7430 = vadd.f32 %v6938, %v7358
      %v7431 = vadd.f32 %v6941, %v7361
      %v7432 = vadd.f32 %v6946, %v7366
      %v7433 = vadd.f32 %v6949, %v7369
      %v7434 = vadd.f32 %v6954, %v7374
      %v7435 = vadd.f32 %v6957, %v7377
      %v7436 = vadd.f32 %v6962, %v7382
      %v7437 = vadd.f32 %v6965, %v7385
      %v7438 = vadd.f32 %v6970, %v7390
      %v7439 = vadd.f32 %v6973, %v7393
      %v7440 = vadd.f32 %v6978, %v7398
      %v7441 = vadd.f32 %v6981, %v7401
      %v7442 = vadd.f32 %v6986, %v7406
      %v7443 = vadd.f32 %v6989, %v7409
      %v7444 = vld [vmem:[%s5880] sm:$0xf]
      %v7445 = vld [vmem:[%s5880 + $0x4] sm:$0xf]
      %v7446 = vld [vmem:[%s5880 + $0xc] sm:$0xf]
      %v7447 = vld [vmem:[%s5880 + $0x10] sm:$0xf]
      %v7448 = vld [vmem:[%s5880 + $0x18] sm:$0xf]
      %v7449 = vld [vmem:[%s5880 + $0x1c] sm:$0xf]
      %v7450 = vld [vmem:[%s5880 + $0x24] sm:$0xf]
      %v7451 = vld [vmem:[%s5880 + $0x28] sm:$0xf]
      %v7452 = vld [vmem:[%s5880 + $0x30] sm:$0xf]
      %v7453 = vld [vmem:[%s5880 + $0x34] sm:$0xf]
      %v7454 = vld [vmem:[%s5880 + $0x3c] sm:$0xf]
      %v7455 = vld [vmem:[%s5880 + $0x40] sm:$0xf]
      %v7456 = vld [vmem:[%s5880 + $0x48] sm:$0xf]
      %v7457 = vld [vmem:[%s5880 + $0x4c] sm:$0xf]
      %v7458 = vld [vmem:[%s5880 + $0x54] sm:$0xf]
      %v7459 = vld [vmem:[%s5880 + $0x58] sm:$0xf]
      %v7460 = vld [vmem:[%s5880 + $0x60] sm:$0xf]
      %v7461 = vld [vmem:[%s5880 + $0x64] sm:$0xf]
      %v7462 = vld [vmem:[%s5880 + $0x6c] sm:$0xf]
      %v7463 = vld [vmem:[%s5880 + $0x70] sm:$0xf]
      %v7464 = vld [vmem:[%s5880 + $0x78] sm:$0xf]
      %v7465 = vld [vmem:[%s5880 + $0x7c] sm:$0xf]
      %v7466 = vld [vmem:[%s5880 + $0x84] sm:$0xf]
      %v7467 = vld [vmem:[%s5880 + $0x88] sm:$0xf]
      %v7468 = vld [vmem:[%s5880 + $0x90] sm:$0xf]
      %v7469 = vld [vmem:[%s5880 + $0x94] sm:$0xf]
      %v7470 = vld [vmem:[%s5880 + $0x9c] sm:$0xf]
      %v7471 = vld [vmem:[%s5880 + $0xa0] sm:$0xf]
      %v7472 = vld [vmem:[%s5880 + $0xa8] sm:$0xf]
      %v7473 = vld [vmem:[%s5880 + $0xac] sm:$0xf]
      %v7474 = vld [vmem:[%s5880 + $0xb4] sm:$0xf]
      %v7475 = vld [vmem:[%s5880 + $0xb8] sm:$0xf]
      %v7508 = vunpack.c.l.b16 %v7444
      %v7509 = vunpack.c.l.b16 %v7445
      %v7510 = vunpack.c.l.b16 %v7446
      %v7511 = vunpack.c.l.b16 %v7447
      %v7512 = vunpack.c.l.b16 %v7448
      %v7513 = vunpack.c.l.b16 %v7449
      %v7514 = vunpack.c.l.b16 %v7450
      %v7515 = vunpack.c.l.b16 %v7451
      %v7516 = vunpack.c.l.b16 %v7452
      %v7517 = vunpack.c.l.b16 %v7453
      %v7518 = vunpack.c.l.b16 %v7454
      %v7519 = vunpack.c.l.b16 %v7455
      %v7520 = vunpack.c.l.b16 %v7456
      %v7521 = vunpack.c.l.b16 %v7457
      %v7522 = vunpack.c.l.b16 %v7458
      %v7523 = vunpack.c.l.b16 %v7459
      %v7524 = vunpack.c.l.b16 %v7460
      %v7525 = vunpack.c.l.b16 %v7461
      %v7526 = vunpack.c.l.b16 %v7462
      %v7527 = vunpack.c.l.b16 %v7463
      %v7528 = vunpack.c.l.b16 %v7464
      %v7529 = vunpack.c.l.b16 %v7465
      %v7530 = vunpack.c.l.b16 %v7466
      %v7531 = vunpack.c.l.b16 %v7467
      %v7532 = vunpack.c.l.b16 %v7468
      %v7533 = vunpack.c.l.b16 %v7469
      %v7534 = vunpack.c.l.b16 %v7470
      %v7535 = vunpack.c.l.b16 %v7471
      %v7536 = vunpack.c.l.b16 %v7472
      %v7537 = vunpack.c.l.b16 %v7473
      %v7538 = vunpack.c.l.b16 %v7474
      %v7539 = vunpack.c.l.b16 %v7475
      %v7540 = vpack.c.b16 %v7509, %v7508
      %v7541 = vpack.c.b16 %v7511, %v7510
      %v7542 = vpack.c.b16 %v7513, %v7512
      %v7543 = vpack.c.b16 %v7515, %v7514
      %v7544 = vpack.c.b16 %v7517, %v7516
      %v7545 = vpack.c.b16 %v7519, %v7518
      %v7546 = vpack.c.b16 %v7521, %v7520
      %v7547 = vpack.c.b16 %v7523, %v7522
      %v7548 = vpack.c.b16 %v7525, %v7524
      %v7549 = vpack.c.b16 %v7527, %v7526
      %v7550 = vpack.c.b16 %v7529, %v7528
      %v7551 = vpack.c.b16 %v7531, %v7530
      %v7552 = vpack.c.b16 %v7533, %v7532
      %v7553 = vpack.c.b16 %v7535, %v7534
      %v7554 = vpack.c.b16 %v7537, %v7536
      %v7555 = vpack.c.b16 %v7539, %v7538
      %v7557 = vsel %vm6486, %v7540, 0
      %v7560 = vsel %vm6486, %v7541, 0
      %v7563 = vsel %vm6486, %v7542, 0
      %v7566 = vsel %vm6486, %v7543, 0
      %v7569 = vsel %vm6486, %v7544, 0
      %v7572 = vsel %vm6486, %v7545, 0
      %v7575 = vsel %vm6486, %v7546, 0
      %v7578 = vsel %vm6486, %v7547, 0
      %v7581 = vsel %vm6486, %v7548, 0
      %v7584 = vsel %vm6486, %v7549, 0
      %v7587 = vsel %vm6486, %v7550, 0
      %v7590 = vsel %vm6486, %v7551, 0
      %v7593 = vsel %vm6486, %v7552, 0
      %v7596 = vsel %vm6486, %v7553, 0
      %v7599 = vsel %vm6486, %v7554, 0
      %v7602 = vsel %vm6486, %v7555, 0
      %v7605 = vsel %vm6535, %v6000, 0
      %7607 = vmatprep.subr.bf16.mxu0 0
      %7608 = vmatpush1.bf16.msra.mxu0 %v7605
      %7609 = vmatprep.subr.bf16.mxu0 0
      %7610 = vmatpush1.bf16.msra.mxu0 0
      %7611 = vmatprep.subr.bf16.mxu0 0
      %7612 = vmatpush1.bf16.msra.mxu0 0
      %7613 = vmatprep.subr.bf16.mxu0 0
      %7614 = vmatpush1.bf16.msra.mxu0 0
      %7615 = vmatprep.subr.bf16.mxu0 0
      %7616 = vmatpush1.bf16.msra.mxu0 0
      %7617 = vmatprep.subr.bf16.mxu0 0
      %7618 = vmatpush1.bf16.msra.mxu0 0
      %7619 = vmatprep.subr.bf16.mxu0 0
      %7620 = vmatpush1.bf16.msra.mxu0 0
      %7621 = vmatprep.subr.bf16.mxu0 0
      %7622 = vmatpush1.bf16.msra.mxu0 0
      %7623 = vmatprep.subr.bf16.mxu0 0
      %7624 = vmatpush1.bf16.msra.mxu0 0
      %7625 = vmatprep.subr.bf16.mxu0 0
      %7626 = vmatpush1.bf16.msra.mxu0 0
      %7627 = vmatprep.subr.bf16.mxu0 0
      %7628 = vmatpush1.bf16.msra.mxu0 0
      %7629 = vmatprep.subr.bf16.mxu0 0
      %7630 = vmatpush1.bf16.msra.mxu0 0
      %7631 = vmatprep.subr.bf16.mxu0 0
      %7632 = vmatpush1.bf16.msra.mxu0 0
      %7633 = vmatprep.subr.bf16.mxu0 0
      %7634 = vmatpush1.bf16.msra.mxu0 0
      %7635 = vmatprep.subr.bf16.mxu0 0
      %7636 = vmatpush1.bf16.msra.mxu0 0
      %7637 = vmatprep.subr.bf16.mxu0 0
      %7638 = vmatpush1.bf16.msra.mxu0 0
      %7639 = vmatprep.mubr.bf16.mxu0 0
      %7640 = vmatmul.mubr.bf16.gmra.mrb[0].mxu0 %v7557
      %v7641 = vpop.f32.mrb[0].mxu0
      %v7642 = vadd.f32 0.0, %v7641
      %v7643 = vpop.f32.mrb[0].mxu0
      %v7644 = vpop.f32.mrb[0].mxu0
      %v7645 = vadd.f32 0.0, %v7644
      %v7646 = vpop.f32.mrb[0].mxu0
      %7647 = vmatprep.mubr.bf16.mxu0 0
      %7648 = vmatmul.mubr.bf16.gmra.mrb[0].mxu0 %v7560
      %v7649 = vpop.f32.mrb[0].mxu0
      %v7650 = vadd.f32 0.0, %v7649
      %v7651 = vpop.f32.mrb[0].mxu0
      %v7652 = vpop.f32.mrb[0].mxu0
      %v7653 = vadd.f32 0.0, %v7652
      %v7654 = vpop.f32.mrb[0].mxu0
      %7655 = vmatprep.mubr.bf16.mxu0 0
      %7656 = vmatmul.mubr.bf16.gmra.mrb[0].mxu0 %v7563
      %v7657 = vpop.f32.mrb[0].mxu0
      %v7658 = vadd.f32 0.0, %v7657
      %v7659 = vpop.f32.mrb[0].mxu0
      %v7660 = vpop.f32.mrb[0].mxu0
      %v7661 = vadd.f32 0.0, %v7660
      %v7662 = vpop.f32.mrb[0].mxu0
      %7663 = vmatprep.mubr.bf16.mxu0 0
      %7664 = vmatmul.mubr.bf16.gmra.mrb[0].mxu0 %v7566
      %v7665 = vpop.f32.mrb[0].mxu0
      %v7666 = vadd.f32 0.0, %v7665
      %v7667 = vpop.f32.mrb[0].mxu0
      %v7668 = vpop.f32.mrb[0].mxu0
      %v7669 = vadd.f32 0.0, %v7668
      %v7670 = vpop.f32.mrb[0].mxu0
      %7671 = vmatprep.mubr.bf16.mxu0 0
      %7672 = vmatmul.mubr.bf16.gmra.mrb[0].mxu0 %v7569
      %v7673 = vpop.f32.mrb[0].mxu0
      %v7674 = vadd.f32 0.0, %v7673
      %v7675 = vpop.f32.mrb[0].mxu0
      %v7676 = vpop.f32.mrb[0].mxu0
      %v7677 = vadd.f32 0.0, %v7676
      %v7678 = vpop.f32.mrb[0].mxu0
      %7679 = vmatprep.mubr.bf16.mxu0 0
      %7680 = vmatmul.mubr.bf16.gmra.mrb[0].mxu0 %v7572
      %v7681 = vpop.f32.mrb[0].mxu0
      %v7682 = vadd.f32 0.0, %v7681
      %v7683 = vpop.f32.mrb[0].mxu0
      %v7684 = vpop.f32.mrb[0].mxu0
      %v7685 = vadd.f32 0.0, %v7684
      %v7686 = vpop.f32.mrb[0].mxu0
      %7687 = vmatprep.mubr.bf16.mxu0 0
      %7688 = vmatmul.mubr.bf16.gmra.mrb[0].mxu0 %v7575
      %v7689 = vpop.f32.mrb[0].mxu0
      %v7690 = vadd.f32 0.0, %v7689
      %v7691 = vpop.f32.mrb[0].mxu0
      %v7692 = vpop.f32.mrb[0].mxu0
      %v7693 = vadd.f32 0.0, %v7692
      %v7694 = vpop.f32.mrb[0].mxu0
      %7695 = vmatprep.mubr.bf16.mxu0 0
      %7696 = vmatmul.mubr.bf16.gmra.mrb[0].mxu0 %v7578
      %v7697 = vpop.f32.mrb[0].mxu0
      %v7698 = vadd.f32 0.0, %v7697
      %v7699 = vpop.f32.mrb[0].mxu0
      %v7700 = vpop.f32.mrb[0].mxu0
      %v7701 = vadd.f32 0.0, %v7700
      %v7702 = vpop.f32.mrb[0].mxu0
      %7703 = vmatprep.mubr.bf16.mxu0 0
      %7704 = vmatmul.mubr.bf16.gmra.mrb[0].mxu0 %v7581
      %v7705 = vpop.f32.mrb[0].mxu0
      %v7706 = vadd.f32 0.0, %v7705
      %v7707 = vpop.f32.mrb[0].mxu0
      %v7708 = vpop.f32.mrb[0].mxu0
      %v7709 = vadd.f32 0.0, %v7708
      %v7710 = vpop.f32.mrb[0].mxu0
      %7711 = vmatprep.mubr.bf16.mxu0 0
      %7712 = vmatmul.mubr.bf16.gmra.mrb[0].mxu0 %v7584
      %v7713 = vpop.f32.mrb[0].mxu0
      %v7714 = vadd.f32 0.0, %v7713
      %v7715 = vpop.f32.mrb[0].mxu0
      %v7716 = vpop.f32.mrb[0].mxu0
      %v7717 = vadd.f32 0.0, %v7716
      %v7718 = vpop.f32.mrb[0].mxu0
      %7719 = vmatprep.mubr.bf16.mxu0 0
      %7720 = vmatmul.mubr.bf16.gmra.mrb[0].mxu0 %v7587
      %v7721 = vpop.f32.mrb[0].mxu0
      %v7722 = vadd.f32 0.0, %v7721
      %v7723 = vpop.f32.mrb[0].mxu0
      %v7724 = vpop.f32.mrb[0].mxu0
      %v7725 = vadd.f32 0.0, %v7724
      %v7726 = vpop.f32.mrb[0].mxu0
      %7727 = vmatprep.mubr.bf16.mxu0 0
      %7728 = vmatmul.mubr.bf16.gmra.mrb[0].mxu0 %v7590
      %v7729 = vpop.f32.mrb[0].mxu0
      %v7730 = vadd.f32 0.0, %v7729
      %v7731 = vpop.f32.mrb[0].mxu0
      %v7732 = vpop.f32.mrb[0].mxu0
      %v7733 = vadd.f32 0.0, %v7732
      %v7734 = vpop.f32.mrb[0].mxu0
      %7735 = vmatprep.mubr.bf16.mxu0 0
      %7736 = vmatmul.mubr.bf16.gmra.mrb[0].mxu0 %v7593
      %v7737 = vpop.f32.mrb[0].mxu0
      %v7738 = vadd.f32 0.0, %v7737
      %v7739 = vpop.f32.mrb[0].mxu0
      %v7740 = vpop.f32.mrb[0].mxu0
      %v7741 = vadd.f32 0.0, %v7740
      %v7742 = vpop.f32.mrb[0].mxu0
      %7743 = vmatprep.mubr.bf16.mxu0 0
      %7744 = vmatmul.mubr.bf16.gmra.mrb[0].mxu0 %v7596
      %v7745 = vpop.f32.mrb[0].mxu0
      %v7746 = vadd.f32 0.0, %v7745
      %v7747 = vpop.f32.mrb[0].mxu0
      %v7748 = vpop.f32.mrb[0].mxu0
      %v7749 = vadd.f32 0.0, %v7748
      %v7750 = vpop.f32.mrb[0].mxu0
      %7751 = vmatprep.mubr.bf16.mxu0 0
      %7752 = vmatmul.mubr.bf16.gmra.mrb[0].mxu0 %v7599
      %v7753 = vpop.f32.mrb[0].mxu0
      %v7754 = vadd.f32 0.0, %v7753
      %v7755 = vpop.f32.mrb[0].mxu0
      %v7756 = vpop.f32.mrb[0].mxu0
      %v7757 = vadd.f32 0.0, %v7756
      %v7758 = vpop.f32.mrb[0].mxu0
      %7759 = vmatprep.mubr.bf16.mxu0 0
      %7760 = vmatmul.mubr.bf16.gmra.mrb[0].mxu0 %v7602
      %v7761 = vpop.f32.mrb[0].mxu0
      %v7762 = vadd.f32 0.0, %v7761
      %v7763 = vpop.f32.mrb[0].mxu0
      %v7764 = vpop.f32.mrb[0].mxu0
      %v7765 = vadd.f32 0.0, %v7764
      %v7766 = vpop.f32.mrb[0].mxu0
      %7767 = vdwg.mxu0
      %v7768 = vadd.f32 %v7412, %v7642
      %v7769 = vadd.f32 %v7413, %v7645
      %v7770 = vadd.f32 %v7414, %v7650
      %v7771 = vadd.f32 %v7415, %v7653
      %v7772 = vadd.f32 %v7416, %v7658
      %v7773 = vadd.f32 %v7417, %v7661
      %v7774 = vadd.f32 %v7418, %v7666
      %v7775 = vadd.f32 %v7419, %v7669
      %v7776 = vadd.f32 %v7420, %v7674
      %v7777 = vadd.f32 %v7421, %v7677
      %v7778 = vadd.f32 %v7422, %v7682
      %v7779 = vadd.f32 %v7423, %v7685
      %v7780 = vadd.f32 %v7424, %v7690
      %v7781 = vadd.f32 %v7425, %v7693
      %v7782 = vadd.f32 %v7426, %v7698
      %v7783 = vadd.f32 %v7427, %v7701
      %v7784 = vadd.f32 %v7428, %v7706
      %v7785 = vadd.f32 %v7429, %v7709
      %v7786 = vadd.f32 %v7430, %v7714
      %v7787 = vadd.f32 %v7431, %v7717
      %v7788 = vadd.f32 %v7432, %v7722
      %v7789 = vadd.f32 %v7433, %v7725
      %v7790 = vadd.f32 %v7434, %v7730
      %v7791 = vadd.f32 %v7435, %v7733
      %v7792 = vadd.f32 %v7436, %v7738
      %v7793 = vadd.f32 %v7437, %v7741
      %v7794 = vadd.f32 %v7438, %v7746
      %v7795 = vadd.f32 %v7439, %v7749
      %v7796 = vadd.f32 %v7440, %v7754
      %v7797 = vadd.f32 %v7441, %v7757
      %v7798 = vadd.f32 %v7442, %v7762
      %v7799 = vadd.f32 %v7443, %v7765
      %v7800 = vld [vmem:[%s5880] sm:$0xf]
      %v7801 = vld [vmem:[%s5880 + $0x4] sm:$0xf]
      %v7802 = vld [vmem:[%s5880 + $0x8] sm:$0x1]
      %v7803 = vld [vmem:[%s5880 + $0xc] sm:$0xf]
      %v7804 = vld [vmem:[%s5880 + $0x10] sm:$0xf]
      %v7805 = vld [vmem:[%s5880 + $0x14] sm:$0x1]
      %v7806 = vld [vmem:[%s5880 + $0x18] sm:$0xf]
      %v7807 = vld [vmem:[%s5880 + $0x1c] sm:$0xf]
      %v7808 = vld [vmem:[%s5880 + $0x20] sm:$0x1]
      %v7809 = vld [vmem:[%s5880 + $0x24] sm:$0xf]
      %v7810 = vld [vmem:[%s5880 + $0x28] sm:$0xf]
      %v7811 = vld [vmem:[%s5880 + $0x2c] sm:$0x1]
      %v7812 = vld [vmem:[%s5880 + $0x30] sm:$0xf]
      %v7813 = vld [vmem:[%s5880 + $0x34] sm:$0xf]
      %v7814 = vld [vmem:[%s5880 + $0x38] sm:$0x1]
      %v7815 = vld [vmem:[%s5880 + $0x3c] sm:$0xf]
      %v7816 = vld [vmem:[%s5880 + $0x40] sm:$0xf]
      %v7817 = vld [vmem:[%s5880 + $0x44] sm:$0x1]
      %v7818 = vld [vmem:[%s5880 + $0x48] sm:$0xf]
      %v7819 = vld [vmem:[%s5880 + $0x4c] sm:$0xf]
      %v7820 = vld [vmem:[%s5880 + $0x50] sm:$0x1]
      %v7821 = vld [vmem:[%s5880 + $0x54] sm:$0xf]
      %v7822 = vld [vmem:[%s5880 + $0x58] sm:$0xf]
      %v7823 = vld [vmem:[%s5880 + $0x5c] sm:$0x1]
      %v7824 = vld [vmem:[%s5880 + $0x60] sm:$0xf]
      %v7825 = vld [vmem:[%s5880 + $0x64] sm:$0xf]
      %v7826 = vld [vmem:[%s5880 + $0x68] sm:$0x1]
      %v7827 = vld [vmem:[%s5880 + $0x6c] sm:$0xf]
      %v7828 = vld [vmem:[%s5880 + $0x70] sm:$0xf]
      %v7829 = vld [vmem:[%s5880 + $0x74] sm:$0x1]
      %v7830 = vld [vmem:[%s5880 + $0x78] sm:$0xf]
      %v7831 = vld [vmem:[%s5880 + $0x7c] sm:$0xf]
      %v7832 = vld [vmem:[%s5880 + $0x80] sm:$0x1]
      %v7833 = vld [vmem:[%s5880 + $0x84] sm:$0xf]
      %v7834 = vld [vmem:[%s5880 + $0x88] sm:$0xf]
      %v7835 = vld [vmem:[%s5880 + $0x8c] sm:$0x1]
      %v7836 = vld [vmem:[%s5880 + $0x90] sm:$0xf]
      %v7837 = vld [vmem:[%s5880 + $0x94] sm:$0xf]
      %v7838 = vld [vmem:[%s5880 + $0x98] sm:$0x1]
      %v7839 = vld [vmem:[%s5880 + $0x9c] sm:$0xf]
      %v7840 = vld [vmem:[%s5880 + $0xa0] sm:$0xf]
      %v7841 = vld [vmem:[%s5880 + $0xa4] sm:$0x1]
      %v7842 = vld [vmem:[%s5880 + $0xa8] sm:$0xf]
      %v7843 = vld [vmem:[%s5880 + $0xac] sm:$0xf]
      %v7844 = vld [vmem:[%s5880 + $0xb0] sm:$0x1]
      %v7845 = vld [vmem:[%s5880 + $0xb4] sm:$0xf]
      %v7846 = vld [vmem:[%s5880 + $0xb8] sm:$0xf]
      %v7847 = vld [vmem:[%s5880 + $0xbc] sm:$0x1]
      %v7849 = vshrl.u32 %v7800, 16
      %v7851 = vrot.slane %v7849, 4
      %v7852 = vshll.u32 %v7800, 16
      %v7854 = vrot.slane %v7852, 5
      %v7855 = vor.u32 %v7851, %v7854
      %v7856 = vrot.slane %v7855, 4
      %v7858 = vshll.u32 %v7801, 16
      %v7860 = vrot.slane %v7858, 5
      %v7861 = vsel %vm814, %v7856, %v7860
      %v7862 = vshrl.u32 %v7801, 16
      %v7864 = vrot.slane %v7862, 4
      %v7865 = vor.u32 %v7864, %v7860
      %v7866 = vrot.slane %v7865, 4
      %v7868 = vshll.u32 %v7802, 16
      %v7870 = vrot.slane %v7868, 5
      %v7871 = vsel %vm814, %v7866, %v7870
      %v7873 = vshrl.u32 %v7803, 16
      %v7875 = vrot.slane %v7873, 4
      %v7876 = vshll.u32 %v7803, 16
      %v7878 = vrot.slane %v7876, 5
      %v7879 = vor.u32 %v7875, %v7878
      %v7880 = vrot.slane %v7879, 4
      %v7882 = vshll.u32 %v7804, 16
      %v7884 = vrot.slane %v7882, 5
      %v7885 = vsel %vm814, %v7880, %v7884
      %v7886 = vshrl.u32 %v7804, 16
      %v7888 = vrot.slane %v7886, 4
      %v7889 = vor.u32 %v7888, %v7884
      %v7890 = vrot.slane %v7889, 4
      %v7892 = vshll.u32 %v7805, 16
      %v7894 = vrot.slane %v7892, 5
      %v7895 = vsel %vm814, %v7890, %v7894
      %v7897 = vshrl.u32 %v7806, 16
      %v7899 = vrot.slane %v7897, 4
      %v7900 = vshll.u32 %v7806, 16
      %v7902 = vrot.slane %v7900, 5
      %v7903 = vor.u32 %v7899, %v7902
      %v7904 = vrot.slane %v7903, 4
      %v7906 = vshll.u32 %v7807, 16
      %v7908 = vrot.slane %v7906, 5
      %v7909 = vsel %vm814, %v7904, %v7908
      %v7910 = vshrl.u32 %v7807, 16
      %v7912 = vrot.slane %v7910, 4
      %v7913 = vor.u32 %v7912, %v7908
      %v7914 = vrot.slane %v7913, 4
      %v7916 = vshll.u32 %v7808, 16
      %v7918 = vrot.slane %v7916, 5
      %v7919 = vsel %vm814, %v7914, %v7918
      %v7921 = vshrl.u32 %v7809, 16
      %v7923 = vrot.slane %v7921, 4
      %v7924 = vshll.u32 %v7809, 16
      %v7926 = vrot.slane %v7924, 5
      %v7927 = vor.u32 %v7923, %v7926
      %v7928 = vrot.slane %v7927, 4
      %v7930 = vshll.u32 %v7810, 16
      %v7932 = vrot.slane %v7930, 5
      %v7933 = vsel %vm814, %v7928, %v7932
      %v7934 = vshrl.u32 %v7810, 16
      %v7936 = vrot.slane %v7934, 4
      %v7937 = vor.u32 %v7936, %v7932
      %v7938 = vrot.slane %v7937, 4
      %v7940 = vshll.u32 %v7811, 16
      %v7942 = vrot.slane %v7940, 5
      %v7943 = vsel %vm814, %v7938, %v7942
      %v7945 = vshrl.u32 %v7812, 16
      %v7947 = vrot.slane %v7945, 4
      %v7948 = vshll.u32 %v7812, 16
      %v7950 = vrot.slane %v7948, 5
      %v7951 = vor.u32 %v7947, %v7950
      %v7952 = vrot.slane %v7951, 4
      %v7954 = vshll.u32 %v7813, 16
      %v7956 = vrot.slane %v7954, 5
      %v7957 = vsel %vm814, %v7952, %v7956
      %v7958 = vshrl.u32 %v7813, 16
      %v7960 = vrot.slane %v7958, 4
      %v7961 = vor.u32 %v7960, %v7956
      %v7962 = vrot.slane %v7961, 4
      %v7964 = vshll.u32 %v7814, 16
      %v7966 = vrot.slane %v7964, 5
      %v7967 = vsel %vm814, %v7962, %v7966
      %v7969 = vshrl.u32 %v7815, 16
      %v7971 = vrot.slane %v7969, 4
      %v7972 = vshll.u32 %v7815, 16
      %v7974 = vrot.slane %v7972, 5
      %v7975 = vor.u32 %v7971, %v7974
      %v7976 = vrot.slane %v7975, 4
      %v7978 = vshll.u32 %v7816, 16
      %v7980 = vrot.slane %v7978, 5
      %v7981 = vsel %vm814, %v7976, %v7980
      %v7982 = vshrl.u32 %v7816, 16
      %v7984 = vrot.slane %v7982, 4
      %v7985 = vor.u32 %v7984, %v7980
      %v7986 = vrot.slane %v7985, 4
      %v7988 = vshll.u32 %v7817, 16
      %v7990 = vrot.slane %v7988, 5
      %v7991 = vsel %vm814, %v7986, %v7990
      %v7993 = vshrl.u32 %v7818, 16
      %v7995 = vrot.slane %v7993, 4
      %v7996 = vshll.u32 %v7818, 16
      %v7998 = vrot.slane %v7996, 5
      %v7999 = vor.u32 %v7995, %v7998
      %v8000 = vrot.slane %v7999, 4
      %v8002 = vshll.u32 %v7819, 16
      %v8004 = vrot.slane %v8002, 5
      %v8005 = vsel %vm814, %v8000, %v8004
      %v8006 = vshrl.u32 %v7819, 16
      %v8008 = vrot.slane %v8006, 4
      %v8009 = vor.u32 %v8008, %v8004
      %v8010 = vrot.slane %v8009, 4
      %v8012 = vshll.u32 %v7820, 16
      %v8014 = vrot.slane %v8012, 5
      %v8015 = vsel %vm814, %v8010, %v8014
      %v8017 = vshrl.u32 %v7821, 16
      %v8019 = vrot.slane %v8017, 4
      %v8020 = vshll.u32 %v7821, 16
      %v8022 = vrot.slane %v8020, 5
      %v8023 = vor.u32 %v8019, %v8022
      %v8024 = vrot.slane %v8023, 4
      %v8026 = vshll.u32 %v7822, 16
      %v8028 = vrot.slane %v8026, 5
      %v8029 = vsel %vm814, %v8024, %v8028
      %v8030 = vshrl.u32 %v7822, 16
      %v8032 = vrot.slane %v8030, 4
      %v8033 = vor.u32 %v8032, %v8028
      %v8034 = vrot.slane %v8033, 4
      %v8036 = vshll.u32 %v7823, 16
      %v8038 = vrot.slane %v8036, 5
      %v8039 = vsel %vm814, %v8034, %v8038
      %v8041 = vshrl.u32 %v7824, 16
      %v8043 = vrot.slane %v8041, 4
      %v8044 = vshll.u32 %v7824, 16
      %v8046 = vrot.slane %v8044, 5
      %v8047 = vor.u32 %v8043, %v8046
      %v8048 = vrot.slane %v8047, 4
      %v8050 = vshll.u32 %v7825, 16
      %v8052 = vrot.slane %v8050, 5
      %v8053 = vsel %vm814, %v8048, %v8052
      %v8054 = vshrl.u32 %v7825, 16
      %v8056 = vrot.slane %v8054, 4
      %v8057 = vor.u32 %v8056, %v8052
      %v8058 = vrot.slane %v8057, 4
      %v8060 = vshll.u32 %v7826, 16
      %v8062 = vrot.slane %v8060, 5
      %v8063 = vsel %vm814, %v8058, %v8062
      %v8065 = vshrl.u32 %v7827, 16
      %v8067 = vrot.slane %v8065, 4
      %v8068 = vshll.u32 %v7827, 16
      %v8070 = vrot.slane %v8068, 5
      %v8071 = vor.u32 %v8067, %v8070
      %v8072 = vrot.slane %v8071, 4
      %v8074 = vshll.u32 %v7828, 16
      %v8076 = vrot.slane %v8074, 5
      %v8077 = vsel %vm814, %v8072, %v8076
      %v8078 = vshrl.u32 %v7828, 16
      %v8080 = vrot.slane %v8078, 4
      %v8081 = vor.u32 %v8080, %v8076
      %v8082 = vrot.slane %v8081, 4
      %v8084 = vshll.u32 %v7829, 16
      %v8086 = vrot.slane %v8084, 5
      %v8087 = vsel %vm814, %v8082, %v8086
      %v8089 = vshrl.u32 %v7830, 16
      %v8091 = vrot.slane %v8089, 4
      %v8092 = vshll.u32 %v7830, 16
      %v8094 = vrot.slane %v8092, 5
      %v8095 = vor.u32 %v8091, %v8094
      %v8096 = vrot.slane %v8095, 4
      %v8098 = vshll.u32 %v7831, 16
      %v8100 = vrot.slane %v8098, 5
      %v8101 = vsel %vm814, %v8096, %v8100
      %v8102 = vshrl.u32 %v7831, 16
      %v8104 = vrot.slane %v8102, 4
      %v8105 = vor.u32 %v8104, %v8100
      %v8106 = vrot.slane %v8105, 4
      %v8108 = vshll.u32 %v7832, 16
      %v8110 = vrot.slane %v8108, 5
      %v8111 = vsel %vm814, %v8106, %v8110
      %v8113 = vshrl.u32 %v7833, 16
      %v8115 = vrot.slane %v8113, 4
      %v8116 = vshll.u32 %v7833, 16
      %v8118 = vrot.slane %v8116, 5
      %v8119 = vor.u32 %v8115, %v8118
      %v8120 = vrot.slane %v8119, 4
      %v8122 = vshll.u32 %v7834, 16
      %v8124 = vrot.slane %v8122, 5
      %v8125 = vsel %vm814, %v8120, %v8124
      %v8126 = vshrl.u32 %v7834, 16
      %v8128 = vrot.slane %v8126, 4
      %v8129 = vor.u32 %v8128, %v8124
      %v8130 = vrot.slane %v8129, 4
      %v8132 = vshll.u32 %v7835, 16
      %v8134 = vrot.slane %v8132, 5
      %v8135 = vsel %vm814, %v8130, %v8134
      %v8137 = vshrl.u32 %v7836, 16
      %v8139 = vrot.slane %v8137, 4
      %v8140 = vshll.u32 %v7836, 16
      %v8142 = vrot.slane %v8140, 5
      %v8143 = vor.u32 %v8139, %v8142
      %v8144 = vrot.slane %v8143, 4
      %v8146 = vshll.u32 %v7837, 16
      %v8148 = vrot.slane %v8146, 5
      %v8149 = vsel %vm814, %v8144, %v8148
      %v8150 = vshrl.u32 %v7837, 16
      %v8152 = vrot.slane %v8150, 4
      %v8153 = vor.u32 %v8152, %v8148
      %v8154 = vrot.slane %v8153, 4
      %v8156 = vshll.u32 %v7838, 16
      %v8158 = vrot.slane %v8156, 5
      %v8159 = vsel %vm814, %v8154, %v8158
      %v8161 = vshrl.u32 %v7839, 16
      %v8163 = vrot.slane %v8161, 4
      %v8164 = vshll.u32 %v7839, 16
      %v8166 = vrot.slane %v8164, 5
      %v8167 = vor.u32 %v8163, %v8166
      %v8168 = vrot.slane %v8167, 4
      %v8170 = vshll.u32 %v7840, 16
      %v8172 = vrot.slane %v8170, 5
      %v8173 = vsel %vm814, %v8168, %v8172
      %v8174 = vshrl.u32 %v7840, 16
      %v8176 = vrot.slane %v8174, 4
      %v8177 = vor.u32 %v8176, %v8172
      %v8178 = vrot.slane %v8177, 4
      %v8180 = vshll.u32 %v7841, 16
      %v8182 = vrot.slane %v8180, 5
      %v8183 = vsel %vm814, %v8178, %v8182
      %v8185 = vshrl.u32 %v7842, 16
      %v8187 = vrot.slane %v8185, 4
      %v8188 = vshll.u32 %v7842, 16
      %v8190 = vrot.slane %v8188, 5
      %v8191 = vor.u32 %v8187, %v8190
      %v8192 = vrot.slane %v8191, 4
      %v8194 = vshll.u32 %v7843, 16
      %v8196 = vrot.slane %v8194, 5
      %v8197 = vsel %vm814, %v8192, %v8196
      %v8198 = vshrl.u32 %v7843, 16
      %v8200 = vrot.slane %v8198, 4
      %v8201 = vor.u32 %v8200, %v8196
      %v8202 = vrot.slane %v8201, 4
      %v8204 = vshll.u32 %v7844, 16
      %v8206 = vrot.slane %v8204, 5
      %v8207 = vsel %vm814, %v8202, %v8206
      %v8209 = vshrl.u32 %v7845, 16
      %v8211 = vrot.slane %v8209, 4
      %v8212 = vshll.u32 %v7845, 16
      %v8214 = vrot.slane %v8212, 5
      %v8215 = vor.u32 %v8211, %v8214
      %v8216 = vrot.slane %v8215, 4
      %v8218 = vshll.u32 %v7846, 16
      %v8220 = vrot.slane %v8218, 5
      %v8221 = vsel %vm814, %v8216, %v8220
      %v8222 = vshrl.u32 %v7846, 16
      %v8224 = vrot.slane %v8222, 4
      %v8225 = vor.u32 %v8224, %v8220
      %v8226 = vrot.slane %v8225, 4
      %v8228 = vshll.u32 %v7847, 16
      %v8230 = vrot.slane %v8228, 5
      %v8231 = vsel %vm814, %v8226, %v8230
      %v8232 = vunpack.c.l.b16 %v7861
      %v8233 = vunpack.c.l.b16 %v7871
      %v8234 = vunpack.c.l.b16 %v7885
      %v8235 = vunpack.c.l.b16 %v7895
      %v8236 = vunpack.c.l.b16 %v7909
      %v8237 = vunpack.c.l.b16 %v7919
      %v8238 = vunpack.c.l.b16 %v7933
      %v8239 = vunpack.c.l.b16 %v7943
      %v8240 = vunpack.c.l.b16 %v7957
      %v8241 = vunpack.c.l.b16 %v7967
      %v8242 = vunpack.c.l.b16 %v7981
      %v8243 = vunpack.c.l.b16 %v7991
      %v8244 = vunpack.c.l.b16 %v8005
      %v8245 = vunpack.c.l.b16 %v8015
      %v8246 = vunpack.c.l.b16 %v8029
      %v8247 = vunpack.c.l.b16 %v8039
      %v8248 = vunpack.c.l.b16 %v8053
      %v8249 = vunpack.c.l.b16 %v8063
      %v8250 = vunpack.c.l.b16 %v8077
      %v8251 = vunpack.c.l.b16 %v8087
      %v8252 = vunpack.c.l.b16 %v8101
      %v8253 = vunpack.c.l.b16 %v8111
      %v8254 = vunpack.c.l.b16 %v8125
      %v8255 = vunpack.c.l.b16 %v8135
      %v8256 = vunpack.c.l.b16 %v8149
      %v8257 = vunpack.c.l.b16 %v8159
      %v8258 = vunpack.c.l.b16 %v8173
      %v8259 = vunpack.c.l.b16 %v8183
      %v8260 = vunpack.c.l.b16 %v8197
      %v8261 = vunpack.c.l.b16 %v8207
      %v8262 = vunpack.c.l.b16 %v8221
      %v8263 = vunpack.c.l.b16 %v8231
      %v8264 = vpack.c.b16 %v8233, %v8232
      %v8265 = vpack.c.b16 %v8235, %v8234
      %v8266 = vpack.c.b16 %v8237, %v8236
      %v8267 = vpack.c.b16 %v8239, %v8238
      %v8268 = vpack.c.b16 %v8241, %v8240
      %v8269 = vpack.c.b16 %v8243, %v8242
      %v8270 = vpack.c.b16 %v8245, %v8244
      %v8271 = vpack.c.b16 %v8247, %v8246
      %v8272 = vpack.c.b16 %v8249, %v8248
      %v8273 = vpack.c.b16 %v8251, %v8250
      %v8274 = vpack.c.b16 %v8253, %v8252
      %v8275 = vpack.c.b16 %v8255, %v8254
      %v8276 = vpack.c.b16 %v8257, %v8256
      %v8277 = vpack.c.b16 %v8259, %v8258
      %v8278 = vpack.c.b16 %v8261, %v8260
      %v8279 = vpack.c.b16 %v8263, %v8262
      %v8281 = vsel %vm6486, %v8264, 0
      %v8284 = vsel %vm6486, %v8265, 0
      %v8287 = vsel %vm6486, %v8266, 0
      %v8290 = vsel %vm6486, %v8267, 0
      %v8293 = vsel %vm6486, %v8268, 0
      %v8296 = vsel %vm6486, %v8269, 0
      %v8299 = vsel %vm6486, %v8270, 0
      %v8302 = vsel %vm6486, %v8271, 0
      %v8305 = vsel %vm6486, %v8272, 0
      %v8308 = vsel %vm6486, %v8273, 0
      %v8311 = vsel %vm6486, %v8274, 0
      %v8314 = vsel %vm6486, %v8275, 0
      %v8317 = vsel %vm6486, %v8276, 0
      %v8320 = vsel %vm6486, %v8277, 0
      %v8323 = vsel %vm6486, %v8278, 0
      %v8326 = vsel %vm6486, %v8279, 0
      %v8329 = vsel %vm6535, %v6001, 0
      %8331 = vmatprep.subr.bf16.mxu0 0
      %8332 = vmatpush1.bf16.msra.mxu0 %v8329
      %8333 = vmatprep.subr.bf16.mxu0 0
      %8334 = vmatpush1.bf16.msra.mxu0 0
      %8335 = vmatprep.subr.bf16.mxu0 0
      %8336 = vmatpush1.bf16.msra.mxu0 0
      %8337 = vmatprep.subr.bf16.mxu0 0
      %8338 = vmatpush1.bf16.msra.mxu0 0
      %8339 = vmatprep.subr.bf16.mxu0 0
      %8340 = vmatpush1.bf16.msra.mxu0 0
      %8341 = vmatprep.subr.bf16.mxu0 0
      %8342 = vmatpush1.bf16.msra.mxu0 0
      %8343 = vmatprep.subr.bf16.mxu0 0
      %8344 = vmatpush1.bf16.msra.mxu0 0
      %8345 = vmatprep.subr.bf16.mxu0 0
      %8346 = vmatpush1.bf16.msra.mxu0 0
      %8347 = vmatprep.subr.bf16.mxu0 0
      %8348 = vmatpush1.bf16.msra.mxu0 0
      %8349 = vmatprep.subr.bf16.mxu0 0
      %8350 = vmatpush1.bf16.msra.mxu0 0
      %8351 = vmatprep.subr.bf16.mxu0 0
      %8352 = vmatpush1.bf16.msra.mxu0 0
      %8353 = vmatprep.subr.bf16.mxu0 0
      %8354 = vmatpush1.bf16.msra.mxu0 0
      %8355 = vmatprep.subr.bf16.mxu0 0
      %8356 = vmatpush1.bf16.msra.mxu0 0
      %8357 = vmatprep.subr.bf16.mxu0 0
      %8358 = vmatpush1.bf16.msra.mxu0 0
      %8359 = vmatprep.subr.bf16.mxu0 0
      %8360 = vmatpush1.bf16.msra.mxu0 0
      %8361 = vmatprep.subr.bf16.mxu0 0
      %8362 = vmatpush1.bf16.msra.mxu0 0
      %8363 = vmatprep.mubr.bf16.mxu0 0
      %8364 = vmatmul.mubr.bf16.gmra.mrb[0].mxu0 %v8281
      %v8365 = vpop.f32.mrb[0].mxu0
      %v8366 = vadd.f32 0.0, %v8365
      %v8367 = vpop.f32.mrb[0].mxu0
      %v8368 = vpop.f32.mrb[0].mxu0
      %v8369 = vadd.f32 0.0, %v8368
      %v8370 = vpop.f32.mrb[0].mxu0
      %8371 = vmatprep.mubr.bf16.mxu0 0
      %8372 = vmatmul.mubr.bf16.gmra.mrb[0].mxu0 %v8284
      %v8373 = vpop.f32.mrb[0].mxu0
      %v8374 = vadd.f32 0.0, %v8373
      %v8375 = vpop.f32.mrb[0].mxu0
      %v8376 = vpop.f32.mrb[0].mxu0
      %v8377 = vadd.f32 0.0, %v8376
      %v8378 = vpop.f32.mrb[0].mxu0
      %8379 = vmatprep.mubr.bf16.mxu0 0
      %8380 = vmatmul.mubr.bf16.gmra.mrb[0].mxu0 %v8287
      %v8381 = vpop.f32.mrb[0].mxu0
      %v8382 = vadd.f32 0.0, %v8381
      %v8383 = vpop.f32.mrb[0].mxu0
      %v8384 = vpop.f32.mrb[0].mxu0
      %v8385 = vadd.f32 0.0, %v8384
      %v8386 = vpop.f32.mrb[0].mxu0
      %8387 = vmatprep.mubr.bf16.mxu0 0
      %8388 = vmatmul.mubr.bf16.gmra.mrb[0].mxu0 %v8290
      %v8389 = vpop.f32.mrb[0].mxu0
      %v8390 = vadd.f32 0.0, %v8389
      %v8391 = vpop.f32.mrb[0].mxu0
      %v8392 = vpop.f32.mrb[0].mxu0
      %v8393 = vadd.f32 0.0, %v8392
      %v8394 = vpop.f32.mrb[0].mxu0
      %8395 = vmatprep.mubr.bf16.mxu0 0
      %8396 = vmatmul.mubr.bf16.gmra.mrb[0].mxu0 %v8293
      %v8397 = vpop.f32.mrb[0].mxu0
      %v8398 = vadd.f32 0.0, %v8397
      %v8399 = vpop.f32.mrb[0].mxu0
      %v8400 = vpop.f32.mrb[0].mxu0
      %v8401 = vadd.f32 0.0, %v8400
      %v8402 = vpop.f32.mrb[0].mxu0
      %8403 = vmatprep.mubr.bf16.mxu0 0
      %8404 = vmatmul.mubr.bf16.gmra.mrb[0].mxu0 %v8296
      %v8405 = vpop.f32.mrb[0].mxu0
      %v8406 = vadd.f32 0.0, %v8405
      %v8407 = vpop.f32.mrb[0].mxu0
      %v8408 = vpop.f32.mrb[0].mxu0
      %v8409 = vadd.f32 0.0, %v8408
      %v8410 = vpop.f32.mrb[0].mxu0
      %8411 = vmatprep.mubr.bf16.mxu0 0
      %8412 = vmatmul.mubr.bf16.gmra.mrb[0].mxu0 %v8299
      %v8413 = vpop.f32.mrb[0].mxu0
      %v8414 = vadd.f32 0.0, %v8413
      %v8415 = vpop.f32.mrb[0].mxu0
      %v8416 = vpop.f32.mrb[0].mxu0
      %v8417 = vadd.f32 0.0, %v8416
      %v8418 = vpop.f32.mrb[0].mxu0
      %8419 = vmatprep.mubr.bf16.mxu0 0
      %8420 = vmatmul.mubr.bf16.gmra.mrb[0].mxu0 %v8302
      %v8421 = vpop.f32.mrb[0].mxu0
      %v8422 = vadd.f32 0.0, %v8421
      %v8423 = vpop.f32.mrb[0].mxu0
      %v8424 = vpop.f32.mrb[0].mxu0
      %v8425 = vadd.f32 0.0, %v8424
      %v8426 = vpop.f32.mrb[0].mxu0
      %8427 = vmatprep.mubr.bf16.mxu0 0
      %8428 = vmatmul.mubr.bf16.gmra.mrb[0].mxu0 %v8305
      %v8429 = vpop.f32.mrb[0].mxu0
      %v8430 = vadd.f32 0.0, %v8429
      %v8431 = vpop.f32.mrb[0].mxu0
      %v8432 = vpop.f32.mrb[0].mxu0
      %v8433 = vadd.f32 0.0, %v8432
      %v8434 = vpop.f32.mrb[0].mxu0
      %8435 = vmatprep.mubr.bf16.mxu0 0
      %8436 = vmatmul.mubr.bf16.gmra.mrb[0].mxu0 %v8308
      %v8437 = vpop.f32.mrb[0].mxu0
      %v8438 = vadd.f32 0.0, %v8437
      %v8439 = vpop.f32.mrb[0].mxu0
      %v8440 = vpop.f32.mrb[0].mxu0
      %v8441 = vadd.f32 0.0, %v8440
      %v8442 = vpop.f32.mrb[0].mxu0
      %8443 = vmatprep.mubr.bf16.mxu0 0
      %8444 = vmatmul.mubr.bf16.gmra.mrb[0].mxu0 %v8311
      %v8445 = vpop.f32.mrb[0].mxu0
      %v8446 = vadd.f32 0.0, %v8445
      %v8447 = vpop.f32.mrb[0].mxu0
      %v8448 = vpop.f32.mrb[0].mxu0
      %v8449 = vadd.f32 0.0, %v8448
      %v8450 = vpop.f32.mrb[0].mxu0
      %8451 = vmatprep.mubr.bf16.mxu0 0
      %8452 = vmatmul.mubr.bf16.gmra.mrb[0].mxu0 %v8314
      %v8453 = vpop.f32.mrb[0].mxu0
      %v8454 = vadd.f32 0.0, %v8453
      %v8455 = vpop.f32.mrb[0].mxu0
      %v8456 = vpop.f32.mrb[0].mxu0
      %v8457 = vadd.f32 0.0, %v8456
      %v8458 = vpop.f32.mrb[0].mxu0
      %8459 = vmatprep.mubr.bf16.mxu0 0
      %8460 = vmatmul.mubr.bf16.gmra.mrb[0].mxu0 %v8317
      %v8461 = vpop.f32.mrb[0].mxu0
      %v8462 = vadd.f32 0.0, %v8461
      %v8463 = vpop.f32.mrb[0].mxu0
      %v8464 = vpop.f32.mrb[0].mxu0
      %v8465 = vadd.f32 0.0, %v8464
      %v8466 = vpop.f32.mrb[0].mxu0
      %8467 = vmatprep.mubr.bf16.mxu0 0
      %8468 = vmatmul.mubr.bf16.gmra.mrb[0].mxu0 %v8320
      %v8469 = vpop.f32.mrb[0].mxu0
      %v8470 = vadd.f32 0.0, %v8469
      %v8471 = vpop.f32.mrb[0].mxu0
      %v8472 = vpop.f32.mrb[0].mxu0
      %v8473 = vadd.f32 0.0, %v8472
      %v8474 = vpop.f32.mrb[0].mxu0
      %8475 = vmatprep.mubr.bf16.mxu0 0
      %8476 = vmatmul.mubr.bf16.gmra.mrb[0].mxu0 %v8323
      %v8477 = vpop.f32.mrb[0].mxu0
      %v8478 = vadd.f32 0.0, %v8477
      %v8479 = vpop.f32.mrb[0].mxu0
      %v8480 = vpop.f32.mrb[0].mxu0
      %v8481 = vadd.f32 0.0, %v8480
      %v8482 = vpop.f32.mrb[0].mxu0
      %8483 = vmatprep.mubr.bf16.mxu0 0
      %8484 = vmatmul.mubr.bf16.gmra.mrb[0].mxu0 %v8326
      %v8485 = vpop.f32.mrb[0].mxu0
      %v8486 = vadd.f32 0.0, %v8485
      %v8487 = vpop.f32.mrb[0].mxu0
      %v8488 = vpop.f32.mrb[0].mxu0
      %v8489 = vadd.f32 0.0, %v8488
      %v8490 = vpop.f32.mrb[0].mxu0
      %8491 = vdwg.mxu0
      %v8492 = vadd.f32 %v7768, %v8366
      %v8493 = vadd.f32 %v7769, %v8369
      %v8494 = vadd.f32 %v7770, %v8374
      %v8495 = vadd.f32 %v7771, %v8377
      %v8496 = vadd.f32 %v7772, %v8382
      %v8497 = vadd.f32 %v7773, %v8385
      %v8498 = vadd.f32 %v7774, %v8390
      %v8499 = vadd.f32 %v7775, %v8393
      %v8500 = vadd.f32 %v7776, %v8398
      %v8501 = vadd.f32 %v7777, %v8401
      %v8502 = vadd.f32 %v7778, %v8406
      %v8503 = vadd.f32 %v7779, %v8409
      %v8504 = vadd.f32 %v7780, %v8414
      %v8505 = vadd.f32 %v7781, %v8417
      %v8506 = vadd.f32 %v7782, %v8422
      %v8507 = vadd.f32 %v7783, %v8425
      %v8508 = vadd.f32 %v7784, %v8430
      %v8509 = vadd.f32 %v7785, %v8433
      %v8510 = vadd.f32 %v7786, %v8438
      %v8511 = vadd.f32 %v7787, %v8441
      %v8512 = vadd.f32 %v7788, %v8446
      %v8513 = vadd.f32 %v7789, %v8449
      %v8514 = vadd.f32 %v7790, %v8454
      %v8515 = vadd.f32 %v7791, %v8457
      %v8516 = vadd.f32 %v7792, %v8462
      %v8517 = vadd.f32 %v7793, %v8465
      %v8518 = vadd.f32 %v7794, %v8470
      %v8519 = vadd.f32 %v7795, %v8473
      %v8520 = vadd.f32 %v7796, %v8478
      %v8521 = vadd.f32 %v7797, %v8481
      %v8522 = vadd.f32 %v7798, %v8486
      %v8523 = vadd.f32 %v7799, %v8489
      %v8524 = vld [vmem:[%s5880] sm:$0xe]
      %v8525 = vld [vmem:[%s5880 + $0xc] sm:$0xe]
      %v8526 = vld [vmem:[%s5880 + $0x18] sm:$0xe]
      %v8527 = vld [vmem:[%s5880 + $0x24] sm:$0xe]
      %v8528 = vld [vmem:[%s5880 + $0x30] sm:$0xe]
      %v8529 = vld [vmem:[%s5880 + $0x3c] sm:$0xe]
      %v8530 = vld [vmem:[%s5880 + $0x48] sm:$0xe]
      %v8531 = vld [vmem:[%s5880 + $0x54] sm:$0xe]
      %v8532 = vld [vmem:[%s5880 + $0x60] sm:$0xe]
      %v8533 = vld [vmem:[%s5880 + $0x6c] sm:$0xe]
      %v8534 = vld [vmem:[%s5880 + $0x78] sm:$0xe]
      %v8535 = vld [vmem:[%s5880 + $0x84] sm:$0xe]
      %v8536 = vld [vmem:[%s5880 + $0x90] sm:$0xe]
      %v8537 = vld [vmem:[%s5880 + $0x9c] sm:$0xe]
      %v8538 = vld [vmem:[%s5880 + $0xa8] sm:$0xe]
      %v8539 = vld [vmem:[%s5880 + $0xb4] sm:$0xe]
      %v8588 = vrot.slane %v8524, 5
      %v8589 = vrot.slane %v8588, 4
      %v8590 = vrot.slane %v7801, 5
      %v8591 = vsel %vm1803, %v8589, %v8590
      %v8592 = vrot.slane %v8590, 4
      %v8593 = vrot.slane %v7802, 5
      %v8594 = vsel %vm1803, %v8592, %v8593
      %v8595 = vrot.slane %v8525, 5
      %v8596 = vrot.slane %v8595, 4
      %v8597 = vrot.slane %v7804, 5
      %v8598 = vsel %vm1803, %v8596, %v8597
      %v8599 = vrot.slane %v8597, 4
      %v8600 = vrot.slane %v7805, 5
      %v8601 = vsel %vm1803, %v8599, %v8600
      %v8602 = vrot.slane %v8526, 5
      %v8603 = vrot.slane %v8602, 4
      %v8604 = vrot.slane %v7807, 5
      %v8605 = vsel %vm1803, %v8603, %v8604
      %v8606 = vrot.slane %v8604, 4
      %v8607 = vrot.slane %v7808, 5
      %v8608 = vsel %vm1803, %v8606, %v8607
      %v8609 = vrot.slane %v8527, 5
      %v8610 = vrot.slane %v8609, 4
      %v8611 = vrot.slane %v7810, 5
      %v8612 = vsel %vm1803, %v8610, %v8611
      %v8613 = vrot.slane %v8611, 4
      %v8614 = vrot.slane %v7811, 5
      %v8615 = vsel %vm1803, %v8613, %v8614
      %v8616 = vrot.slane %v8528, 5
      %v8617 = vrot.slane %v8616, 4
      %v8618 = vrot.slane %v7813, 5
      %v8619 = vsel %vm1803, %v8617, %v8618
      %v8620 = vrot.slane %v8618, 4
      %v8621 = vrot.slane %v7814, 5
      %v8622 = vsel %vm1803, %v8620, %v8621
      %v8623 = vrot.slane %v8529, 5
      %v8624 = vrot.slane %v8623, 4
      %v8625 = vrot.slane %v7816, 5
      %v8626 = vsel %vm1803, %v8624, %v8625
      %v8627 = vrot.slane %v8625, 4
      %v8628 = vrot.slane %v7817, 5
      %v8629 = vsel %vm1803, %v8627, %v8628
      %v8630 = vrot.slane %v8530, 5
      %v8631 = vrot.slane %v8630, 4
      %v8632 = vrot.slane %v7819, 5
      %v8633 = vsel %vm1803, %v8631, %v8632
      %v8634 = vrot.slane %v8632, 4
      %v8635 = vrot.slane %v7820, 5
      %v8636 = vsel %vm1803, %v8634, %v8635
      %v8637 = vrot.slane %v8531, 5
      %v8638 = vrot.slane %v8637, 4
      %v8639 = vrot.slane %v7822, 5
      %v8640 = vsel %vm1803, %v8638, %v8639
      %v8641 = vrot.slane %v8639, 4
      %v8642 = vrot.slane %v7823, 5
      %v8643 = vsel %vm1803, %v8641, %v8642
      %v8644 = vrot.slane %v8532, 5
      %v8645 = vrot.slane %v8644, 4
      %v8646 = vrot.slane %v7825, 5
      %v8647 = vsel %vm1803, %v8645, %v8646
      %v8648 = vrot.slane %v8646, 4
      %v8649 = vrot.slane %v7826, 5
      %v8650 = vsel %vm1803, %v8648, %v8649
      %v8651 = vrot.slane %v8533, 5
      %v8652 = vrot.slane %v8651, 4
      %v8653 = vrot.slane %v7828, 5
      %v8654 = vsel %vm1803, %v8652, %v8653
      %v8655 = vrot.slane %v8653, 4
      %v8656 = vrot.slane %v7829, 5
      %v8657 = vsel %vm1803, %v8655, %v8656
      %v8658 = vrot.slane %v8534, 5
      %v8659 = vrot.slane %v8658, 4
      %v8660 = vrot.slane %v7831, 5
      %v8661 = vsel %vm1803, %v8659, %v8660
      %v8662 = vrot.slane %v8660, 4
      %v8663 = vrot.slane %v7832, 5
      %v8664 = vsel %vm1803, %v8662, %v8663
      %v8665 = vrot.slane %v8535, 5
      %v8666 = vrot.slane %v8665, 4
      %v8667 = vrot.slane %v7834, 5
      %v8668 = vsel %vm1803, %v8666, %v8667
      %v8669 = vrot.slane %v8667, 4
      %v8670 = vrot.slane %v7835, 5
      %v8671 = vsel %vm1803, %v8669, %v8670
      %v8672 = vrot.slane %v8536, 5
      %v8673 = vrot.slane %v8672, 4
      %v8674 = vrot.slane %v7837, 5
      %v8675 = vsel %vm1803, %v8673, %v8674
      %v8676 = vrot.slane %v8674, 4
      %v8677 = vrot.slane %v7838, 5
      %v8678 = vsel %vm1803, %v8676, %v8677
      %v8679 = vrot.slane %v8537, 5
      %v8680 = vrot.slane %v8679, 4
      %v8681 = vrot.slane %v7840, 5
      %v8682 = vsel %vm1803, %v8680, %v8681
      %v8683 = vrot.slane %v8681, 4
      %v8684 = vrot.slane %v7841, 5
      %v8685 = vsel %vm1803, %v8683, %v8684
      %v8686 = vrot.slane %v8538, 5
      %v8687 = vrot.slane %v8686, 4
      %v8688 = vrot.slane %v7843, 5
      %v8689 = vsel %vm1803, %v8687, %v8688
      %v8690 = vrot.slane %v8688, 4
      %v8691 = vrot.slane %v7844, 5
      %v8692 = vsel %vm1803, %v8690, %v8691
      %v8693 = vrot.slane %v8539, 5
      %v8694 = vrot.slane %v8693, 4
      %v8695 = vrot.slane %v7846, 5
      %v8696 = vsel %vm1803, %v8694, %v8695
      %v8697 = vrot.slane %v8695, 4
      %v8698 = vrot.slane %v7847, 5
      %v8699 = vsel %vm1803, %v8697, %v8698
      %v8700 = vunpack.c.l.b16 %v8591
      %v8701 = vunpack.c.l.b16 %v8594
      %v8702 = vunpack.c.l.b16 %v8598
      %v8703 = vunpack.c.l.b16 %v8601
      %v8704 = vunpack.c.l.b16 %v8605
      %v8705 = vunpack.c.l.b16 %v8608
      %v8706 = vunpack.c.l.b16 %v8612
      %v8707 = vunpack.c.l.b16 %v8615
      %v8708 = vunpack.c.l.b16 %v8619
      %v8709 = vunpack.c.l.b16 %v8622
      %v8710 = vunpack.c.l.b16 %v8626
      %v8711 = vunpack.c.l.b16 %v8629
      %v8712 = vunpack.c.l.b16 %v8633
      %v8713 = vunpack.c.l.b16 %v8636
      %v8714 = vunpack.c.l.b16 %v8640
      %v8715 = vunpack.c.l.b16 %v8643
      %v8716 = vunpack.c.l.b16 %v8647
      %v8717 = vunpack.c.l.b16 %v8650
      %v8718 = vunpack.c.l.b16 %v8654
      %v8719 = vunpack.c.l.b16 %v8657
      %v8720 = vunpack.c.l.b16 %v8661
      %v8721 = vunpack.c.l.b16 %v8664
      %v8722 = vunpack.c.l.b16 %v8668
      %v8723 = vunpack.c.l.b16 %v8671
      %v8724 = vunpack.c.l.b16 %v8675
      %v8725 = vunpack.c.l.b16 %v8678
      %v8726 = vunpack.c.l.b16 %v8682
      %v8727 = vunpack.c.l.b16 %v8685
      %v8728 = vunpack.c.l.b16 %v8689
      %v8729 = vunpack.c.l.b16 %v8692
      %v8730 = vunpack.c.l.b16 %v8696
      %v8731 = vunpack.c.l.b16 %v8699
      %v8732 = vpack.c.b16 %v8701, %v8700
      %v8733 = vpack.c.b16 %v8703, %v8702
      %v8734 = vpack.c.b16 %v8705, %v8704
      %v8735 = vpack.c.b16 %v8707, %v8706
      %v8736 = vpack.c.b16 %v8709, %v8708
      %v8737 = vpack.c.b16 %v8711, %v8710
      %v8738 = vpack.c.b16 %v8713, %v8712
      %v8739 = vpack.c.b16 %v8715, %v8714
      %v8740 = vpack.c.b16 %v8717, %v8716
      %v8741 = vpack.c.b16 %v8719, %v8718
      %v8742 = vpack.c.b16 %v8721, %v8720
      %v8743 = vpack.c.b16 %v8723, %v8722
      %v8744 = vpack.c.b16 %v8725, %v8724
      %v8745 = vpack.c.b16 %v8727, %v8726
      %v8746 = vpack.c.b16 %v8729, %v8728
      %v8747 = vpack.c.b16 %v8731, %v8730
      %v8749 = vsel %vm6486, %v8732, 0
      %v8752 = vsel %vm6486, %v8733, 0
      %v8755 = vsel %vm6486, %v8734, 0
      %v8758 = vsel %vm6486, %v8735, 0
      %v8761 = vsel %vm6486, %v8736, 0
      %v8764 = vsel %vm6486, %v8737, 0
      %v8767 = vsel %vm6486, %v8738, 0
      %v8770 = vsel %vm6486, %v8739, 0
      %v8773 = vsel %vm6486, %v8740, 0
      %v8776 = vsel %vm6486, %v8741, 0
      %v8779 = vsel %vm6486, %v8742, 0
      %v8782 = vsel %vm6486, %v8743, 0
      %v8785 = vsel %vm6486, %v8744, 0
      %v8788 = vsel %vm6486, %v8745, 0
      %v8791 = vsel %vm6486, %v8746, 0
      %v8794 = vsel %vm6486, %v8747, 0
      %v8797 = vsel %vm6535, %v6002, 0
      %8799 = vmatprep.subr.bf16.mxu0 0
      %8800 = vmatpush1.bf16.msra.mxu0 %v8797
      %8801 = vmatprep.subr.bf16.mxu0 0
      %8802 = vmatpush1.bf16.msra.mxu0 0
      %8803 = vmatprep.subr.bf16.mxu0 0
      %8804 = vmatpush1.bf16.msra.mxu0 0
      %8805 = vmatprep.subr.bf16.mxu0 0
      %8806 = vmatpush1.bf16.msra.mxu0 0
      %8807 = vmatprep.subr.bf16.mxu0 0
      %8808 = vmatpush1.bf16.msra.mxu0 0
      %8809 = vmatprep.subr.bf16.mxu0 0
      %8810 = vmatpush1.bf16.msra.mxu0 0
      %8811 = vmatprep.subr.bf16.mxu0 0
      %8812 = vmatpush1.bf16.msra.mxu0 0
      %8813 = vmatprep.subr.bf16.mxu0 0
      %8814 = vmatpush1.bf16.msra.mxu0 0
      %8815 = vmatprep.subr.bf16.mxu0 0
      %8816 = vmatpush1.bf16.msra.mxu0 0
      %8817 = vmatprep.subr.bf16.mxu0 0
      %8818 = vmatpush1.bf16.msra.mxu0 0
      %8819 = vmatprep.subr.bf16.mxu0 0
      %8820 = vmatpush1.bf16.msra.mxu0 0
      %8821 = vmatprep.subr.bf16.mxu0 0
      %8822 = vmatpush1.bf16.msra.mxu0 0
      %8823 = vmatprep.subr.bf16.mxu0 0
      %8824 = vmatpush1.bf16.msra.mxu0 0
      %8825 = vmatprep.subr.bf16.mxu0 0
      %8826 = vmatpush1.bf16.msra.mxu0 0
      %8827 = vmatprep.subr.bf16.mxu0 0
      %8828 = vmatpush1.bf16.msra.mxu0 0
      %8829 = vmatprep.subr.bf16.mxu0 0
      %8830 = vmatpush1.bf16.msra.mxu0 0
      %8831 = vmatprep.mubr.bf16.mxu0 0
      %8832 = vmatmul.mubr.bf16.gmra.mrb[0].mxu0 %v8749
      %v8833 = vpop.f32.mrb[0].mxu0
      %v8834 = vadd.f32 0.0, %v8833
      %v8835 = vpop.f32.mrb[0].mxu0
      %v8836 = vpop.f32.mrb[0].mxu0
      %v8837 = vadd.f32 0.0, %v8836
      %v8838 = vpop.f32.mrb[0].mxu0
      %8839 = vmatprep.mubr.bf16.mxu0 0
      %8840 = vmatmul.mubr.bf16.gmra.mrb[0].mxu0 %v8752
      %v8841 = vpop.f32.mrb[0].mxu0
      %v8842 = vadd.f32 0.0, %v8841
      %v8843 = vpop.f32.mrb[0].mxu0
      %v8844 = vpop.f32.mrb[0].mxu0
      %v8845 = vadd.f32 0.0, %v8844
      %v8846 = vpop.f32.mrb[0].mxu0
      %8847 = vmatprep.mubr.bf16.mxu0 0
      %8848 = vmatmul.mubr.bf16.gmra.mrb[0].mxu0 %v8755
      %v8849 = vpop.f32.mrb[0].mxu0
      %v8850 = vadd.f32 0.0, %v8849
      %v8851 = vpop.f32.mrb[0].mxu0
      %v8852 = vpop.f32.mrb[0].mxu0
      %v8853 = vadd.f32 0.0, %v8852
      %v8854 = vpop.f32.mrb[0].mxu0
      %8855 = vmatprep.mubr.bf16.mxu0 0
      %8856 = vmatmul.mubr.bf16.gmra.mrb[0].mxu0 %v8758
      %v8857 = vpop.f32.mrb[0].mxu0
      %v8858 = vadd.f32 0.0, %v8857
      %v8859 = vpop.f32.mrb[0].mxu0
      %v8860 = vpop.f32.mrb[0].mxu0
      %v8861 = vadd.f32 0.0, %v8860
      %v8862 = vpop.f32.mrb[0].mxu0
      %8863 = vmatprep.mubr.bf16.mxu0 0
      %8864 = vmatmul.mubr.bf16.gmra.mrb[0].mxu0 %v8761
      %v8865 = vpop.f32.mrb[0].mxu0
      %v8866 = vadd.f32 0.0, %v8865
      %v8867 = vpop.f32.mrb[0].mxu0
      %v8868 = vpop.f32.mrb[0].mxu0
      %v8869 = vadd.f32 0.0, %v8868
      %v8870 = vpop.f32.mrb[0].mxu0
      %8871 = vmatprep.mubr.bf16.mxu0 0
      %8872 = vmatmul.mubr.bf16.gmra.mrb[0].mxu0 %v8764
      %v8873 = vpop.f32.mrb[0].mxu0
      %v8874 = vadd.f32 0.0, %v8873
      %v8875 = vpop.f32.mrb[0].mxu0
      %v8876 = vpop.f32.mrb[0].mxu0
      %v8877 = vadd.f32 0.0, %v8876
      %v8878 = vpop.f32.mrb[0].mxu0
      %8879 = vmatprep.mubr.bf16.mxu0 0
      %8880 = vmatmul.mubr.bf16.gmra.mrb[0].mxu0 %v8767
      %v8881 = vpop.f32.mrb[0].mxu0
      %v8882 = vadd.f32 0.0, %v8881
      %v8883 = vpop.f32.mrb[0].mxu0
      %v8884 = vpop.f32.mrb[0].mxu0
      %v8885 = vadd.f32 0.0, %v8884
      %v8886 = vpop.f32.mrb[0].mxu0
      %8887 = vmatprep.mubr.bf16.mxu0 0
      %8888 = vmatmul.mubr.bf16.gmra.mrb[0].mxu0 %v8770
      %v8889 = vpop.f32.mrb[0].mxu0
      %v8890 = vadd.f32 0.0, %v8889
      %v8891 = vpop.f32.mrb[0].mxu0
      %v8892 = vpop.f32.mrb[0].mxu0
      %v8893 = vadd.f32 0.0, %v8892
      %v8894 = vpop.f32.mrb[0].mxu0
      %8895 = vmatprep.mubr.bf16.mxu0 0
      %8896 = vmatmul.mubr.bf16.gmra.mrb[0].mxu0 %v8773
      %v8897 = vpop.f32.mrb[0].mxu0
      %v8898 = vadd.f32 0.0, %v8897
      %v8899 = vpop.f32.mrb[0].mxu0
      %v8900 = vpop.f32.mrb[0].mxu0
      %v8901 = vadd.f32 0.0, %v8900
      %v8902 = vpop.f32.mrb[0].mxu0
      %8903 = vmatprep.mubr.bf16.mxu0 0
      %8904 = vmatmul.mubr.bf16.gmra.mrb[0].mxu0 %v8776
      %v8905 = vpop.f32.mrb[0].mxu0
      %v8906 = vadd.f32 0.0, %v8905
      %v8907 = vpop.f32.mrb[0].mxu0
      %v8908 = vpop.f32.mrb[0].mxu0
      %v8909 = vadd.f32 0.0, %v8908
      %v8910 = vpop.f32.mrb[0].mxu0
      %8911 = vmatprep.mubr.bf16.mxu0 0
      %8912 = vmatmul.mubr.bf16.gmra.mrb[0].mxu0 %v8779
      %v8913 = vpop.f32.mrb[0].mxu0
      %v8914 = vadd.f32 0.0, %v8913
      %v8915 = vpop.f32.mrb[0].mxu0
      %v8916 = vpop.f32.mrb[0].mxu0
      %v8917 = vadd.f32 0.0, %v8916
      %v8918 = vpop.f32.mrb[0].mxu0
      %8919 = vmatprep.mubr.bf16.mxu0 0
      %8920 = vmatmul.mubr.bf16.gmra.mrb[0].mxu0 %v8782
      %v8921 = vpop.f32.mrb[0].mxu0
      %v8922 = vadd.f32 0.0, %v8921
      %v8923 = vpop.f32.mrb[0].mxu0
      %v8924 = vpop.f32.mrb[0].mxu0
      %v8925 = vadd.f32 0.0, %v8924
      %v8926 = vpop.f32.mrb[0].mxu0
      %8927 = vmatprep.mubr.bf16.mxu0 0
      %8928 = vmatmul.mubr.bf16.gmra.mrb[0].mxu0 %v8785
      %v8929 = vpop.f32.mrb[0].mxu0
      %v8930 = vadd.f32 0.0, %v8929
      %v8931 = vpop.f32.mrb[0].mxu0
      %v8932 = vpop.f32.mrb[0].mxu0
      %v8933 = vadd.f32 0.0, %v8932
      %v8934 = vpop.f32.mrb[0].mxu0
      %8935 = vmatprep.mubr.bf16.mxu0 0
      %8936 = vmatmul.mubr.bf16.gmra.mrb[0].mxu0 %v8788
      %v8937 = vpop.f32.mrb[0].mxu0
      %v8938 = vadd.f32 0.0, %v8937
      %v8939 = vpop.f32.mrb[0].mxu0
      %v8940 = vpop.f32.mrb[0].mxu0
      %v8941 = vadd.f32 0.0, %v8940
      %v8942 = vpop.f32.mrb[0].mxu0
      %8943 = vmatprep.mubr.bf16.mxu0 0
      %8944 = vmatmul.mubr.bf16.gmra.mrb[0].mxu0 %v8791
      %v8945 = vpop.f32.mrb[0].mxu0
      %v8946 = vadd.f32 0.0, %v8945
      %v8947 = vpop.f32.mrb[0].mxu0
      %v8948 = vpop.f32.mrb[0].mxu0
      %v8949 = vadd.f32 0.0, %v8948
      %v8950 = vpop.f32.mrb[0].mxu0
      %8951 = vmatprep.mubr.bf16.mxu0 0
      %8952 = vmatmul.mubr.bf16.gmra.mrb[0].mxu0 %v8794
      %v8953 = vpop.f32.mrb[0].mxu0
      %v8954 = vadd.f32 0.0, %v8953
      %v8955 = vpop.f32.mrb[0].mxu0
      %v8956 = vpop.f32.mrb[0].mxu0
      %v8957 = vadd.f32 0.0, %v8956
      %v8958 = vpop.f32.mrb[0].mxu0
      %8959 = vdwg.mxu0
      %v8960 = vadd.f32 %v8492, %v8834
      %v8961 = vadd.f32 %v8493, %v8837
      %v8962 = vadd.f32 %v8494, %v8842
      %v8963 = vadd.f32 %v8495, %v8845
      %v8964 = vadd.f32 %v8496, %v8850
      %v8965 = vadd.f32 %v8497, %v8853
      %v8966 = vadd.f32 %v8498, %v8858
      %v8967 = vadd.f32 %v8499, %v8861
      %v8968 = vadd.f32 %v8500, %v8866
      %v8969 = vadd.f32 %v8501, %v8869
      %v8970 = vadd.f32 %v8502, %v8874
      %v8971 = vadd.f32 %v8503, %v8877
      %v8972 = vadd.f32 %v8504, %v8882
      %v8973 = vadd.f32 %v8505, %v8885
      %v8974 = vadd.f32 %v8506, %v8890
      %v8975 = vadd.f32 %v8507, %v8893
      %v8976 = vadd.f32 %v8508, %v8898
      %v8977 = vadd.f32 %v8509, %v8901
      %v8978 = vadd.f32 %v8510, %v8906
      %v8979 = vadd.f32 %v8511, %v8909
      %v8980 = vadd.f32 %v8512, %v8914
      %v8981 = vadd.f32 %v8513, %v8917
      %v8982 = vadd.f32 %v8514, %v8922
      %v8983 = vadd.f32 %v8515, %v8925
      %v8984 = vadd.f32 %v8516, %v8930
      %v8985 = vadd.f32 %v8517, %v8933
      %v8986 = vadd.f32 %v8518, %v8938
      %v8987 = vadd.f32 %v8519, %v8941
      %v8988 = vadd.f32 %v8520, %v8946
      %v8989 = vadd.f32 %v8521, %v8949
      %v8990 = vadd.f32 %v8522, %v8954
      %v8991 = vadd.f32 %v8523, %v8957
      %s8992 = scalar_lea.vmem [#allocation3], 24
      %v8993 = vld [vmem:[%s8992] sm:$0xf]
      %v8994 = vld [vmem:[%s8992 + $0x4] sm:$0xf]
      %v8995 = vld [vmem:[%s8992 + $0xc] sm:$0xf]
      %v8996 = vld [vmem:[%s8992 + $0x10] sm:$0xf]
      %v8997 = vld [vmem:[%s8992 + $0x18] sm:$0xf]
      %v8998 = vld [vmem:[%s8992 + $0x1c] sm:$0xf]
      %v8999 = vld [vmem:[%s8992 + $0x24] sm:$0xf]
      %v9000 = vld [vmem:[%s8992 + $0x28] sm:$0xf]
      %v9001 = vld [vmem:[%s8992 + $0x30] sm:$0xf]
      %v9002 = vld [vmem:[%s8992 + $0x34] sm:$0xf]
      %v9003 = vld [vmem:[%s8992 + $0x3c] sm:$0xf]
      %v9004 = vld [vmem:[%s8992 + $0x40] sm:$0xf]
      %v9005 = vld [vmem:[%s8992 + $0x48] sm:$0xf]
      %v9006 = vld [vmem:[%s8992 + $0x4c] sm:$0xf]
      %v9007 = vld [vmem:[%s8992 + $0x54] sm:$0xf]
      %v9008 = vld [vmem:[%s8992 + $0x58] sm:$0xf]
      %v9009 = vld [vmem:[%s8992 + $0x60] sm:$0xf]
      %v9010 = vld [vmem:[%s8992 + $0x64] sm:$0xf]
      %v9011 = vld [vmem:[%s8992 + $0x6c] sm:$0xf]
      %v9012 = vld [vmem:[%s8992 + $0x70] sm:$0xf]
      %v9013 = vld [vmem:[%s8992 + $0x78] sm:$0xf]
      %v9014 = vld [vmem:[%s8992 + $0x7c] sm:$0xf]
      %v9015 = vld [vmem:[%s8992 + $0x84] sm:$0xf]
      %v9016 = vld [vmem:[%s8992 + $0x88] sm:$0xf]
      %v9017 = vld [vmem:[%s8992 + $0x90] sm:$0xf]
      %v9018 = vld [vmem:[%s8992 + $0x94] sm:$0xf]
      %v9019 = vld [vmem:[%s8992 + $0x9c] sm:$0xf]
      %v9020 = vld [vmem:[%s8992 + $0xa0] sm:$0xf]
      %v9021 = vld [vmem:[%s8992 + $0xa8] sm:$0xf]
      %v9022 = vld [vmem:[%s8992 + $0xac] sm:$0xf]
      %v9023 = vld [vmem:[%s8992 + $0xb4] sm:$0xf]
      %v9024 = vld [vmem:[%s8992 + $0xb8] sm:$0xf]
      %v9057 = vunpack.c.l.b16 %v8993
      %v9058 = vunpack.c.l.b16 %v8994
      %v9059 = vunpack.c.l.b16 %v8995
      %v9060 = vunpack.c.l.b16 %v8996
      %v9061 = vunpack.c.l.b16 %v8997
      %v9062 = vunpack.c.l.b16 %v8998
      %v9063 = vunpack.c.l.b16 %v8999
      %v9064 = vunpack.c.l.b16 %v9000
      %v9065 = vunpack.c.l.b16 %v9001
      %v9066 = vunpack.c.l.b16 %v9002
      %v9067 = vunpack.c.l.b16 %v9003
      %v9068 = vunpack.c.l.b16 %v9004
      %v9069 = vunpack.c.l.b16 %v9005
      %v9070 = vunpack.c.l.b16 %v9006
      %v9071 = vunpack.c.l.b16 %v9007
      %v9072 = vunpack.c.l.b16 %v9008
      %v9073 = vunpack.c.l.b16 %v9009
      %v9074 = vunpack.c.l.b16 %v9010
      %v9075 = vunpack.c.l.b16 %v9011
      %v9076 = vunpack.c.l.b16 %v9012
      %v9077 = vunpack.c.l.b16 %v9013
      %v9078 = vunpack.c.l.b16 %v9014
      %v9079 = vunpack.c.l.b16 %v9015
      %v9080 = vunpack.c.l.b16 %v9016
      %v9081 = vunpack.c.l.b16 %v9017
      %v9082 = vunpack.c.l.b16 %v9018
      %v9083 = vunpack.c.l.b16 %v9019
      %v9084 = vunpack.c.l.b16 %v9020
      %v9085 = vunpack.c.l.b16 %v9021
      %v9086 = vunpack.c.l.b16 %v9022
      %v9087 = vunpack.c.l.b16 %v9023
      %v9088 = vunpack.c.l.b16 %v9024
      %v9089 = vpack.c.b16 %v9058, %v9057
      %v9090 = vpack.c.b16 %v9060, %v9059
      %v9091 = vpack.c.b16 %v9062, %v9061
      %v9092 = vpack.c.b16 %v9064, %v9063
      %v9093 = vpack.c.b16 %v9066, %v9065
      %v9094 = vpack.c.b16 %v9068, %v9067
      %v9095 = vpack.c.b16 %v9070, %v9069
      %v9096 = vpack.c.b16 %v9072, %v9071
      %v9097 = vpack.c.b16 %v9074, %v9073
      %v9098 = vpack.c.b16 %v9076, %v9075
      %v9099 = vpack.c.b16 %v9078, %v9077
      %v9100 = vpack.c.b16 %v9080, %v9079
      %v9101 = vpack.c.b16 %v9082, %v9081
      %v9102 = vpack.c.b16 %v9084, %v9083
      %v9103 = vpack.c.b16 %v9086, %v9085
      %v9104 = vpack.c.b16 %v9088, %v9087
      %v9106 = vsel %vm6486, %v9089, 0
      %v9109 = vsel %vm6486, %v9090, 0
      %v9112 = vsel %vm6486, %v9091, 0
      %v9115 = vsel %vm6486, %v9092, 0
      %v9118 = vsel %vm6486, %v9093, 0
      %v9121 = vsel %vm6486, %v9094, 0
      %v9124 = vsel %vm6486, %v9095, 0
      %v9127 = vsel %vm6486, %v9096, 0
      %v9130 = vsel %vm6486, %v9097, 0
      %v9133 = vsel %vm6486, %v9098, 0
      %v9136 = vsel %vm6486, %v9099, 0
      %v9139 = vsel %vm6486, %v9100, 0
      %v9142 = vsel %vm6486, %v9101, 0
      %v9145 = vsel %vm6486, %v9102, 0
      %v9148 = vsel %vm6486, %v9103, 0
      %v9151 = vsel %vm6486, %v9104, 0
      %v9154 = vsel %vm6535, %v6003, 0
      %9156 = vmatprep.subr.bf16.mxu0 0
      %9157 = vmatpush1.bf16.msra.mxu0 %v9154
      %9158 = vmatprep.subr.bf16.mxu0 0
      %9159 = vmatpush1.bf16.msra.mxu0 0
      %9160 = vmatprep.subr.bf16.mxu0 0
      %9161 = vmatpush1.bf16.msra.mxu0 0
      %9162 = vmatprep.subr.bf16.mxu0 0
      %9163 = vmatpush1.bf16.msra.mxu0 0
      %9164 = vmatprep.subr.bf16.mxu0 0
      %9165 = vmatpush1.bf16.msra.mxu0 0
      %9166 = vmatprep.subr.bf16.mxu0 0
      %9167 = vmatpush1.bf16.msra.mxu0 0
      %9168 = vmatprep.subr.bf16.mxu0 0
      %9169 = vmatpush1.bf16.msra.mxu0 0
      %9170 = vmatprep.subr.bf16.mxu0 0
      %9171 = vmatpush1.bf16.msra.mxu0 0
      %9172 = vmatprep.subr.bf16.mxu0 0
      %9173 = vmatpush1.bf16.msra.mxu0 0
      %9174 = vmatprep.subr.bf16.mxu0 0
      %9175 = vmatpush1.bf16.msra.mxu0 0
      %9176 = vmatprep.subr.bf16.mxu0 0
      %9177 = vmatpush1.bf16.msra.mxu0 0
      %9178 = vmatprep.subr.bf16.mxu0 0
      %9179 = vmatpush1.bf16.msra.mxu0 0
      %9180 = vmatprep.subr.bf16.mxu0 0
      %9181 = vmatpush1.bf16.msra.mxu0 0
      %9182 = vmatprep.subr.bf16.mxu0 0
      %9183 = vmatpush1.bf16.msra.mxu0 0
      %9184 = vmatprep.subr.bf16.mxu0 0
      %9185 = vmatpush1.bf16.msra.mxu0 0
      %9186 = vmatprep.subr.bf16.mxu0 0
      %9187 = vmatpush1.bf16.msra.mxu0 0
      %9188 = vmatprep.mubr.bf16.mxu0 0
      %9189 = vmatmul.mubr.bf16.gmra.mrb[0].mxu0 %v9106
      %v9190 = vpop.f32.mrb[0].mxu0
      %v9191 = vadd.f32 0.0, %v9190
      %v9192 = vpop.f32.mrb[0].mxu0
      %v9193 = vpop.f32.mrb[0].mxu0
      %v9194 = vadd.f32 0.0, %v9193
      %v9195 = vpop.f32.mrb[0].mxu0
      %9196 = vmatprep.mubr.bf16.mxu0 0
      %9197 = vmatmul.mubr.bf16.gmra.mrb[0].mxu0 %v9109
      %v9198 = vpop.f32.mrb[0].mxu0
      %v9199 = vadd.f32 0.0, %v9198
      %v9200 = vpop.f32.mrb[0].mxu0
      %v9201 = vpop.f32.mrb[0].mxu0
      %v9202 = vadd.f32 0.0, %v9201
      %v9203 = vpop.f32.mrb[0].mxu0
      %9204 = vmatprep.mubr.bf16.mxu0 0
      %9205 = vmatmul.mubr.bf16.gmra.mrb[0].mxu0 %v9112
      %v9206 = vpop.f32.mrb[0].mxu0
      %v9207 = vadd.f32 0.0, %v9206
      %v9208 = vpop.f32.mrb[0].mxu0
      %v9209 = vpop.f32.mrb[0].mxu0
      %v9210 = vadd.f32 0.0, %v9209
      %v9211 = vpop.f32.mrb[0].mxu0
      %9212 = vmatprep.mubr.bf16.mxu0 0
      %9213 = vmatmul.mubr.bf16.gmra.mrb[0].mxu0 %v9115
      %v9214 = vpop.f32.mrb[0].mxu0
      %v9215 = vadd.f32 0.0, %v9214
      %v9216 = vpop.f32.mrb[0].mxu0
      %v9217 = vpop.f32.mrb[0].mxu0
      %v9218 = vadd.f32 0.0, %v9217
      %v9219 = vpop.f32.mrb[0].mxu0
      %9220 = vmatprep.mubr.bf16.mxu0 0
      %9221 = vmatmul.mubr.bf16.gmra.mrb[0].mxu0 %v9118
      %v9222 = vpop.f32.mrb[0].mxu0
      %v9223 = vadd.f32 0.0, %v9222
      %v9224 = vpop.f32.mrb[0].mxu0
      %v9225 = vpop.f32.mrb[0].mxu0
      %v9226 = vadd.f32 0.0, %v9225
      %v9227 = vpop.f32.mrb[0].mxu0
      %9228 = vmatprep.mubr.bf16.mxu0 0
      %9229 = vmatmul.mubr.bf16.gmra.mrb[0].mxu0 %v9121
      %v9230 = vpop.f32.mrb[0].mxu0
      %v9231 = vadd.f32 0.0, %v9230
      %v9232 = vpop.f32.mrb[0].mxu0
      %v9233 = vpop.f32.mrb[0].mxu0
      %v9234 = vadd.f32 0.0, %v9233
      %v9235 = vpop.f32.mrb[0].mxu0
      %9236 = vmatprep.mubr.bf16.mxu0 0
      %9237 = vmatmul.mubr.bf16.gmra.mrb[0].mxu0 %v9124
      %v9238 = vpop.f32.mrb[0].mxu0
      %v9239 = vadd.f32 0.0, %v9238
      %v9240 = vpop.f32.mrb[0].mxu0
      %v9241 = vpop.f32.mrb[0].mxu0
      %v9242 = vadd.f32 0.0, %v9241
      %v9243 = vpop.f32.mrb[0].mxu0
      %9244 = vmatprep.mubr.bf16.mxu0 0
      %9245 = vmatmul.mubr.bf16.gmra.mrb[0].mxu0 %v9127
      %v9246 = vpop.f32.mrb[0].mxu0
      %v9247 = vadd.f32 0.0, %v9246
      %v9248 = vpop.f32.mrb[0].mxu0
      %v9249 = vpop.f32.mrb[0].mxu0
      %v9250 = vadd.f32 0.0, %v9249
      %v9251 = vpop.f32.mrb[0].mxu0
      %9252 = vmatprep.mubr.bf16.mxu0 0
      %9253 = vmatmul.mubr.bf16.gmra.mrb[0].mxu0 %v9130
      %v9254 = vpop.f32.mrb[0].mxu0
      %v9255 = vadd.f32 0.0, %v9254
      %v9256 = vpop.f32.mrb[0].mxu0
      %v9257 = vpop.f32.mrb[0].mxu0
      %v9258 = vadd.f32 0.0, %v9257
      %v9259 = vpop.f32.mrb[0].mxu0
      %9260 = vmatprep.mubr.bf16.mxu0 0
      %9261 = vmatmul.mubr.bf16.gmra.mrb[0].mxu0 %v9133
      %v9262 = vpop.f32.mrb[0].mxu0
      %v9263 = vadd.f32 0.0, %v9262
      %v9264 = vpop.f32.mrb[0].mxu0
      %v9265 = vpop.f32.mrb[0].mxu0
      %v9266 = vadd.f32 0.0, %v9265
      %v9267 = vpop.f32.mrb[0].mxu0
      %9268 = vmatprep.mubr.bf16.mxu0 0
      %9269 = vmatmul.mubr.bf16.gmra.mrb[0].mxu0 %v9136
      %v9270 = vpop.f32.mrb[0].mxu0
      %v9271 = vadd.f32 0.0, %v9270
      %v9272 = vpop.f32.mrb[0].mxu0
      %v9273 = vpop.f32.mrb[0].mxu0
      %v9274 = vadd.f32 0.0, %v9273
      %v9275 = vpop.f32.mrb[0].mxu0
      %9276 = vmatprep.mubr.bf16.mxu0 0
      %9277 = vmatmul.mubr.bf16.gmra.mrb[0].mxu0 %v9139
      %v9278 = vpop.f32.mrb[0].mxu0
      %v9279 = vadd.f32 0.0, %v9278
      %v9280 = vpop.f32.mrb[0].mxu0
      %v9281 = vpop.f32.mrb[0].mxu0
      %v9282 = vadd.f32 0.0, %v9281
      %v9283 = vpop.f32.mrb[0].mxu0
      %9284 = vmatprep.mubr.bf16.mxu0 0
      %9285 = vmatmul.mubr.bf16.gmra.mrb[0].mxu0 %v9142
      %v9286 = vpop.f32.mrb[0].mxu0
      %v9287 = vadd.f32 0.0, %v9286
      %v9288 = vpop.f32.mrb[0].mxu0
      %v9289 = vpop.f32.mrb[0].mxu0
      %v9290 = vadd.f32 0.0, %v9289
      %v9291 = vpop.f32.mrb[0].mxu0
      %9292 = vmatprep.mubr.bf16.mxu0 0
      %9293 = vmatmul.mubr.bf16.gmra.mrb[0].mxu0 %v9145
      %v9294 = vpop.f32.mrb[0].mxu0
      %v9295 = vadd.f32 0.0, %v9294
      %v9296 = vpop.f32.mrb[0].mxu0
      %v9297 = vpop.f32.mrb[0].mxu0
      %v9298 = vadd.f32 0.0, %v9297
      %v9299 = vpop.f32.mrb[0].mxu0
      %9300 = vmatprep.mubr.bf16.mxu0 0
      %9301 = vmatmul.mubr.bf16.gmra.mrb[0].mxu0 %v9148
      %v9302 = vpop.f32.mrb[0].mxu0
      %v9303 = vadd.f32 0.0, %v9302
      %v9304 = vpop.f32.mrb[0].mxu0
      %v9305 = vpop.f32.mrb[0].mxu0
      %v9306 = vadd.f32 0.0, %v9305
      %v9307 = vpop.f32.mrb[0].mxu0
      %9308 = vmatprep.mubr.bf16.mxu0 0
      %9309 = vmatmul.mubr.bf16.gmra.mrb[0].mxu0 %v9151
      %v9310 = vpop.f32.mrb[0].mxu0
      %v9311 = vadd.f32 0.0, %v9310
      %v9312 = vpop.f32.mrb[0].mxu0
      %v9313 = vpop.f32.mrb[0].mxu0
      %v9314 = vadd.f32 0.0, %v9313
      %v9315 = vpop.f32.mrb[0].mxu0
      %9316 = vdwg.mxu0
      %v9317 = vadd.f32 %v8960, %v9191
      %v9318 = vadd.f32 %v8961, %v9194
      %v9319 = vadd.f32 %v8962, %v9199
      %v9320 = vadd.f32 %v8963, %v9202
      %v9321 = vadd.f32 %v8964, %v9207
      %v9322 = vadd.f32 %v8965, %v9210
      %v9323 = vadd.f32 %v8966, %v9215
      %v9324 = vadd.f32 %v8967, %v9218
      %v9325 = vadd.f32 %v8968, %v9223
      %v9326 = vadd.f32 %v8969, %v9226
      %v9327 = vadd.f32 %v8970, %v9231
      %v9328 = vadd.f32 %v8971, %v9234
      %v9329 = vadd.f32 %v8972, %v9239
      %v9330 = vadd.f32 %v8973, %v9242
      %v9331 = vadd.f32 %v8974, %v9247
      %v9332 = vadd.f32 %v8975, %v9250
      %v9333 = vadd.f32 %v8976, %v9255
      %v9334 = vadd.f32 %v8977, %v9258
      %v9335 = vadd.f32 %v8978, %v9263
      %v9336 = vadd.f32 %v8979, %v9266
      %v9337 = vadd.f32 %v8980, %v9271
      %v9338 = vadd.f32 %v8981, %v9274
      %v9339 = vadd.f32 %v8982, %v9279
      %v9340 = vadd.f32 %v8983, %v9282
      %v9341 = vadd.f32 %v8984, %v9287
      %v9342 = vadd.f32 %v8985, %v9290
      %v9343 = vadd.f32 %v8986, %v9295
      %v9344 = vadd.f32 %v8987, %v9298
      %v9345 = vadd.f32 %v8988, %v9303
      %v9346 = vadd.f32 %v8989, %v9306
      %v9347 = vadd.f32 %v8990, %v9311
      %v9348 = vadd.f32 %v8991, %v9314
      %v9349 = vld [vmem:[%s8992] sm:$0xf]
      %v9350 = vld [vmem:[%s8992 + $0x4] sm:$0xf]
      %v9351 = vld [vmem:[%s8992 + $0x8] sm:$0x1]
      %v9352 = vld [vmem:[%s8992 + $0xc] sm:$0xf]
      %v9353 = vld [vmem:[%s8992 + $0x10] sm:$0xf]
      %v9354 = vld [vmem:[%s8992 + $0x14] sm:$0x1]
      %v9355 = vld [vmem:[%s8992 + $0x18] sm:$0xf]
      %v9356 = vld [vmem:[%s8992 + $0x1c] sm:$0xf]
      %v9357 = vld [vmem:[%s8992 + $0x20] sm:$0x1]
      %v9358 = vld [vmem:[%s8992 + $0x24] sm:$0xf]
      %v9359 = vld [vmem:[%s8992 + $0x28] sm:$0xf]
      %v9360 = vld [vmem:[%s8992 + $0x2c] sm:$0x1]
      %v9361 = vld [vmem:[%s8992 + $0x30] sm:$0xf]
      %v9362 = vld [vmem:[%s8992 + $0x34] sm:$0xf]
      %v9363 = vld [vmem:[%s8992 + $0x38] sm:$0x1]
      %v9364 = vld [vmem:[%s8992 + $0x3c] sm:$0xf]
      %v9365 = vld [vmem:[%s8992 + $0x40] sm:$0xf]
      %v9366 = vld [vmem:[%s8992 + $0x44] sm:$0x1]
      %v9367 = vld [vmem:[%s8992 + $0x48] sm:$0xf]
      %v9368 = vld [vmem:[%s8992 + $0x4c] sm:$0xf]
      %v9369 = vld [vmem:[%s8992 + $0x50] sm:$0x1]
      %v9370 = vld [vmem:[%s8992 + $0x54] sm:$0xf]
      %v9371 = vld [vmem:[%s8992 + $0x58] sm:$0xf]
      %v9372 = vld [vmem:[%s8992 + $0x5c] sm:$0x1]
      %v9373 = vld [vmem:[%s8992 + $0x60] sm:$0xf]
      %v9374 = vld [vmem:[%s8992 + $0x64] sm:$0xf]
      %v9375 = vld [vmem:[%s8992 + $0x68] sm:$0x1]
      %v9376 = vld [vmem:[%s8992 + $0x6c] sm:$0xf]
      %v9377 = vld [vmem:[%s8992 + $0x70] sm:$0xf]
      %v9378 = vld [vmem:[%s8992 + $0x74] sm:$0x1]
      %v9379 = vld [vmem:[%s8992 + $0x78] sm:$0xf]
      %v9380 = vld [vmem:[%s8992 + $0x7c] sm:$0xf]
      %v9381 = vld [vmem:[%s8992 + $0x80] sm:$0x1]
      %v9382 = vld [vmem:[%s8992 + $0x84] sm:$0xf]
      %v9383 = vld [vmem:[%s8992 + $0x88] sm:$0xf]
      %v9384 = vld [vmem:[%s8992 + $0x8c] sm:$0x1]
      %v9385 = vld [vmem:[%s8992 + $0x90] sm:$0xf]
      %v9386 = vld [vmem:[%s8992 + $0x94] sm:$0xf]
      %v9387 = vld [vmem:[%s8992 + $0x98] sm:$0x1]
      %v9388 = vld [vmem:[%s8992 + $0x9c] sm:$0xf]
      %v9389 = vld [vmem:[%s8992 + $0xa0] sm:$0xf]
      %v9390 = vld [vmem:[%s8992 + $0xa4] sm:$0x1]
      %v9391 = vld [vmem:[%s8992 + $0xa8] sm:$0xf]
      %v9392 = vld [vmem:[%s8992 + $0xac] sm:$0xf]
      %v9393 = vld [vmem:[%s8992 + $0xb0] sm:$0x1]
      %v9394 = vld [vmem:[%s8992 + $0xb4] sm:$0xf]
      %v9395 = vld [vmem:[%s8992 + $0xb8] sm:$0xf]
      %v9396 = vld [vmem:[%s8992 + $0xbc] sm:$0x1]
      %v9398 = vshrl.u32 %v9349, 16
      %v9400 = vrot.slane %v9398, 4
      %v9401 = vshll.u32 %v9349, 16
      %v9403 = vrot.slane %v9401, 5
      %v9404 = vor.u32 %v9400, %v9403
      %v9405 = vrot.slane %v9404, 4
      %v9407 = vshll.u32 %v9350, 16
      %v9409 = vrot.slane %v9407, 5
      %v9410 = vsel %vm814, %v9405, %v9409
      %v9411 = vshrl.u32 %v9350, 16
      %v9413 = vrot.slane %v9411, 4
      %v9414 = vor.u32 %v9413, %v9409
      %v9415 = vrot.slane %v9414, 4
      %v9417 = vshll.u32 %v9351, 16
      %v9419 = vrot.slane %v9417, 5
      %v9420 = vsel %vm814, %v9415, %v9419
      %v9422 = vshrl.u32 %v9352, 16
      %v9424 = vrot.slane %v9422, 4
      %v9425 = vshll.u32 %v9352, 16
      %v9427 = vrot.slane %v9425, 5
      %v9428 = vor.u32 %v9424, %v9427
      %v9429 = vrot.slane %v9428, 4
      %v9431 = vshll.u32 %v9353, 16
      %v9433 = vrot.slane %v9431, 5
      %v9434 = vsel %vm814, %v9429, %v9433
      %v9435 = vshrl.u32 %v9353, 16
      %v9437 = vrot.slane %v9435, 4
      %v9438 = vor.u32 %v9437, %v9433
      %v9439 = vrot.slane %v9438, 4
      %v9441 = vshll.u32 %v9354, 16
      %v9443 = vrot.slane %v9441, 5
      %v9444 = vsel %vm814, %v9439, %v9443
      %v9446 = vshrl.u32 %v9355, 16
      %v9448 = vrot.slane %v9446, 4
      %v9449 = vshll.u32 %v9355, 16
      %v9451 = vrot.slane %v9449, 5
      %v9452 = vor.u32 %v9448, %v9451
      %v9453 = vrot.slane %v9452, 4
      %v9455 = vshll.u32 %v9356, 16
      %v9457 = vrot.slane %v9455, 5
      %v9458 = vsel %vm814, %v9453, %v9457
      %v9459 = vshrl.u32 %v9356, 16
      %v9461 = vrot.slane %v9459, 4
      %v9462 = vor.u32 %v9461, %v9457
      %v9463 = vrot.slane %v9462, 4
      %v9465 = vshll.u32 %v9357, 16
      %v9467 = vrot.slane %v9465, 5
      %v9468 = vsel %vm814, %v9463, %v9467
      %v9470 = vshrl.u32 %v9358, 16
      %v9472 = vrot.slane %v9470, 4
      %v9473 = vshll.u32 %v9358, 16
      %v9475 = vrot.slane %v9473, 5
      %v9476 = vor.u32 %v9472, %v9475
      %v9477 = vrot.slane %v9476, 4
      %v9479 = vshll.u32 %v9359, 16
      %v9481 = vrot.slane %v9479, 5
      %v9482 = vsel %vm814, %v9477, %v9481
      %v9483 = vshrl.u32 %v9359, 16
      %v9485 = vrot.slane %v9483, 4
      %v9486 = vor.u32 %v9485, %v9481
      %v9487 = vrot.slane %v9486, 4
      %v9489 = vshll.u32 %v9360, 16
      %v9491 = vrot.slane %v9489, 5
      %v9492 = vsel %vm814, %v9487, %v9491
      %v9494 = vshrl.u32 %v9361, 16
      %v9496 = vrot.slane %v9494, 4
      %v9497 = vshll.u32 %v9361, 16
      %v9499 = vrot.slane %v9497, 5
      %v9500 = vor.u32 %v9496, %v9499
      %v9501 = vrot.slane %v9500, 4
      %v9503 = vshll.u32 %v9362, 16
      %v9505 = vrot.slane %v9503, 5
      %v9506 = vsel %vm814, %v9501, %v9505
      %v9507 = vshrl.u32 %v9362, 16
      %v9509 = vrot.slane %v9507, 4
      %v9510 = vor.u32 %v9509, %v9505
      %v9511 = vrot.slane %v9510, 4
      %v9513 = vshll.u32 %v9363, 16
      %v9515 = vrot.slane %v9513, 5
      %v9516 = vsel %vm814, %v9511, %v9515
      %v9518 = vshrl.u32 %v9364, 16
      %v9520 = vrot.slane %v9518, 4
      %v9521 = vshll.u32 %v9364, 16
      %v9523 = vrot.slane %v9521, 5
      %v9524 = vor.u32 %v9520, %v9523
      %v9525 = vrot.slane %v9524, 4
      %v9527 = vshll.u32 %v9365, 16
      %v9529 = vrot.slane %v9527, 5
      %v9530 = vsel %vm814, %v9525, %v9529
      %v9531 = vshrl.u32 %v9365, 16
      %v9533 = vrot.slane %v9531, 4
      %v9534 = vor.u32 %v9533, %v9529
      %v9535 = vrot.slane %v9534, 4
      %v9537 = vshll.u32 %v9366, 16
      %v9539 = vrot.slane %v9537, 5
      %v9540 = vsel %vm814, %v9535, %v9539
      %v9542 = vshrl.u32 %v9367, 16
      %v9544 = vrot.slane %v9542, 4
      %v9545 = vshll.u32 %v9367, 16
      %v9547 = vrot.slane %v9545, 5
      %v9548 = vor.u32 %v9544, %v9547
      %v9549 = vrot.slane %v9548, 4
      %v9551 = vshll.u32 %v9368, 16
      %v9553 = vrot.slane %v9551, 5
      %v9554 = vsel %vm814, %v9549, %v9553
      %v9555 = vshrl.u32 %v9368, 16
      %v9557 = vrot.slane %v9555, 4
      %v9558 = vor.u32 %v9557, %v9553
      %v9559 = vrot.slane %v9558, 4
      %v9561 = vshll.u32 %v9369, 16
      %v9563 = vrot.slane %v9561, 5
      %v9564 = vsel %vm814, %v9559, %v9563
      %v9566 = vshrl.u32 %v9370, 16
      %v9568 = vrot.slane %v9566, 4
      %v9569 = vshll.u32 %v9370, 16
      %v9571 = vrot.slane %v9569, 5
      %v9572 = vor.u32 %v9568, %v9571
      %v9573 = vrot.slane %v9572, 4
      %v9575 = vshll.u32 %v9371, 16
      %v9577 = vrot.slane %v9575, 5
      %v9578 = vsel %vm814, %v9573, %v9577
      %v9579 = vshrl.u32 %v9371, 16
      %v9581 = vrot.slane %v9579, 4
      %v9582 = vor.u32 %v9581, %v9577
      %v9583 = vrot.slane %v9582, 4
      %v9585 = vshll.u32 %v9372, 16
      %v9587 = vrot.slane %v9585, 5
      %v9588 = vsel %vm814, %v9583, %v9587
      %v9590 = vshrl.u32 %v9373, 16
      %v9592 = vrot.slane %v9590, 4
      %v9593 = vshll.u32 %v9373, 16
      %v9595 = vrot.slane %v9593, 5
      %v9596 = vor.u32 %v9592, %v9595
      %v9597 = vrot.slane %v9596, 4
      %v9599 = vshll.u32 %v9374, 16
      %v9601 = vrot.slane %v9599, 5
      %v9602 = vsel %vm814, %v9597, %v9601
      %v9603 = vshrl.u32 %v9374, 16
      %v9605 = vrot.slane %v9603, 4
      %v9606 = vor.u32 %v9605, %v9601
      %v9607 = vrot.slane %v9606, 4
      %v9609 = vshll.u32 %v9375, 16
      %v9611 = vrot.slane %v9609, 5
      %v9612 = vsel %vm814, %v9607, %v9611
      %v9614 = vshrl.u32 %v9376, 16
      %v9616 = vrot.slane %v9614, 4
      %v9617 = vshll.u32 %v9376, 16
      %v9619 = vrot.slane %v9617, 5
      %v9620 = vor.u32 %v9616, %v9619
      %v9621 = vrot.slane %v9620, 4
      %v9623 = vshll.u32 %v9377, 16
      %v9625 = vrot.slane %v9623, 5
      %v9626 = vsel %vm814, %v9621, %v9625
      %v9627 = vshrl.u32 %v9377, 16
      %v9629 = vrot.slane %v9627, 4
      %v9630 = vor.u32 %v9629, %v9625
      %v9631 = vrot.slane %v9630, 4
      %v9633 = vshll.u32 %v9378, 16
      %v9635 = vrot.slane %v9633, 5
      %v9636 = vsel %vm814, %v9631, %v9635
      %v9638 = vshrl.u32 %v9379, 16
      %v9640 = vrot.slane %v9638, 4
      %v9641 = vshll.u32 %v9379, 16
      %v9643 = vrot.slane %v9641, 5
      %v9644 = vor.u32 %v9640, %v9643
      %v9645 = vrot.slane %v9644, 4
      %v9647 = vshll.u32 %v9380, 16
      %v9649 = vrot.slane %v9647, 5
      %v9650 = vsel %vm814, %v9645, %v9649
      %v9651 = vshrl.u32 %v9380, 16
      %v9653 = vrot.slane %v9651, 4
      %v9654 = vor.u32 %v9653, %v9649
      %v9655 = vrot.slane %v9654, 4
      %v9657 = vshll.u32 %v9381, 16
      %v9659 = vrot.slane %v9657, 5
      %v9660 = vsel %vm814, %v9655, %v9659
      %v9662 = vshrl.u32 %v9382, 16
      %v9664 = vrot.slane %v9662, 4
      %v9665 = vshll.u32 %v9382, 16
      %v9667 = vrot.slane %v9665, 5
      %v9668 = vor.u32 %v9664, %v9667
      %v9669 = vrot.slane %v9668, 4
      %v9671 = vshll.u32 %v9383, 16
      %v9673 = vrot.slane %v9671, 5
      %v9674 = vsel %vm814, %v9669, %v9673
      %v9675 = vshrl.u32 %v9383, 16
      %v9677 = vrot.slane %v9675, 4
      %v9678 = vor.u32 %v9677, %v9673
      %v9679 = vrot.slane %v9678, 4
      %v9681 = vshll.u32 %v9384, 16
      %v9683 = vrot.slane %v9681, 5
      %v9684 = vsel %vm814, %v9679, %v9683
      %v9686 = vshrl.u32 %v9385, 16
      %v9688 = vrot.slane %v9686, 4
      %v9689 = vshll.u32 %v9385, 16
      %v9691 = vrot.slane %v9689, 5
      %v9692 = vor.u32 %v9688, %v9691
      %v9693 = vrot.slane %v9692, 4
      %v9695 = vshll.u32 %v9386, 16
      %v9697 = vrot.slane %v9695, 5
      %v9698 = vsel %vm814, %v9693, %v9697
      %v9699 = vshrl.u32 %v9386, 16
      %v9701 = vrot.slane %v9699, 4
      %v9702 = vor.u32 %v9701, %v9697
      %v9703 = vrot.slane %v9702, 4
      %v9705 = vshll.u32 %v9387, 16
      %v9707 = vrot.slane %v9705, 5
      %v9708 = vsel %vm814, %v9703, %v9707
      %v9710 = vshrl.u32 %v9388, 16
      %v9712 = vrot.slane %v9710, 4
      %v9713 = vshll.u32 %v9388, 16
      %v9715 = vrot.slane %v9713, 5
      %v9716 = vor.u32 %v9712, %v9715
      %v9717 = vrot.slane %v9716, 4
      %v9719 = vshll.u32 %v9389, 16
      %v9721 = vrot.slane %v9719, 5
      %v9722 = vsel %vm814, %v9717, %v9721
      %v9723 = vshrl.u32 %v9389, 16
      %v9725 = vrot.slane %v9723, 4
      %v9726 = vor.u32 %v9725, %v9721
      %v9727 = vrot.slane %v9726, 4
      %v9729 = vshll.u32 %v9390, 16
      %v9731 = vrot.slane %v9729, 5
      %v9732 = vsel %vm814, %v9727, %v9731
      %v9734 = vshrl.u32 %v9391, 16
      %v9736 = vrot.slane %v9734, 4
      %v9737 = vshll.u32 %v9391, 16
      %v9739 = vrot.slane %v9737, 5
      %v9740 = vor.u32 %v9736, %v9739
      %v9741 = vrot.slane %v9740, 4
      %v9743 = vshll.u32 %v9392, 16
      %v9745 = vrot.slane %v9743, 5
      %v9746 = vsel %vm814, %v9741, %v9745
      %v9747 = vshrl.u32 %v9392, 16
      %v9749 = vrot.slane %v9747, 4
      %v9750 = vor.u32 %v9749, %v9745
      %v9751 = vrot.slane %v9750, 4
      %v9753 = vshll.u32 %v9393, 16
      %v9755 = vrot.slane %v9753, 5
      %v9756 = vsel %vm814, %v9751, %v9755
      %v9758 = vshrl.u32 %v9394, 16
      %v9760 = vrot.slane %v9758, 4
      %v9761 = vshll.u32 %v9394, 16
      %v9763 = vrot.slane %v9761, 5
      %v9764 = vor.u32 %v9760, %v9763
      %v9765 = vrot.slane %v9764, 4
      %v9767 = vshll.u32 %v9395, 16
      %v9769 = vrot.slane %v9767, 5
      %v9770 = vsel %vm814, %v9765, %v9769
      %v9771 = vshrl.u32 %v9395, 16
      %v9773 = vrot.slane %v9771, 4
      %v9774 = vor.u32 %v9773, %v9769
      %v9775 = vrot.slane %v9774, 4
      %v9777 = vshll.u32 %v9396, 16
      %v9779 = vrot.slane %v9777, 5
      %v9780 = vsel %vm814, %v9775, %v9779
      %v9781 = vunpack.c.l.b16 %v9410
      %v9782 = vunpack.c.l.b16 %v9420
      %v9783 = vunpack.c.l.b16 %v9434
      %v9784 = vunpack.c.l.b16 %v9444
      %v9785 = vunpack.c.l.b16 %v9458
      %v9786 = vunpack.c.l.b16 %v9468
      %v9787 = vunpack.c.l.b16 %v9482
      %v9788 = vunpack.c.l.b16 %v9492
      %v9789 = vunpack.c.l.b16 %v9506
      %v9790 = vunpack.c.l.b16 %v9516
      %v9791 = vunpack.c.l.b16 %v9530
      %v9792 = vunpack.c.l.b16 %v9540
      %v9793 = vunpack.c.l.b16 %v9554
      %v9794 = vunpack.c.l.b16 %v9564
      %v9795 = vunpack.c.l.b16 %v9578
      %v9796 = vunpack.c.l.b16 %v9588
      %v9797 = vunpack.c.l.b16 %v9602
      %v9798 = vunpack.c.l.b16 %v9612
      %v9799 = vunpack.c.l.b16 %v9626
      %v9800 = vunpack.c.l.b16 %v9636
      %v9801 = vunpack.c.l.b16 %v9650
      %v9802 = vunpack.c.l.b16 %v9660
      %v9803 = vunpack.c.l.b16 %v9674
      %v9804 = vunpack.c.l.b16 %v9684
      %v9805 = vunpack.c.l.b16 %v9698
      %v9806 = vunpack.c.l.b16 %v9708
      %v9807 = vunpack.c.l.b16 %v9722
      %v9808 = vunpack.c.l.b16 %v9732
      %v9809 = vunpack.c.l.b16 %v9746
      %v9810 = vunpack.c.l.b16 %v9756
      %v9811 = vunpack.c.l.b16 %v9770
      %v9812 = vunpack.c.l.b16 %v9780
      %v9813 = vpack.c.b16 %v9782, %v9781
      %v9814 = vpack.c.b16 %v9784, %v9783
      %v9815 = vpack.c.b16 %v9786, %v9785
      %v9816 = vpack.c.b16 %v9788, %v9787
      %v9817 = vpack.c.b16 %v9790, %v9789
      %v9818 = vpack.c.b16 %v9792, %v9791
      %v9819 = vpack.c.b16 %v9794, %v9793
      %v9820 = vpack.c.b16 %v9796, %v9795
      %v9821 = vpack.c.b16 %v9798, %v9797
      %v9822 = vpack.c.b16 %v9800, %v9799
      %v9823 = vpack.c.b16 %v9802, %v9801
      %v9824 = vpack.c.b16 %v9804, %v9803
      %v9825 = vpack.c.b16 %v9806, %v9805
      %v9826 = vpack.c.b16 %v9808, %v9807
      %v9827 = vpack.c.b16 %v9810, %v9809
      %v9828 = vpack.c.b16 %v9812, %v9811
      %v9830 = vsel %vm6486, %v9813, 0
      %v9833 = vsel %vm6486, %v9814, 0
      %v9836 = vsel %vm6486, %v9815, 0
      %v9839 = vsel %vm6486, %v9816, 0
      %v9842 = vsel %vm6486, %v9817, 0
      %v9845 = vsel %vm6486, %v9818, 0
      %v9848 = vsel %vm6486, %v9819, 0
      %v9851 = vsel %vm6486, %v9820, 0
      %v9854 = vsel %vm6486, %v9821, 0
      %v9857 = vsel %vm6486, %v9822, 0
      %v9860 = vsel %vm6486, %v9823, 0
      %v9863 = vsel %vm6486, %v9824, 0
      %v9866 = vsel %vm6486, %v9825, 0
      %v9869 = vsel %vm6486, %v9826, 0
      %v9872 = vsel %vm6486, %v9827, 0
      %v9875 = vsel %vm6486, %v9828, 0
      %v9878 = vsel %vm6535, %v6004, 0
      %9880 = vmatprep.subr.bf16.mxu0 0
      %9881 = vmatpush1.bf16.msra.mxu0 %v9878
      %9882 = vmatprep.subr.bf16.mxu0 0
      %9883 = vmatpush1.bf16.msra.mxu0 0
      %9884 = vmatprep.subr.bf16.mxu0 0
      %9885 = vmatpush1.bf16.msra.mxu0 0
      %9886 = vmatprep.subr.bf16.mxu0 0
      %9887 = vmatpush1.bf16.msra.mxu0 0
      %9888 = vmatprep.subr.bf16.mxu0 0
      %9889 = vmatpush1.bf16.msra.mxu0 0
      %9890 = vmatprep.subr.bf16.mxu0 0
      %9891 = vmatpush1.bf16.msra.mxu0 0
      %9892 = vmatprep.subr.bf16.mxu0 0
      %9893 = vmatpush1.bf16.msra.mxu0 0
      %9894 = vmatprep.subr.bf16.mxu0 0
      %9895 = vmatpush1.bf16.msra.mxu0 0
      %9896 = vmatprep.subr.bf16.mxu0 0
      %9897 = vmatpush1.bf16.msra.mxu0 0
      %9898 = vmatprep.subr.bf16.mxu0 0
      %9899 = vmatpush1.bf16.msra.mxu0 0
      %9900 = vmatprep.subr.bf16.mxu0 0
      %9901 = vmatpush1.bf16.msra.mxu0 0
      %9902 = vmatprep.subr.bf16.mxu0 0
      %9903 = vmatpush1.bf16.msra.mxu0 0
      %9904 = vmatprep.subr.bf16.mxu0 0
      %9905 = vmatpush1.bf16.msra.mxu0 0
      %9906 = vmatprep.subr.bf16.mxu0 0
      %9907 = vmatpush1.bf16.msra.mxu0 0
      %9908 = vmatprep.subr.bf16.mxu0 0
      %9909 = vmatpush1.bf16.msra.mxu0 0
      %9910 = vmatprep.subr.bf16.mxu0 0
      %9911 = vmatpush1.bf16.msra.mxu0 0
      %9912 = vmatprep.mubr.bf16.mxu0 0
      %9913 = vmatmul.mubr.bf16.gmra.mrb[0].mxu0 %v9830
      %v9914 = vpop.f32.mrb[0].mxu0
      %v9915 = vadd.f32 0.0, %v9914
      %v9916 = vpop.f32.mrb[0].mxu0
      %v9917 = vpop.f32.mrb[0].mxu0
      %v9918 = vadd.f32 0.0, %v9917
      %v9919 = vpop.f32.mrb[0].mxu0
      %9920 = vmatprep.mubr.bf16.mxu0 0
      %9921 = vmatmul.mubr.bf16.gmra.mrb[0].mxu0 %v9833
      %v9922 = vpop.f32.mrb[0].mxu0
      %v9923 = vadd.f32 0.0, %v9922
      %v9924 = vpop.f32.mrb[0].mxu0
      %v9925 = vpop.f32.mrb[0].mxu0
      %v9926 = vadd.f32 0.0, %v9925
      %v9927 = vpop.f32.mrb[0].mxu0
      %9928 = vmatprep.mubr.bf16.mxu0 0
      %9929 = vmatmul.mubr.bf16.gmra.mrb[0].mxu0 %v9836
      %v9930 = vpop.f32.mrb[0].mxu0
      %v9931 = vadd.f32 0.0, %v9930
      %v9932 = vpop.f32.mrb[0].mxu0
      %v9933 = vpop.f32.mrb[0].mxu0
      %v9934 = vadd.f32 0.0, %v9933
      %v9935 = vpop.f32.mrb[0].mxu0
      %9936 = vmatprep.mubr.bf16.mxu0 0
      %9937 = vmatmul.mubr.bf16.gmra.mrb[0].mxu0 %v9839
      %v9938 = vpop.f32.mrb[0].mxu0
      %v9939 = vadd.f32 0.0, %v9938
      %v9940 = vpop.f32.mrb[0].mxu0
      %v9941 = vpop.f32.mrb[0].mxu0
      %v9942 = vadd.f32 0.0, %v9941
      %v9943 = vpop.f32.mrb[0].mxu0
      %9944 = vmatprep.mubr.bf16.mxu0 0
      %9945 = vmatmul.mubr.bf16.gmra.mrb[0].mxu0 %v9842
      %v9946 = vpop.f32.mrb[0].mxu0
      %v9947 = vadd.f32 0.0, %v9946
      %v9948 = vpop.f32.mrb[0].mxu0
      %v9949 = vpop.f32.mrb[0].mxu0
      %v9950 = vadd.f32 0.0, %v9949
      %v9951 = vpop.f32.mrb[0].mxu0
      %9952 = vmatprep.mubr.bf16.mxu0 0
      %9953 = vmatmul.mubr.bf16.gmra.mrb[0].mxu0 %v9845
      %v9954 = vpop.f32.mrb[0].mxu0
      %v9955 = vadd.f32 0.0, %v9954
      %v9956 = vpop.f32.mrb[0].mxu0
      %v9957 = vpop.f32.mrb[0].mxu0
      %v9958 = vadd.f32 0.0, %v9957
      %v9959 = vpop.f32.mrb[0].mxu0
      %9960 = vmatprep.mubr.bf16.mxu0 0
      %9961 = vmatmul.mubr.bf16.gmra.mrb[0].mxu0 %v9848
      %v9962 = vpop.f32.mrb[0].mxu0
      %v9963 = vadd.f32 0.0, %v9962
      %v9964 = vpop.f32.mrb[0].mxu0
      %v9965 = vpop.f32.mrb[0].mxu0
      %v9966 = vadd.f32 0.0, %v9965
      %v9967 = vpop.f32.mrb[0].mxu0
      %9968 = vmatprep.mubr.bf16.mxu0 0
      %9969 = vmatmul.mubr.bf16.gmra.mrb[0].mxu0 %v9851
      %v9970 = vpop.f32.mrb[0].mxu0
      %v9971 = vadd.f32 0.0, %v9970
      %v9972 = vpop.f32.mrb[0].mxu0
      %v9973 = vpop.f32.mrb[0].mxu0
      %v9974 = vadd.f32 0.0, %v9973
      %v9975 = vpop.f32.mrb[0].mxu0
      %9976 = vmatprep.mubr.bf16.mxu0 0
      %9977 = vmatmul.mubr.bf16.gmra.mrb[0].mxu0 %v9854
      %v9978 = vpop.f32.mrb[0].mxu0
      %v9979 = vadd.f32 0.0, %v9978
      %v9980 = vpop.f32.mrb[0].mxu0
      %v9981 = vpop.f32.mrb[0].mxu0
      %v9982 = vadd.f32 0.0, %v9981
      %v9983 = vpop.f32.mrb[0].mxu0
      %9984 = vmatprep.mubr.bf16.mxu0 0
      %9985 = vmatmul.mubr.bf16.gmra.mrb[0].mxu0 %v9857
      %v9986 = vpop.f32.mrb[0].mxu0
      %v9987 = vadd.f32 0.0, %v9986
      %v9988 = vpop.f32.mrb[0].mxu0
      %v9989 = vpop.f32.mrb[0].mxu0
      %v9990 = vadd.f32 0.0, %v9989
      %v9991 = vpop.f32.mrb[0].mxu0
      %9992 = vmatprep.mubr.bf16.mxu0 0
      %9993 = vmatmul.mubr.bf16.gmra.mrb[0].mxu0 %v9860
      %v9994 = vpop.f32.mrb[0].mxu0
      %v9995 = vadd.f32 0.0, %v9994
      %v9996 = vpop.f32.mrb[0].mxu0
      %v9997 = vpop.f32.mrb[0].mxu0
      %v9998 = vadd.f32 0.0, %v9997
      %v9999 = vpop.f32.mrb[0].mxu0
      %10000 = vmatprep.mubr.bf16.mxu0 0
      %10001 = vmatmul.mubr.bf16.gmra.mrb[0].mxu0 %v9863
      %v10002 = vpop.f32.mrb[0].mxu0
      %v10003 = vadd.f32 0.0, %v10002
      %v10004 = vpop.f32.mrb[0].mxu0
      %v10005 = vpop.f32.mrb[0].mxu0
      %v10006 = vadd.f32 0.0, %v10005
      %v10007 = vpop.f32.mrb[0].mxu0
      %10008 = vmatprep.mubr.bf16.mxu0 0
      %10009 = vmatmul.mubr.bf16.gmra.mrb[0].mxu0 %v9866
      %v10010 = vpop.f32.mrb[0].mxu0
      %v10011 = vadd.f32 0.0, %v10010
      %v10012 = vpop.f32.mrb[0].mxu0
      %v10013 = vpop.f32.mrb[0].mxu0
      %v10014 = vadd.f32 0.0, %v10013
      %v10015 = vpop.f32.mrb[0].mxu0
      %10016 = vmatprep.mubr.bf16.mxu0 0
      %10017 = vmatmul.mubr.bf16.gmra.mrb[0].mxu0 %v9869
      %v10018 = vpop.f32.mrb[0].mxu0
      %v10019 = vadd.f32 0.0, %v10018
      %v10020 = vpop.f32.mrb[0].mxu0
      %v10021 = vpop.f32.mrb[0].mxu0
      %v10022 = vadd.f32 0.0, %v10021
      %v10023 = vpop.f32.mrb[0].mxu0
      %10024 = vmatprep.mubr.bf16.mxu0 0
      %10025 = vmatmul.mubr.bf16.gmra.mrb[0].mxu0 %v9872
      %v10026 = vpop.f32.mrb[0].mxu0
      %v10027 = vadd.f32 0.0, %v10026
      %v10028 = vpop.f32.mrb[0].mxu0
      %v10029 = vpop.f32.mrb[0].mxu0
      %v10030 = vadd.f32 0.0, %v10029
      %v10031 = vpop.f32.mrb[0].mxu0
      %10032 = vmatprep.mubr.bf16.mxu0 0
      %10033 = vmatmul.mubr.bf16.gmra.mrb[0].mxu0 %v9875
      %v10034 = vpop.f32.mrb[0].mxu0
      %v10035 = vadd.f32 0.0, %v10034
      %v10036 = vpop.f32.mrb[0].mxu0
      %v10037 = vpop.f32.mrb[0].mxu0
      %v10038 = vadd.f32 0.0, %v10037
      %v10039 = vpop.f32.mrb[0].mxu0
      %10040 = vdwg.mxu0
      %v10041 = vadd.f32 %v9317, %v9915
      %v10042 = vadd.f32 %v9318, %v9918
      %v10043 = vadd.f32 %v9319, %v9923
      %v10044 = vadd.f32 %v9320, %v9926
      %v10045 = vadd.f32 %v9321, %v9931
      %v10046 = vadd.f32 %v9322, %v9934
      %v10047 = vadd.f32 %v9323, %v9939
      %v10048 = vadd.f32 %v9324, %v9942
      %v10049 = vadd.f32 %v9325, %v9947
      %v10050 = vadd.f32 %v9326, %v9950
      %v10051 = vadd.f32 %v9327, %v9955
      %v10052 = vadd.f32 %v9328, %v9958
      %v10053 = vadd.f32 %v9329, %v9963
      %v10054 = vadd.f32 %v9330, %v9966
      %v10055 = vadd.f32 %v9331, %v9971
      %v10056 = vadd.f32 %v9332, %v9974
      %v10057 = vadd.f32 %v9333, %v9979
      %v10058 = vadd.f32 %v9334, %v9982
      %v10059 = vadd.f32 %v9335, %v9987
      %v10060 = vadd.f32 %v9336, %v9990
      %v10061 = vadd.f32 %v9337, %v9995
      %v10062 = vadd.f32 %v9338, %v9998
      %v10063 = vadd.f32 %v9339, %v10003
      %v10064 = vadd.f32 %v9340, %v10006
      %v10065 = vadd.f32 %v9341, %v10011
      %v10066 = vadd.f32 %v9342, %v10014
      %v10067 = vadd.f32 %v9343, %v10019
      %v10068 = vadd.f32 %v9344, %v10022
      %v10069 = vadd.f32 %v9345, %v10027
      %v10070 = vadd.f32 %v9346, %v10030
      %v10071 = vadd.f32 %v9347, %v10035
      %v10072 = vadd.f32 %v9348, %v10038
      %v10073 = vld [vmem:[%s8992] sm:$0xe]
      %v10074 = vld [vmem:[%s8992 + $0xc] sm:$0xe]
      %v10075 = vld [vmem:[%s8992 + $0x18] sm:$0xe]
      %v10076 = vld [vmem:[%s8992 + $0x24] sm:$0xe]
      %v10077 = vld [vmem:[%s8992 + $0x30] sm:$0xe]
      %v10078 = vld [vmem:[%s8992 + $0x3c] sm:$0xe]
      %v10079 = vld [vmem:[%s8992 + $0x48] sm:$0xe]
      %v10080 = vld [vmem:[%s8992 + $0x54] sm:$0xe]
      %v10081 = vld [vmem:[%s8992 + $0x60] sm:$0xe]
      %v10082 = vld [vmem:[%s8992 + $0x6c] sm:$0xe]
      %v10083 = vld [vmem:[%s8992 + $0x78] sm:$0xe]
      %v10084 = vld [vmem:[%s8992 + $0x84] sm:$0xe]
      %v10085 = vld [vmem:[%s8992 + $0x90] sm:$0xe]
      %v10086 = vld [vmem:[%s8992 + $0x9c] sm:$0xe]
      %v10087 = vld [vmem:[%s8992 + $0xa8] sm:$0xe]
      %v10088 = vld [vmem:[%s8992 + $0xb4] sm:$0xe]
      %v10137 = vrot.slane %v10073, 5
      %v10138 = vrot.slane %v10137, 4
      %v10139 = vrot.slane %v9350, 5
      %v10140 = vsel %vm1803, %v10138, %v10139
      %v10141 = vrot.slane %v10139, 4
      %v10142 = vrot.slane %v9351, 5
      %v10143 = vsel %vm1803, %v10141, %v10142
      %v10144 = vrot.slane %v10074, 5
      %v10145 = vrot.slane %v10144, 4
      %v10146 = vrot.slane %v9353, 5
      %v10147 = vsel %vm1803, %v10145, %v10146
      %v10148 = vrot.slane %v10146, 4
      %v10149 = vrot.slane %v9354, 5
      %v10150 = vsel %vm1803, %v10148, %v10149
      %v10151 = vrot.slane %v10075, 5
      %v10152 = vrot.slane %v10151, 4
      %v10153 = vrot.slane %v9356, 5
      %v10154 = vsel %vm1803, %v10152, %v10153
      %v10155 = vrot.slane %v10153, 4
      %v10156 = vrot.slane %v9357, 5
      %v10157 = vsel %vm1803, %v10155, %v10156
      %v10158 = vrot.slane %v10076, 5
      %v10159 = vrot.slane %v10158, 4
      %v10160 = vrot.slane %v9359, 5
      %v10161 = vsel %vm1803, %v10159, %v10160
      %v10162 = vrot.slane %v10160, 4
      %v10163 = vrot.slane %v9360, 5
      %v10164 = vsel %vm1803, %v10162, %v10163
      %v10165 = vrot.slane %v10077, 5
      %v10166 = vrot.slane %v10165, 4
      %v10167 = vrot.slane %v9362, 5
      %v10168 = vsel %vm1803, %v10166, %v10167
      %v10169 = vrot.slane %v10167, 4
      %v10170 = vrot.slane %v9363, 5
      %v10171 = vsel %vm1803, %v10169, %v10170
      %v10172 = vrot.slane %v10078, 5
      %v10173 = vrot.slane %v10172, 4
      %v10174 = vrot.slane %v9365, 5
      %v10175 = vsel %vm1803, %v10173, %v10174
      %v10176 = vrot.slane %v10174, 4
      %v10177 = vrot.slane %v9366, 5
      %v10178 = vsel %vm1803, %v10176, %v10177
      %v10179 = vrot.slane %v10079, 5
      %v10180 = vrot.slane %v10179, 4
      %v10181 = vrot.slane %v9368, 5
      %v10182 = vsel %vm1803, %v10180, %v10181
      %v10183 = vrot.slane %v10181, 4
      %v10184 = vrot.slane %v9369, 5
      %v10185 = vsel %vm1803, %v10183, %v10184
      %v10186 = vrot.slane %v10080, 5
      %v10187 = vrot.slane %v10186, 4
      %v10188 = vrot.slane %v9371, 5
      %v10189 = vsel %vm1803, %v10187, %v10188
      %v10190 = vrot.slane %v10188, 4
      %v10191 = vrot.slane %v9372, 5
      %v10192 = vsel %vm1803, %v10190, %v10191
      %v10193 = vrot.slane %v10081, 5
      %v10194 = vrot.slane %v10193, 4
      %v10195 = vrot.slane %v9374, 5
      %v10196 = vsel %vm1803, %v10194, %v10195
      %v10197 = vrot.slane %v10195, 4
      %v10198 = vrot.slane %v9375, 5
      %v10199 = vsel %vm1803, %v10197, %v10198
      %v10200 = vrot.slane %v10082, 5
      %v10201 = vrot.slane %v10200, 4
      %v10202 = vrot.slane %v9377, 5
      %v10203 = vsel %vm1803, %v10201, %v10202
      %v10204 = vrot.slane %v10202, 4
      %v10205 = vrot.slane %v9378, 5
      %v10206 = vsel %vm1803, %v10204, %v10205
      %v10207 = vrot.slane %v10083, 5
      %v10208 = vrot.slane %v10207, 4
      %v10209 = vrot.slane %v9380, 5
      %v10210 = vsel %vm1803, %v10208, %v10209
      %v10211 = vrot.slane %v10209, 4
      %v10212 = vrot.slane %v9381, 5
      %v10213 = vsel %vm1803, %v10211, %v10212
      %v10214 = vrot.slane %v10084, 5
      %v10215 = vrot.slane %v10214, 4
      %v10216 = vrot.slane %v9383, 5
      %v10217 = vsel %vm1803, %v10215, %v10216
      %v10218 = vrot.slane %v10216, 4
      %v10219 = vrot.slane %v9384, 5
      %v10220 = vsel %vm1803, %v10218, %v10219
      %v10221 = vrot.slane %v10085, 5
      %v10222 = vrot.slane %v10221, 4
      %v10223 = vrot.slane %v9386, 5
      %v10224 = vsel %vm1803, %v10222, %v10223
      %v10225 = vrot.slane %v10223, 4
      %v10226 = vrot.slane %v9387, 5
      %v10227 = vsel %vm1803, %v10225, %v10226
      %v10228 = vrot.slane %v10086, 5
      %v10229 = vrot.slane %v10228, 4
      %v10230 = vrot.slane %v9389, 5
      %v10231 = vsel %vm1803, %v10229, %v10230
      %v10232 = vrot.slane %v10230, 4
      %v10233 = vrot.slane %v9390, 5
      %v10234 = vsel %vm1803, %v10232, %v10233
      %v10235 = vrot.slane %v10087, 5
      %v10236 = vrot.slane %v10235, 4
      %v10237 = vrot.slane %v9392, 5
      %v10238 = vsel %vm1803, %v10236, %v10237
      %v10239 = vrot.slane %v10237, 4
      %v10240 = vrot.slane %v9393, 5
      %v10241 = vsel %vm1803, %v10239, %v10240
      %v10242 = vrot.slane %v10088, 5
      %v10243 = vrot.slane %v10242, 4
      %v10244 = vrot.slane %v9395, 5
      %v10245 = vsel %vm1803, %v10243, %v10244
      %v10246 = vrot.slane %v10244, 4
      %v10247 = vrot.slane %v9396, 5
      %v10248 = vsel %vm1803, %v10246, %v10247
      %v10249 = vunpack.c.l.b16 %v10140
      %v10250 = vunpack.c.l.b16 %v10143
      %v10251 = vunpack.c.l.b16 %v10147
      %v10252 = vunpack.c.l.b16 %v10150
      %v10253 = vunpack.c.l.b16 %v10154
      %v10254 = vunpack.c.l.b16 %v10157
      %v10255 = vunpack.c.l.b16 %v10161
      %v10256 = vunpack.c.l.b16 %v10164
      %v10257 = vunpack.c.l.b16 %v10168
      %v10258 = vunpack.c.l.b16 %v10171
      %v10259 = vunpack.c.l.b16 %v10175
      %v10260 = vunpack.c.l.b16 %v10178
      %v10261 = vunpack.c.l.b16 %v10182
      %v10262 = vunpack.c.l.b16 %v10185
      %v10263 = vunpack.c.l.b16 %v10189
      %v10264 = vunpack.c.l.b16 %v10192
      %v10265 = vunpack.c.l.b16 %v10196
      %v10266 = vunpack.c.l.b16 %v10199
      %v10267 = vunpack.c.l.b16 %v10203
      %v10268 = vunpack.c.l.b16 %v10206
      %v10269 = vunpack.c.l.b16 %v10210
      %v10270 = vunpack.c.l.b16 %v10213
      %v10271 = vunpack.c.l.b16 %v10217
      %v10272 = vunpack.c.l.b16 %v10220
      %v10273 = vunpack.c.l.b16 %v10224
      %v10274 = vunpack.c.l.b16 %v10227
      %v10275 = vunpack.c.l.b16 %v10231
      %v10276 = vunpack.c.l.b16 %v10234
      %v10277 = vunpack.c.l.b16 %v10238
      %v10278 = vunpack.c.l.b16 %v10241
      %v10279 = vunpack.c.l.b16 %v10245
      %v10280 = vunpack.c.l.b16 %v10248
      %v10281 = vpack.c.b16 %v10250, %v10249
      %v10282 = vpack.c.b16 %v10252, %v10251
      %v10283 = vpack.c.b16 %v10254, %v10253
      %v10284 = vpack.c.b16 %v10256, %v10255
      %v10285 = vpack.c.b16 %v10258, %v10257
      %v10286 = vpack.c.b16 %v10260, %v10259
      %v10287 = vpack.c.b16 %v10262, %v10261
      %v10288 = vpack.c.b16 %v10264, %v10263
      %v10289 = vpack.c.b16 %v10266, %v10265
      %v10290 = vpack.c.b16 %v10268, %v10267
      %v10291 = vpack.c.b16 %v10270, %v10269
      %v10292 = vpack.c.b16 %v10272, %v10271
      %v10293 = vpack.c.b16 %v10274, %v10273
      %v10294 = vpack.c.b16 %v10276, %v10275
      %v10295 = vpack.c.b16 %v10278, %v10277
      %v10296 = vpack.c.b16 %v10280, %v10279
      %v10298 = vsel %vm6486, %v10281, 0
      %v10301 = vsel %vm6486, %v10282, 0
      %v10304 = vsel %vm6486, %v10283, 0
      %v10307 = vsel %vm6486, %v10284, 0
      %v10310 = vsel %vm6486, %v10285, 0
      %v10313 = vsel %vm6486, %v10286, 0
      %v10316 = vsel %vm6486, %v10287, 0
      %v10319 = vsel %vm6486, %v10288, 0
      %v10322 = vsel %vm6486, %v10289, 0
      %v10325 = vsel %vm6486, %v10290, 0
      %v10328 = vsel %vm6486, %v10291, 0
      %v10331 = vsel %vm6486, %v10292, 0
      %v10334 = vsel %vm6486, %v10293, 0
      %v10337 = vsel %vm6486, %v10294, 0
      %v10340 = vsel %vm6486, %v10295, 0
      %v10343 = vsel %vm6486, %v10296, 0
      %v10346 = vsel %vm6535, %v6005, 0
      %10348 = vmatprep.subr.bf16.mxu0 0
      %10349 = vmatpush1.bf16.msra.mxu0 %v10346
      %10350 = vmatprep.subr.bf16.mxu0 0
      %10351 = vmatpush1.bf16.msra.mxu0 0
      %10352 = vmatprep.subr.bf16.mxu0 0
      %10353 = vmatpush1.bf16.msra.mxu0 0
      %10354 = vmatprep.subr.bf16.mxu0 0
      %10355 = vmatpush1.bf16.msra.mxu0 0
      %10356 = vmatprep.subr.bf16.mxu0 0
      %10357 = vmatpush1.bf16.msra.mxu0 0
      %10358 = vmatprep.subr.bf16.mxu0 0
      %10359 = vmatpush1.bf16.msra.mxu0 0
      %10360 = vmatprep.subr.bf16.mxu0 0
      %10361 = vmatpush1.bf16.msra.mxu0 0
      %10362 = vmatprep.subr.bf16.mxu0 0
      %10363 = vmatpush1.bf16.msra.mxu0 0
      %10364 = vmatprep.subr.bf16.mxu0 0
      %10365 = vmatpush1.bf16.msra.mxu0 0
      %10366 = vmatprep.subr.bf16.mxu0 0
      %10367 = vmatpush1.bf16.msra.mxu0 0
      %10368 = vmatprep.subr.bf16.mxu0 0
      %10369 = vmatpush1.bf16.msra.mxu0 0
      %10370 = vmatprep.subr.bf16.mxu0 0
      %10371 = vmatpush1.bf16.msra.mxu0 0
      %10372 = vmatprep.subr.bf16.mxu0 0
      %10373 = vmatpush1.bf16.msra.mxu0 0
      %10374 = vmatprep.subr.bf16.mxu0 0
      %10375 = vmatpush1.bf16.msra.mxu0 0
      %10376 = vmatprep.subr.bf16.mxu0 0
      %10377 = vmatpush1.bf16.msra.mxu0 0
      %10378 = vmatprep.subr.bf16.mxu0 0
      %10379 = vmatpush1.bf16.msra.mxu0 0
      %10380 = vmatprep.mubr.bf16.mxu0 0
      %10381 = vmatmul.mubr.bf16.gmra.mrb[0].mxu0 %v10298
      %v10382 = vpop.f32.mrb[0].mxu0
      %v10383 = vadd.f32 0.0, %v10382
      %v10384 = vpop.f32.mrb[0].mxu0
      %v10385 = vpop.f32.mrb[0].mxu0
      %v10386 = vadd.f32 0.0, %v10385
      %v10387 = vpop.f32.mrb[0].mxu0
      %10388 = vmatprep.mubr.bf16.mxu0 0
      %10389 = vmatmul.mubr.bf16.gmra.mrb[0].mxu0 %v10301
      %v10390 = vpop.f32.mrb[0].mxu0
      %v10391 = vadd.f32 0.0, %v10390
      %v10392 = vpop.f32.mrb[0].mxu0
      %v10393 = vpop.f32.mrb[0].mxu0
      %v10394 = vadd.f32 0.0, %v10393
      %v10395 = vpop.f32.mrb[0].mxu0
      %10396 = vmatprep.mubr.bf16.mxu0 0
      %10397 = vmatmul.mubr.bf16.gmra.mrb[0].mxu0 %v10304
      %v10398 = vpop.f32.mrb[0].mxu0
      %v10399 = vadd.f32 0.0, %v10398
      %v10400 = vpop.f32.mrb[0].mxu0
      %v10401 = vpop.f32.mrb[0].mxu0
      %v10402 = vadd.f32 0.0, %v10401
      %v10403 = vpop.f32.mrb[0].mxu0
      %10404 = vmatprep.mubr.bf16.mxu0 0
      %10405 = vmatmul.mubr.bf16.gmra.mrb[0].mxu0 %v10307
      %v10406 = vpop.f32.mrb[0].mxu0
      %v10407 = vadd.f32 0.0, %v10406
      %v10408 = vpop.f32.mrb[0].mxu0
      %v10409 = vpop.f32.mrb[0].mxu0
      %v10410 = vadd.f32 0.0, %v10409
      %v10411 = vpop.f32.mrb[0].mxu0
      %10412 = vmatprep.mubr.bf16.mxu0 0
      %10413 = vmatmul.mubr.bf16.gmra.mrb[0].mxu0 %v10310
      %v10414 = vpop.f32.mrb[0].mxu0
      %v10415 = vadd.f32 0.0, %v10414
      %v10416 = vpop.f32.mrb[0].mxu0
      %v10417 = vpop.f32.mrb[0].mxu0
      %v10418 = vadd.f32 0.0, %v10417
      %v10419 = vpop.f32.mrb[0].mxu0
      %10420 = vmatprep.mubr.bf16.mxu0 0
      %10421 = vmatmul.mubr.bf16.gmra.mrb[0].mxu0 %v10313
      %v10422 = vpop.f32.mrb[0].mxu0
      %v10423 = vadd.f32 0.0, %v10422
      %v10424 = vpop.f32.mrb[0].mxu0
      %v10425 = vpop.f32.mrb[0].mxu0
      %v10426 = vadd.f32 0.0, %v10425
      %v10427 = vpop.f32.mrb[0].mxu0
      %10428 = vmatprep.mubr.bf16.mxu0 0
      %10429 = vmatmul.mubr.bf16.gmra.mrb[0].mxu0 %v10316
      %v10430 = vpop.f32.mrb[0].mxu0
      %v10431 = vadd.f32 0.0, %v10430
      %v10432 = vpop.f32.mrb[0].mxu0
      %v10433 = vpop.f32.mrb[0].mxu0
      %v10434 = vadd.f32 0.0, %v10433
      %v10435 = vpop.f32.mrb[0].mxu0
      %10436 = vmatprep.mubr.bf16.mxu0 0
      %10437 = vmatmul.mubr.bf16.gmra.mrb[0].mxu0 %v10319
      %v10438 = vpop.f32.mrb[0].mxu0
      %v10439 = vadd.f32 0.0, %v10438
      %v10440 = vpop.f32.mrb[0].mxu0
      %v10441 = vpop.f32.mrb[0].mxu0
      %v10442 = vadd.f32 0.0, %v10441
      %v10443 = vpop.f32.mrb[0].mxu0
      %10444 = vmatprep.mubr.bf16.mxu0 0
      %10445 = vmatmul.mubr.bf16.gmra.mrb[0].mxu0 %v10322
      %v10446 = vpop.f32.mrb[0].mxu0
      %v10447 = vadd.f32 0.0, %v10446
      %v10448 = vpop.f32.mrb[0].mxu0
      %v10449 = vpop.f32.mrb[0].mxu0
      %v10450 = vadd.f32 0.0, %v10449
      %v10451 = vpop.f32.mrb[0].mxu0
      %10452 = vmatprep.mubr.bf16.mxu0 0
      %10453 = vmatmul.mubr.bf16.gmra.mrb[0].mxu0 %v10325
      %v10454 = vpop.f32.mrb[0].mxu0
      %v10455 = vadd.f32 0.0, %v10454
      %v10456 = vpop.f32.mrb[0].mxu0
      %v10457 = vpop.f32.mrb[0].mxu0
      %v10458 = vadd.f32 0.0, %v10457
      %v10459 = vpop.f32.mrb[0].mxu0
      %10460 = vmatprep.mubr.bf16.mxu0 0
      %10461 = vmatmul.mubr.bf16.gmra.mrb[0].mxu0 %v10328
      %v10462 = vpop.f32.mrb[0].mxu0
      %v10463 = vadd.f32 0.0, %v10462
      %v10464 = vpop.f32.mrb[0].mxu0
      %v10465 = vpop.f32.mrb[0].mxu0
      %v10466 = vadd.f32 0.0, %v10465
      %v10467 = vpop.f32.mrb[0].mxu0
      %10468 = vmatprep.mubr.bf16.mxu0 0
      %10469 = vmatmul.mubr.bf16.gmra.mrb[0].mxu0 %v10331
      %v10470 = vpop.f32.mrb[0].mxu0
      %v10471 = vadd.f32 0.0, %v10470
      %v10472 = vpop.f32.mrb[0].mxu0
      %v10473 = vpop.f32.mrb[0].mxu0
      %v10474 = vadd.f32 0.0, %v10473
      %v10475 = vpop.f32.mrb[0].mxu0
      %10476 = vmatprep.mubr.bf16.mxu0 0
      %10477 = vmatmul.mubr.bf16.gmra.mrb[0].mxu0 %v10334
      %v10478 = vpop.f32.mrb[0].mxu0
      %v10479 = vadd.f32 0.0, %v10478
      %v10480 = vpop.f32.mrb[0].mxu0
      %v10481 = vpop.f32.mrb[0].mxu0
      %v10482 = vadd.f32 0.0, %v10481
      %v10483 = vpop.f32.mrb[0].mxu0
      %10484 = vmatprep.mubr.bf16.mxu0 0
      %10485 = vmatmul.mubr.bf16.gmra.mrb[0].mxu0 %v10337
      %v10486 = vpop.f32.mrb[0].mxu0
      %v10487 = vadd.f32 0.0, %v10486
      %v10488 = vpop.f32.mrb[0].mxu0
      %v10489 = vpop.f32.mrb[0].mxu0
      %v10490 = vadd.f32 0.0, %v10489
      %v10491 = vpop.f32.mrb[0].mxu0
      %10492 = vmatprep.mubr.bf16.mxu0 0
      %10493 = vmatmul.mubr.bf16.gmra.mrb[0].mxu0 %v10340
      %v10494 = vpop.f32.mrb[0].mxu0
      %v10495 = vadd.f32 0.0, %v10494
      %v10496 = vpop.f32.mrb[0].mxu0
      %v10497 = vpop.f32.mrb[0].mxu0
      %v10498 = vadd.f32 0.0, %v10497
      %v10499 = vpop.f32.mrb[0].mxu0
      %10500 = vmatprep.mubr.bf16.mxu0 0
      %10501 = vmatmul.mubr.bf16.gmra.mrb[0].mxu0 %v10343
      %v10502 = vpop.f32.mrb[0].mxu0
      %v10503 = vadd.f32 0.0, %v10502
      %v10504 = vpop.f32.mrb[0].mxu0
      %v10505 = vpop.f32.mrb[0].mxu0
      %v10506 = vadd.f32 0.0, %v10505
      %v10507 = vpop.f32.mrb[0].mxu0
      %10508 = vdwg.mxu0
      %v10509 = vadd.f32 %v10041, %v10383
      %v10510 = vadd.f32 %v10042, %v10386
      %v10511 = vadd.f32 %v10043, %v10391
      %v10512 = vadd.f32 %v10044, %v10394
      %v10513 = vadd.f32 %v10045, %v10399
      %v10514 = vadd.f32 %v10046, %v10402
      %v10515 = vadd.f32 %v10047, %v10407
      %v10516 = vadd.f32 %v10048, %v10410
      %v10517 = vadd.f32 %v10049, %v10415
      %v10518 = vadd.f32 %v10050, %v10418
      %v10519 = vadd.f32 %v10051, %v10423
      %v10520 = vadd.f32 %v10052, %v10426
      %v10521 = vadd.f32 %v10053, %v10431
      %v10522 = vadd.f32 %v10054, %v10434
      %v10523 = vadd.f32 %v10055, %v10439
      %v10524 = vadd.f32 %v10056, %v10442
      %v10525 = vadd.f32 %v10057, %v10447
      %v10526 = vadd.f32 %v10058, %v10450
      %v10527 = vadd.f32 %v10059, %v10455
      %v10528 = vadd.f32 %v10060, %v10458
      %v10529 = vadd.f32 %v10061, %v10463
      %v10530 = vadd.f32 %v10062, %v10466
      %v10531 = vadd.f32 %v10063, %v10471
      %v10532 = vadd.f32 %v10064, %v10474
      %v10533 = vadd.f32 %v10065, %v10479
      %v10534 = vadd.f32 %v10066, %v10482
      %v10535 = vadd.f32 %v10067, %v10487
      %v10536 = vadd.f32 %v10068, %v10490
      %v10537 = vadd.f32 %v10069, %v10495
      %v10538 = vadd.f32 %v10070, %v10498
      %v10539 = vadd.f32 %v10071, %v10503
      %v10540 = vadd.f32 %v10072, %v10506
      %v10541 = vld [vmem:[%s4] sm:$0x1]
      %v10543 = vlaneseq
      %v10544 = vshrl.u32 %v10543, 7
      %v10545 = vsub.s32 0, %v10544
      %v10546 = vrot.slane %v10541, %v10545
      %v10548 = vadd.f32 %v10509, %v10546
      %v10549 = vadd.f32 %v10510, %v10546
      %v10550 = vadd.f32 %v10511, %v10546
      %v10551 = vadd.f32 %v10512, %v10546
      %v10552 = vadd.f32 %v10513, %v10546
      %v10553 = vadd.f32 %v10514, %v10546
      %v10554 = vadd.f32 %v10515, %v10546
      %v10555 = vadd.f32 %v10516, %v10546
      %v10556 = vadd.f32 %v10517, %v10546
      %v10557 = vadd.f32 %v10518, %v10546
      %v10558 = vadd.f32 %v10519, %v10546
      %v10559 = vadd.f32 %v10520, %v10546
      %v10560 = vadd.f32 %v10521, %v10546
      %v10561 = vadd.f32 %v10522, %v10546
      %v10562 = vadd.f32 %v10523, %v10546
      %v10563 = vadd.f32 %v10524, %v10546
      %v10564 = vadd.f32 %v10525, %v10546
      %v10565 = vadd.f32 %v10526, %v10546
      %v10566 = vadd.f32 %v10527, %v10546
      %v10567 = vadd.f32 %v10528, %v10546
      %v10568 = vadd.f32 %v10529, %v10546
      %v10569 = vadd.f32 %v10530, %v10546
      %v10570 = vadd.f32 %v10531, %v10546
      %v10571 = vadd.f32 %v10532, %v10546
      %v10572 = vadd.f32 %v10533, %v10546
      %v10573 = vadd.f32 %v10534, %v10546
      %v10574 = vadd.f32 %v10535, %v10546
      %v10575 = vadd.f32 %v10536, %v10546
      %v10576 = vadd.f32 %v10537, %v10546
      %v10577 = vadd.f32 %v10538, %v10546
      %v10578 = vadd.f32 %v10539, %v10546
      %v10579 = vadd.f32 %v10540, %v10546
      %v10580 = vmax.f32 %v10548, 0.0
      %v10581 = vmax.f32 %v10549, 0.0
      %v10582 = vmax.f32 %v10550, 0.0
      %v10583 = vmax.f32 %v10551, 0.0
      %v10584 = vmax.f32 %v10552, 0.0
      %v10585 = vmax.f32 %v10553, 0.0
      %v10586 = vmax.f32 %v10554, 0.0
      %v10587 = vmax.f32 %v10555, 0.0
      %v10588 = vmax.f32 %v10556, 0.0
      %v10589 = vmax.f32 %v10557, 0.0
      %v10590 = vmax.f32 %v10558, 0.0
      %v10591 = vmax.f32 %v10559, 0.0
      %v10592 = vmax.f32 %v10560, 0.0
      %v10593 = vmax.f32 %v10561, 0.0
      %v10594 = vmax.f32 %v10562, 0.0
      %v10595 = vmax.f32 %v10563, 0.0
      %v10596 = vmax.f32 %v10564, 0.0
      %v10597 = vmax.f32 %v10565, 0.0
      %v10598 = vmax.f32 %v10566, 0.0
      %v10599 = vmax.f32 %v10567, 0.0
      %v10600 = vmax.f32 %v10568, 0.0
      %v10601 = vmax.f32 %v10569, 0.0
      %v10602 = vmax.f32 %v10570, 0.0
      %v10603 = vmax.f32 %v10571, 0.0
      %v10604 = vmax.f32 %v10572, 0.0
      %v10605 = vmax.f32 %v10573, 0.0
      %v10606 = vmax.f32 %v10574, 0.0
      %v10607 = vmax.f32 %v10575, 0.0
      %v10608 = vmax.f32 %v10576, 0.0
      %v10609 = vmax.f32 %v10577, 0.0
      %v10610 = vmax.f32 %v10578, 0.0
      %v10611 = vmax.f32 %v10579, 0.0
      %v10612 = vmin.f32 %v10580, 6.0
      %v10613 = vmin.f32 %v10581, 6.0
      %v10614 = vmin.f32 %v10582, 6.0
      %v10615 = vmin.f32 %v10583, 6.0
      %v10616 = vmin.f32 %v10584, 6.0
      %v10617 = vmin.f32 %v10585, 6.0
      %v10618 = vmin.f32 %v10586, 6.0
      %v10619 = vmin.f32 %v10587, 6.0
      %v10620 = vmin.f32 %v10588, 6.0
      %v10621 = vmin.f32 %v10589, 6.0
      %v10622 = vmin.f32 %v10590, 6.0
      %v10623 = vmin.f32 %v10591, 6.0
      %v10624 = vmin.f32 %v10592, 6.0
      %v10625 = vmin.f32 %v10593, 6.0
      %v10626 = vmin.f32 %v10594, 6.0
      %v10627 = vmin.f32 %v10595, 6.0
      %v10628 = vmin.f32 %v10596, 6.0
      %v10629 = vmin.f32 %v10597, 6.0
      %v10630 = vmin.f32 %v10598, 6.0
      %v10631 = vmin.f32 %v10599, 6.0
      %v10632 = vmin.f32 %v10600, 6.0
      %v10633 = vmin.f32 %v10601, 6.0
      %v10634 = vmin.f32 %v10602, 6.0
      %v10635 = vmin.f32 %v10603, 6.0
      %v10636 = vmin.f32 %v10604, 6.0
      %v10637 = vmin.f32 %v10605, 6.0
      %v10638 = vmin.f32 %v10606, 6.0
      %v10639 = vmin.f32 %v10607, 6.0
      %v10640 = vmin.f32 %v10608, 6.0
      %v10641 = vmin.f32 %v10609, 6.0
      %v10642 = vmin.f32 %v10610, 6.0
      %v10643 = vmin.f32 %v10611, 6.0
      %v10644 = vpack.c.bf16 %v10613, %v10612
      %v10645 = vpack.c.bf16 %v10615, %v10614
      %v10646 = vpack.c.bf16 %v10617, %v10616
      %v10647 = vpack.c.bf16 %v10619, %v10618
      %v10648 = vpack.c.bf16 %v10621, %v10620
      %v10649 = vpack.c.bf16 %v10623, %v10622
      %v10650 = vpack.c.bf16 %v10625, %v10624
      %v10651 = vpack.c.bf16 %v10627, %v10626
      %v10652 = vpack.c.bf16 %v10629, %v10628
      %v10653 = vpack.c.bf16 %v10631, %v10630
      %v10654 = vpack.c.bf16 %v10633, %v10632
      %v10655 = vpack.c.bf16 %v10635, %v10634
      %v10656 = vpack.c.bf16 %v10637, %v10636
      %v10657 = vpack.c.bf16 %v10639, %v10638
      %v10658 = vpack.c.bf16 %v10641, %v10640
      %v10659 = vpack.c.bf16 %v10643, %v10642
      %v10676 = vunpack.c.l.b16 %v10644
      %v10677 = vunpack.c.h.b16 %v10644
      %v10678 = vunpack.c.l.b16 %v10645
      %v10679 = vunpack.c.h.b16 %v10645
      %v10680 = vunpack.c.l.b16 %v10646
      %v10681 = vunpack.c.h.b16 %v10646
      %v10682 = vunpack.c.l.b16 %v10647
      %v10683 = vunpack.c.h.b16 %v10647
      %v10684 = vunpack.c.l.b16 %v10648
      %v10685 = vunpack.c.h.b16 %v10648
      %v10686 = vunpack.c.l.b16 %v10649
      %v10687 = vunpack.c.h.b16 %v10649
      %v10688 = vunpack.c.l.b16 %v10650
      %v10689 = vunpack.c.h.b16 %v10650
      %v10690 = vunpack.c.l.b16 %v10651
      %v10691 = vunpack.c.h.b16 %v10651
      %v10692 = vunpack.c.l.b16 %v10652
      %v10693 = vunpack.c.h.b16 %v10652
      %v10694 = vunpack.c.l.b16 %v10653
      %v10695 = vunpack.c.h.b16 %v10653
      %v10696 = vunpack.c.l.b16 %v10654
      %v10697 = vunpack.c.h.b16 %v10654
      %v10698 = vunpack.c.l.b16 %v10655
      %v10699 = vunpack.c.h.b16 %v10655
      %v10700 = vunpack.c.l.b16 %v10656
      %v10701 = vunpack.c.h.b16 %v10656
      %v10702 = vunpack.c.l.b16 %v10657
      %v10703 = vunpack.c.h.b16 %v10657
      %v10704 = vunpack.c.l.b16 %v10658
      %v10705 = vunpack.c.h.b16 %v10658
      %v10706 = vunpack.c.l.b16 %v10659
      %v10707 = vunpack.c.h.b16 %v10659
      %v10708 = vpack.c.b16 %v10676, %v10676
      %v10709 = vpack.c.b16 %v10677, %v10677
      %v10710 = vpack.c.b16 %v10678, %v10678
      %v10711 = vpack.c.b16 %v10679, %v10679
      %v10712 = vpack.c.b16 %v10680, %v10680
      %v10713 = vpack.c.b16 %v10681, %v10681
      %v10714 = vpack.c.b16 %v10682, %v10682
      %v10715 = vpack.c.b16 %v10683, %v10683
      %v10716 = vpack.c.b16 %v10684, %v10684
      %v10717 = vpack.c.b16 %v10685, %v10685
      %v10718 = vpack.c.b16 %v10686, %v10686
      %v10719 = vpack.c.b16 %v10687, %v10687
      %v10720 = vpack.c.b16 %v10688, %v10688
      %v10721 = vpack.c.b16 %v10689, %v10689
      %v10722 = vpack.c.b16 %v10690, %v10690
      %v10723 = vpack.c.b16 %v10691, %v10691
      %v10724 = vpack.c.b16 %v10692, %v10692
      %v10725 = vpack.c.b16 %v10693, %v10693
      %v10726 = vpack.c.b16 %v10694, %v10694
      %v10727 = vpack.c.b16 %v10695, %v10695
      %v10728 = vpack.c.b16 %v10696, %v10696
      %v10729 = vpack.c.b16 %v10697, %v10697
      %v10730 = vpack.c.b16 %v10698, %v10698
      %v10731 = vpack.c.b16 %v10699, %v10699
      %v10732 = vpack.c.b16 %v10700, %v10700
      %v10733 = vpack.c.b16 %v10701, %v10701
      %v10734 = vpack.c.b16 %v10702, %v10702
      %v10735 = vpack.c.b16 %v10703, %v10703
      %v10736 = vpack.c.b16 %v10704, %v10704
      %v10737 = vpack.c.b16 %v10705, %v10705
      %v10738 = vpack.c.b16 %v10706, %v10706
      %v10739 = vpack.c.b16 %v10707, %v10707
      %10772 = vst.msk [vmem:[%s224] sm:$0xf] %vm258, %v10708
      %10773 = vst.msk [vmem:[%s224 + $0x4] sm:$0xf] %vm258, %v10709
      %10774 = vst.msk [vmem:[%s224 + $0x8] sm:$0xf] %vm258, %v10710
      %10775 = vst.msk [vmem:[%s224 + $0xc] sm:$0xf] %vm258, %v10711
      %10776 = vst.msk [vmem:[%s224 + $0x10] sm:$0xf] %vm258, %v10712
      %10777 = vst.msk [vmem:[%s224 + $0x14] sm:$0xf] %vm258, %v10713
      %10778 = vst.msk [vmem:[%s224 + $0x18] sm:$0xf] %vm258, %v10714
      %10779 = vst.msk [vmem:[%s224 + $0x1c] sm:$0xf] %vm258, %v10715
      %10780 = vst.msk [vmem:[%s224 + $0x20] sm:$0xf] %vm258, %v10716
      %10781 = vst.msk [vmem:[%s224 + $0x24] sm:$0xf] %vm258, %v10717
      %10782 = vst.msk [vmem:[%s224 + $0x28] sm:$0xf] %vm258, %v10718
      %10783 = vst.msk [vmem:[%s224 + $0x2c] sm:$0xf] %vm258, %v10719
      %10784 = vst.msk [vmem:[%s224 + $0x30] sm:$0xf] %vm258, %v10720
      %10785 = vst.msk [vmem:[%s224 + $0x34] sm:$0xf] %vm258, %v10721
      %10786 = vst.msk [vmem:[%s224 + $0x38] sm:$0xf] %vm258, %v10722
      %10787 = vst.msk [vmem:[%s224 + $0x3c] sm:$0xf] %vm258, %v10723
      %10788 = vst.msk [vmem:[%s224 + $0x40] sm:$0xf] %vm258, %v10724
      %10789 = vst.msk [vmem:[%s224 + $0x44] sm:$0xf] %vm258, %v10725
      %10790 = vst.msk [vmem:[%s224 + $0x48] sm:$0xf] %vm258, %v10726
      %10791 = vst.msk [vmem:[%s224 + $0x4c] sm:$0xf] %vm258, %v10727
      %10792 = vst.msk [vmem:[%s224 + $0x50] sm:$0xf] %vm258, %v10728
      %10793 = vst.msk [vmem:[%s224 + $0x54] sm:$0xf] %vm258, %v10729
      %10794 = vst.msk [vmem:[%s224 + $0x58] sm:$0xf] %vm258, %v10730
      %10795 = vst.msk [vmem:[%s224 + $0x5c] sm:$0xf] %vm258, %v10731
      %10796 = vst.msk [vmem:[%s224 + $0x60] sm:$0xf] %vm258, %v10732
      %10797 = vst.msk [vmem:[%s224 + $0x64] sm:$0xf] %vm258, %v10733
      %10798 = vst.msk [vmem:[%s224 + $0x68] sm:$0xf] %vm258, %v10734
      %10799 = vst.msk [vmem:[%s224 + $0x6c] sm:$0xf] %vm258, %v10735
      %10800 = vst.msk [vmem:[%s224 + $0x70] sm:$0xf] %vm258, %v10736
      %10801 = vst.msk [vmem:[%s224 + $0x74] sm:$0xf] %vm258, %v10737
      %10802 = vst.msk [vmem:[%s224 + $0x78] sm:$0xf] %vm258, %v10738
      %10803 = vst.msk [vmem:[%s224 + $0x7c] sm:$0xf] %vm258, %v10739
      %p10804 = scmp.lt.s32.totalorder %s16, 1
      %s10805 = scalar_select %p10804, %s16, 1
      %s10806 = smul.addr %s10805, 32
      %s10807 = smul.addr %s10806, 4
      %s10808 = scalar_lea.vmem %s5, %s10807
      // Predicated region
      $region41: #{bottleneck.1} parent=39 // pred_check
        %p10809 = pneg %p144
      $region42: #{bottleneck.1} parent=39 // pred_check_branch
        %10811 = sbr.rel (%p10809) target = $region44
      $region43: #{bottleneck.1} parent=39 // pred_region
        _
      $region44: #{bottleneck.1} parent=39 // pred_fallthru
        _
    $region40: #{bottleneck.1} parent=5 // pred_fallthru
      _
    %p10812 = scmp.le.s32.totalorder 2, %s11
    // Predicated region
    $region45: #{bottleneck.1} parent=5 // pred_check
      %p10813 = pneg %p10812
    $region46: #{bottleneck.1} parent=5 // pred_check_branch
      %10815 = sbr.rel (%p10813) target = $region48
    $region47: #{bottleneck.1} parent=5 // pred_region
      %s10816 = ssub.s32 %s11, 2
      // Predicated region
      $region49: #{bottleneck.1} parent=47 // pred_check
        %p10817 = pneg %p150
      $region50: #{bottleneck.1} parent=47 // pred_check_branch
        %10819 = sbr.rel (%p10817) target = $region52
      $region51: #{bottleneck.1} parent=47 // pred_region
        %p10820 = scmp.lt.s32.totalorder %s17, 1
        %s10821 = scalar_select %p10820, %s17, 1
        %s10822 = smul.addr %s10821, 32
        %s10823 = smul.addr %s10822, 4
        %s10824 = scalar_lea.vmem %s5, %s10823
      $region52: #{bottleneck.1} parent=47 // pred_fallthru
        _
    $region48: #{bottleneck.1} parent=5 // pred_fallthru
      _
  $region6: #{bottleneck.1} parent=0 // loop_footer
    %s15 = sadd.s32 1, %s11
  $region7: #{bottleneck.1} parent=0 // loop_footer_branch
    %10 = sbr.rel target = $region3
  $region8: #{bottleneck.1} parent=0 // loop_exit
    _

</llo_original>
